<compile_context>
chip_gen: v7x
topology: tpu7x:2x2x1
jax: 0.10.0
libtpu: 0.0.40
codegen_flags: <defaults>
</compile_context>

<pallas_src>
import math

import jax
import jax.numpy as jnp
from jax.experimental import pallas as pl
from jax.experimental.pallas import tpu as pltpu

# ----------------------------- configuration --------------------------------
B = 2
T = 8                       # == num_frames (avoids the padding branch of the reference)
INPUT_FEATS = 6             # divisible by 3 (patch_embed reshape in the reference)
LATENT_DIM = 32
FF_SIZE = 64
NUM_LAYERS = 2
NUM_HEADS = 4
AUDIO_LATENT_DIM = 16
N_AUDIO = 8
SPATIAL_DIM = 16
EMOTION_F = 8
SPEAKER_DIMS = 30
SPEAKER_F = 8
TIME_EMBED_DIM = LATENT_DIM * 4
HEAD_DIM = LATENT_DIM // NUM_HEADS
D = LATENT_DIM
OUT_PAD = 128                        # lane-dense padded output width
WEIGHT_DTYPE = jnp.bfloat16          # matmul weights; accumulation stays float32


# ----------------------------- math helpers ---------------------------------
def _silu(x):
    return x * jax.nn.sigmoid(x)


def _gelu_tanh(x):
    # tanh-approx GELU (EUP tanh).  nn.GELU() uses exact erf; difference < ~1e-3.
    c = math.sqrt(2.0 / math.pi)
    return 0.5 * x * (1.0 + jnp.tanh(c * (x + 0.044715 * x * x * x)))


# ------------------------------ slab packing ---------------------------------
class _SlabPacker:
    """Packs many small 2-D tensors into one lane-dense (rows, 128) slab so the
    kernel receives a handful of operands (one DMA each) instead of ~50 and
    addresses each piece with a static row/lane slice."""

    def __init__(self, dtype, row_align, width=128):
        self.dtype = dtype
        self.row_align = row_align
        self.width = width
        self.index = {}          # name -> (row_offset, rows, cols); static ints
        self._blocks = []
        self._rows = 0

    def add(self, name, arr):
        arr = jnp.asarray(arr, self.dtype)
        if arr.ndim == 1:
            arr = arr[None, :]
        r, c = arr.shape
        assert c <= self.width, (name, arr.shape)
        rp = -(-r // self.row_align) * self.row_align          # sublane-aligned
        blk = jnp.zeros((rp, self.width), self.dtype).at[:r, :c].set(arr)
        self.index[name] = (self._rows, r, c)
        self._blocks.append(blk)
        self._rows += rp

    def build(self):
        return jnp.concatenate(self._blocks, axis=0)


# ------------------------------ fused kernel ---------------------------------
def _build_trunk_kernel(fidx, widx, num_layers, num_heads, head_dim):
    """Fused trunk: joint_embed -> L x {SA, CA, FFN} -> out, one kernel body.
    fidx / widx map names to static (row_off, rows, cols) slices of the slabs."""

    def kernel(fslab_ref, wslab_ref, out_ref, attn_scratch):
        def fp(name):                                   # f32 slab piece
            off, r, c = fidx[name]
            return fslab_ref[off:off + r, :c]

        def wp(name):                                   # bf16 weight slab piece
            off, r, c = widx[name]
            return wslab_ref[off:off + r, :c]

        def mm(x2, wname, bname):
            return (jnp.dot(x2.astype(WEIGHT_DTYPE), wp(wname),
                            preferred_element_type=jnp.float32) + fp(bname))

        def layernorm(x2, g, b, eps=1e-5):
            mu = jnp.mean(x2, axis=-1, keepdims=True)
            var = jnp.mean(jnp.square(x2 - mu), axis=-1, keepdims=True)
            return (x2 - mu) * jax.lax.rsqrt(var + eps) * g + b

        def attention(q2, k2, v2, m_len):
            # q2: (B*T, D); k2, v2: (B*m_len, D).  Torch semantics:
            # einsum('bnhd,bmhd->bnmh') / sqrt(head_dim), softmax over m.
            # The reference's (1 - src_mask) * -1e5 add is a per-query constant
            # over the softmax axis and cancels exactly, so it is dropped.
            qb = q2.reshape(B, T, num_heads * head_dim)
            kb = k2.reshape(B, m_len, num_heads * head_dim)
            vb = v2.reshape(B, m_len, num_heads * head_dim)
            scale = 1.0 / math.sqrt(head_dim)
            for hh in range(num_heads):                 # short unrolled head loop
                sl = slice(hh * head_dim, (hh + 1) * head_dim)
                s = jnp.einsum('btd,bmd->btm', qb[..., sl], kb[..., sl],
                               preferred_element_type=jnp.float32) * scale
                mx = jnp.max(s, axis=-1, keepdims=True)
                e = jnp.exp(s - mx)
                p = e * pl.reciprocal(jnp.sum(e, axis=-1, keepdims=True),
                                      approx=True)
                o = jnp.einsum('btm,bmd->btd', p, vb[..., sl],
                               preferred_element_type=jnp.float32)
                # assemble heads at static lane offsets (no lane concat)
                attn_scratch[:, sl] = o.reshape(B * T, head_dim)
            return attn_scratch[...]

        def adaln_tail(y2, pfx):
            e = fp(pfx + "e")                           # (B*T, 2D), hoisted to host
            hn = layernorm(y2, fp(pfx + "g"), fp(pfx + "b"))
            hn = hn * (1.0 + e[:, :D]) + e[:, D:2 * D]
            return mm(_silu(hn), pfx + "wo", pfx + "bo")

        x = fp("x")                                     # (B*T, input_feats)
        xf = fp("xf")                                   # (B*N, audio_latent)

        # joint_embed + sequence embedding (pos pre-expanded to (B*T, D))
        h = mm(x, "joint_w", "joint_b") + fp("pos")

        for l in range(num_layers):                     # unrolled, static slices
            if l == num_layers // 2:
                h = h + fp("cls")                       # cls pre-expanded (B*T, D)
            pfx = "l%d_" % l

            # ---- temporal self-attention (fused QKV projection) ----
            xn = layernorm(h, fp(pfx + "sa_lng"), fp(pfx + "sa_lnb"))
            qkv = mm(xn, pfx + "sa_wqkv", pfx + "sa_bqkv")        # (B*T, 3D)
            y = attention(qkv[:, :D], qkv[:, D:2 * D], qkv[:, 2 * D:3 * D], T)
            h = h + adaln_tail(y, pfx + "sa_ada_")

            # ---- temporal cross-attention (audio, fused KV projection) ----
            xn = layernorm(h, fp(pfx + "ca_lng"), fp(pfx + "ca_lnb"))
            xfn = layernorm(xf, fp(pfx + "ca_alng"), fp(pfx + "ca_alnb"))
            q = mm(xn, pfx + "ca_wq", pfx + "ca_bq")              # (B*T, D)
            kv = mm(xfn, pfx + "ca_wkv", pfx + "ca_bkv")          # (B*N, 2D)
            y = attention(q, kv[:, :D], kv[:, D:2 * D], N_AUDIO)
            h = h + adaln_tail(y, pfx + "ca_ada_")

            # ---- FFN ----
            mid = _gelu_tanh(mm(h, pfx + "ffn_w1", pfx + "ffn_b1"))
            y = mm(mid, pfx + "ffn_w2", pfx + "ffn_b2")
            h = h + adaln_tail(y, pfx + "ffn_ada_")

        # out projection; out_w zero-padded to 128 cols -> unmasked lane-dense store
        out_ref[...] = mm(h, "out_w", "out_b")

    return kernel


# --------------------------- pallas_call plumbing ----------------------------
def fused_trunk(p, x, audio_out, cls_tokens, emb):
    bx, tx, _ = x.shape
    bt = bx * tx

    # ---- f32 slab: runtime data, biases, LN params, AdaLN conditioning ----
    fpk = _SlabPacker(jnp.float32, row_align=8)
    fpk.add("x", x.reshape(bt, INPUT_FEATS))
    fpk.add("xf", audio_out.reshape(bx * N_AUDIO, AUDIO_LATENT_DIM))
    fpk.add("pos", jnp.tile(p["seq_emb"][:tx, :], (bx, 1)))        # (B*T, D)
    fpk.add("cls", jnp.repeat(cls_tokens[:, 0, :], tx, axis=0))    # (B*T, D)
    fpk.add("joint_b", p["joint_b"])
    fpk.add("out_b", jnp.pad(p["out_b"], ((0, 0), (0, OUT_PAD - INPUT_FEATS))))

    # ---- bf16 slab: every weight matrix (QKV / KV fused host-side) ----
    wpk = _SlabPacker(WEIGHT_DTYPE, row_align=16)
    wpk.add("joint_w", p["joint_w"])
    wpk.add("out_w", jnp.pad(p["out_w"], ((0, 0), (0, OUT_PAD - INPUT_FEATS))))

    silu_emb = _silu(emb)                                          # (B, time_embed)

    def add_ada(pfx, a):
        # AdaLN conditioning matmul is T-independent: hoist it and pre-expand
        # scale|shift to (B*T, 2D) so the kernel does pure elementwise work.
        e = silu_emb @ a["we"] + a["be"]                           # (B, 2D)
        fpk.add(pfx + "e", jnp.repeat(e, tx, axis=0))              # (B*T, 2D)
        fpk.add(pfx + "g", a["g"])
        fpk.add(pfx + "b", a["b"])
        fpk.add(pfx + "bo", a["bo"])
        wpk.add(pfx + "wo", a["wo"])

    for l, lp in enumerate(p["layers"]):
        pfx = "l%d_" % l
        sa, ca, fn = lp["sa"], lp["ca"], lp["ffn"]
        # self-attention: fused QKV
        fpk.add(pfx + "sa_lng", sa["g"])
        fpk.add(pfx + "sa_lnb", sa["b"])
        wpk.add(pfx + "sa_wqkv", jnp.concatenate([sa["wq"], sa["wk"], sa["wv"]], axis=1))
        fpk.add(pfx + "sa_bqkv", jnp.concatenate([sa["bq"], sa["bk"], sa["bv"]], axis=1))
        add_ada(pfx + "sa_ada_", sa["ada"])
        # cross-attention: fused KV
        fpk.add(pfx + "ca_lng", ca["g"])
        fpk.add(pfx + "ca_lnb", ca["b"])
        fpk.add(pfx + "ca_alng", ca["ag"])
        fpk.add(pfx + "ca_alnb", ca["ab"])
        wpk.add(pfx + "ca_wq", ca["wq"])
        fpk.add(pfx + "ca_bq", ca["bq"])
        wpk.add(pfx + "ca_wkv", jnp.concatenate([ca["wk"], ca["wv"]], axis=1))
        fpk.add(pfx + "ca_bkv", jnp.concatenate([ca["bk"], ca["bv"]], axis=1))
        add_ada(pfx + "ca_ada_", ca["ada"])
        # FFN
        wpk.add(pfx + "ffn_w1", fn["w1"])
        fpk.add(pfx + "ffn_b1", fn["b1"])
        wpk.add(pfx + "ffn_w2", fn["w2"])
        fpk.add(pfx + "ffn_b2", fn["b2"])
        add_ada(pfx + "ffn_ada_", fn["ada"])

    fslab = fpk.build()                 # (~496, 128) f32  — one DMA
    wslab = wpk.build()                 # (~592, 128) bf16 — one DMA

    kernel = _build_trunk_kernel(fpk.index, wpk.index, NUM_LAYERS, NUM_HEADS, HEAD_DIM)
    out = pl.pallas_call(
        kernel,
        out_shape=jax.ShapeDtypeStruct((bt, OUT_PAD), jnp.float32),
        grid=(1,),                                       # whole trunk in one step
        in_specs=[pl.BlockSpec(fslab.shape, lambda i: (0, 0)),
                  pl.BlockSpec(wslab.shape, lambda i: (0, 0))],
        out_specs=pl.BlockSpec((bt, OUT_PAD), lambda i: (0, 0)),
        scratch_shapes=[pltpu.VMEM((bt, LATENT_DIM), jnp.float32)],  # head assembly
        compiler_params=pltpu.CompilerParams(
            dimension_semantics=("arbitrary",),
            vmem_limit_bytes=32 * 1024 * 1024),          # total footprint << 1 MiB
    )(fslab, wslab)
    return out[:, :INPUT_FEATS].reshape(bx, tx, INPUT_FEATS)


# ------------------------------- parameters ----------------------------------
def init_params(key):
    kit = [key]

    def nk():
        kit[0], sub = jax.random.split(kit[0])
        return sub

    def rn(shape, scale=0.05):
        return jax.random.normal(nk(), shape, jnp.float32) * scale

    def lin(din, dout):
        return rn((din, dout)), rn((1, dout), 0.01)

    def adaln(E, Dm):
        we, be = lin(E, 2 * Dm)
        wo, bo = lin(Dm, Dm)   # zero_module in the reference; random here (see header)
        return dict(we=we, be=be, g=jnp.ones((1, Dm), jnp.float32),
                    b=jnp.zeros((1, Dm), jnp.float32), wo=wo, bo=bo)

    p = {}
    p["cls_token"] = jnp.zeros((1, 1, SPATIAL_DIM), jnp.float32)   # torch.zeros init
    p["time_mlp_w1"], p["time_mlp_b1"] = lin(SPATIAL_DIM, SPATIAL_DIM)
    p["time_mlp_w2"], p["time_mlp_b2"] = lin(SPATIAL_DIM, SPATIAL_DIM)
    p["spatial_proj_w"], p["spatial_proj_b"] = lin(SPATIAL_DIM, LATENT_DIM)
    p["time_embed_w1"], p["time_embed_b1"] = lin(LATENT_DIM, TIME_EMBED_DIM)
    p["time_embed_w2"], p["time_embed_b2"] = lin(TIME_EMBED_DIM, TIME_EMBED_DIM)

    # emotion head (Embedding + Conv1d/BN/LeakyReLU stack + MLP)
    p["emotion_embedding"] = rn((EMOTION_F, EMOTION_F), 1.0)
    p["emo_convs"] = []
    for cin, cout in [(EMOTION_F, 8), (8, 16), (16, 16), (16, EMOTION_F)]:
        p["emo_convs"].append(dict(
            w=rn((cout, cin, 9), 0.05), b=rn((cout,), 0.01),
            gamma=jnp.ones((cout,), jnp.float32), beta=jnp.zeros((cout,), jnp.float32)))
    p["emo_proj_w1"], p["emo_proj_b1"] = lin(EMOTION_F, AUDIO_LATENT_DIM)
    p["emo_proj_w2"], p["emo_proj_b2"] = lin(AUDIO_LATENT_DIM, TIME_EMBED_DIM)

    # speaker head
    p["speaker_embedding"] = rn((SPEAKER_DIMS, SPEAKER_F), 1.0)
    p["spk_w1"], p["spk_b1"] = lin(SPEAKER_F, AUDIO_LATENT_DIM)
    p["spk_w2"], p["spk_b2"] = lin(AUDIO_LATENT_DIM, TIME_EMBED_DIM)

    # trunk
    p["joint_w"], p["joint_b"] = lin(INPUT_FEATS, LATENT_DIM)
    p["seq_emb"] = rn((150, LATENT_DIM), 1.0)                       # torch.randn init
    p["out_w"], p["out_b"] = lin(LATENT_DIM, INPUT_FEATS)           # zero_module in reference

    layers = []
    for _ in range(NUM_LAYERS):
        sa = dict(g=jnp.ones((1, LATENT_DIM), jnp.float32),
                  b=jnp.zeros((1, LATENT_DIM), jnp.float32))
        sa["wq"], sa["bq"] = lin(LATENT_DIM, LATENT_DIM)
        sa["wk"], sa["bk"] = lin(LATENT_DIM, LATENT_DIM)
        sa["wv"], sa["bv"] = lin(LATENT_DIM, LATENT_DIM)
        sa["ada"] = adaln(TIME_EMBED_DIM, LATENT_DIM)
        ca = dict(g=jnp.ones((1, LATENT_DIM), jnp.float32),
                  b=jnp.zeros((1, LATENT_DIM), jnp.float32),
                  ag=jnp.ones((1, AUDIO_LATENT_DIM), jnp.float32),
                  ab=jnp.zeros((1, AUDIO_LATENT_DIM), jnp.float32))
        ca["wq"], ca["bq"] = lin(LATENT_DIM, LATENT_DIM)
        ca["wk"], ca["bk"] = lin(AUDIO_LATENT_DIM, LATENT_DIM)
        ca["wv"], ca["bv"] = lin(AUDIO_LATENT_DIM, LATENT_DIM)
        ca["ada"] = adaln(TIME_EMBED_DIM, LATENT_DIM)
        ffn = {}
        ffn["w1"], ffn["b1"] = lin(LATENT_DIM, FF_SIZE)
        ffn["w2"], ffn["b2"] = lin(FF_SIZE, LATENT_DIM)             # zero_module in reference
        ffn["ada"] = adaln(TIME_EMBED_DIM, LATENT_DIM)
        layers.append(dict(sa=sa, ca=ca, ffn=ffn))
    p["layers"] = layers
    return p


# ------------------------------- glue (plain JAX) ----------------------------
def timestep_embedding(timesteps, dim, max_period=10000):
    half = dim // 2
    freqs = jnp.exp(-math.log(max_period) * jnp.arange(half, dtype=jnp.float32) / half)
    args = timesteps.astype(jnp.float32)[:, None] * freqs[None]
    emb = jnp.concatenate([jnp.cos(args), jnp.sin(args)], axis=-1)
    if dim % 2:
        emb = jnp.concatenate([emb, jnp.zeros_like(emb[:, :1])], axis=-1)
    return emb


def encode_emo(p, in_emo):
    x = p["emotion_embedding"][in_emo]                 # (B, T, emotion_f)
    x = jnp.transpose(x, (0, 2, 1))                    # (B, C, T)  — NCW like torch
    for c in p["emo_convs"]:
        x = jax.lax.conv_general_dilated(
            x, c["w"], window_strides=(1,), padding=[(4, 4)],
            dimension_numbers=("NCH", "OIH", "NCH")) + c["b"][None, :, None]
        # BatchNorm1d, inference mode with default running stats (mean=0, var=1)
        x = (x * (1.0 / math.sqrt(1.0 + 1e-5))) * c["gamma"][None, :, None] \
            + c["beta"][None, :, None]
        x = jnp.where(x >= 0, x, 0.3 * x)              # LeakyReLU(0.3)
    x = jnp.mean(jnp.transpose(x, (0, 2, 1)), axis=1)  # (B, emotion_f)
    h = x @ p["emo_proj_w1"] + p["emo_proj_b1"]
    h = _silu(h)
    return h @ p["emo_proj_w2"] + p["emo_proj_b2"]     # (B, time_embed_dim)


def encode_speaker(p, in_id):
    e = p["speaker_embedding"][in_id[:, 0]]            # (B, speaker_f)
    h = e @ p["spk_w1"] + p["spk_b1"]
    # nn.LeakyReLU(True): negative_slope == 1.0 -> identity (reproduced as-is)
    return h @ p["spk_w2"] + p["spk_b2"]               # (B, time_embed_dim)


def gesture_transformer_forward(p, x, timesteps, in_emo, in_id, length, audio_out):
    # `length` only feeds the reference's src_mask, whose (1-mask)*-1e5 add is a
    # per-query constant that cancels exactly in softmax; the kernel drops it.
    del length

    # cls-token path
    te_s = timestep_embedding(timesteps, SPATIAL_DIM)
    tm = _silu(te_s @ p["time_mlp_w1"] + p["time_mlp_b1"])
    tm = tm @ p["time_mlp_w2"] + p["time_mlp_b2"]
    cls_tokens = p["cls_token"] + tm[:, None, :]                    # (B, 1, spatial_dim)
    # TODO(synk): the reference also computes `spatial_x` via patch_embed /
    # position_embedding / spatialTransEncoder, but that value is never consumed
    # afterwards (dead code in the reference forward), so it is omitted here.
    cls_tokens = cls_tokens @ p["spatial_proj_w"] + p["spatial_proj_b"]  # (B, 1, latent)

    # conditioning embedding (B, time_embed_dim)
    emo_proj = encode_emo(p, in_emo)
    id_proj = encode_speaker(p, in_id)
    te = timestep_embedding(timesteps, LATENT_DIM)
    emb = _silu(te @ p["time_embed_w1"] + p["time_embed_b1"])
    emb = emb @ p["time_embed_w2"] + p["time_embed_b2"]
    emb = emb + id_proj + emo_proj

    # whole decoder trunk in a single fused Pallas kernel
    return fused_trunk(p, x, audio_out, cls_tokens, emb)            # (B, T, input_feats)


# ----------------------------------- main ------------------------------------
if __name__ == "__main__":
    key = jax.random.PRNGKey(0)
    k_params, k_x, k_t, k_emo, k_id, k_audio = jax.random.split(key, 6)
    params = init_params(k_params)

    x = jax.random.normal(k_x, (B, T, INPUT_FEATS), jnp.float32)
    timesteps = jax.random.randint(k_t, (B,), 0, 1000).astype(jnp.float32)
    in_emo = jax.random.randint(k_emo, (B, T), 0, EMOTION_F)
    in_id = jax.random.randint(k_id, (B, 1), 0, SPEAKER_DIMS)
    length = jnp.array([T, T - 3], dtype=jnp.int32)
    # wav2vec / encode_audio is bypassed by supplying `audio_out` directly,
    # exactly as the reference forward allows (its `audio_proj` is never used).
    audio_out = jax.random.normal(k_audio, (B, N_AUDIO, AUDIO_LATENT_DIM), jnp.float32)

    fwd = jax.jit(gesture_transformer_forward)
    out = jax.block_until_ready(fwd(params, x, timesteps, in_emo, in_id, length, audio_out))
    assert out.shape == (B, T, INPUT_FEATS)
    assert bool(jnp.all(jnp.isfinite(out)))
    print("KERNEL_OK")
</pallas_src>

<mosaic_0001>
module attributes {stable_mosaic.version = 11 : i64} {
  func.func @kernel(%arg0: i32, %arg1: memref<496x128xf32, #tpu.memory_space<vmem>>, %arg2: memref<592x128xbf16, #tpu.memory_space<vmem>>, %arg3: memref<16x128xf32, #tpu.memory_space<vmem>>, %arg4: memref<16x32xf32, #tpu.memory_space<vmem>>) attributes {dimension_semantics = [#tpu.dimension_semantics<arbitrary>], iteration_bounds = array<i64: 1>, scalar_prefetch = 0 : i64, scratch_operands = 1 : i64, tpu.core_type = #tpu.core_type<tc>, window_params = [{pipeline_mode = #tpu.pipeline_mode<synchronous>, transform_indices = @transform_0, window_bounds = array<i64: 496, 128>}, {pipeline_mode = #tpu.pipeline_mode<synchronous>, transform_indices = @transform_1, window_bounds = array<i64: 592, 128>}, {pipeline_mode = #tpu.pipeline_mode<synchronous>, transform_indices = @transform_2, window_bounds = array<i64: 16, 128>}]} {
    %c0 = arith.constant 0 : index
    %c0_0 = arith.constant 0 : index
    %0 = vector.load %arg1[%c0, %c0_0] : memref<496x128xf32, #tpu.memory_space<vmem>>, vector<16x6xf32>
    %c16 = arith.constant 16 : index
    %c0_1 = arith.constant 0 : index
    %1 = vector.load %arg1[%c16, %c0_1] : memref<496x128xf32, #tpu.memory_space<vmem>>, vector<16x16xf32>
    %2 = arith.truncf %0 : vector<16x6xf32> to vector<16x6xbf16>
    %c0_2 = arith.constant 0 : index
    %c0_3 = arith.constant 0 : index
    %3 = vector.load %arg2[%c0_2, %c0_3] : memref<592x128xbf16, #tpu.memory_space<vmem>>, vector<6x32xbf16>
    %cst = arith.constant dense<0.000000e+00> : vector<16x32xf32>
    %4 = tpu.matmul %2, %3, %cst {dimension_numbers = #tpu.dot_dimension_numbers<[1], [0], [0], [1], [0, 0, 1, 1], [], []>} : vector<16x6xbf16>, vector<6x32xbf16>, vector<16x32xf32> -> vector<16x32xf32>
    %c64 = arith.constant 64 : index
    %c0_4 = arith.constant 0 : index
    %5 = vector.load %arg1[%c64, %c0_4] : memref<496x128xf32, #tpu.memory_space<vmem>>, vector<1x32xf32>
    %6 = vector.broadcast %5 : vector<1x32xf32> to vector<16x32xf32>
    %7 = arith.addf %4, %6 : vector<16x32xf32>
    %c32 = arith.constant 32 : index
    %c0_5 = arith.constant 0 : index
    %8 = vector.load %arg1[%c32, %c0_5] : memref<496x128xf32, #tpu.memory_space<vmem>>, vector<16x32xf32>
    %9 = arith.addf %7, %8 : vector<16x32xf32>
    %c80 = arith.constant 80 : index
    %c0_6 = arith.constant 0 : index
    %10 = vector.load %arg1[%c80, %c0_6] : memref<496x128xf32, #tpu.memory_space<vmem>>, vector<1x32xf32>
    %c88 = arith.constant 88 : index
    %c0_7 = arith.constant 0 : index
    %11 = vector.load %arg1[%c88, %c0_7] : memref<496x128xf32, #tpu.memory_space<vmem>>, vector<1x32xf32>
    %cst_8 = arith.constant dense<0.000000e+00> : vector<16xf32>
    %12 = vector.multi_reduction <add>, %9, %cst_8 [1] : vector<16x32xf32> to vector<16xf32>
    %13 = vector.shape_cast %12 : vector<16xf32> to vector<16x1xf32>
    %cst_9 = arith.constant 3.200000e+01 : f32
    %14 = vector.broadcast %cst_9 : f32 to vector<16x1xf32>
    %15 = arith.divf %13, %14 : vector<16x1xf32>
    %16 = vector.broadcast %15 : vector<16x1xf32> to vector<16x32xf32>
    %17 = arith.subf %9, %16 : vector<16x32xf32>
    %18 = arith.mulf %17, %17 : vector<16x32xf32>
    %cst_10 = arith.constant dense<0.000000e+00> : vector<16xf32>
    %19 = vector.multi_reduction <add>, %18, %cst_10 [1] : vector<16x32xf32> to vector<16xf32>
    %20 = vector.shape_cast %19 : vector<16xf32> to vector<16x1xf32>
    %cst_11 = arith.constant 3.200000e+01 : f32
    %21 = vector.broadcast %cst_11 : f32 to vector<16x1xf32>
    %22 = arith.divf %20, %21 : vector<16x1xf32>
    %23 = vector.broadcast %15 : vector<16x1xf32> to vector<16x32xf32>
    %24 = arith.subf %9, %23 : vector<16x32xf32>
    %cst_12 = arith.constant 9.99999974E-6 : f32
    %25 = vector.broadcast %cst_12 : f32 to vector<16x1xf32>
    %26 = arith.addf %22, %25 : vector<16x1xf32>
    %27 = math.rsqrt %26 : vector<16x1xf32>
    %28 = vector.broadcast %27 : vector<16x1xf32> to vector<16x32xf32>
    %29 = arith.mulf %24, %28 : vector<16x32xf32>
    %30 = vector.broadcast %10 : vector<1x32xf32> to vector<16x32xf32>
    %31 = arith.mulf %29, %30 : vector<16x32xf32>
    %32 = vector.broadcast %11 : vector<1x32xf32> to vector<16x32xf32>
    %33 = arith.addf %31, %32 : vector<16x32xf32>
    %34 = arith.truncf %33 : vector<16x32xf32> to vector<16x32xbf16>
    %c48 = arith.constant 48 : index
    %c0_13 = arith.constant 0 : index
    %35 = vector.load %arg2[%c48, %c0_13] : memref<592x128xbf16, #tpu.memory_space<vmem>>, vector<32x96xbf16>
    %cst_14 = arith.constant dense<0.000000e+00> : vector<16x96xf32>
    %36 = tpu.matmul %34, %35, %cst_14 {dimension_numbers = #tpu.dot_dimension_numbers<[1], [0], [0], [1], [0, 0, 1, 1], [], []>} : vector<16x32xbf16>, vector<32x96xbf16>, vector<16x96xf32> -> vector<16x96xf32>
    %c96 = arith.constant 96 : index
    %c0_15 = arith.constant 0 : index
    %37 = vector.load %arg1[%c96, %c0_15] : memref<496x128xf32, #tpu.memory_space<vmem>>, vector<1x96xf32>
    %38 = vector.broadcast %37 : vector<1x96xf32> to vector<16x96xf32>
    %39 = arith.addf %36, %38 : vector<16x96xf32>
    %40 = vector.extract_strided_slice %39 {offsets = [0, 0], sizes = [16, 32], strides = [1, 1]} : vector<16x96xf32> to vector<16x32xf32>
    %41 = vector.extract_strided_slice %39 {offsets = [0, 32], sizes = [16, 32], strides = [1, 1]} : vector<16x96xf32> to vector<16x32xf32>
    %42 = vector.extract_strided_slice %39 {offsets = [0, 64], sizes = [16, 32], strides = [1, 1]} : vector<16x96xf32> to vector<16x32xf32>
    %43 = vector.shape_cast %40 : vector<16x32xf32> to vector<2x8x32xf32>
    %44 = vector.shape_cast %41 : vector<16x32xf32> to vector<2x8x32xf32>
    %45 = vector.shape_cast %42 : vector<16x32xf32> to vector<2x8x32xf32>
    %46 = vector.extract_strided_slice %43 {offsets = [0, 0, 0], sizes = [2, 8, 8], strides = [1, 1, 1]} : vector<2x8x32xf32> to vector<2x8x8xf32>
    %47 = vector.extract_strided_slice %44 {offsets = [0, 0, 0], sizes = [2, 8, 8], strides = [1, 1, 1]} : vector<2x8x32xf32> to vector<2x8x8xf32>
    "tpu.trace_start"() <{level = 10 : i32, message = "btd,bmd->btm"}> : () -> ()
    %cst_16 = arith.constant dense<0.000000e+00> : vector<2x8x8xf32>
    %48 = tpu.matmul %46, %47, %cst_16 {dimension_numbers = #tpu.dot_dimension_numbers<[2], [2], [1], [1], [0, 0, 0, 1, 1, 1], [0], [0]>} : vector<2x8x8xf32>, vector<2x8x8xf32>, vector<2x8x8xf32> -> vector<2x8x8xf32>
    "tpu.trace_stop"() : () -> ()
    %cst_17 = arith.constant 0.353553385 : f32
    %49 = vector.broadcast %cst_17 : f32 to vector<2x8x8xf32>
    %50 = arith.mulf %48, %49 : vector<2x8x8xf32>
    %cst_18 = arith.constant dense<0xFF800000> : vector<2x8xf32>
    %51 = vector.multi_reduction <maximumf>, %50, %cst_18 [2] : vector<2x8x8xf32> to vector<2x8xf32>
    %52 = vector.shape_cast %51 : vector<2x8xf32> to vector<2x8x1xf32>
    %53 = vector.broadcast %52 : vector<2x8x1xf32> to vector<2x8x8xf32>
    %54 = arith.subf %50, %53 : vector<2x8x8xf32>
    %55 = math.exp %54 : vector<2x8x8xf32>
    %cst_19 = arith.constant dense<0.000000e+00> : vector<2x8xf32>
    %56 = vector.multi_reduction <add>, %55, %cst_19 [2] : vector<2x8x8xf32> to vector<2x8xf32>
    %57 = vector.shape_cast %56 : vector<2x8xf32> to vector<2x8x1xf32>
    %58 = tpu.reciprocal %57 {approx = true} : vector<2x8x1xf32> -> vector<2x8x1xf32>
    %59 = vector.broadcast %58 : vector<2x8x1xf32> to vector<2x8x8xf32>
    %60 = arith.mulf %55, %59 : vector<2x8x8xf32>
    %61 = vector.extract_strided_slice %45 {offsets = [0, 0, 0], sizes = [2, 8, 8], strides = [1, 1, 1]} : vector<2x8x32xf32> to vector<2x8x8xf32>
    "tpu.trace_start"() <{level = 10 : i32, message = "btm,bmd->btd"}> : () -> ()
    %cst_20 = arith.constant dense<0.000000e+00> : vector<2x8x8xf32>
    %62 = tpu.matmul %60, %61, %cst_20 {dimension_numbers = #tpu.dot_dimension_numbers<[2], [1], [1], [2], [0, 0, 0, 1, 1, 2], [0], [0]>} : vector<2x8x8xf32>, vector<2x8x8xf32>, vector<2x8x8xf32> -> vector<2x8x8xf32>
    "tpu.trace_stop"() : () -> ()
    %63 = vector.shape_cast %62 : vector<2x8x8xf32> to vector<16x8xf32>
    %c0_21 = arith.constant 0 : index
    %c0_22 = arith.constant 0 : index
    %64 = vector.load %arg4[%c0_21, %c0_22] : memref<16x32xf32, #tpu.memory_space<vmem>>, vector<16x8xf32>
    tpu.vector_store %arg4[%c0_21, %c0_22], %63 {strides = array<i32>} : memref<16x32xf32, #tpu.memory_space<vmem>>, vector<16x8xf32>,
    %65 = vector.extract_strided_slice %43 {offsets = [0, 0, 8], sizes = [2, 8, 8], strides = [1, 1, 1]} : vector<2x8x32xf32> to vector<2x8x8xf32>
    %66 = vector.extract_strided_slice %44 {offsets = [0, 0, 8], sizes = [2, 8, 8], strides = [1, 1, 1]} : vector<2x8x32xf32> to vector<2x8x8xf32>
    "tpu.trace_start"() <{level = 10 : i32, message = "btd,bmd->btm"}> : () -> ()
    %cst_23 = arith.constant dense<0.000000e+00> : vector<2x8x8xf32>
    %67 = tpu.matmul %65, %66, %cst_23 {dimension_numbers = #tpu.dot_dimension_numbers<[2], [2], [1], [1], [0, 0, 0, 1, 1, 1], [0], [0]>} : vector<2x8x8xf32>, vector<2x8x8xf32>, vector<2x8x8xf32> -> vector<2x8x8xf32>
    "tpu.trace_stop"() : () -> ()
    %cst_24 = arith.constant 0.353553385 : f32
    %68 = vector.broadcast %cst_24 : f32 to vector<2x8x8xf32>
    %69 = arith.mulf %67, %68 : vector<2x8x8xf32>
    %cst_25 = arith.constant dense<0xFF800000> : vector<2x8xf32>
    %70 = vector.multi_reduction <maximumf>, %69, %cst_25 [2] : vector<2x8x8xf32> to vector<2x8xf32>
    %71 = vector.shape_cast %70 : vector<2x8xf32> to vector<2x8x1xf32>
    %72 = vector.broadcast %71 : vector<2x8x1xf32> to vector<2x8x8xf32>
    %73 = arith.subf %69, %72 : vector<2x8x8xf32>
    %74 = math.exp %73 : vector<2x8x8xf32>
    %cst_26 = arith.constant dense<0.000000e+00> : vector<2x8xf32>
    %75 = vector.multi_reduction <add>, %74, %cst_26 [2] : vector<2x8x8xf32> to vector<2x8xf32>
    %76 = vector.shape_cast %75 : vector<2x8xf32> to vector<2x8x1xf32>
    %77 = tpu.reciprocal %76 {approx = true} : vector<2x8x1xf32> -> vector<2x8x1xf32>
    %78 = vector.broadcast %77 : vector<2x8x1xf32> to vector<2x8x8xf32>
    %79 = arith.mulf %74, %78 : vector<2x8x8xf32>
    %80 = vector.extract_strided_slice %45 {offsets = [0, 0, 8], sizes = [2, 8, 8], strides = [1, 1, 1]} : vector<2x8x32xf32> to vector<2x8x8xf32>
    "tpu.trace_start"() <{level = 10 : i32, message = "btm,bmd->btd"}> : () -> ()
    %cst_27 = arith.constant dense<0.000000e+00> : vector<2x8x8xf32>
    %81 = tpu.matmul %79, %80, %cst_27 {dimension_numbers = #tpu.dot_dimension_numbers<[2], [1], [1], [2], [0, 0, 0, 1, 1, 2], [0], [0]>} : vector<2x8x8xf32>, vector<2x8x8xf32>, vector<2x8x8xf32> -> vector<2x8x8xf32>
    "tpu.trace_stop"() : () -> ()
    %82 = vector.shape_cast %81 : vector<2x8x8xf32> to vector<16x8xf32>
    %c0_28 = arith.constant 0 : index
    %c8 = arith.constant 8 : index
    %83 = vector.load %arg4[%c0_28, %c8] : memref<16x32xf32, #tpu.memory_space<vmem>>, vector<16x8xf32>
    tpu.vector_store %arg4[%c0_28, %c8], %82 {strides = array<i32>} : memref<16x32xf32, #tpu.memory_space<vmem>>, vector<16x8xf32>,
    %84 = vector.extract_strided_slice %43 {offsets = [0, 0, 16], sizes = [2, 8, 8], strides = [1, 1, 1]} : vector<2x8x32xf32> to vector<2x8x8xf32>
    %85 = vector.extract_strided_slice %44 {offsets = [0, 0, 16], sizes = [2, 8, 8], strides = [1, 1, 1]} : vector<2x8x32xf32> to vector<2x8x8xf32>
    "tpu.trace_start"() <{level = 10 : i32, message = "btd,bmd->btm"}> : () -> ()
    %cst_29 = arith.constant dense<0.000000e+00> : vector<2x8x8xf32>
    %86 = tpu.matmul %84, %85, %cst_29 {dimension_numbers = #tpu.dot_dimension_numbers<[2], [2], [1], [1], [0, 0, 0, 1, 1, 1], [0], [0]>} : vector<2x8x8xf32>, vector<2x8x8xf32>, vector<2x8x8xf32> -> vector<2x8x8xf32>
    "tpu.trace_stop"() : () -> ()
    %cst_30 = arith.constant 0.353553385 : f32
    %87 = vector.broadcast %cst_30 : f32 to vector<2x8x8xf32>
    %88 = arith.mulf %86, %87 : vector<2x8x8xf32>
    %cst_31 = arith.constant dense<0xFF800000> : vector<2x8xf32>
    %89 = vector.multi_reduction <maximumf>, %88, %cst_31 [2] : vector<2x8x8xf32> to vector<2x8xf32>
    %90 = vector.shape_cast %89 : vector<2x8xf32> to vector<2x8x1xf32>
    %91 = vector.broadcast %90 : vector<2x8x1xf32> to vector<2x8x8xf32>
    %92 = arith.subf %88, %91 : vector<2x8x8xf32>
    %93 = math.exp %92 : vector<2x8x8xf32>
    %cst_32 = arith.constant dense<0.000000e+00> : vector<2x8xf32>
    %94 = vector.multi_reduction <add>, %93, %cst_32 [2] : vector<2x8x8xf32> to vector<2x8xf32>
    %95 = vector.shape_cast %94 : vector<2x8xf32> to vector<2x8x1xf32>
    %96 = tpu.reciprocal %95 {approx = true} : vector<2x8x1xf32> -> vector<2x8x1xf32>
    %97 = vector.broadcast %96 : vector<2x8x1xf32> to vector<2x8x8xf32>
    %98 = arith.mulf %93, %97 : vector<2x8x8xf32>
    %99 = vector.extract_strided_slice %45 {offsets = [0, 0, 16], sizes = [2, 8, 8], strides = [1, 1, 1]} : vector<2x8x32xf32> to vector<2x8x8xf32>
    "tpu.trace_start"() <{level = 10 : i32, message = "btm,bmd->btd"}> : () -> ()
    %cst_33 = arith.constant dense<0.000000e+00> : vector<2x8x8xf32>
    %100 = tpu.matmul %98, %99, %cst_33 {dimension_numbers = #tpu.dot_dimension_numbers<[2], [1], [1], [2], [0, 0, 0, 1, 1, 2], [0], [0]>} : vector<2x8x8xf32>, vector<2x8x8xf32>, vector<2x8x8xf32> -> vector<2x8x8xf32>
    "tpu.trace_stop"() : () -> ()
    %101 = vector.shape_cast %100 : vector<2x8x8xf32> to vector<16x8xf32>
    %c0_34 = arith.constant 0 : index
    %c16_35 = arith.constant 16 : index
    %102 = vector.load %arg4[%c0_34, %c16_35] : memref<16x32xf32, #tpu.memory_space<vmem>>, vector<16x8xf32>
    tpu.vector_store %arg4[%c0_34, %c16_35], %101 {strides = array<i32>} : memref<16x32xf32, #tpu.memory_space<vmem>>, vector<16x8xf32>,
    %103 = vector.extract_strided_slice %43 {offsets = [0, 0, 24], sizes = [2, 8, 8], strides = [1, 1, 1]} : vector<2x8x32xf32> to vector<2x8x8xf32>
    %104 = vector.extract_strided_slice %44 {offsets = [0, 0, 24], sizes = [2, 8, 8], strides = [1, 1, 1]} : vector<2x8x32xf32> to vector<2x8x8xf32>
    "tpu.trace_start"() <{level = 10 : i32, message = "btd,bmd->btm"}> : () -> ()
    %cst_36 = arith.constant dense<0.000000e+00> : vector<2x8x8xf32>
    %105 = tpu.matmul %103, %104, %cst_36 {dimension_numbers = #tpu.dot_dimension_numbers<[2], [2], [1], [1], [0, 0, 0, 1, 1, 1], [0], [0]>} : vector<2x8x8xf32>, vector<2x8x8xf32>, vector<2x8x8xf32> -> vector<2x8x8xf32>
    "tpu.trace_stop"() : () -> ()
    %cst_37 = arith.constant 0.353553385 : f32
    %106 = vector.broadcast %cst_37 : f32 to vector<2x8x8xf32>
    %107 = arith.mulf %105, %106 : vector<2x8x8xf32>
    %cst_38 = arith.constant dense<0xFF800000> : vector<2x8xf32>
    %108 = vector.multi_reduction <maximumf>, %107, %cst_38 [2] : vector<2x8x8xf32> to vector<2x8xf32>
    %109 = vector.shape_cast %108 : vector<2x8xf32> to vector<2x8x1xf32>
    %110 = vector.broadcast %109 : vector<2x8x1xf32> to vector<2x8x8xf32>
    %111 = arith.subf %107, %110 : vector<2x8x8xf32>
    %112 = math.exp %111 : vector<2x8x8xf32>
    %cst_39 = arith.constant dense<0.000000e+00> : vector<2x8xf32>
    %113 = vector.multi_reduction <add>, %112, %cst_39 [2] : vector<2x8x8xf32> to vector<2x8xf32>
    %114 = vector.shape_cast %113 : vector<2x8xf32> to vector<2x8x1xf32>
    %115 = tpu.reciprocal %114 {approx = true} : vector<2x8x1xf32> -> vector<2x8x1xf32>
    %116 = vector.broadcast %115 : vector<2x8x1xf32> to vector<2x8x8xf32>
    %117 = arith.mulf %112, %116 : vector<2x8x8xf32>
    %118 = vector.extract_strided_slice %45 {offsets = [0, 0, 24], sizes = [2, 8, 8], strides = [1, 1, 1]} : vector<2x8x32xf32> to vector<2x8x8xf32>
    "tpu.trace_start"() <{level = 10 : i32, message = "btm,bmd->btd"}> : () -> ()
    %cst_40 = arith.constant dense<0.000000e+00> : vector<2x8x8xf32>
    %119 = tpu.matmul %117, %118, %cst_40 {dimension_numbers = #tpu.dot_dimension_numbers<[2], [1], [1], [2], [0, 0, 0, 1, 1, 2], [0], [0]>} : vector<2x8x8xf32>, vector<2x8x8xf32>, vector<2x8x8xf32> -> vector<2x8x8xf32>
    "tpu.trace_stop"() : () -> ()
    %120 = vector.shape_cast %119 : vector<2x8x8xf32> to vector<16x8xf32>
    %c0_41 = arith.constant 0 : index
    %c24 = arith.constant 24 : index
    %121 = vector.load %arg4[%c0_41, %c24] : memref<16x32xf32, #tpu.memory_space<vmem>>, vector<16x8xf32>
    tpu.vector_store %arg4[%c0_41, %c24], %120 {strides = array<i32>} : memref<16x32xf32, #tpu.memory_space<vmem>>, vector<16x8xf32>,
    %c0_42 = arith.constant 0 : index
    %c0_43 = arith.constant 0 : index
    %122 = vector.load %arg4[%c0_42, %c0_43] : memref<16x32xf32, #tpu.memory_space<vmem>>, vector<16x32xf32>
    %c104 = arith.constant 104 : index
    %c0_44 = arith.constant 0 : index
    %123 = vector.load %arg1[%c104, %c0_44] : memref<496x128xf32, #tpu.memory_space<vmem>>, vector<16x64xf32>
    %c120 = arith.constant 120 : index
    %c0_45 = arith.constant 0 : index
    %124 = vector.load %arg1[%c120, %c0_45] : memref<496x128xf32, #tpu.memory_space<vmem>>, vector<1x32xf32>
    %c128 = arith.constant 128 : index
    %c0_46 = arith.constant 0 : index
    %125 = vector.load %arg1[%c128, %c0_46] : memref<496x128xf32, #tpu.memory_space<vmem>>, vector<1x32xf32>
    %cst_47 = arith.constant dense<0.000000e+00> : vector<16xf32>
    %126 = vector.multi_reduction <add>, %122, %cst_47 [1] : vector<16x32xf32> to vector<16xf32>
    %127 = vector.shape_cast %126 : vector<16xf32> to vector<16x1xf32>
    %cst_48 = arith.constant 3.200000e+01 : f32
    %128 = vector.broadcast %cst_48 : f32 to vector<16x1xf32>
    %129 = arith.divf %127, %128 : vector<16x1xf32>
    %130 = vector.broadcast %129 : vector<16x1xf32> to vector<16x32xf32>
    %131 = arith.subf %122, %130 : vector<16x32xf32>
    %132 = arith.mulf %131, %131 : vector<16x32xf32>
    %cst_49 = arith.constant dense<0.000000e+00> : vector<16xf32>
    %133 = vector.multi_reduction <add>, %132, %cst_49 [1] : vector<16x32xf32> to vector<16xf32>
    %134 = vector.shape_cast %133 : vector<16xf32> to vector<16x1xf32>
    %cst_50 = arith.constant 3.200000e+01 : f32
    %135 = vector.broadcast %cst_50 : f32 to vector<16x1xf32>
    %136 = arith.divf %134, %135 : vector<16x1xf32>
    %137 = vector.broadcast %129 : vector<16x1xf32> to vector<16x32xf32>
    %138 = arith.subf %122, %137 : vector<16x32xf32>
    %cst_51 = arith.constant 9.99999974E-6 : f32
    %139 = vector.broadcast %cst_51 : f32 to vector<16x1xf32>
    %140 = arith.addf %136, %139 : vector<16x1xf32>
    %141 = math.rsqrt %140 : vector<16x1xf32>
    %142 = vector.broadcast %141 : vector<16x1xf32> to vector<16x32xf32>
    %143 = arith.mulf %138, %142 : vector<16x32xf32>
    %144 = vector.broadcast %124 : vector<1x32xf32> to vector<16x32xf32>
    %145 = arith.mulf %143, %144 : vector<16x32xf32>
    %146 = vector.broadcast %125 : vector<1x32xf32> to vector<16x32xf32>
    %147 = arith.addf %145, %146 : vector<16x32xf32>
    %148 = vector.extract_strided_slice %123 {offsets = [0, 0], sizes = [16, 32], strides = [1, 1]} : vector<16x64xf32> to vector<16x32xf32>
    %cst_52 = arith.constant 1.000000e+00 : f32
    %149 = vector.broadcast %cst_52 : f32 to vector<16x32xf32>
    %150 = arith.addf %149, %148 : vector<16x32xf32>
    %151 = arith.mulf %147, %150 : vector<16x32xf32>
    %152 = vector.extract_strided_slice %123 {offsets = [0, 32], sizes = [16, 32], strides = [1, 1]} : vector<16x64xf32> to vector<16x32xf32>
    %153 = arith.addf %151, %152 : vector<16x32xf32>
    %154 = arith.negf %153 : vector<16x32xf32>
    %155 = math.exp %154 : vector<16x32xf32>
    %cst_53 = arith.constant 1.000000e+00 : f32
    %156 = vector.broadcast %cst_53 : f32 to vector<16x32xf32>
    %157 = arith.addf %156, %155 : vector<16x32xf32>
    %158 = arith.divf %156, %157 : vector<16x32xf32>
    %159 = arith.mulf %153, %158 : vector<16x32xf32>
    %160 = arith.truncf %159 : vector<16x32xf32> to vector<16x32xbf16>
    %c80_54 = arith.constant 80 : index
    %c0_55 = arith.constant 0 : index
    %161 = vector.load %arg2[%c80_54, %c0_55] : memref<592x128xbf16, #tpu.memory_space<vmem>>, vector<32x32xbf16>
    %cst_56 = arith.constant dense<0.000000e+00> : vector<16x32xf32>
    %162 = tpu.matmul %160, %161, %cst_56 {dimension_numbers = #tpu.dot_dimension_numbers<[1], [0], [0], [1], [0, 0, 1, 1], [], []>} : vector<16x32xbf16>, vector<32x32xbf16>, vector<16x32xf32> -> vector<16x32xf32>
    %c136 = arith.constant 136 : index
    %c0_57 = arith.constant 0 : index
    %163 = vector.load %arg1[%c136, %c0_57] : memref<496x128xf32, #tpu.memory_space<vmem>>, vector<1x32xf32>
    %164 = vector.broadcast %163 : vector<1x32xf32> to vector<16x32xf32>
    %165 = arith.addf %162, %164 : vector<16x32xf32>
    %166 = arith.addf %9, %165 : vector<16x32xf32>
    %c144 = arith.constant 144 : index
    %c0_58 = arith.constant 0 : index
    %167 = vector.load %arg1[%c144, %c0_58] : memref<496x128xf32, #tpu.memory_space<vmem>>, vector<1x32xf32>
    %c152 = arith.constant 152 : index
    %c0_59 = arith.constant 0 : index
    %168 = vector.load %arg1[%c152, %c0_59] : memref<496x128xf32, #tpu.memory_space<vmem>>, vector<1x32xf32>
    %cst_60 = arith.constant dense<0.000000e+00> : vector<16xf32>
    %169 = vector.multi_reduction <add>, %166, %cst_60 [1] : vector<16x32xf32> to vector<16xf32>
    %170 = vector.shape_cast %169 : vector<16xf32> to vector<16x1xf32>
    %cst_61 = arith.constant 3.200000e+01 : f32
    %171 = vector.broadcast %cst_61 : f32 to vector<16x1xf32>
    %172 = arith.divf %170, %171 : vector<16x1xf32>
    %173 = vector.broadcast %172 : vector<16x1xf32> to vector<16x32xf32>
    %174 = arith.subf %166, %173 : vector<16x32xf32>
    %175 = arith.mulf %174, %174 : vector<16x32xf32>
    %cst_62 = arith.constant dense<0.000000e+00> : vector<16xf32>
    %176 = vector.multi_reduction <add>, %175, %cst_62 [1] : vector<16x32xf32> to vector<16xf32>
    %177 = vector.shape_cast %176 : vector<16xf32> to vector<16x1xf32>
    %cst_63 = arith.constant 3.200000e+01 : f32
    %178 = vector.broadcast %cst_63 : f32 to vector<16x1xf32>
    %179 = arith.divf %177, %178 : vector<16x1xf32>
    %180 = vector.broadcast %172 : vector<16x1xf32> to vector<16x32xf32>
    %181 = arith.subf %166, %180 : vector<16x32xf32>
    %cst_64 = arith.constant 9.99999974E-6 : f32
    %182 = vector.broadcast %cst_64 : f32 to vector<16x1xf32>
    %183 = arith.addf %179, %182 : vector<16x1xf32>
    %184 = math.rsqrt %183 : vector<16x1xf32>
    %185 = vector.broadcast %184 : vector<16x1xf32> to vector<16x32xf32>
    %186 = arith.mulf %181, %185 : vector<16x32xf32>
    %187 = vector.broadcast %167 : vector<1x32xf32> to vector<16x32xf32>
    %188 = arith.mulf %186, %187 : vector<16x32xf32>
    %189 = vector.broadcast %168 : vector<1x32xf32> to vector<16x32xf32>
    %190 = arith.addf %188, %189 : vector<16x32xf32>
    %c160 = arith.constant 160 : index
    %c0_65 = arith.constant 0 : index
    %191 = vector.load %arg1[%c160, %c0_65] : memref<496x128xf32, #tpu.memory_space<vmem>>, vector<1x16xf32>
    %c168 = arith.constant 168 : index
    %c0_66 = arith.constant 0 : index
    %192 = vector.load %arg1[%c168, %c0_66] : memref<496x128xf32, #tpu.memory_space<vmem>>, vector<1x16xf32>
    %cst_67 = arith.constant dense<0.000000e+00> : vector<16xf32>
    %193 = vector.multi_reduction <add>, %1, %cst_67 [1] : vector<16x16xf32> to vector<16xf32>
    %194 = vector.shape_cast %193 : vector<16xf32> to vector<16x1xf32>
    %cst_68 = arith.constant 1.600000e+01 : f32
    %195 = vector.broadcast %cst_68 : f32 to vector<16x1xf32>
    %196 = arith.divf %194, %195 : vector<16x1xf32>
    %197 = vector.broadcast %196 : vector<16x1xf32> to vector<16x16xf32>
    %198 = arith.subf %1, %197 : vector<16x16xf32>
    %199 = arith.mulf %198, %198 : vector<16x16xf32>
    %cst_69 = arith.constant dense<0.000000e+00> : vector<16xf32>
    %200 = vector.multi_reduction <add>, %199, %cst_69 [1] : vector<16x16xf32> to vector<16xf32>
    %201 = vector.shape_cast %200 : vector<16xf32> to vector<16x1xf32>
    %cst_70 = arith.constant 1.600000e+01 : f32
    %202 = vector.broadcast %cst_70 : f32 to vector<16x1xf32>
    %203 = arith.divf %201, %202 : vector<16x1xf32>
    %204 = vector.broadcast %196 : vector<16x1xf32> to vector<16x16xf32>
    %205 = arith.subf %1, %204 : vector<16x16xf32>
    %cst_71 = arith.constant 9.99999974E-6 : f32
    %206 = vector.broadcast %cst_71 : f32 to vector<16x1xf32>
    %207 = arith.addf %203, %206 : vector<16x1xf32>
    %208 = math.rsqrt %207 : vector<16x1xf32>
    %209 = vector.broadcast %208 : vector<16x1xf32> to vector<16x16xf32>
    %210 = arith.mulf %205, %209 : vector<16x16xf32>
    %211 = vector.broadcast %191 : vector<1x16xf32> to vector<16x16xf32>
    %212 = arith.mulf %210, %211 : vector<16x16xf32>
    %213 = vector.broadcast %192 : vector<1x16xf32> to vector<16x16xf32>
    %214 = arith.addf %212, %213 : vector<16x16xf32>
    %215 = arith.truncf %190 : vector<16x32xf32> to vector<16x32xbf16>
    %c112 = arith.constant 112 : index
    %c0_72 = arith.constant 0 : index
    %216 = vector.load %arg2[%c112, %c0_72] : memref<592x128xbf16, #tpu.memory_space<vmem>>, vector<32x32xbf16>
    %cst_73 = arith.constant dense<0.000000e+00> : vector<16x32xf32>
    %217 = tpu.matmul %215, %216, %cst_73 {dimension_numbers = #tpu.dot_dimension_numbers<[1], [0], [0], [1], [0, 0, 1, 1], [], []>} : vector<16x32xbf16>, vector<32x32xbf16>, vector<16x32xf32> -> vector<16x32xf32>
    %c176 = arith.constant 176 : index
    %c0_74 = arith.constant 0 : index
    %218 = vector.load %arg1[%c176, %c0_74] : memref<496x128xf32, #tpu.memory_space<vmem>>, vector<1x32xf32>
    %219 = vector.broadcast %218 : vector<1x32xf32> to vector<16x32xf32>
    %220 = arith.addf %217, %219 : vector<16x32xf32>
    %221 = arith.truncf %214 : vector<16x16xf32> to vector<16x16xbf16>
    %c144_75 = arith.constant 144 : index
    %c0_76 = arith.constant 0 : index
    %222 = vector.load %arg2[%c144_75, %c0_76] : memref<592x128xbf16, #tpu.memory_space<vmem>>, vector<16x64xbf16>
    %cst_77 = arith.constant dense<0.000000e+00> : vector<16x64xf32>
    %223 = tpu.matmul %221, %222, %cst_77 {dimension_numbers = #tpu.dot_dimension_numbers<[1], [0], [0], [1], [0, 0, 1, 1], [], []>} : vector<16x16xbf16>, vector<16x64xbf16>, vector<16x64xf32> -> vector<16x64xf32>
    %c184 = arith.constant 184 : index
    %c0_78 = arith.constant 0 : index
    %224 = vector.load %arg1[%c184, %c0_78] : memref<496x128xf32, #tpu.memory_space<vmem>>, vector<1x64xf32>
    %225 = vector.broadcast %224 : vector<1x64xf32> to vector<16x64xf32>
    %226 = arith.addf %223, %225 : vector<16x64xf32>
    %227 = vector.extract_strided_slice %226 {offsets = [0, 0], sizes = [16, 32], strides = [1, 1]} : vector<16x64xf32> to vector<16x32xf32>
    %228 = vector.extract_strided_slice %226 {offsets = [0, 32], sizes = [16, 32], strides = [1, 1]} : vector<16x64xf32> to vector<16x32xf32>
    %229 = vector.shape_cast %220 : vector<16x32xf32> to vector<2x8x32xf32>
    %230 = vector.shape_cast %227 : vector<16x32xf32> to vector<2x8x32xf32>
    %231 = vector.shape_cast %228 : vector<16x32xf32> to vector<2x8x32xf32>
    %232 = vector.extract_strided_slice %229 {offsets = [0, 0, 0], sizes = [2, 8, 8], strides = [1, 1, 1]} : vector<2x8x32xf32> to vector<2x8x8xf32>
    %233 = vector.extract_strided_slice %230 {offsets = [0, 0, 0], sizes = [2, 8, 8], strides = [1, 1, 1]} : vector<2x8x32xf32> to vector<2x8x8xf32>
    "tpu.trace_start"() <{level = 10 : i32, message = "btd,bmd->btm"}> : () -> ()
    %cst_79 = arith.constant dense<0.000000e+00> : vector<2x8x8xf32>
    %234 = tpu.matmul %232, %233, %cst_79 {dimension_numbers = #tpu.dot_dimension_numbers<[2], [2], [1], [1], [0, 0, 0, 1, 1, 1], [0], [0]>} : vector<2x8x8xf32>, vector<2x8x8xf32>, vector<2x8x8xf32> -> vector<2x8x8xf32>
    "tpu.trace_stop"() : () -> ()
    %cst_80 = arith.constant 0.353553385 : f32
    %235 = vector.broadcast %cst_80 : f32 to vector<2x8x8xf32>
    %236 = arith.mulf %234, %235 : vector<2x8x8xf32>
    %cst_81 = arith.constant dense<0xFF800000> : vector<2x8xf32>
    %237 = vector.multi_reduction <maximumf>, %236, %cst_81 [2] : vector<2x8x8xf32> to vector<2x8xf32>
    %238 = vector.shape_cast %237 : vector<2x8xf32> to vector<2x8x1xf32>
    %239 = vector.broadcast %238 : vector<2x8x1xf32> to vector<2x8x8xf32>
    %240 = arith.subf %236, %239 : vector<2x8x8xf32>
    %241 = math.exp %240 : vector<2x8x8xf32>
    %cst_82 = arith.constant dense<0.000000e+00> : vector<2x8xf32>
    %242 = vector.multi_reduction <add>, %241, %cst_82 [2] : vector<2x8x8xf32> to vector<2x8xf32>
    %243 = vector.shape_cast %242 : vector<2x8xf32> to vector<2x8x1xf32>
    %244 = tpu.reciprocal %243 {approx = true} : vector<2x8x1xf32> -> vector<2x8x1xf32>
    %245 = vector.broadcast %244 : vector<2x8x1xf32> to vector<2x8x8xf32>
    %246 = arith.mulf %241, %245 : vector<2x8x8xf32>
    %247 = vector.extract_strided_slice %231 {offsets = [0, 0, 0], sizes = [2, 8, 8], strides = [1, 1, 1]} : vector<2x8x32xf32> to vector<2x8x8xf32>
    "tpu.trace_start"() <{level = 10 : i32, message = "btm,bmd->btd"}> : () -> ()
    %cst_83 = arith.constant dense<0.000000e+00> : vector<2x8x8xf32>
    %248 = tpu.matmul %246, %247, %cst_83 {dimension_numbers = #tpu.dot_dimension_numbers<[2], [1], [1], [2], [0, 0, 0, 1, 1, 2], [0], [0]>} : vector<2x8x8xf32>, vector<2x8x8xf32>, vector<2x8x8xf32> -> vector<2x8x8xf32>
    "tpu.trace_stop"() : () -> ()
    %249 = vector.shape_cast %248 : vector<2x8x8xf32> to vector<16x8xf32>
    %c0_84 = arith.constant 0 : index
    %c0_85 = arith.constant 0 : index
    %250 = vector.load %arg4[%c0_84, %c0_85] : memref<16x32xf32, #tpu.memory_space<vmem>>, vector<16x8xf32>
    tpu.vector_store %arg4[%c0_84, %c0_85], %249 {strides = array<i32>} : memref<16x32xf32, #tpu.memory_space<vmem>>, vector<16x8xf32>,
    %251 = vector.extract_strided_slice %229 {offsets = [0, 0, 8], sizes = [2, 8, 8], strides = [1, 1, 1]} : vector<2x8x32xf32> to vector<2x8x8xf32>
    %252 = vector.extract_strided_slice %230 {offsets = [0, 0, 8], sizes = [2, 8, 8], strides = [1, 1, 1]} : vector<2x8x32xf32> to vector<2x8x8xf32>
    "tpu.trace_start"() <{level = 10 : i32, message = "btd,bmd->btm"}> : () -> ()
    %cst_86 = arith.constant dense<0.000000e+00> : vector<2x8x8xf32>
    %253 = tpu.matmul %251, %252, %cst_86 {dimension_numbers = #tpu.dot_dimension_numbers<[2], [2], [1], [1], [0, 0, 0, 1, 1, 1], [0], [0]>} : vector<2x8x8xf32>, vector<2x8x8xf32>, vector<2x8x8xf32> -> vector<2x8x8xf32>
    "tpu.trace_stop"() : () -> ()
    %cst_87 = arith.constant 0.353553385 : f32
    %254 = vector.broadcast %cst_87 : f32 to vector<2x8x8xf32>
    %255 = arith.mulf %253, %254 : vector<2x8x8xf32>
    %cst_88 = arith.constant dense<0xFF800000> : vector<2x8xf32>
    %256 = vector.multi_reduction <maximumf>, %255, %cst_88 [2] : vector<2x8x8xf32> to vector<2x8xf32>
    %257 = vector.shape_cast %256 : vector<2x8xf32> to vector<2x8x1xf32>
    %258 = vector.broadcast %257 : vector<2x8x1xf32> to vector<2x8x8xf32>
    %259 = arith.subf %255, %258 : vector<2x8x8xf32>
    %260 = math.exp %259 : vector<2x8x8xf32>
    %cst_89 = arith.constant dense<0.000000e+00> : vector<2x8xf32>
    %261 = vector.multi_reduction <add>, %260, %cst_89 [2] : vector<2x8x8xf32> to vector<2x8xf32>
    %262 = vector.shape_cast %261 : vector<2x8xf32> to vector<2x8x1xf32>
    %263 = tpu.reciprocal %262 {approx = true} : vector<2x8x1xf32> -> vector<2x8x1xf32>
    %264 = vector.broadcast %263 : vector<2x8x1xf32> to vector<2x8x8xf32>
    %265 = arith.mulf %260, %264 : vector<2x8x8xf32>
    %266 = vector.extract_strided_slice %231 {offsets = [0, 0, 8], sizes = [2, 8, 8], strides = [1, 1, 1]} : vector<2x8x32xf32> to vector<2x8x8xf32>
    "tpu.trace_start"() <{level = 10 : i32, message = "btm,bmd->btd"}> : () -> ()
    %cst_90 = arith.constant dense<0.000000e+00> : vector<2x8x8xf32>
    %267 = tpu.matmul %265, %266, %cst_90 {dimension_numbers = #tpu.dot_dimension_numbers<[2], [1], [1], [2], [0, 0, 0, 1, 1, 2], [0], [0]>} : vector<2x8x8xf32>, vector<2x8x8xf32>, vector<2x8x8xf32> -> vector<2x8x8xf32>
    "tpu.trace_stop"() : () -> ()
    %268 = vector.shape_cast %267 : vector<2x8x8xf32> to vector<16x8xf32>
    %c0_91 = arith.constant 0 : index
    %c8_92 = arith.constant 8 : index
    %269 = vector.load %arg4[%c0_91, %c8_92] : memref<16x32xf32, #tpu.memory_space<vmem>>, vector<16x8xf32>
    tpu.vector_store %arg4[%c0_91, %c8_92], %268 {strides = array<i32>} : memref<16x32xf32, #tpu.memory_space<vmem>>, vector<16x8xf32>,
    %270 = vector.extract_strided_slice %229 {offsets = [0, 0, 16], sizes = [2, 8, 8], strides = [1, 1, 1]} : vector<2x8x32xf32> to vector<2x8x8xf32>
    %271 = vector.extract_strided_slice %230 {offsets = [0, 0, 16], sizes = [2, 8, 8], strides = [1, 1, 1]} : vector<2x8x32xf32> to vector<2x8x8xf32>
    "tpu.trace_start"() <{level = 10 : i32, message = "btd,bmd->btm"}> : () -> ()
    %cst_93 = arith.constant dense<0.000000e+00> : vector<2x8x8xf32>
    %272 = tpu.matmul %270, %271, %cst_93 {dimension_numbers = #tpu.dot_dimension_numbers<[2], [2], [1], [1], [0, 0, 0, 1, 1, 1], [0], [0]>} : vector<2x8x8xf32>, vector<2x8x8xf32>, vector<2x8x8xf32> -> vector<2x8x8xf32>
    "tpu.trace_stop"() : () -> ()
    %cst_94 = arith.constant 0.353553385 : f32
    %273 = vector.broadcast %cst_94 : f32 to vector<2x8x8xf32>
    %274 = arith.mulf %272, %273 : vector<2x8x8xf32>
    %cst_95 = arith.constant dense<0xFF800000> : vector<2x8xf32>
    %275 = vector.multi_reduction <maximumf>, %274, %cst_95 [2] : vector<2x8x8xf32> to vector<2x8xf32>
    %276 = vector.shape_cast %275 : vector<2x8xf32> to vector<2x8x1xf32>
    %277 = vector.broadcast %276 : vector<2x8x1xf32> to vector<2x8x8xf32>
    %278 = arith.subf %274, %277 : vector<2x8x8xf32>
    %279 = math.exp %278 : vector<2x8x8xf32>
    %cst_96 = arith.constant dense<0.000000e+00> : vector<2x8xf32>
    %280 = vector.multi_reduction <add>, %279, %cst_96 [2] : vector<2x8x8xf32> to vector<2x8xf32>
    %281 = vector.shape_cast %280 : vector<2x8xf32> to vector<2x8x1xf32>
    %282 = tpu.reciprocal %281 {approx = true} : vector<2x8x1xf32> -> vector<2x8x1xf32>
    %283 = vector.broadcast %282 : vector<2x8x1xf32> to vector<2x8x8xf32>
    %284 = arith.mulf %279, %283 : vector<2x8x8xf32>
    %285 = vector.extract_strided_slice %231 {offsets = [0, 0, 16], sizes = [2, 8, 8], strides = [1, 1, 1]} : vector<2x8x32xf32> to vector<2x8x8xf32>
    "tpu.trace_start"() <{level = 10 : i32, message = "btm,bmd->btd"}> : () -> ()
    %cst_97 = arith.constant dense<0.000000e+00> : vector<2x8x8xf32>
    %286 = tpu.matmul %284, %285, %cst_97 {dimension_numbers = #tpu.dot_dimension_numbers<[2], [1], [1], [2], [0, 0, 0, 1, 1, 2], [0], [0]>} : vector<2x8x8xf32>, vector<2x8x8xf32>, vector<2x8x8xf32> -> vector<2x8x8xf32>
    "tpu.trace_stop"() : () -> ()
    %287 = vector.shape_cast %286 : vector<2x8x8xf32> to vector<16x8xf32>
    %c0_98 = arith.constant 0 : index
    %c16_99 = arith.constant 16 : index
    %288 = vector.load %arg4[%c0_98, %c16_99] : memref<16x32xf32, #tpu.memory_space<vmem>>, vector<16x8xf32>
    tpu.vector_store %arg4[%c0_98, %c16_99], %287 {strides = array<i32>} : memref<16x32xf32, #tpu.memory_space<vmem>>, vector<16x8xf32>,
    %289 = vector.extract_strided_slice %229 {offsets = [0, 0, 24], sizes = [2, 8, 8], strides = [1, 1, 1]} : vector<2x8x32xf32> to vector<2x8x8xf32>
    %290 = vector.extract_strided_slice %230 {offsets = [0, 0, 24], sizes = [2, 8, 8], strides = [1, 1, 1]} : vector<2x8x32xf32> to vector<2x8x8xf32>
    "tpu.trace_start"() <{level = 10 : i32, message = "btd,bmd->btm"}> : () -> ()
    %cst_100 = arith.constant dense<0.000000e+00> : vector<2x8x8xf32>
    %291 = tpu.matmul %289, %290, %cst_100 {dimension_numbers = #tpu.dot_dimension_numbers<[2], [2], [1], [1], [0, 0, 0, 1, 1, 1], [0], [0]>} : vector<2x8x8xf32>, vector<2x8x8xf32>, vector<2x8x8xf32> -> vector<2x8x8xf32>
    "tpu.trace_stop"() : () -> ()
    %cst_101 = arith.constant 0.353553385 : f32
    %292 = vector.broadcast %cst_101 : f32 to vector<2x8x8xf32>
    %293 = arith.mulf %291, %292 : vector<2x8x8xf32>
    %cst_102 = arith.constant dense<0xFF800000> : vector<2x8xf32>
    %294 = vector.multi_reduction <maximumf>, %293, %cst_102 [2] : vector<2x8x8xf32> to vector<2x8xf32>
    %295 = vector.shape_cast %294 : vector<2x8xf32> to vector<2x8x1xf32>
    %296 = vector.broadcast %295 : vector<2x8x1xf32> to vector<2x8x8xf32>
    %297 = arith.subf %293, %296 : vector<2x8x8xf32>
    %298 = math.exp %297 : vector<2x8x8xf32>
    %cst_103 = arith.constant dense<0.000000e+00> : vector<2x8xf32>
    %299 = vector.multi_reduction <add>, %298, %cst_103 [2] : vector<2x8x8xf32> to vector<2x8xf32>
    %300 = vector.shape_cast %299 : vector<2x8xf32> to vector<2x8x1xf32>
    %301 = tpu.reciprocal %300 {approx = true} : vector<2x8x1xf32> -> vector<2x8x1xf32>
    %302 = vector.broadcast %301 : vector<2x8x1xf32> to vector<2x8x8xf32>
    %303 = arith.mulf %298, %302 : vector<2x8x8xf32>
    %304 = vector.extract_strided_slice %231 {offsets = [0, 0, 24], sizes = [2, 8, 8], strides = [1, 1, 1]} : vector<2x8x32xf32> to vector<2x8x8xf32>
    "tpu.trace_start"() <{level = 10 : i32, message = "btm,bmd->btd"}> : () -> ()
    %cst_104 = arith.constant dense<0.000000e+00> : vector<2x8x8xf32>
    %305 = tpu.matmul %303, %304, %cst_104 {dimension_numbers = #tpu.dot_dimension_numbers<[2], [1], [1], [2], [0, 0, 0, 1, 1, 2], [0], [0]>} : vector<2x8x8xf32>, vector<2x8x8xf32>, vector<2x8x8xf32> -> vector<2x8x8xf32>
    "tpu.trace_stop"() : () -> ()
    %306 = vector.shape_cast %305 : vector<2x8x8xf32> to vector<16x8xf32>
    %c0_105 = arith.constant 0 : index
    %c24_106 = arith.constant 24 : index
    %307 = vector.load %arg4[%c0_105, %c24_106] : memref<16x32xf32, #tpu.memory_space<vmem>>, vector<16x8xf32>
    tpu.vector_store %arg4[%c0_105, %c24_106], %306 {strides = array<i32>} : memref<16x32xf32, #tpu.memory_space<vmem>>, vector<16x8xf32>,
    %c0_107 = arith.constant 0 : index
    %c0_108 = arith.constant 0 : index
    %308 = vector.load %arg4[%c0_107, %c0_108] : memref<16x32xf32, #tpu.memory_space<vmem>>, vector<16x32xf32>
    %c192 = arith.constant 192 : index
    %c0_109 = arith.constant 0 : index
    %309 = vector.load %arg1[%c192, %c0_109] : memref<496x128xf32, #tpu.memory_space<vmem>>, vector<16x64xf32>
    %c208 = arith.constant 208 : index
    %c0_110 = arith.constant 0 : index
    %310 = vector.load %arg1[%c208, %c0_110] : memref<496x128xf32, #tpu.memory_space<vmem>>, vector<1x32xf32>
    %c216 = arith.constant 216 : index
    %c0_111 = arith.constant 0 : index
    %311 = vector.load %arg1[%c216, %c0_111] : memref<496x128xf32, #tpu.memory_space<vmem>>, vector<1x32xf32>
    %cst_112 = arith.constant dense<0.000000e+00> : vector<16xf32>
    %312 = vector.multi_reduction <add>, %308, %cst_112 [1] : vector<16x32xf32> to vector<16xf32>
    %313 = vector.shape_cast %312 : vector<16xf32> to vector<16x1xf32>
    %cst_113 = arith.constant 3.200000e+01 : f32
    %314 = vector.broadcast %cst_113 : f32 to vector<16x1xf32>
    %315 = arith.divf %313, %314 : vector<16x1xf32>
    %316 = vector.broadcast %315 : vector<16x1xf32> to vector<16x32xf32>
    %317 = arith.subf %308, %316 : vector<16x32xf32>
    %318 = arith.mulf %317, %317 : vector<16x32xf32>
    %cst_114 = arith.constant dense<0.000000e+00> : vector<16xf32>
    %319 = vector.multi_reduction <add>, %318, %cst_114 [1] : vector<16x32xf32> to vector<16xf32>
    %320 = vector.shape_cast %319 : vector<16xf32> to vector<16x1xf32>
    %cst_115 = arith.constant 3.200000e+01 : f32
    %321 = vector.broadcast %cst_115 : f32 to vector<16x1xf32>
    %322 = arith.divf %320, %321 : vector<16x1xf32>
    %323 = vector.broadcast %315 : vector<16x1xf32> to vector<16x32xf32>
    %324 = arith.subf %308, %323 : vector<16x32xf32>
    %cst_116 = arith.constant 9.99999974E-6 : f32
    %325 = vector.broadcast %cst_116 : f32 to vector<16x1xf32>
    %326 = arith.addf %322, %325 : vector<16x1xf32>
    %327 = math.rsqrt %326 : vector<16x1xf32>
    %328 = vector.broadcast %327 : vector<16x1xf32> to vector<16x32xf32>
    %329 = arith.mulf %324, %328 : vector<16x32xf32>
    %330 = vector.broadcast %310 : vector<1x32xf32> to vector<16x32xf32>
    %331 = arith.mulf %329, %330 : vector<16x32xf32>
    %332 = vector.broadcast %311 : vector<1x32xf32> to vector<16x32xf32>
    %333 = arith.addf %331, %332 : vector<16x32xf32>
    %334 = vector.extract_strided_slice %309 {offsets = [0, 0], sizes = [16, 32], strides = [1, 1]} : vector<16x64xf32> to vector<16x32xf32>
    %cst_117 = arith.constant 1.000000e+00 : f32
    %335 = vector.broadcast %cst_117 : f32 to vector<16x32xf32>
    %336 = arith.addf %335, %334 : vector<16x32xf32>
    %337 = arith.mulf %333, %336 : vector<16x32xf32>
    %338 = vector.extract_strided_slice %309 {offsets = [0, 32], sizes = [16, 32], strides = [1, 1]} : vector<16x64xf32> to vector<16x32xf32>
    %339 = arith.addf %337, %338 : vector<16x32xf32>
    %340 = arith.negf %339 : vector<16x32xf32>
    %341 = math.exp %340 : vector<16x32xf32>
    %cst_118 = arith.constant 1.000000e+00 : f32
    %342 = vector.broadcast %cst_118 : f32 to vector<16x32xf32>
    %343 = arith.addf %342, %341 : vector<16x32xf32>
    %344 = arith.divf %342, %343 : vector<16x32xf32>
    %345 = arith.mulf %339, %344 : vector<16x32xf32>
    %346 = arith.truncf %345 : vector<16x32xf32> to vector<16x32xbf16>
    %c160_119 = arith.constant 160 : index
    %c0_120 = arith.constant 0 : index
    %347 = vector.load %arg2[%c160_119, %c0_120] : memref<592x128xbf16, #tpu.memory_space<vmem>>, vector<32x32xbf16>
    %cst_121 = arith.constant dense<0.000000e+00> : vector<16x32xf32>
    %348 = tpu.matmul %346, %347, %cst_121 {dimension_numbers = #tpu.dot_dimension_numbers<[1], [0], [0], [1], [0, 0, 1, 1], [], []>} : vector<16x32xbf16>, vector<32x32xbf16>, vector<16x32xf32> -> vector<16x32xf32>
    %c224 = arith.constant 224 : index
    %c0_122 = arith.constant 0 : index
    %349 = vector.load %arg1[%c224, %c0_122] : memref<496x128xf32, #tpu.memory_space<vmem>>, vector<1x32xf32>
    %350 = vector.broadcast %349 : vector<1x32xf32> to vector<16x32xf32>
    %351 = arith.addf %348, %350 : vector<16x32xf32>
    %352 = arith.addf %166, %351 : vector<16x32xf32>
    %353 = arith.truncf %352 : vector<16x32xf32> to vector<16x32xbf16>
    %c192_123 = arith.constant 192 : index
    %c0_124 = arith.constant 0 : index
    %354 = vector.load %arg2[%c192_123, %c0_124] : memref<592x128xbf16, #tpu.memory_space<vmem>>, vector<32x64xbf16>
    %cst_125 = arith.constant dense<0.000000e+00> : vector<16x64xf32>
    %355 = tpu.matmul %353, %354, %cst_125 {dimension_numbers = #tpu.dot_dimension_numbers<[1], [0], [0], [1], [0, 0, 1, 1], [], []>} : vector<16x32xbf16>, vector<32x64xbf16>, vector<16x64xf32> -> vector<16x64xf32>
    %c232 = arith.constant 232 : index
    %c0_126 = arith.constant 0 : index
    %356 = vector.load %arg1[%c232, %c0_126] : memref<496x128xf32, #tpu.memory_space<vmem>>, vector<1x64xf32>
    %357 = vector.broadcast %356 : vector<1x64xf32> to vector<16x64xf32>
    %358 = arith.addf %355, %357 : vector<16x64xf32>
    %cst_127 = arith.constant 5.000000e-01 : f32
    %359 = vector.broadcast %cst_127 : f32 to vector<16x64xf32>
    %360 = arith.mulf %359, %358 : vector<16x64xf32>
    %cst_128 = arith.constant 4.471500e-02 : f32
    %361 = vector.broadcast %cst_128 : f32 to vector<16x64xf32>
    %362 = arith.mulf %361, %358 : vector<16x64xf32>
    %363 = arith.mulf %362, %358 : vector<16x64xf32>
    %364 = arith.mulf %363, %358 : vector<16x64xf32>
    %365 = arith.addf %358, %364 : vector<16x64xf32>
    %cst_129 = arith.constant 0.797884583 : f32
    %366 = vector.broadcast %cst_129 : f32 to vector<16x64xf32>
    %367 = arith.mulf %366, %365 : vector<16x64xf32>
    %368 = math.tanh %367 : vector<16x64xf32>
    %cst_130 = arith.constant 1.000000e+00 : f32
    %369 = vector.broadcast %cst_130 : f32 to vector<16x64xf32>
    %370 = arith.addf %369, %368 : vector<16x64xf32>
    %371 = arith.mulf %360, %370 : vector<16x64xf32>
    %372 = arith.truncf %371 : vector<16x64xf32> to vector<16x64xbf16>
    %c224_131 = arith.constant 224 : index
    %c0_132 = arith.constant 0 : index
    %373 = vector.load %arg2[%c224_131, %c0_132] : memref<592x128xbf16, #tpu.memory_space<vmem>>, vector<64x32xbf16>
    %cst_133 = arith.constant dense<0.000000e+00> : vector<16x32xf32>
    %374 = tpu.matmul %372, %373, %cst_133 {dimension_numbers = #tpu.dot_dimension_numbers<[1], [0], [0], [1], [0, 0, 1, 1], [], []>} : vector<16x64xbf16>, vector<64x32xbf16>, vector<16x32xf32> -> vector<16x32xf32>
    %c240 = arith.constant 240 : index
    %c0_134 = arith.constant 0 : index
    %375 = vector.load %arg1[%c240, %c0_134] : memref<496x128xf32, #tpu.memory_space<vmem>>, vector<1x32xf32>
    %376 = vector.broadcast %375 : vector<1x32xf32> to vector<16x32xf32>
    %377 = arith.addf %374, %376 : vector<16x32xf32>
    %c248 = arith.constant 248 : index
    %c0_135 = arith.constant 0 : index
    %378 = vector.load %arg1[%c248, %c0_135] : memref<496x128xf32, #tpu.memory_space<vmem>>, vector<16x64xf32>
    %c264 = arith.constant 264 : index
    %c0_136 = arith.constant 0 : index
    %379 = vector.load %arg1[%c264, %c0_136] : memref<496x128xf32, #tpu.memory_space<vmem>>, vector<1x32xf32>
    %c272 = arith.constant 272 : index
    %c0_137 = arith.constant 0 : index
    %380 = vector.load %arg1[%c272, %c0_137] : memref<496x128xf32, #tpu.memory_space<vmem>>, vector<1x32xf32>
    %cst_138 = arith.constant dense<0.000000e+00> : vector<16xf32>
    %381 = vector.multi_reduction <add>, %377, %cst_138 [1] : vector<16x32xf32> to vector<16xf32>
    %382 = vector.shape_cast %381 : vector<16xf32> to vector<16x1xf32>
    %cst_139 = arith.constant 3.200000e+01 : f32
    %383 = vector.broadcast %cst_139 : f32 to vector<16x1xf32>
    %384 = arith.divf %382, %383 : vector<16x1xf32>
    %385 = vector.broadcast %384 : vector<16x1xf32> to vector<16x32xf32>
    %386 = arith.subf %377, %385 : vector<16x32xf32>
    %387 = arith.mulf %386, %386 : vector<16x32xf32>
    %cst_140 = arith.constant dense<0.000000e+00> : vector<16xf32>
    %388 = vector.multi_reduction <add>, %387, %cst_140 [1] : vector<16x32xf32> to vector<16xf32>
    %389 = vector.shape_cast %388 : vector<16xf32> to vector<16x1xf32>
    %cst_141 = arith.constant 3.200000e+01 : f32
    %390 = vector.broadcast %cst_141 : f32 to vector<16x1xf32>
    %391 = arith.divf %389, %390 : vector<16x1xf32>
    %392 = vector.broadcast %384 : vector<16x1xf32> to vector<16x32xf32>
    %393 = arith.subf %377, %392 : vector<16x32xf32>
    %cst_142 = arith.constant 9.99999974E-6 : f32
    %394 = vector.broadcast %cst_142 : f32 to vector<16x1xf32>
    %395 = arith.addf %391, %394 : vector<16x1xf32>
    %396 = math.rsqrt %395 : vector<16x1xf32>
    %397 = vector.broadcast %396 : vector<16x1xf32> to vector<16x32xf32>
    %398 = arith.mulf %393, %397 : vector<16x32xf32>
    %399 = vector.broadcast %379 : vector<1x32xf32> to vector<16x32xf32>
    %400 = arith.mulf %398, %399 : vector<16x32xf32>
    %401 = vector.broadcast %380 : vector<1x32xf32> to vector<16x32xf32>
    %402 = arith.addf %400, %401 : vector<16x32xf32>
    %403 = vector.extract_strided_slice %378 {offsets = [0, 0], sizes = [16, 32], strides = [1, 1]} : vector<16x64xf32> to vector<16x32xf32>
    %cst_143 = arith.constant 1.000000e+00 : f32
    %404 = vector.broadcast %cst_143 : f32 to vector<16x32xf32>
    %405 = arith.addf %404, %403 : vector<16x32xf32>
    %406 = arith.mulf %402, %405 : vector<16x32xf32>
    %407 = vector.extract_strided_slice %378 {offsets = [0, 32], sizes = [16, 32], strides = [1, 1]} : vector<16x64xf32> to vector<16x32xf32>
    %408 = arith.addf %406, %407 : vector<16x32xf32>
    %409 = arith.negf %408 : vector<16x32xf32>
    %410 = math.exp %409 : vector<16x32xf32>
    %cst_144 = arith.constant 1.000000e+00 : f32
    %411 = vector.broadcast %cst_144 : f32 to vector<16x32xf32>
    %412 = arith.addf %411, %410 : vector<16x32xf32>
    %413 = arith.divf %411, %412 : vector<16x32xf32>
    %414 = arith.mulf %408, %413 : vector<16x32xf32>
    %415 = arith.truncf %414 : vector<16x32xf32> to vector<16x32xbf16>
    %c288 = arith.constant 288 : index
    %c0_145 = arith.constant 0 : index
    %416 = vector.load %arg2[%c288, %c0_145] : memref<592x128xbf16, #tpu.memory_space<vmem>>, vector<32x32xbf16>
    %cst_146 = arith.constant dense<0.000000e+00> : vector<16x32xf32>
    %417 = tpu.matmul %415, %416, %cst_146 {dimension_numbers = #tpu.dot_dimension_numbers<[1], [0], [0], [1], [0, 0, 1, 1], [], []>} : vector<16x32xbf16>, vector<32x32xbf16>, vector<16x32xf32> -> vector<16x32xf32>
    %c280 = arith.constant 280 : index
    %c0_147 = arith.constant 0 : index
    %418 = vector.load %arg1[%c280, %c0_147] : memref<496x128xf32, #tpu.memory_space<vmem>>, vector<1x32xf32>
    %419 = vector.broadcast %418 : vector<1x32xf32> to vector<16x32xf32>
    %420 = arith.addf %417, %419 : vector<16x32xf32>
    %421 = arith.addf %352, %420 : vector<16x32xf32>
    %c48_148 = arith.constant 48 : index
    %c0_149 = arith.constant 0 : index
    %422 = vector.load %arg1[%c48_148, %c0_149] : memref<496x128xf32, #tpu.memory_space<vmem>>, vector<16x32xf32>
    %423 = arith.addf %421, %422 : vector<16x32xf32>
    %c288_150 = arith.constant 288 : index
    %c0_151 = arith.constant 0 : index
    %424 = vector.load %arg1[%c288_150, %c0_151] : memref<496x128xf32, #tpu.memory_space<vmem>>, vector<1x32xf32>
    %c296 = arith.constant 296 : index
    %c0_152 = arith.constant 0 : index
    %425 = vector.load %arg1[%c296, %c0_152] : memref<496x128xf32, #tpu.memory_space<vmem>>, vector<1x32xf32>
    %cst_153 = arith.constant dense<0.000000e+00> : vector<16xf32>
    %426 = vector.multi_reduction <add>, %423, %cst_153 [1] : vector<16x32xf32> to vector<16xf32>
    %427 = vector.shape_cast %426 : vector<16xf32> to vector<16x1xf32>
    %cst_154 = arith.constant 3.200000e+01 : f32
    %428 = vector.broadcast %cst_154 : f32 to vector<16x1xf32>
    %429 = arith.divf %427, %428 : vector<16x1xf32>
    %430 = vector.broadcast %429 : vector<16x1xf32> to vector<16x32xf32>
    %431 = arith.subf %423, %430 : vector<16x32xf32>
    %432 = arith.mulf %431, %431 : vector<16x32xf32>
    %cst_155 = arith.constant dense<0.000000e+00> : vector<16xf32>
    %433 = vector.multi_reduction <add>, %432, %cst_155 [1] : vector<16x32xf32> to vector<16xf32>
    %434 = vector.shape_cast %433 : vector<16xf32> to vector<16x1xf32>
    %cst_156 = arith.constant 3.200000e+01 : f32
    %435 = vector.broadcast %cst_156 : f32 to vector<16x1xf32>
    %436 = arith.divf %434, %435 : vector<16x1xf32>
    %437 = vector.broadcast %429 : vector<16x1xf32> to vector<16x32xf32>
    %438 = arith.subf %423, %437 : vector<16x32xf32>
    %cst_157 = arith.constant 9.99999974E-6 : f32
    %439 = vector.broadcast %cst_157 : f32 to vector<16x1xf32>
    %440 = arith.addf %436, %439 : vector<16x1xf32>
    %441 = math.rsqrt %440 : vector<16x1xf32>
    %442 = vector.broadcast %441 : vector<16x1xf32> to vector<16x32xf32>
    %443 = arith.mulf %438, %442 : vector<16x32xf32>
    %444 = vector.broadcast %424 : vector<1x32xf32> to vector<16x32xf32>
    %445 = arith.mulf %443, %444 : vector<16x32xf32>
    %446 = vector.broadcast %425 : vector<1x32xf32> to vector<16x32xf32>
    %447 = arith.addf %445, %446 : vector<16x32xf32>
    %448 = arith.truncf %447 : vector<16x32xf32> to vector<16x32xbf16>
    %c320 = arith.constant 320 : index
    %c0_158 = arith.constant 0 : index
    %449 = vector.load %arg2[%c320, %c0_158] : memref<592x128xbf16, #tpu.memory_space<vmem>>, vector<32x96xbf16>
    %cst_159 = arith.constant dense<0.000000e+00> : vector<16x96xf32>
    %450 = tpu.matmul %448, %449, %cst_159 {dimension_numbers = #tpu.dot_dimension_numbers<[1], [0], [0], [1], [0, 0, 1, 1], [], []>} : vector<16x32xbf16>, vector<32x96xbf16>, vector<16x96xf32> -> vector<16x96xf32>
    %c304 = arith.constant 304 : index
    %c0_160 = arith.constant 0 : index
    %451 = vector.load %arg1[%c304, %c0_160] : memref<496x128xf32, #tpu.memory_space<vmem>>, vector<1x96xf32>
    %452 = vector.broadcast %451 : vector<1x96xf32> to vector<16x96xf32>
    %453 = arith.addf %450, %452 : vector<16x96xf32>
    %454 = vector.extract_strided_slice %453 {offsets = [0, 0], sizes = [16, 32], strides = [1, 1]} : vector<16x96xf32> to vector<16x32xf32>
    %455 = vector.extract_strided_slice %453 {offsets = [0, 32], sizes = [16, 32], strides = [1, 1]} : vector<16x96xf32> to vector<16x32xf32>
    %456 = vector.extract_strided_slice %453 {offsets = [0, 64], sizes = [16, 32], strides = [1, 1]} : vector<16x96xf32> to vector<16x32xf32>
    %457 = vector.shape_cast %454 : vector<16x32xf32> to vector<2x8x32xf32>
    %458 = vector.shape_cast %455 : vector<16x32xf32> to vector<2x8x32xf32>
    %459 = vector.shape_cast %456 : vector<16x32xf32> to vector<2x8x32xf32>
    %460 = vector.extract_strided_slice %457 {offsets = [0, 0, 0], sizes = [2, 8, 8], strides = [1, 1, 1]} : vector<2x8x32xf32> to vector<2x8x8xf32>
    %461 = vector.extract_strided_slice %458 {offsets = [0, 0, 0], sizes = [2, 8, 8], strides = [1, 1, 1]} : vector<2x8x32xf32> to vector<2x8x8xf32>
    "tpu.trace_start"() <{level = 10 : i32, message = "btd,bmd->btm"}> : () -> ()
    %cst_161 = arith.constant dense<0.000000e+00> : vector<2x8x8xf32>
    %462 = tpu.matmul %460, %461, %cst_161 {dimension_numbers = #tpu.dot_dimension_numbers<[2], [2], [1], [1], [0, 0, 0, 1, 1, 1], [0], [0]>} : vector<2x8x8xf32>, vector<2x8x8xf32>, vector<2x8x8xf32> -> vector<2x8x8xf32>
    "tpu.trace_stop"() : () -> ()
    %cst_162 = arith.constant 0.353553385 : f32
    %463 = vector.broadcast %cst_162 : f32 to vector<2x8x8xf32>
    %464 = arith.mulf %462, %463 : vector<2x8x8xf32>
    %cst_163 = arith.constant dense<0xFF800000> : vector<2x8xf32>
    %465 = vector.multi_reduction <maximumf>, %464, %cst_163 [2] : vector<2x8x8xf32> to vector<2x8xf32>
    %466 = vector.shape_cast %465 : vector<2x8xf32> to vector<2x8x1xf32>
    %467 = vector.broadcast %466 : vector<2x8x1xf32> to vector<2x8x8xf32>
    %468 = arith.subf %464, %467 : vector<2x8x8xf32>
    %469 = math.exp %468 : vector<2x8x8xf32>
    %cst_164 = arith.constant dense<0.000000e+00> : vector<2x8xf32>
    %470 = vector.multi_reduction <add>, %469, %cst_164 [2] : vector<2x8x8xf32> to vector<2x8xf32>
    %471 = vector.shape_cast %470 : vector<2x8xf32> to vector<2x8x1xf32>
    %472 = tpu.reciprocal %471 {approx = true} : vector<2x8x1xf32> -> vector<2x8x1xf32>
    %473 = vector.broadcast %472 : vector<2x8x1xf32> to vector<2x8x8xf32>
    %474 = arith.mulf %469, %473 : vector<2x8x8xf32>
    %475 = vector.extract_strided_slice %459 {offsets = [0, 0, 0], sizes = [2, 8, 8], strides = [1, 1, 1]} : vector<2x8x32xf32> to vector<2x8x8xf32>
    "tpu.trace_start"() <{level = 10 : i32, message = "btm,bmd->btd"}> : () -> ()
    %cst_165 = arith.constant dense<0.000000e+00> : vector<2x8x8xf32>
    %476 = tpu.matmul %474, %475, %cst_165 {dimension_numbers = #tpu.dot_dimension_numbers<[2], [1], [1], [2], [0, 0, 0, 1, 1, 2], [0], [0]>} : vector<2x8x8xf32>, vector<2x8x8xf32>, vector<2x8x8xf32> -> vector<2x8x8xf32>
    "tpu.trace_stop"() : () -> ()
    %477 = vector.shape_cast %476 : vector<2x8x8xf32> to vector<16x8xf32>
    %c0_166 = arith.constant 0 : index
    %c0_167 = arith.constant 0 : index
    %478 = vector.load %arg4[%c0_166, %c0_167] : memref<16x32xf32, #tpu.memory_space<vmem>>, vector<16x8xf32>
    tpu.vector_store %arg4[%c0_166, %c0_167], %477 {strides = array<i32>} : memref<16x32xf32, #tpu.memory_space<vmem>>, vector<16x8xf32>,
    %479 = vector.extract_strided_slice %457 {offsets = [0, 0, 8], sizes = [2, 8, 8], strides = [1, 1, 1]} : vector<2x8x32xf32> to vector<2x8x8xf32>
    %480 = vector.extract_strided_slice %458 {offsets = [0, 0, 8], sizes = [2, 8, 8], strides = [1, 1, 1]} : vector<2x8x32xf32> to vector<2x8x8xf32>
    "tpu.trace_start"() <{level = 10 : i32, message = "btd,bmd->btm"}> : () -> ()
    %cst_168 = arith.constant dense<0.000000e+00> : vector<2x8x8xf32>
    %481 = tpu.matmul %479, %480, %cst_168 {dimension_numbers = #tpu.dot_dimension_numbers<[2], [2], [1], [1], [0, 0, 0, 1, 1, 1], [0], [0]>} : vector<2x8x8xf32>, vector<2x8x8xf32>, vector<2x8x8xf32> -> vector<2x8x8xf32>
    "tpu.trace_stop"() : () -> ()
    %cst_169 = arith.constant 0.353553385 : f32
    %482 = vector.broadcast %cst_169 : f32 to vector<2x8x8xf32>
    %483 = arith.mulf %481, %482 : vector<2x8x8xf32>
    %cst_170 = arith.constant dense<0xFF800000> : vector<2x8xf32>
    %484 = vector.multi_reduction <maximumf>, %483, %cst_170 [2] : vector<2x8x8xf32> to vector<2x8xf32>
    %485 = vector.shape_cast %484 : vector<2x8xf32> to vector<2x8x1xf32>
    %486 = vector.broadcast %485 : vector<2x8x1xf32> to vector<2x8x8xf32>
    %487 = arith.subf %483, %486 : vector<2x8x8xf32>
    %488 = math.exp %487 : vector<2x8x8xf32>
    %cst_171 = arith.constant dense<0.000000e+00> : vector<2x8xf32>
    %489 = vector.multi_reduction <add>, %488, %cst_171 [2] : vector<2x8x8xf32> to vector<2x8xf32>
    %490 = vector.shape_cast %489 : vector<2x8xf32> to vector<2x8x1xf32>
    %491 = tpu.reciprocal %490 {approx = true} : vector<2x8x1xf32> -> vector<2x8x1xf32>
    %492 = vector.broadcast %491 : vector<2x8x1xf32> to vector<2x8x8xf32>
    %493 = arith.mulf %488, %492 : vector<2x8x8xf32>
    %494 = vector.extract_strided_slice %459 {offsets = [0, 0, 8], sizes = [2, 8, 8], strides = [1, 1, 1]} : vector<2x8x32xf32> to vector<2x8x8xf32>
    "tpu.trace_start"() <{level = 10 : i32, message = "btm,bmd->btd"}> : () -> ()
    %cst_172 = arith.constant dense<0.000000e+00> : vector<2x8x8xf32>
    %495 = tpu.matmul %493, %494, %cst_172 {dimension_numbers = #tpu.dot_dimension_numbers<[2], [1], [1], [2], [0, 0, 0, 1, 1, 2], [0], [0]>} : vector<2x8x8xf32>, vector<2x8x8xf32>, vector<2x8x8xf32> -> vector<2x8x8xf32>
    "tpu.trace_stop"() : () -> ()
    %496 = vector.shape_cast %495 : vector<2x8x8xf32> to vector<16x8xf32>
    %c0_173 = arith.constant 0 : index
    %c8_174 = arith.constant 8 : index
    %497 = vector.load %arg4[%c0_173, %c8_174] : memref<16x32xf32, #tpu.memory_space<vmem>>, vector<16x8xf32>
    tpu.vector_store %arg4[%c0_173, %c8_174], %496 {strides = array<i32>} : memref<16x32xf32, #tpu.memory_space<vmem>>, vector<16x8xf32>,
    %498 = vector.extract_strided_slice %457 {offsets = [0, 0, 16], sizes = [2, 8, 8], strides = [1, 1, 1]} : vector<2x8x32xf32> to vector<2x8x8xf32>
    %499 = vector.extract_strided_slice %458 {offsets = [0, 0, 16], sizes = [2, 8, 8], strides = [1, 1, 1]} : vector<2x8x32xf32> to vector<2x8x8xf32>
    "tpu.trace_start"() <{level = 10 : i32, message = "btd,bmd->btm"}> : () -> ()
    %cst_175 = arith.constant dense<0.000000e+00> : vector<2x8x8xf32>
    %500 = tpu.matmul %498, %499, %cst_175 {dimension_numbers = #tpu.dot_dimension_numbers<[2], [2], [1], [1], [0, 0, 0, 1, 1, 1], [0], [0]>} : vector<2x8x8xf32>, vector<2x8x8xf32>, vector<2x8x8xf32> -> vector<2x8x8xf32>
    "tpu.trace_stop"() : () -> ()
    %cst_176 = arith.constant 0.353553385 : f32
    %501 = vector.broadcast %cst_176 : f32 to vector<2x8x8xf32>
    %502 = arith.mulf %500, %501 : vector<2x8x8xf32>
    %cst_177 = arith.constant dense<0xFF800000> : vector<2x8xf32>
    %503 = vector.multi_reduction <maximumf>, %502, %cst_177 [2] : vector<2x8x8xf32> to vector<2x8xf32>
    %504 = vector.shape_cast %503 : vector<2x8xf32> to vector<2x8x1xf32>
    %505 = vector.broadcast %504 : vector<2x8x1xf32> to vector<2x8x8xf32>
    %506 = arith.subf %502, %505 : vector<2x8x8xf32>
    %507 = math.exp %506 : vector<2x8x8xf32>
    %cst_178 = arith.constant dense<0.000000e+00> : vector<2x8xf32>
    %508 = vector.multi_reduction <add>, %507, %cst_178 [2] : vector<2x8x8xf32> to vector<2x8xf32>
    %509 = vector.shape_cast %508 : vector<2x8xf32> to vector<2x8x1xf32>
    %510 = tpu.reciprocal %509 {approx = true} : vector<2x8x1xf32> -> vector<2x8x1xf32>
    %511 = vector.broadcast %510 : vector<2x8x1xf32> to vector<2x8x8xf32>
    %512 = arith.mulf %507, %511 : vector<2x8x8xf32>
    %513 = vector.extract_strided_slice %459 {offsets = [0, 0, 16], sizes = [2, 8, 8], strides = [1, 1, 1]} : vector<2x8x32xf32> to vector<2x8x8xf32>
    "tpu.trace_start"() <{level = 10 : i32, message = "btm,bmd->btd"}> : () -> ()
    %cst_179 = arith.constant dense<0.000000e+00> : vector<2x8x8xf32>
    %514 = tpu.matmul %512, %513, %cst_179 {dimension_numbers = #tpu.dot_dimension_numbers<[2], [1], [1], [2], [0, 0, 0, 1, 1, 2], [0], [0]>} : vector<2x8x8xf32>, vector<2x8x8xf32>, vector<2x8x8xf32> -> vector<2x8x8xf32>
    "tpu.trace_stop"() : () -> ()
    %515 = vector.shape_cast %514 : vector<2x8x8xf32> to vector<16x8xf32>
    %c0_180 = arith.constant 0 : index
    %c16_181 = arith.constant 16 : index
    %516 = vector.load %arg4[%c0_180, %c16_181] : memref<16x32xf32, #tpu.memory_space<vmem>>, vector<16x8xf32>
    tpu.vector_store %arg4[%c0_180, %c16_181], %515 {strides = array<i32>} : memref<16x32xf32, #tpu.memory_space<vmem>>, vector<16x8xf32>,
    %517 = vector.extract_strided_slice %457 {offsets = [0, 0, 24], sizes = [2, 8, 8], strides = [1, 1, 1]} : vector<2x8x32xf32> to vector<2x8x8xf32>
    %518 = vector.extract_strided_slice %458 {offsets = [0, 0, 24], sizes = [2, 8, 8], strides = [1, 1, 1]} : vector<2x8x32xf32> to vector<2x8x8xf32>
    "tpu.trace_start"() <{level = 10 : i32, message = "btd,bmd->btm"}> : () -> ()
    %cst_182 = arith.constant dense<0.000000e+00> : vector<2x8x8xf32>
    %519 = tpu.matmul %517, %518, %cst_182 {dimension_numbers = #tpu.dot_dimension_numbers<[2], [2], [1], [1], [0, 0, 0, 1, 1, 1], [0], [0]>} : vector<2x8x8xf32>, vector<2x8x8xf32>, vector<2x8x8xf32> -> vector<2x8x8xf32>
    "tpu.trace_stop"() : () -> ()
    %cst_183 = arith.constant 0.353553385 : f32
    %520 = vector.broadcast %cst_183 : f32 to vector<2x8x8xf32>
    %521 = arith.mulf %519, %520 : vector<2x8x8xf32>
    %cst_184 = arith.constant dense<0xFF800000> : vector<2x8xf32>
    %522 = vector.multi_reduction <maximumf>, %521, %cst_184 [2] : vector<2x8x8xf32> to vector<2x8xf32>
    %523 = vector.shape_cast %522 : vector<2x8xf32> to vector<2x8x1xf32>
    %524 = vector.broadcast %523 : vector<2x8x1xf32> to vector<2x8x8xf32>
    %525 = arith.subf %521, %524 : vector<2x8x8xf32>
    %526 = math.exp %525 : vector<2x8x8xf32>
    %cst_185 = arith.constant dense<0.000000e+00> : vector<2x8xf32>
    %527 = vector.multi_reduction <add>, %526, %cst_185 [2] : vector<2x8x8xf32> to vector<2x8xf32>
    %528 = vector.shape_cast %527 : vector<2x8xf32> to vector<2x8x1xf32>
    %529 = tpu.reciprocal %528 {approx = true} : vector<2x8x1xf32> -> vector<2x8x1xf32>
    %530 = vector.broadcast %529 : vector<2x8x1xf32> to vector<2x8x8xf32>
    %531 = arith.mulf %526, %530 : vector<2x8x8xf32>
    %532 = vector.extract_strided_slice %459 {offsets = [0, 0, 24], sizes = [2, 8, 8], strides = [1, 1, 1]} : vector<2x8x32xf32> to vector<2x8x8xf32>
    "tpu.trace_start"() <{level = 10 : i32, message = "btm,bmd->btd"}> : () -> ()
    %cst_186 = arith.constant dense<0.000000e+00> : vector<2x8x8xf32>
    %533 = tpu.matmul %531, %532, %cst_186 {dimension_numbers = #tpu.dot_dimension_numbers<[2], [1], [1], [2], [0, 0, 0, 1, 1, 2], [0], [0]>} : vector<2x8x8xf32>, vector<2x8x8xf32>, vector<2x8x8xf32> -> vector<2x8x8xf32>
    "tpu.trace_stop"() : () -> ()
    %534 = vector.shape_cast %533 : vector<2x8x8xf32> to vector<16x8xf32>
    %c0_187 = arith.constant 0 : index
    %c24_188 = arith.constant 24 : index
    %535 = vector.load %arg4[%c0_187, %c24_188] : memref<16x32xf32, #tpu.memory_space<vmem>>, vector<16x8xf32>
    tpu.vector_store %arg4[%c0_187, %c24_188], %534 {strides = array<i32>} : memref<16x32xf32, #tpu.memory_space<vmem>>, vector<16x8xf32>,
    %c0_189 = arith.constant 0 : index
    %c0_190 = arith.constant 0 : index
    %536 = vector.load %arg4[%c0_189, %c0_190] : memref<16x32xf32, #tpu.memory_space<vmem>>, vector<16x32xf32>
    %c312 = arith.constant 312 : index
    %c0_191 = arith.constant 0 : index
    %537 = vector.load %arg1[%c312, %c0_191] : memref<496x128xf32, #tpu.memory_space<vmem>>, vector<16x64xf32>
    %c328 = arith.constant 328 : index
    %c0_192 = arith.constant 0 : index
    %538 = vector.load %arg1[%c328, %c0_192] : memref<496x128xf32, #tpu.memory_space<vmem>>, vector<1x32xf32>
    %c336 = arith.constant 336 : index
    %c0_193 = arith.constant 0 : index
    %539 = vector.load %arg1[%c336, %c0_193] : memref<496x128xf32, #tpu.memory_space<vmem>>, vector<1x32xf32>
    %cst_194 = arith.constant dense<0.000000e+00> : vector<16xf32>
    %540 = vector.multi_reduction <add>, %536, %cst_194 [1] : vector<16x32xf32> to vector<16xf32>
    %541 = vector.shape_cast %540 : vector<16xf32> to vector<16x1xf32>
    %cst_195 = arith.constant 3.200000e+01 : f32
    %542 = vector.broadcast %cst_195 : f32 to vector<16x1xf32>
    %543 = arith.divf %541, %542 : vector<16x1xf32>
    %544 = vector.broadcast %543 : vector<16x1xf32> to vector<16x32xf32>
    %545 = arith.subf %536, %544 : vector<16x32xf32>
    %546 = arith.mulf %545, %545 : vector<16x32xf32>
    %cst_196 = arith.constant dense<0.000000e+00> : vector<16xf32>
    %547 = vector.multi_reduction <add>, %546, %cst_196 [1] : vector<16x32xf32> to vector<16xf32>
    %548 = vector.shape_cast %547 : vector<16xf32> to vector<16x1xf32>
    %cst_197 = arith.constant 3.200000e+01 : f32
    %549 = vector.broadcast %cst_197 : f32 to vector<16x1xf32>
    %550 = arith.divf %548, %549 : vector<16x1xf32>
    %551 = vector.broadcast %543 : vector<16x1xf32> to vector<16x32xf32>
    %552 = arith.subf %536, %551 : vector<16x32xf32>
    %cst_198 = arith.constant 9.99999974E-6 : f32
    %553 = vector.broadcast %cst_198 : f32 to vector<16x1xf32>
    %554 = arith.addf %550, %553 : vector<16x1xf32>
    %555 = math.rsqrt %554 : vector<16x1xf32>
    %556 = vector.broadcast %555 : vector<16x1xf32> to vector<16x32xf32>
    %557 = arith.mulf %552, %556 : vector<16x32xf32>
    %558 = vector.broadcast %538 : vector<1x32xf32> to vector<16x32xf32>
    %559 = arith.mulf %557, %558 : vector<16x32xf32>
    %560 = vector.broadcast %539 : vector<1x32xf32> to vector<16x32xf32>
    %561 = arith.addf %559, %560 : vector<16x32xf32>
    %562 = vector.extract_strided_slice %537 {offsets = [0, 0], sizes = [16, 32], strides = [1, 1]} : vector<16x64xf32> to vector<16x32xf32>
    %cst_199 = arith.constant 1.000000e+00 : f32
    %563 = vector.broadcast %cst_199 : f32 to vector<16x32xf32>
    %564 = arith.addf %563, %562 : vector<16x32xf32>
    %565 = arith.mulf %561, %564 : vector<16x32xf32>
    %566 = vector.extract_strided_slice %537 {offsets = [0, 32], sizes = [16, 32], strides = [1, 1]} : vector<16x64xf32> to vector<16x32xf32>
    %567 = arith.addf %565, %566 : vector<16x32xf32>
    %568 = arith.negf %567 : vector<16x32xf32>
    %569 = math.exp %568 : vector<16x32xf32>
    %cst_200 = arith.constant 1.000000e+00 : f32
    %570 = vector.broadcast %cst_200 : f32 to vector<16x32xf32>
    %571 = arith.addf %570, %569 : vector<16x32xf32>
    %572 = arith.divf %570, %571 : vector<16x32xf32>
    %573 = arith.mulf %567, %572 : vector<16x32xf32>
    %574 = arith.truncf %573 : vector<16x32xf32> to vector<16x32xbf16>
    %c352 = arith.constant 352 : index
    %c0_201 = arith.constant 0 : index
    %575 = vector.load %arg2[%c352, %c0_201] : memref<592x128xbf16, #tpu.memory_space<vmem>>, vector<32x32xbf16>
    %cst_202 = arith.constant dense<0.000000e+00> : vector<16x32xf32>
    %576 = tpu.matmul %574, %575, %cst_202 {dimension_numbers = #tpu.dot_dimension_numbers<[1], [0], [0], [1], [0, 0, 1, 1], [], []>} : vector<16x32xbf16>, vector<32x32xbf16>, vector<16x32xf32> -> vector<16x32xf32>
    %c344 = arith.constant 344 : index
    %c0_203 = arith.constant 0 : index
    %577 = vector.load %arg1[%c344, %c0_203] : memref<496x128xf32, #tpu.memory_space<vmem>>, vector<1x32xf32>
    %578 = vector.broadcast %577 : vector<1x32xf32> to vector<16x32xf32>
    %579 = arith.addf %576, %578 : vector<16x32xf32>
    %580 = arith.addf %423, %579 : vector<16x32xf32>
    %c352_204 = arith.constant 352 : index
    %c0_205 = arith.constant 0 : index
    %581 = vector.load %arg1[%c352_204, %c0_205] : memref<496x128xf32, #tpu.memory_space<vmem>>, vector<1x32xf32>
    %c360 = arith.constant 360 : index
    %c0_206 = arith.constant 0 : index
    %582 = vector.load %arg1[%c360, %c0_206] : memref<496x128xf32, #tpu.memory_space<vmem>>, vector<1x32xf32>
    %cst_207 = arith.constant dense<0.000000e+00> : vector<16xf32>
    %583 = vector.multi_reduction <add>, %580, %cst_207 [1] : vector<16x32xf32> to vector<16xf32>
    %584 = vector.shape_cast %583 : vector<16xf32> to vector<16x1xf32>
    %cst_208 = arith.constant 3.200000e+01 : f32
    %585 = vector.broadcast %cst_208 : f32 to vector<16x1xf32>
    %586 = arith.divf %584, %585 : vector<16x1xf32>
    %587 = vector.broadcast %586 : vector<16x1xf32> to vector<16x32xf32>
    %588 = arith.subf %580, %587 : vector<16x32xf32>
    %589 = arith.mulf %588, %588 : vector<16x32xf32>
    %cst_209 = arith.constant dense<0.000000e+00> : vector<16xf32>
    %590 = vector.multi_reduction <add>, %589, %cst_209 [1] : vector<16x32xf32> to vector<16xf32>
    %591 = vector.shape_cast %590 : vector<16xf32> to vector<16x1xf32>
    %cst_210 = arith.constant 3.200000e+01 : f32
    %592 = vector.broadcast %cst_210 : f32 to vector<16x1xf32>
    %593 = arith.divf %591, %592 : vector<16x1xf32>
    %594 = vector.broadcast %586 : vector<16x1xf32> to vector<16x32xf32>
    %595 = arith.subf %580, %594 : vector<16x32xf32>
    %cst_211 = arith.constant 9.99999974E-6 : f32
    %596 = vector.broadcast %cst_211 : f32 to vector<16x1xf32>
    %597 = arith.addf %593, %596 : vector<16x1xf32>
    %598 = math.rsqrt %597 : vector<16x1xf32>
    %599 = vector.broadcast %598 : vector<16x1xf32> to vector<16x32xf32>
    %600 = arith.mulf %595, %599 : vector<16x32xf32>
    %601 = vector.broadcast %581 : vector<1x32xf32> to vector<16x32xf32>
    %602 = arith.mulf %600, %601 : vector<16x32xf32>
    %603 = vector.broadcast %582 : vector<1x32xf32> to vector<16x32xf32>
    %604 = arith.addf %602, %603 : vector<16x32xf32>
    %c368 = arith.constant 368 : index
    %c0_212 = arith.constant 0 : index
    %605 = vector.load %arg1[%c368, %c0_212] : memref<496x128xf32, #tpu.memory_space<vmem>>, vector<1x16xf32>
    %c376 = arith.constant 376 : index
    %c0_213 = arith.constant 0 : index
    %606 = vector.load %arg1[%c376, %c0_213] : memref<496x128xf32, #tpu.memory_space<vmem>>, vector<1x16xf32>
    %cst_214 = arith.constant dense<0.000000e+00> : vector<16xf32>
    %607 = vector.multi_reduction <add>, %1, %cst_214 [1] : vector<16x16xf32> to vector<16xf32>
    %608 = vector.shape_cast %607 : vector<16xf32> to vector<16x1xf32>
    %cst_215 = arith.constant 1.600000e+01 : f32
    %609 = vector.broadcast %cst_215 : f32 to vector<16x1xf32>
    %610 = arith.divf %608, %609 : vector<16x1xf32>
    %611 = vector.broadcast %610 : vector<16x1xf32> to vector<16x16xf32>
    %612 = arith.subf %1, %611 : vector<16x16xf32>
    %613 = arith.mulf %612, %612 : vector<16x16xf32>
    %cst_216 = arith.constant dense<0.000000e+00> : vector<16xf32>
    %614 = vector.multi_reduction <add>, %613, %cst_216 [1] : vector<16x16xf32> to vector<16xf32>
    %615 = vector.shape_cast %614 : vector<16xf32> to vector<16x1xf32>
    %cst_217 = arith.constant 1.600000e+01 : f32
    %616 = vector.broadcast %cst_217 : f32 to vector<16x1xf32>
    %617 = arith.divf %615, %616 : vector<16x1xf32>
    %618 = vector.broadcast %610 : vector<16x1xf32> to vector<16x16xf32>
    %619 = arith.subf %1, %618 : vector<16x16xf32>
    %cst_218 = arith.constant 9.99999974E-6 : f32
    %620 = vector.broadcast %cst_218 : f32 to vector<16x1xf32>
    %621 = arith.addf %617, %620 : vector<16x1xf32>
    %622 = math.rsqrt %621 : vector<16x1xf32>
    %623 = vector.broadcast %622 : vector<16x1xf32> to vector<16x16xf32>
    %624 = arith.mulf %619, %623 : vector<16x16xf32>
    %625 = vector.broadcast %605 : vector<1x16xf32> to vector<16x16xf32>
    %626 = arith.mulf %624, %625 : vector<16x16xf32>
    %627 = vector.broadcast %606 : vector<1x16xf32> to vector<16x16xf32>
    %628 = arith.addf %626, %627 : vector<16x16xf32>
    %629 = arith.truncf %604 : vector<16x32xf32> to vector<16x32xbf16>
    %c384 = arith.constant 384 : index
    %c0_219 = arith.constant 0 : index
    %630 = vector.load %arg2[%c384, %c0_219] : memref<592x128xbf16, #tpu.memory_space<vmem>>, vector<32x32xbf16>
    %cst_220 = arith.constant dense<0.000000e+00> : vector<16x32xf32>
    %631 = tpu.matmul %629, %630, %cst_220 {dimension_numbers = #tpu.dot_dimension_numbers<[1], [0], [0], [1], [0, 0, 1, 1], [], []>} : vector<16x32xbf16>, vector<32x32xbf16>, vector<16x32xf32> -> vector<16x32xf32>
    %c384_221 = arith.constant 384 : index
    %c0_222 = arith.constant 0 : index
    %632 = vector.load %arg1[%c384_221, %c0_222] : memref<496x128xf32, #tpu.memory_space<vmem>>, vector<1x32xf32>
    %633 = vector.broadcast %632 : vector<1x32xf32> to vector<16x32xf32>
    %634 = arith.addf %631, %633 : vector<16x32xf32>
    %635 = arith.truncf %628 : vector<16x16xf32> to vector<16x16xbf16>
    %c416 = arith.constant 416 : index
    %c0_223 = arith.constant 0 : index
    %636 = vector.load %arg2[%c416, %c0_223] : memref<592x128xbf16, #tpu.memory_space<vmem>>, vector<16x64xbf16>
    %cst_224 = arith.constant dense<0.000000e+00> : vector<16x64xf32>
    %637 = tpu.matmul %635, %636, %cst_224 {dimension_numbers = #tpu.dot_dimension_numbers<[1], [0], [0], [1], [0, 0, 1, 1], [], []>} : vector<16x16xbf16>, vector<16x64xbf16>, vector<16x64xf32> -> vector<16x64xf32>
    %c392 = arith.constant 392 : index
    %c0_225 = arith.constant 0 : index
    %638 = vector.load %arg1[%c392, %c0_225] : memref<496x128xf32, #tpu.memory_space<vmem>>, vector<1x64xf32>
    %639 = vector.broadcast %638 : vector<1x64xf32> to vector<16x64xf32>
    %640 = arith.addf %637, %639 : vector<16x64xf32>
    %641 = vector.extract_strided_slice %640 {offsets = [0, 0], sizes = [16, 32], strides = [1, 1]} : vector<16x64xf32> to vector<16x32xf32>
    %642 = vector.extract_strided_slice %640 {offsets = [0, 32], sizes = [16, 32], strides = [1, 1]} : vector<16x64xf32> to vector<16x32xf32>
    %643 = vector.shape_cast %634 : vector<16x32xf32> to vector<2x8x32xf32>
    %644 = vector.shape_cast %641 : vector<16x32xf32> to vector<2x8x32xf32>
    %645 = vector.shape_cast %642 : vector<16x32xf32> to vector<2x8x32xf32>
    %646 = vector.extract_strided_slice %643 {offsets = [0, 0, 0], sizes = [2, 8, 8], strides = [1, 1, 1]} : vector<2x8x32xf32> to vector<2x8x8xf32>
    %647 = vector.extract_strided_slice %644 {offsets = [0, 0, 0], sizes = [2, 8, 8], strides = [1, 1, 1]} : vector<2x8x32xf32> to vector<2x8x8xf32>
    "tpu.trace_start"() <{level = 10 : i32, message = "btd,bmd->btm"}> : () -> ()
    %cst_226 = arith.constant dense<0.000000e+00> : vector<2x8x8xf32>
    %648 = tpu.matmul %646, %647, %cst_226 {dimension_numbers = #tpu.dot_dimension_numbers<[2], [2], [1], [1], [0, 0, 0, 1, 1, 1], [0], [0]>} : vector<2x8x8xf32>, vector<2x8x8xf32>, vector<2x8x8xf32> -> vector<2x8x8xf32>
    "tpu.trace_stop"() : () -> ()
    %cst_227 = arith.constant 0.353553385 : f32
    %649 = vector.broadcast %cst_227 : f32 to vector<2x8x8xf32>
    %650 = arith.mulf %648, %649 : vector<2x8x8xf32>
    %cst_228 = arith.constant dense<0xFF800000> : vector<2x8xf32>
    %651 = vector.multi_reduction <maximumf>, %650, %cst_228 [2] : vector<2x8x8xf32> to vector<2x8xf32>
    %652 = vector.shape_cast %651 : vector<2x8xf32> to vector<2x8x1xf32>
    %653 = vector.broadcast %652 : vector<2x8x1xf32> to vector<2x8x8xf32>
    %654 = arith.subf %650, %653 : vector<2x8x8xf32>
    %655 = math.exp %654 : vector<2x8x8xf32>
    %cst_229 = arith.constant dense<0.000000e+00> : vector<2x8xf32>
    %656 = vector.multi_reduction <add>, %655, %cst_229 [2] : vector<2x8x8xf32> to vector<2x8xf32>
    %657 = vector.shape_cast %656 : vector<2x8xf32> to vector<2x8x1xf32>
    %658 = tpu.reciprocal %657 {approx = true} : vector<2x8x1xf32> -> vector<2x8x1xf32>
    %659 = vector.broadcast %658 : vector<2x8x1xf32> to vector<2x8x8xf32>
    %660 = arith.mulf %655, %659 : vector<2x8x8xf32>
    %661 = vector.extract_strided_slice %645 {offsets = [0, 0, 0], sizes = [2, 8, 8], strides = [1, 1, 1]} : vector<2x8x32xf32> to vector<2x8x8xf32>
    "tpu.trace_start"() <{level = 10 : i32, message = "btm,bmd->btd"}> : () -> ()
    %cst_230 = arith.constant dense<0.000000e+00> : vector<2x8x8xf32>
    %662 = tpu.matmul %660, %661, %cst_230 {dimension_numbers = #tpu.dot_dimension_numbers<[2], [1], [1], [2], [0, 0, 0, 1, 1, 2], [0], [0]>} : vector<2x8x8xf32>, vector<2x8x8xf32>, vector<2x8x8xf32> -> vector<2x8x8xf32>
    "tpu.trace_stop"() : () -> ()
    %663 = vector.shape_cast %662 : vector<2x8x8xf32> to vector<16x8xf32>
    %c0_231 = arith.constant 0 : index
    %c0_232 = arith.constant 0 : index
    %664 = vector.load %arg4[%c0_231, %c0_232] : memref<16x32xf32, #tpu.memory_space<vmem>>, vector<16x8xf32>
    tpu.vector_store %arg4[%c0_231, %c0_232], %663 {strides = array<i32>} : memref<16x32xf32, #tpu.memory_space<vmem>>, vector<16x8xf32>,
    %665 = vector.extract_strided_slice %643 {offsets = [0, 0, 8], sizes = [2, 8, 8], strides = [1, 1, 1]} : vector<2x8x32xf32> to vector<2x8x8xf32>
    %666 = vector.extract_strided_slice %644 {offsets = [0, 0, 8], sizes = [2, 8, 8], strides = [1, 1, 1]} : vector<2x8x32xf32> to vector<2x8x8xf32>
    "tpu.trace_start"() <{level = 10 : i32, message = "btd,bmd->btm"}> : () -> ()
    %cst_233 = arith.constant dense<0.000000e+00> : vector<2x8x8xf32>
    %667 = tpu.matmul %665, %666, %cst_233 {dimension_numbers = #tpu.dot_dimension_numbers<[2], [2], [1], [1], [0, 0, 0, 1, 1, 1], [0], [0]>} : vector<2x8x8xf32>, vector<2x8x8xf32>, vector<2x8x8xf32> -> vector<2x8x8xf32>
    "tpu.trace_stop"() : () -> ()
    %cst_234 = arith.constant 0.353553385 : f32
    %668 = vector.broadcast %cst_234 : f32 to vector<2x8x8xf32>
    %669 = arith.mulf %667, %668 : vector<2x8x8xf32>
    %cst_235 = arith.constant dense<0xFF800000> : vector<2x8xf32>
    %670 = vector.multi_reduction <maximumf>, %669, %cst_235 [2] : vector<2x8x8xf32> to vector<2x8xf32>
    %671 = vector.shape_cast %670 : vector<2x8xf32> to vector<2x8x1xf32>
    %672 = vector.broadcast %671 : vector<2x8x1xf32> to vector<2x8x8xf32>
    %673 = arith.subf %669, %672 : vector<2x8x8xf32>
    %674 = math.exp %673 : vector<2x8x8xf32>
    %cst_236 = arith.constant dense<0.000000e+00> : vector<2x8xf32>
    %675 = vector.multi_reduction <add>, %674, %cst_236 [2] : vector<2x8x8xf32> to vector<2x8xf32>
    %676 = vector.shape_cast %675 : vector<2x8xf32> to vector<2x8x1xf32>
    %677 = tpu.reciprocal %676 {approx = true} : vector<2x8x1xf32> -> vector<2x8x1xf32>
    %678 = vector.broadcast %677 : vector<2x8x1xf32> to vector<2x8x8xf32>
    %679 = arith.mulf %674, %678 : vector<2x8x8xf32>
    %680 = vector.extract_strided_slice %645 {offsets = [0, 0, 8], sizes = [2, 8, 8], strides = [1, 1, 1]} : vector<2x8x32xf32> to vector<2x8x8xf32>
    "tpu.trace_start"() <{level = 10 : i32, message = "btm,bmd->btd"}> : () -> ()
    %cst_237 = arith.constant dense<0.000000e+00> : vector<2x8x8xf32>
    %681 = tpu.matmul %679, %680, %cst_237 {dimension_numbers = #tpu.dot_dimension_numbers<[2], [1], [1], [2], [0, 0, 0, 1, 1, 2], [0], [0]>} : vector<2x8x8xf32>, vector<2x8x8xf32>, vector<2x8x8xf32> -> vector<2x8x8xf32>
    "tpu.trace_stop"() : () -> ()
    %682 = vector.shape_cast %681 : vector<2x8x8xf32> to vector<16x8xf32>
    %c0_238 = arith.constant 0 : index
    %c8_239 = arith.constant 8 : index
    %683 = vector.load %arg4[%c0_238, %c8_239] : memref<16x32xf32, #tpu.memory_space<vmem>>, vector<16x8xf32>
    tpu.vector_store %arg4[%c0_238, %c8_239], %682 {strides = array<i32>} : memref<16x32xf32, #tpu.memory_space<vmem>>, vector<16x8xf32>,
    %684 = vector.extract_strided_slice %643 {offsets = [0, 0, 16], sizes = [2, 8, 8], strides = [1, 1, 1]} : vector<2x8x32xf32> to vector<2x8x8xf32>
    %685 = vector.extract_strided_slice %644 {offsets = [0, 0, 16], sizes = [2, 8, 8], strides = [1, 1, 1]} : vector<2x8x32xf32> to vector<2x8x8xf32>
    "tpu.trace_start"() <{level = 10 : i32, message = "btd,bmd->btm"}> : () -> ()
    %cst_240 = arith.constant dense<0.000000e+00> : vector<2x8x8xf32>
    %686 = tpu.matmul %684, %685, %cst_240 {dimension_numbers = #tpu.dot_dimension_numbers<[2], [2], [1], [1], [0, 0, 0, 1, 1, 1], [0], [0]>} : vector<2x8x8xf32>, vector<2x8x8xf32>, vector<2x8x8xf32> -> vector<2x8x8xf32>
    "tpu.trace_stop"() : () -> ()
    %cst_241 = arith.constant 0.353553385 : f32
    %687 = vector.broadcast %cst_241 : f32 to vector<2x8x8xf32>
    %688 = arith.mulf %686, %687 : vector<2x8x8xf32>
    %cst_242 = arith.constant dense<0xFF800000> : vector<2x8xf32>
    %689 = vector.multi_reduction <maximumf>, %688, %cst_242 [2] : vector<2x8x8xf32> to vector<2x8xf32>
    %690 = vector.shape_cast %689 : vector<2x8xf32> to vector<2x8x1xf32>
    %691 = vector.broadcast %690 : vector<2x8x1xf32> to vector<2x8x8xf32>
    %692 = arith.subf %688, %691 : vector<2x8x8xf32>
    %693 = math.exp %692 : vector<2x8x8xf32>
    %cst_243 = arith.constant dense<0.000000e+00> : vector<2x8xf32>
    %694 = vector.multi_reduction <add>, %693, %cst_243 [2] : vector<2x8x8xf32> to vector<2x8xf32>
    %695 = vector.shape_cast %694 : vector<2x8xf32> to vector<2x8x1xf32>
    %696 = tpu.reciprocal %695 {approx = true} : vector<2x8x1xf32> -> vector<2x8x1xf32>
    %697 = vector.broadcast %696 : vector<2x8x1xf32> to vector<2x8x8xf32>
    %698 = arith.mulf %693, %697 : vector<2x8x8xf32>
    %699 = vector.extract_strided_slice %645 {offsets = [0, 0, 16], sizes = [2, 8, 8], strides = [1, 1, 1]} : vector<2x8x32xf32> to vector<2x8x8xf32>
    "tpu.trace_start"() <{level = 10 : i32, message = "btm,bmd->btd"}> : () -> ()
    %cst_244 = arith.constant dense<0.000000e+00> : vector<2x8x8xf32>
    %700 = tpu.matmul %698, %699, %cst_244 {dimension_numbers = #tpu.dot_dimension_numbers<[2], [1], [1], [2], [0, 0, 0, 1, 1, 2], [0], [0]>} : vector<2x8x8xf32>, vector<2x8x8xf32>, vector<2x8x8xf32> -> vector<2x8x8xf32>
    "tpu.trace_stop"() : () -> ()
    %701 = vector.shape_cast %700 : vector<2x8x8xf32> to vector<16x8xf32>
    %c0_245 = arith.constant 0 : index
    %c16_246 = arith.constant 16 : index
    %702 = vector.load %arg4[%c0_245, %c16_246] : memref<16x32xf32, #tpu.memory_space<vmem>>, vector<16x8xf32>
    tpu.vector_store %arg4[%c0_245, %c16_246], %701 {strides = array<i32>} : memref<16x32xf32, #tpu.memory_space<vmem>>, vector<16x8xf32>,
    %703 = vector.extract_strided_slice %643 {offsets = [0, 0, 24], sizes = [2, 8, 8], strides = [1, 1, 1]} : vector<2x8x32xf32> to vector<2x8x8xf32>
    %704 = vector.extract_strided_slice %644 {offsets = [0, 0, 24], sizes = [2, 8, 8], strides = [1, 1, 1]} : vector<2x8x32xf32> to vector<2x8x8xf32>
    "tpu.trace_start"() <{level = 10 : i32, message = "btd,bmd->btm"}> : () -> ()
    %cst_247 = arith.constant dense<0.000000e+00> : vector<2x8x8xf32>
    %705 = tpu.matmul %703, %704, %cst_247 {dimension_numbers = #tpu.dot_dimension_numbers<[2], [2], [1], [1], [0, 0, 0, 1, 1, 1], [0], [0]>} : vector<2x8x8xf32>, vector<2x8x8xf32>, vector<2x8x8xf32> -> vector<2x8x8xf32>
    "tpu.trace_stop"() : () -> ()
    %cst_248 = arith.constant 0.353553385 : f32
    %706 = vector.broadcast %cst_248 : f32 to vector<2x8x8xf32>
    %707 = arith.mulf %705, %706 : vector<2x8x8xf32>
    %cst_249 = arith.constant dense<0xFF800000> : vector<2x8xf32>
    %708 = vector.multi_reduction <maximumf>, %707, %cst_249 [2] : vector<2x8x8xf32> to vector<2x8xf32>
    %709 = vector.shape_cast %708 : vector<2x8xf32> to vector<2x8x1xf32>
    %710 = vector.broadcast %709 : vector<2x8x1xf32> to vector<2x8x8xf32>
    %711 = arith.subf %707, %710 : vector<2x8x8xf32>
    %712 = math.exp %711 : vector<2x8x8xf32>
    %cst_250 = arith.constant dense<0.000000e+00> : vector<2x8xf32>
    %713 = vector.multi_reduction <add>, %712, %cst_250 [2] : vector<2x8x8xf32> to vector<2x8xf32>
    %714 = vector.shape_cast %713 : vector<2x8xf32> to vector<2x8x1xf32>
    %715 = tpu.reciprocal %714 {approx = true} : vector<2x8x1xf32> -> vector<2x8x1xf32>
    %716 = vector.broadcast %715 : vector<2x8x1xf32> to vector<2x8x8xf32>
    %717 = arith.mulf %712, %716 : vector<2x8x8xf32>
    %718 = vector.extract_strided_slice %645 {offsets = [0, 0, 24], sizes = [2, 8, 8], strides = [1, 1, 1]} : vector<2x8x32xf32> to vector<2x8x8xf32>
    "tpu.trace_start"() <{level = 10 : i32, message = "btm,bmd->btd"}> : () -> ()
    %cst_251 = arith.constant dense<0.000000e+00> : vector<2x8x8xf32>
    %719 = tpu.matmul %717, %718, %cst_251 {dimension_numbers = #tpu.dot_dimension_numbers<[2], [1], [1], [2], [0, 0, 0, 1, 1, 2], [0], [0]>} : vector<2x8x8xf32>, vector<2x8x8xf32>, vector<2x8x8xf32> -> vector<2x8x8xf32>
    "tpu.trace_stop"() : () -> ()
    %720 = vector.shape_cast %719 : vector<2x8x8xf32> to vector<16x8xf32>
    %c0_252 = arith.constant 0 : index
    %c24_253 = arith.constant 24 : index
    %721 = vector.load %arg4[%c0_252, %c24_253] : memref<16x32xf32, #tpu.memory_space<vmem>>, vector<16x8xf32>
    tpu.vector_store %arg4[%c0_252, %c24_253], %720 {strides = array<i32>} : memref<16x32xf32, #tpu.memory_space<vmem>>, vector<16x8xf32>,
    %c0_254 = arith.constant 0 : index
    %c0_255 = arith.constant 0 : index
    %722 = vector.load %arg4[%c0_254, %c0_255] : memref<16x32xf32, #tpu.memory_space<vmem>>, vector<16x32xf32>
    %c400 = arith.constant 400 : index
    %c0_256 = arith.constant 0 : index
    %723 = vector.load %arg1[%c400, %c0_256] : memref<496x128xf32, #tpu.memory_space<vmem>>, vector<16x64xf32>
    %c416_257 = arith.constant 416 : index
    %c0_258 = arith.constant 0 : index
    %724 = vector.load %arg1[%c416_257, %c0_258] : memref<496x128xf32, #tpu.memory_space<vmem>>, vector<1x32xf32>
    %c424 = arith.constant 424 : index
    %c0_259 = arith.constant 0 : index
    %725 = vector.load %arg1[%c424, %c0_259] : memref<496x128xf32, #tpu.memory_space<vmem>>, vector<1x32xf32>
    %cst_260 = arith.constant dense<0.000000e+00> : vector<16xf32>
    %726 = vector.multi_reduction <add>, %722, %cst_260 [1] : vector<16x32xf32> to vector<16xf32>
    %727 = vector.shape_cast %726 : vector<16xf32> to vector<16x1xf32>
    %cst_261 = arith.constant 3.200000e+01 : f32
    %728 = vector.broadcast %cst_261 : f32 to vector<16x1xf32>
    %729 = arith.divf %727, %728 : vector<16x1xf32>
    %730 = vector.broadcast %729 : vector<16x1xf32> to vector<16x32xf32>
    %731 = arith.subf %722, %730 : vector<16x32xf32>
    %732 = arith.mulf %731, %731 : vector<16x32xf32>
    %cst_262 = arith.constant dense<0.000000e+00> : vector<16xf32>
    %733 = vector.multi_reduction <add>, %732, %cst_262 [1] : vector<16x32xf32> to vector<16xf32>
    %734 = vector.shape_cast %733 : vector<16xf32> to vector<16x1xf32>
    %cst_263 = arith.constant 3.200000e+01 : f32
    %735 = vector.broadcast %cst_263 : f32 to vector<16x1xf32>
    %736 = arith.divf %734, %735 : vector<16x1xf32>
    %737 = vector.broadcast %729 : vector<16x1xf32> to vector<16x32xf32>
    %738 = arith.subf %722, %737 : vector<16x32xf32>
    %cst_264 = arith.constant 9.99999974E-6 : f32
    %739 = vector.broadcast %cst_264 : f32 to vector<16x1xf32>
    %740 = arith.addf %736, %739 : vector<16x1xf32>
    %741 = math.rsqrt %740 : vector<16x1xf32>
    %742 = vector.broadcast %741 : vector<16x1xf32> to vector<16x32xf32>
    %743 = arith.mulf %738, %742 : vector<16x32xf32>
    %744 = vector.broadcast %724 : vector<1x32xf32> to vector<16x32xf32>
    %745 = arith.mulf %743, %744 : vector<16x32xf32>
    %746 = vector.broadcast %725 : vector<1x32xf32> to vector<16x32xf32>
    %747 = arith.addf %745, %746 : vector<16x32xf32>
    %748 = vector.extract_strided_slice %723 {offsets = [0, 0], sizes = [16, 32], strides = [1, 1]} : vector<16x64xf32> to vector<16x32xf32>
    %cst_265 = arith.constant 1.000000e+00 : f32
    %749 = vector.broadcast %cst_265 : f32 to vector<16x32xf32>
    %750 = arith.addf %749, %748 : vector<16x32xf32>
    %751 = arith.mulf %747, %750 : vector<16x32xf32>
    %752 = vector.extract_strided_slice %723 {offsets = [0, 32], sizes = [16, 32], strides = [1, 1]} : vector<16x64xf32> to vector<16x32xf32>
    %753 = arith.addf %751, %752 : vector<16x32xf32>
    %754 = arith.negf %753 : vector<16x32xf32>
    %755 = math.exp %754 : vector<16x32xf32>
    %cst_266 = arith.constant 1.000000e+00 : f32
    %756 = vector.broadcast %cst_266 : f32 to vector<16x32xf32>
    %757 = arith.addf %756, %755 : vector<16x32xf32>
    %758 = arith.divf %756, %757 : vector<16x32xf32>
    %759 = arith.mulf %753, %758 : vector<16x32xf32>
    %760 = arith.truncf %759 : vector<16x32xf32> to vector<16x32xbf16>
    %c432 = arith.constant 432 : index
    %c0_267 = arith.constant 0 : index
    %761 = vector.load %arg2[%c432, %c0_267] : memref<592x128xbf16, #tpu.memory_space<vmem>>, vector<32x32xbf16>
    %cst_268 = arith.constant dense<0.000000e+00> : vector<16x32xf32>
    %762 = tpu.matmul %760, %761, %cst_268 {dimension_numbers = #tpu.dot_dimension_numbers<[1], [0], [0], [1], [0, 0, 1, 1], [], []>} : vector<16x32xbf16>, vector<32x32xbf16>, vector<16x32xf32> -> vector<16x32xf32>
    %c432_269 = arith.constant 432 : index
    %c0_270 = arith.constant 0 : index
    %763 = vector.load %arg1[%c432_269, %c0_270] : memref<496x128xf32, #tpu.memory_space<vmem>>, vector<1x32xf32>
    %764 = vector.broadcast %763 : vector<1x32xf32> to vector<16x32xf32>
    %765 = arith.addf %762, %764 : vector<16x32xf32>
    %766 = arith.addf %580, %765 : vector<16x32xf32>
    %767 = arith.truncf %766 : vector<16x32xf32> to vector<16x32xbf16>
    %c464 = arith.constant 464 : index
    %c0_271 = arith.constant 0 : index
    %768 = vector.load %arg2[%c464, %c0_271] : memref<592x128xbf16, #tpu.memory_space<vmem>>, vector<32x64xbf16>
    %cst_272 = arith.constant dense<0.000000e+00> : vector<16x64xf32>
    %769 = tpu.matmul %767, %768, %cst_272 {dimension_numbers = #tpu.dot_dimension_numbers<[1], [0], [0], [1], [0, 0, 1, 1], [], []>} : vector<16x32xbf16>, vector<32x64xbf16>, vector<16x64xf32> -> vector<16x64xf32>
    %c440 = arith.constant 440 : index
    %c0_273 = arith.constant 0 : index
    %770 = vector.load %arg1[%c440, %c0_273] : memref<496x128xf32, #tpu.memory_space<vmem>>, vector<1x64xf32>
    %771 = vector.broadcast %770 : vector<1x64xf32> to vector<16x64xf32>
    %772 = arith.addf %769, %771 : vector<16x64xf32>
    %cst_274 = arith.constant 5.000000e-01 : f32
    %773 = vector.broadcast %cst_274 : f32 to vector<16x64xf32>
    %774 = arith.mulf %773, %772 : vector<16x64xf32>
    %cst_275 = arith.constant 4.471500e-02 : f32
    %775 = vector.broadcast %cst_275 : f32 to vector<16x64xf32>
    %776 = arith.mulf %775, %772 : vector<16x64xf32>
    %777 = arith.mulf %776, %772 : vector<16x64xf32>
    %778 = arith.mulf %777, %772 : vector<16x64xf32>
    %779 = arith.addf %772, %778 : vector<16x64xf32>
    %cst_276 = arith.constant 0.797884583 : f32
    %780 = vector.broadcast %cst_276 : f32 to vector<16x64xf32>
    %781 = arith.mulf %780, %779 : vector<16x64xf32>
    %782 = math.tanh %781 : vector<16x64xf32>
    %cst_277 = arith.constant 1.000000e+00 : f32
    %783 = vector.broadcast %cst_277 : f32 to vector<16x64xf32>
    %784 = arith.addf %783, %782 : vector<16x64xf32>
    %785 = arith.mulf %774, %784 : vector<16x64xf32>
    %786 = arith.truncf %785 : vector<16x64xf32> to vector<16x64xbf16>
    %c496 = arith.constant 496 : index
    %c0_278 = arith.constant 0 : index
    %787 = vector.load %arg2[%c496, %c0_278] : memref<592x128xbf16, #tpu.memory_space<vmem>>, vector<64x32xbf16>
    %cst_279 = arith.constant dense<0.000000e+00> : vector<16x32xf32>
    %788 = tpu.matmul %786, %787, %cst_279 {dimension_numbers = #tpu.dot_dimension_numbers<[1], [0], [0], [1], [0, 0, 1, 1], [], []>} : vector<16x64xbf16>, vector<64x32xbf16>, vector<16x32xf32> -> vector<16x32xf32>
    %c448 = arith.constant 448 : index
    %c0_280 = arith.constant 0 : index
    %789 = vector.load %arg1[%c448, %c0_280] : memref<496x128xf32, #tpu.memory_space<vmem>>, vector<1x32xf32>
    %790 = vector.broadcast %789 : vector<1x32xf32> to vector<16x32xf32>
    %791 = arith.addf %788, %790 : vector<16x32xf32>
    %c456 = arith.constant 456 : index
    %c0_281 = arith.constant 0 : index
    %792 = vector.load %arg1[%c456, %c0_281] : memref<496x128xf32, #tpu.memory_space<vmem>>, vector<16x64xf32>
    %c472 = arith.constant 472 : index
    %c0_282 = arith.constant 0 : index
    %793 = vector.load %arg1[%c472, %c0_282] : memref<496x128xf32, #tpu.memory_space<vmem>>, vector<1x32xf32>
    %c480 = arith.constant 480 : index
    %c0_283 = arith.constant 0 : index
    %794 = vector.load %arg1[%c480, %c0_283] : memref<496x128xf32, #tpu.memory_space<vmem>>, vector<1x32xf32>
    %cst_284 = arith.constant dense<0.000000e+00> : vector<16xf32>
    %795 = vector.multi_reduction <add>, %791, %cst_284 [1] : vector<16x32xf32> to vector<16xf32>
    %796 = vector.shape_cast %795 : vector<16xf32> to vector<16x1xf32>
    %cst_285 = arith.constant 3.200000e+01 : f32
    %797 = vector.broadcast %cst_285 : f32 to vector<16x1xf32>
    %798 = arith.divf %796, %797 : vector<16x1xf32>
    %799 = vector.broadcast %798 : vector<16x1xf32> to vector<16x32xf32>
    %800 = arith.subf %791, %799 : vector<16x32xf32>
    %801 = arith.mulf %800, %800 : vector<16x32xf32>
    %cst_286 = arith.constant dense<0.000000e+00> : vector<16xf32>
    %802 = vector.multi_reduction <add>, %801, %cst_286 [1] : vector<16x32xf32> to vector<16xf32>
    %803 = vector.shape_cast %802 : vector<16xf32> to vector<16x1xf32>
    %cst_287 = arith.constant 3.200000e+01 : f32
    %804 = vector.broadcast %cst_287 : f32 to vector<16x1xf32>
    %805 = arith.divf %803, %804 : vector<16x1xf32>
    %806 = vector.broadcast %798 : vector<16x1xf32> to vector<16x32xf32>
    %807 = arith.subf %791, %806 : vector<16x32xf32>
    %cst_288 = arith.constant 9.99999974E-6 : f32
    %808 = vector.broadcast %cst_288 : f32 to vector<16x1xf32>
    %809 = arith.addf %805, %808 : vector<16x1xf32>
    %810 = math.rsqrt %809 : vector<16x1xf32>
    %811 = vector.broadcast %810 : vector<16x1xf32> to vector<16x32xf32>
    %812 = arith.mulf %807, %811 : vector<16x32xf32>
    %813 = vector.broadcast %793 : vector<1x32xf32> to vector<16x32xf32>
    %814 = arith.mulf %812, %813 : vector<16x32xf32>
    %815 = vector.broadcast %794 : vector<1x32xf32> to vector<16x32xf32>
    %816 = arith.addf %814, %815 : vector<16x32xf32>
    %817 = vector.extract_strided_slice %792 {offsets = [0, 0], sizes = [16, 32], strides = [1, 1]} : vector<16x64xf32> to vector<16x32xf32>
    %cst_289 = arith.constant 1.000000e+00 : f32
    %818 = vector.broadcast %cst_289 : f32 to vector<16x32xf32>
    %819 = arith.addf %818, %817 : vector<16x32xf32>
    %820 = arith.mulf %816, %819 : vector<16x32xf32>
    %821 = vector.extract_strided_slice %792 {offsets = [0, 32], sizes = [16, 32], strides = [1, 1]} : vector<16x64xf32> to vector<16x32xf32>
    %822 = arith.addf %820, %821 : vector<16x32xf32>
    %823 = arith.negf %822 : vector<16x32xf32>
    %824 = math.exp %823 : vector<16x32xf32>
    %cst_290 = arith.constant 1.000000e+00 : f32
    %825 = vector.broadcast %cst_290 : f32 to vector<16x32xf32>
    %826 = arith.addf %825, %824 : vector<16x32xf32>
    %827 = arith.divf %825, %826 : vector<16x32xf32>
    %828 = arith.mulf %822, %827 : vector<16x32xf32>
    %829 = arith.truncf %828 : vector<16x32xf32> to vector<16x32xbf16>
    %c560 = arith.constant 560 : index
    %c0_291 = arith.constant 0 : index
    %830 = vector.load %arg2[%c560, %c0_291] : memref<592x128xbf16, #tpu.memory_space<vmem>>, vector<32x32xbf16>
    %cst_292 = arith.constant dense<0.000000e+00> : vector<16x32xf32>
    %831 = tpu.matmul %829, %830, %cst_292 {dimension_numbers = #tpu.dot_dimension_numbers<[1], [0], [0], [1], [0, 0, 1, 1], [], []>} : vector<16x32xbf16>, vector<32x32xbf16>, vector<16x32xf32> -> vector<16x32xf32>
    %c488 = arith.constant 488 : index
    %c0_293 = arith.constant 0 : index
    %832 = vector.load %arg1[%c488, %c0_293] : memref<496x128xf32, #tpu.memory_space<vmem>>, vector<1x32xf32>
    %833 = vector.broadcast %832 : vector<1x32xf32> to vector<16x32xf32>
    %834 = arith.addf %831, %833 : vector<16x32xf32>
    %835 = arith.addf %766, %834 : vector<16x32xf32>
    %836 = arith.truncf %835 : vector<16x32xf32> to vector<16x32xbf16>
    %c16_294 = arith.constant 16 : index
    %c0_295 = arith.constant 0 : index
    %837 = vector.load %arg2[%c16_294, %c0_295] : memref<592x128xbf16, #tpu.memory_space<vmem>>, vector<32x128xbf16>
    %cst_296 = arith.constant dense<0.000000e+00> : vector<16x128xf32>
    %838 = tpu.matmul %836, %837, %cst_296 {dimension_numbers = #tpu.dot_dimension_numbers<[1], [0], [0], [1], [0, 0, 1, 1], [], []>} : vector<16x32xbf16>, vector<32x128xbf16>, vector<16x128xf32> -> vector<16x128xf32>
    %c72 = arith.constant 72 : index
    %c0_297 = arith.constant 0 : index
    %839 = vector.load %arg1[%c72, %c0_297] : memref<496x128xf32, #tpu.memory_space<vmem>>, vector<1x128xf32>
    %840 = vector.broadcast %839 : vector<1x128xf32> to vector<16x128xf32>
    %841 = arith.addf %838, %840 : vector<16x128xf32>
    %c0_298 = arith.constant 0 : index
    %c0_299 = arith.constant 0 : index
    %842 = vector.load %arg3[%c0_298, %c0_299] : memref<16x128xf32, #tpu.memory_space<vmem>>, vector<16x128xf32>
    tpu.vector_store %arg3[%c0_298, %c0_299], %841 {strides = array<i32>} : memref<16x128xf32, #tpu.memory_space<vmem>>, vector<16x128xf32>,
    return
  }
  func.func @transform_0(%arg0: i32) -> (i32, i32) {
    %c0_i32 = arith.constant 0 : i32
    %c0_i32_0 = arith.constant 0 : i32
    %c0_i32_1 = arith.constant 0 : i32
    return %c0_i32, %c0_i32_0 : i32, i32
  }
  func.func @transform_1(%arg0: i32) -> (i32, i32) {
    %c0_i32 = arith.constant 0 : i32
    %c0_i32_0 = arith.constant 0 : i32
    %c0_i32_1 = arith.constant 0 : i32
    return %c0_i32, %c0_i32_0 : i32, i32
  }
  func.func @transform_2(%arg0: i32) -> (i32, i32) {
    %c0_i32 = arith.constant 0 : i32
    %c0_i32_0 = arith.constant 0 : i32
    %c0_i32_1 = arith.constant 0 : i32
    return %c0_i32, %c0_i32_0 : i32, i32
  }
}

</mosaic_0001>

<llo_original>
// kernel: reverse
$region0: #{reverse}
  %s0 = inlined_call_operand.vmem [shape: f32[8,8,9], index: 0, kind: input, shape index: {}]
  %s1 = inlined_call_operand.vmem [shape: bf16[8,8,9], index: 1, kind: output, shape index: {}]
  %v2 = vlaneseq
  %v3 = vsub.s32 8, %v2
  %4 = vset.pattern.permute.xlu0 %v3
  $region1: #{reverse} parent=0
    #allocation0 [shape = 'u8[32768]{0}', space=vmem, size = 0x8000, scoped, tag = 'operand span for operand 0']
    #allocation1 [shape = 'u8[32768]{0}', space=vmem, size = 0x8000, scoped, tag = 'operand span for operand 1']
    #allocation2 [shape = 'u8[16384]{0}', space=vmem, size = 0x4000, scoped, tag = 'packed  for operand 1']
    // Predicated region
    $region2: #{reverse} parent=1 // pred_check
      _
    $region3: #{reverse} parent=1 // pred_check_branch
      %6 = sbr.rel (0) target = $region5
    $region4: #{reverse} parent=1 // pred_region
      // Predicated region
      $region6: #{reverse} parent=4 // pred_check
        _
      $region7: #{reverse} parent=4 // pred_check_branch
        %8 = sbr.rel (0) target = $region9
      $region8: #{reverse} parent=4 // pred_region
        // Predicated region
        $region21: #{reverse} parent=8 // pred_check
          _
        $region22: #{reverse} parent=8 // pred_check_branch
          %37 = sbr.rel (0) target = $region24
        $region23: #{reverse} parent=8 // pred_region
          loop: start=0, step=1, limit=1
          $region25: #{reverse} parent=23 // loop_pre_header
            _
          $region26: #{reverse} parent=23 // loop_header
            %s39 = sphi 0, %s43
            %p40 = scmp.ge.s32.totalorder %s39, 1
            %s44 = sphi %s0, %s0
            %s45 = sphi [#allocation0], [#allocation0]
          $region27: #{reverse} parent=23 // loop_header_branch
            %42 = sbr.rel (%p40) target = $region31
          $region28: #{reverse} parent=23 // loop_body
            %v46 = vld [vmem:[%s44] sm:$0xff]
            %47 = vst [vmem:[%s45] sm:$0xff] %v46
            %v48 = vld [vmem:[%s44 + $0x8] sm:$0xff]
            %49 = vst [vmem:[%s45 + $0x8] sm:$0xff] %v48
            %v50 = vld [vmem:[%s44 + $0x10] sm:$0xff]
            %51 = vst [vmem:[%s45 + $0x10] sm:$0xff] %v50
            %v52 = vld [vmem:[%s44 + $0x18] sm:$0xff]
            %53 = vst [vmem:[%s45 + $0x18] sm:$0xff] %v52
            %v54 = vld [vmem:[%s44 + $0x20] sm:$0xff]
            %55 = vst [vmem:[%s45 + $0x20] sm:$0xff] %v54
            %v56 = vld [vmem:[%s44 + $0x28] sm:$0xff]
            %57 = vst [vmem:[%s45 + $0x28] sm:$0xff] %v56
            %v58 = vld [vmem:[%s44 + $0x30] sm:$0xff]
            %59 = vst [vmem:[%s45 + $0x30] sm:$0xff] %v58
            %v60 = vld [vmem:[%s44 + $0x38] sm:$0xff]
            %61 = vst [vmem:[%s45 + $0x38] sm:$0xff] %v60
          $region29: #{reverse} parent=23 // loop_footer
            %s43 = sadd.s32 1, %s39
          $region30: #{reverse} parent=23 // loop_footer_branch
            %38 = sbr.rel target = $region26
          $region31: #{reverse} parent=23 // loop_exit
            _
        $region24: #{reverse} parent=8 // pred_fallthru
          _
        // Predicated region
        $region32: #{reverse} parent=8 // pred_check
          _
        $region33: #{reverse} parent=8 // pred_check_branch
          %63 = sbr.rel target = $region35
        $region34: #{reverse} parent=8 // pred_region
          _
        $region35: #{reverse} parent=8 // pred_fallthru
          _
      $region9: #{reverse} parent=4 // pred_fallthru
        _
      // Predicated region
      $region10: #{reverse} parent=4 // pred_check
        _
      $region11: #{reverse} parent=4 // pred_check_branch
        %10 = sbr.rel target = $region13
      $region12: #{reverse} parent=4 // pred_region
        loop: start=0, step=1, limit=1
        $region14: #{reverse} parent=12 // loop_pre_header
          _
        $region15: #{reverse} parent=12 // loop_header
          %s13 = sphi 0, %s17
          %p14 = scmp.ge.s32.totalorder %s13, 1
          %s18 = sphi %s0, %s0
          %s19 = sphi [#allocation0], [#allocation0]
        $region16: #{reverse} parent=12 // loop_header_branch
          %16 = sbr.rel (%p14) target = $region20
        $region17: #{reverse} parent=12 // loop_body
          %v20 = vld [vmem:[%s18] sm:$0xff]
          %21 = vst [vmem:[%s19] sm:$0xff] %v20
          %v22 = vld [vmem:[%s18 + $0x8] sm:$0xff]
          %23 = vst [vmem:[%s19 + $0x8] sm:$0xff] %v22
          %v24 = vld [vmem:[%s18 + $0x10] sm:$0xff]
          %25 = vst [vmem:[%s19 + $0x10] sm:$0xff] %v24
          %v26 = vld [vmem:[%s18 + $0x18] sm:$0xff]
          %27 = vst [vmem:[%s19 + $0x18] sm:$0xff] %v26
          %v28 = vld [vmem:[%s18 + $0x20] sm:$0xff]
          %29 = vst [vmem:[%s19 + $0x20] sm:$0xff] %v28
          %v30 = vld [vmem:[%s18 + $0x28] sm:$0xff]
          %31 = vst [vmem:[%s19 + $0x28] sm:$0xff] %v30
          %v32 = vld [vmem:[%s18 + $0x30] sm:$0xff]
          %33 = vst [vmem:[%s19 + $0x30] sm:$0xff] %v32
          %v34 = vld [vmem:[%s18 + $0x38] sm:$0xff]
          %35 = vst [vmem:[%s19 + $0x38] sm:$0xff] %v34
        $region18: #{reverse} parent=12 // loop_footer
          %s17 = sadd.s32 1, %s13
        $region19: #{reverse} parent=12 // loop_footer_branch
          %12 = sbr.rel target = $region15
        $region20: #{reverse} parent=12 // loop_exit
          _
      $region13: #{reverse} parent=4 // pred_fallthru
        _
    $region5: #{reverse} parent=1 // pred_fallthru
      _
    %64 = vnop
    %v65 = vld [vmem:[#allocation0] sm:$0xff]
    %66 = vperm.xlu0 %4, %v65
    %v67 = vpop.permute.xlu0 %66
    %68 = vst [vmem:[#allocation1] sm:$0xff] %v67
    %s69 = scalar_lea.vmem [#allocation1], 8
    %s70 = scalar_lea.vmem [#allocation0], 8
    %v71 = vld [vmem:[%s70] sm:$0xff]
    %72 = vperm.xlu0 %4, %v71
    %v73 = vpop.permute.xlu0 %72
    %74 = vst [vmem:[%s69] sm:$0xff] %v73
    %s75 = scalar_lea.vmem [#allocation1], 16
    %s76 = scalar_lea.vmem [#allocation0], 16
    %v77 = vld [vmem:[%s76] sm:$0xff]
    %78 = vperm.xlu0 %4, %v77
    %v79 = vpop.permute.xlu0 %78
    %80 = vst [vmem:[%s75] sm:$0xff] %v79
    %s81 = scalar_lea.vmem [#allocation1], 24
    %s82 = scalar_lea.vmem [#allocation0], 24
    %v83 = vld [vmem:[%s82] sm:$0xff]
    %84 = vperm.xlu0 %4, %v83
    %v85 = vpop.permute.xlu0 %84
    %86 = vst [vmem:[%s81] sm:$0xff] %v85
    %s87 = scalar_lea.vmem [#allocation1], 32
    %s88 = scalar_lea.vmem [#allocation0], 32
    %v89 = vld [vmem:[%s88] sm:$0xff]
    %90 = vperm.xlu0 %4, %v89
    %v91 = vpop.permute.xlu0 %90
    %92 = vst [vmem:[%s87] sm:$0xff] %v91
    %s93 = scalar_lea.vmem [#allocation1], 40
    %s94 = scalar_lea.vmem [#allocation0], 40
    %v95 = vld [vmem:[%s94] sm:$0xff]
    %96 = vperm.xlu0 %4, %v95
    %v97 = vpop.permute.xlu0 %96
    %98 = vst [vmem:[%s93] sm:$0xff] %v97
    %s99 = scalar_lea.vmem [#allocation1], 48
    %s100 = scalar_lea.vmem [#allocation0], 48
    %v101 = vld [vmem:[%s100] sm:$0xff]
    %102 = vperm.xlu0 %4, %v101
    %v103 = vpop.permute.xlu0 %102
    %104 = vst [vmem:[%s99] sm:$0xff] %v103
    %s105 = scalar_lea.vmem [#allocation1], 56
    %s106 = scalar_lea.vmem [#allocation0], 56
    %v107 = vld [vmem:[%s106] sm:$0xff]
    %108 = vperm.xlu0 %4, %v107
    %v109 = vpop.permute.xlu0 %108
    %110 = vst [vmem:[%s105] sm:$0xff] %v109
    %s112 = smul.u32 4, 2
    %s113 = sshllo.u32 0, %s112
    %s114 = sshrl.u32 %s112, 1
    %v115 = vld [vmem:[#allocation1] sm:%s113]
    %v116 = vpack.c.bf16 0.0, %v115
    %s117 = sshllo.u32 0, %s114
    %118 = vst [vmem:[#allocation2] sm:%s117] %v116
    %s119 = scalar_lea.vmem [#allocation1], 8
    %v120 = vld [vmem:[%s119] sm:%s113]
    %v121 = vpack.c.bf16 0.0, %v120
    %s122 = sshllo.u32 0, %s114
    %s123 = scalar_lea.vmem [#allocation2], 4
    %124 = vst [vmem:[%s123] sm:%s122] %v121
    %s125 = scalar_lea.vmem [#allocation1], 16
    %v126 = vld [vmem:[%s125] sm:%s113]
    %v127 = vpack.c.bf16 0.0, %v126
    %s128 = sshllo.u32 0, %s114
    %s129 = smul.addr 4, 2
    %s130 = scalar_lea.vmem [#allocation2], %s129
    %131 = vst [vmem:[%s130] sm:%s128] %v127
    %s132 = scalar_lea.vmem [#allocation1], 24
    %v133 = vld [vmem:[%s132] sm:%s113]
    %v134 = vpack.c.bf16 0.0, %v133
    %s135 = sshllo.u32 0, %s114
    %s136 = smul.addr 4, 3
    %s137 = scalar_lea.vmem [#allocation2], %s136
    %138 = vst [vmem:[%s137] sm:%s135] %v134
    %s139 = scalar_lea.vmem [#allocation1], 32
    %v140 = vld [vmem:[%s139] sm:%s113]
    %v141 = vpack.c.bf16 0.0, %v140
    %s142 = sshllo.u32 0, %s114
    %s143 = smul.addr 4, 4
    %s144 = scalar_lea.vmem [#allocation2], %s143
    %145 = vst [vmem:[%s144] sm:%s142] %v141
    %s146 = scalar_lea.vmem [#allocation1], 40
    %v147 = vld [vmem:[%s146] sm:%s113]
    %v148 = vpack.c.bf16 0.0, %v147
    %s149 = sshllo.u32 0, %s114
    %s150 = smul.addr 4, 5
    %s151 = scalar_lea.vmem [#allocation2], %s150
    %152 = vst [vmem:[%s151] sm:%s149] %v148
    %s153 = scalar_lea.vmem [#allocation1], 48
    %v154 = vld [vmem:[%s153] sm:%s113]
    %v155 = vpack.c.bf16 0.0, %v154
    %s156 = sshllo.u32 0, %s114
    %s157 = smul.addr 4, 6
    %s158 = scalar_lea.vmem [#allocation2], %s157
    %159 = vst [vmem:[%s158] sm:%s156] %v155
    %s160 = scalar_lea.vmem [#allocation1], 56
    %v161 = vld [vmem:[%s160] sm:%s113]
    %v162 = vpack.c.bf16 0.0, %v161
    %s163 = sshllo.u32 0, %s114
    %s164 = smul.addr 4, 7
    %s165 = scalar_lea.vmem [#allocation2], %s164
    %166 = vst [vmem:[%s165] sm:%s163] %v162
    // Predicated region
    $region36: #{reverse} parent=1 // pred_check
      _
    $region37: #{reverse} parent=1 // pred_check_branch
      %168 = sbr.rel (0) target = $region39
    $region38: #{reverse} parent=1 // pred_region
      // Predicated region
      $region40: #{reverse} parent=38 // pred_check
        _
      $region41: #{reverse} parent=38 // pred_check_branch
        %170 = sbr.rel target = $region43
      $region42: #{reverse} parent=38 // pred_region
        // Predicated region
        $region55: #{reverse} parent=42 // pred_check
          _
        $region56: #{reverse} parent=42 // pred_check_branch
          %199 = sbr.rel (0) target = $region58
        $region57: #{reverse} parent=42 // pred_region
          loop: start=0, step=1, limit=1
          $region59: #{reverse} parent=57 // loop_pre_header
            _
          $region60: #{reverse} parent=57 // loop_header
            %s201 = sphi 0, %s205
            %p202 = scmp.ge.s32.totalorder %s201, 1
            %s206 = sphi [#allocation2], [#allocation2]
            %s207 = sphi %s1, %s1
          $region61: #{reverse} parent=57 // loop_header_branch
            %204 = sbr.rel (%p202) target = $region65
          $region62: #{reverse} parent=57 // loop_body
            _
          $region63: #{reverse} parent=57 // loop_footer
            %s205 = sadd.s32 1, %s201
          $region64: #{reverse} parent=57 // loop_footer_branch
            %200 = sbr.rel target = $region60
          $region65: #{reverse} parent=57 // loop_exit
            _
          loop: start=0, step=1, limit=1
          $region66: #{reverse} parent=57 // loop_pre_header
            _
          $region67: #{reverse} parent=57 // loop_header
            %s210 = sphi 0, %s214
            %p211 = scmp.ge.s32.totalorder %s210, 1
            %s215 = sphi [#allocation2], [#allocation2]
            %s216 = sphi %s1, %s1
          $region68: #{reverse} parent=57 // loop_header_branch
            %213 = sbr.rel (%p211) target = $region72
          $region69: #{reverse} parent=57 // loop_body
            %v217 = vld [vmem:[%s215] sm:$0xf]
            %218 = vst [vmem:[%s216] sm:$0xf] %v217
            %v219 = vld [vmem:[%s215 + $0x4] sm:$0xf]
            %220 = vst [vmem:[%s216 + $0x4] sm:$0xf] %v219
            %v221 = vld [vmem:[%s215 + $0x8] sm:$0xf]
            %222 = vst [vmem:[%s216 + $0x8] sm:$0xf] %v221
            %v223 = vld [vmem:[%s215 + $0xc] sm:$0xf]
            %224 = vst [vmem:[%s216 + $0xc] sm:$0xf] %v223
            %v225 = vld [vmem:[%s215 + $0x10] sm:$0xf]
            %226 = vst [vmem:[%s216 + $0x10] sm:$0xf] %v225
            %v227 = vld [vmem:[%s215 + $0x14] sm:$0xf]
            %228 = vst [vmem:[%s216 + $0x14] sm:$0xf] %v227
            %v229 = vld [vmem:[%s215 + $0x18] sm:$0xf]
            %230 = vst [vmem:[%s216 + $0x18] sm:$0xf] %v229
            %v231 = vld [vmem:[%s215 + $0x1c] sm:$0xf]
            %232 = vst [vmem:[%s216 + $0x1c] sm:$0xf] %v231
          $region70: #{reverse} parent=57 // loop_footer
            %s214 = sadd.s32 1, %s210
          $region71: #{reverse} parent=57 // loop_footer_branch
            %209 = sbr.rel target = $region67
          $region72: #{reverse} parent=57 // loop_exit
            _
        $region58: #{reverse} parent=42 // pred_fallthru
          _
      $region43: #{reverse} parent=38 // pred_fallthru
        _
      // Predicated region
      $region44: #{reverse} parent=38 // pred_check
        _
      $region45: #{reverse} parent=38 // pred_check_branch
        %172 = sbr.rel (0) target = $region47
      $region46: #{reverse} parent=38 // pred_region
        loop: start=0, step=1, limit=1
        $region48: #{reverse} parent=46 // loop_pre_header
          _
        $region49: #{reverse} parent=46 // loop_header
          %s175 = sphi 0, %s179
          %p176 = scmp.ge.s32.totalorder %s175, 1
          %s180 = sphi [#allocation2], [#allocation2]
          %s181 = sphi %s1, %s1
        $region50: #{reverse} parent=46 // loop_header_branch
          %178 = sbr.rel (%p176) target = $region54
        $region51: #{reverse} parent=46 // loop_body
          %v182 = vld [vmem:[%s180] sm:$0xf]
          %183 = vst [vmem:[%s181] sm:$0xf] %v182
          %v184 = vld [vmem:[%s180 + $0x4] sm:$0xf]
          %185 = vst [vmem:[%s181 + $0x4] sm:$0xf] %v184
          %v186 = vld [vmem:[%s180 + $0x8] sm:$0xf]
          %187 = vst [vmem:[%s181 + $0x8] sm:$0xf] %v186
          %v188 = vld [vmem:[%s180 + $0xc] sm:$0xf]
          %189 = vst [vmem:[%s181 + $0xc] sm:$0xf] %v188
          %v190 = vld [vmem:[%s180 + $0x10] sm:$0xf]
          %191 = vst [vmem:[%s181 + $0x10] sm:$0xf] %v190
          %v192 = vld [vmem:[%s180 + $0x14] sm:$0xf]
          %193 = vst [vmem:[%s181 + $0x14] sm:$0xf] %v192
          %v194 = vld [vmem:[%s180 + $0x18] sm:$0xf]
          %195 = vst [vmem:[%s181 + $0x18] sm:$0xf] %v194
          %v196 = vld [vmem:[%s180 + $0x1c] sm:$0xf]
          %197 = vst [vmem:[%s181 + $0x1c] sm:$0xf] %v196
        $region52: #{reverse} parent=46 // loop_footer
          %s179 = sadd.s32 1, %s175
        $region53: #{reverse} parent=46 // loop_footer_branch
          %174 = sbr.rel target = $region49
        $region54: #{reverse} parent=46 // loop_exit
          _
      $region47: #{reverse} parent=38 // pred_fallthru
        _
    $region39: #{reverse} parent=1 // pred_fallthru
      _
    %233 = vnop

// kernel: reverse.1
$region0: #{reverse.1}
  #allocation0 [shape = 's32[1]{0}', space=sflag, size = 0x4, scoped, tag = 'scoped memory for reverse.1']
  %s0 = inlined_call_operand.vmem [shape: f32[16,8,9], index: 0, kind: input, shape index: {}]
  %s1 = inlined_call_operand.vmem [shape: bf16[16,8,9], index: 1, kind: output, shape index: {}]
  %s2 = scalar_lea.vmem %s0, 64
  %v3 = vld [vmem:[%s2] sm:$0xff]
  %v4 = vpack.c.bf16 0.0, %v3
  %5 = vst [vmem:[%s1] sm:$0xf] %v4
  %s6 = scalar_lea.vmem %s0, 56
  %v7 = vld [vmem:[%s6] sm:$0xff]
  %s8 = scalar_lea.vmem %s1, 4
  %v9 = vpack.c.bf16 0.0, %v7
  %10 = vst [vmem:[%s8] sm:$0xf] %v9
  %s11 = scalar_lea.vmem %s0, 48
  %v12 = vld [vmem:[%s11] sm:$0xff]
  %s13 = scalar_lea.vmem %s1, 8
  %v14 = vpack.c.bf16 0.0, %v12
  %15 = vst [vmem:[%s13] sm:$0xf] %v14
  %s16 = scalar_lea.vmem %s0, 40
  %v17 = vld [vmem:[%s16] sm:$0xff]
  %s18 = scalar_lea.vmem %s1, 12
  %v19 = vpack.c.bf16 0.0, %v17
  %20 = vst [vmem:[%s18] sm:$0xf] %v19
  %s21 = scalar_lea.vmem %s0, 32
  %v22 = vld [vmem:[%s21] sm:$0xff]
  %s23 = scalar_lea.vmem %s1, 16
  %v24 = vpack.c.bf16 0.0, %v22
  %25 = vst [vmem:[%s23] sm:$0xf] %v24
  %s26 = scalar_lea.vmem %s0, 24
  %v27 = vld [vmem:[%s26] sm:$0xff]
  %s28 = scalar_lea.vmem %s1, 20
  %v29 = vpack.c.bf16 0.0, %v27
  %30 = vst [vmem:[%s28] sm:$0xf] %v29
  %s31 = scalar_lea.vmem %s0, 16
  %v32 = vld [vmem:[%s31] sm:$0xff]
  %s33 = scalar_lea.vmem %s1, 24
  %v34 = vpack.c.bf16 0.0, %v32
  %35 = vst [vmem:[%s33] sm:$0xf] %v34
  %s36 = scalar_lea.vmem %s0, 8
  %v37 = vld [vmem:[%s36] sm:$0xff]
  %s38 = scalar_lea.vmem %s1, 28
  %v39 = vpack.c.bf16 0.0, %v37
  %40 = vst [vmem:[%s38] sm:$0xf] %v39
  %v41 = vld [vmem:[%s0] sm:$0xff]
  %s42 = scalar_lea.vmem %s1, 32
  %v43 = vpack.c.bf16 0.0, %v41
  %44 = vst [vmem:[%s42] sm:$0xf] %v43

// kernel: reverse.2
$region0: #{reverse.2}
  #allocation0 [shape = 's32[1]{0}', space=sflag, size = 0x4, scoped, tag = 'scoped memory for reverse.2']
  %s0 = inlined_call_operand.vmem [shape: f32[16,16,9], index: 0, kind: input, shape index: {}]
  %s1 = inlined_call_operand.vmem [shape: bf16[16,16,9], index: 1, kind: output, shape index: {}]
  %s2 = scalar_lea.vmem %s0, 128
  %v3 = vld [vmem:[%s2] sm:$0xff]
  %v4 = vpack.c.bf16 0.0, %v3
  %5 = vst [vmem:[%s1] sm:$0xf] %v4
  %s6 = scalar_lea.vmem %s0, 112
  %v7 = vld [vmem:[%s6] sm:$0xff]
  %s8 = scalar_lea.vmem %s1, 8
  %v9 = vpack.c.bf16 0.0, %v7
  %10 = vst [vmem:[%s8] sm:$0xf] %v9
  %s11 = scalar_lea.vmem %s0, 96
  %v12 = vld [vmem:[%s11] sm:$0xff]
  %s13 = scalar_lea.vmem %s1, 16
  %v14 = vpack.c.bf16 0.0, %v12
  %15 = vst [vmem:[%s13] sm:$0xf] %v14
  %s16 = scalar_lea.vmem %s0, 80
  %v17 = vld [vmem:[%s16] sm:$0xff]
  %s18 = scalar_lea.vmem %s1, 24
  %v19 = vpack.c.bf16 0.0, %v17
  %20 = vst [vmem:[%s18] sm:$0xf] %v19
  %s21 = scalar_lea.vmem %s0, 64
  %v22 = vld [vmem:[%s21] sm:$0xff]
  %s23 = scalar_lea.vmem %s1, 32
  %v24 = vpack.c.bf16 0.0, %v22
  %25 = vst [vmem:[%s23] sm:$0xf] %v24
  %s26 = scalar_lea.vmem %s0, 48
  %v27 = vld [vmem:[%s26] sm:$0xff]
  %s28 = scalar_lea.vmem %s1, 40
  %v29 = vpack.c.bf16 0.0, %v27
  %30 = vst [vmem:[%s28] sm:$0xf] %v29
  %s31 = scalar_lea.vmem %s0, 32
  %v32 = vld [vmem:[%s31] sm:$0xff]
  %s33 = scalar_lea.vmem %s1, 48
  %v34 = vpack.c.bf16 0.0, %v32
  %35 = vst [vmem:[%s33] sm:$0xf] %v34
  %s36 = scalar_lea.vmem %s0, 16
  %v37 = vld [vmem:[%s36] sm:$0xff]
  %s38 = scalar_lea.vmem %s1, 56
  %v39 = vpack.c.bf16 0.0, %v37
  %40 = vst [vmem:[%s38] sm:$0xf] %v39
  %v41 = vld [vmem:[%s0] sm:$0xff]
  %s42 = scalar_lea.vmem %s1, 64
  %v43 = vpack.c.bf16 0.0, %v41
  %44 = vst [vmem:[%s42] sm:$0xf] %v43
  %s45 = scalar_lea.vmem %s0, 136
  %v46 = vld [vmem:[%s45] sm:$0xff]
  %s47 = scalar_lea.vmem %s1, 4
  %v48 = vpack.c.bf16 0.0, %v46
  %49 = vst [vmem:[%s47] sm:$0xf] %v48
  %s50 = scalar_lea.vmem %s0, 120
  %v51 = vld [vmem:[%s50] sm:$0xff]
  %s52 = scalar_lea.vmem %s1, 12
  %v53 = vpack.c.bf16 0.0, %v51
  %54 = vst [vmem:[%s52] sm:$0xf] %v53
  %s55 = scalar_lea.vmem %s0, 104
  %v56 = vld [vmem:[%s55] sm:$0xff]
  %s57 = scalar_lea.vmem %s1, 20
  %v58 = vpack.c.bf16 0.0, %v56
  %59 = vst [vmem:[%s57] sm:$0xf] %v58
  %s60 = scalar_lea.vmem %s0, 88
  %v61 = vld [vmem:[%s60] sm:$0xff]
  %s62 = scalar_lea.vmem %s1, 28
  %v63 = vpack.c.bf16 0.0, %v61
  %64 = vst [vmem:[%s62] sm:$0xf] %v63
  %s65 = scalar_lea.vmem %s0, 72
  %v66 = vld [vmem:[%s65] sm:$0xff]
  %s67 = scalar_lea.vmem %s1, 36
  %v68 = vpack.c.bf16 0.0, %v66
  %69 = vst [vmem:[%s67] sm:$0xf] %v68
  %s70 = scalar_lea.vmem %s0, 56
  %v71 = vld [vmem:[%s70] sm:$0xff]
  %s72 = scalar_lea.vmem %s1, 44
  %v73 = vpack.c.bf16 0.0, %v71
  %74 = vst [vmem:[%s72] sm:$0xf] %v73
  %s75 = scalar_lea.vmem %s0, 40
  %v76 = vld [vmem:[%s75] sm:$0xff]
  %s77 = scalar_lea.vmem %s1, 52
  %v78 = vpack.c.bf16 0.0, %v76
  %79 = vst [vmem:[%s77] sm:$0xf] %v78
  %s80 = scalar_lea.vmem %s0, 24
  %v81 = vld [vmem:[%s80] sm:$0xff]
  %s82 = scalar_lea.vmem %s1, 60
  %v83 = vpack.c.bf16 0.0, %v81
  %84 = vst [vmem:[%s82] sm:$0xf] %v83
  %s85 = scalar_lea.vmem %s0, 8
  %v86 = vld [vmem:[%s85] sm:$0xff]
  %s87 = scalar_lea.vmem %s1, 68
  %v88 = vpack.c.bf16 0.0, %v86
  %89 = vst [vmem:[%s87] sm:$0xf] %v88

// kernel: reverse.3
$region0: #{reverse.3}
  #allocation0 [shape = 's32[1]{0}', space=sflag, size = 0x4, scoped, tag = 'scoped memory for reverse.3']
  %s0 = inlined_call_operand.vmem [shape: f32[8,16,9], index: 0, kind: input, shape index: {}]
  %s1 = inlined_call_operand.vmem [shape: bf16[8,16,9], index: 1, kind: output, shape index: {}]
  %s2 = scalar_lea.vmem %s0, 64
  %v3 = vld [vmem:[%s2] sm:$0xff]
  %v4 = vpack.c.bf16 0.0, %v3
  %5 = vst [vmem:[%s1] sm:$0xf] %v4
  %s6 = scalar_lea.vmem %s0, 56
  %v7 = vld [vmem:[%s6] sm:$0xff]
  %s8 = scalar_lea.vmem %s1, 4
  %v9 = vpack.c.bf16 0.0, %v7
  %10 = vst [vmem:[%s8] sm:$0xf] %v9
  %s11 = scalar_lea.vmem %s0, 48
  %v12 = vld [vmem:[%s11] sm:$0xff]
  %s13 = scalar_lea.vmem %s1, 8
  %v14 = vpack.c.bf16 0.0, %v12
  %15 = vst [vmem:[%s13] sm:$0xf] %v14
  %s16 = scalar_lea.vmem %s0, 40
  %v17 = vld [vmem:[%s16] sm:$0xff]
  %s18 = scalar_lea.vmem %s1, 12
  %v19 = vpack.c.bf16 0.0, %v17
  %20 = vst [vmem:[%s18] sm:$0xf] %v19
  %s21 = scalar_lea.vmem %s0, 32
  %v22 = vld [vmem:[%s21] sm:$0xff]
  %s23 = scalar_lea.vmem %s1, 16
  %v24 = vpack.c.bf16 0.0, %v22
  %25 = vst [vmem:[%s23] sm:$0xf] %v24
  %s26 = scalar_lea.vmem %s0, 24
  %v27 = vld [vmem:[%s26] sm:$0xff]
  %s28 = scalar_lea.vmem %s1, 20
  %v29 = vpack.c.bf16 0.0, %v27
  %30 = vst [vmem:[%s28] sm:$0xf] %v29
  %s31 = scalar_lea.vmem %s0, 16
  %v32 = vld [vmem:[%s31] sm:$0xff]
  %s33 = scalar_lea.vmem %s1, 24
  %v34 = vpack.c.bf16 0.0, %v32
  %35 = vst [vmem:[%s33] sm:$0xf] %v34
  %s36 = scalar_lea.vmem %s0, 8
  %v37 = vld [vmem:[%s36] sm:$0xff]
  %s38 = scalar_lea.vmem %s1, 28
  %v39 = vpack.c.bf16 0.0, %v37
  %40 = vst [vmem:[%s38] sm:$0xf] %v39
  %v41 = vld [vmem:[%s0] sm:$0xff]
  %s42 = scalar_lea.vmem %s1, 32
  %v43 = vpack.c.bf16 0.0, %v41
  %44 = vst [vmem:[%s42] sm:$0xf] %v43

// kernel: gesture_transformer_forward.1
$region0: #{gesture_transformer_forward.1}
  #allocation0 [shape = 'u32[]', space=smem, size = 0x4, offset = 0x4, fixed_abs, tag = 'smem constant byte address 0x4 - core index']
  #allocation1 [shape = 'u32[144,128]{1,0:T(1,128)}', space=vmem, size = 0x12000, scoped, tag = 'internal scratch']
  #allocation2 [shape = 'f32[16,32]{1,0:T(8,128)}', space=vmem, size = 0x2000, scoped, tag = 'scratch operand']
  %s0 = inlined_call_operand.vmem [shape: f32[496,128], index: 0, kind: input, shape index: {}]
  %s1 = inlined_call_operand.vmem [shape: bf16[592,128], index: 1, kind: input, shape index: {}]
  %s2 = inlined_call_operand.vmem [shape: f32[16,128], index: 2, kind: output, shape index: {}]
  %s3 = sld [smem:[#allocation0]]
  $region18: #{gesture_transformer_forward.1} parent=0
    _
  %s5 = ssub.s32 1, %s3
  %s6 = scalar_select 0, %s5, %s3
  // Predicated region
  $region2: #{gesture_transformer_forward.1} parent=0 // pred_check
    _
  $region3: #{gesture_transformer_forward.1} parent=0 // pred_check_branch
    %8 = sbr.rel (0) target = $region5
  $region4: #{gesture_transformer_forward.1} parent=0 // pred_region
    _
  $region5: #{gesture_transformer_forward.1} parent=0 // pred_fallthru
    _
  // Predicated region
  $region6: #{gesture_transformer_forward.1} parent=0 // pred_check
    _
  $region7: #{gesture_transformer_forward.1} parent=0 // pred_check_branch
    %10 = sbr.rel (0) target = $region9
  $region8: #{gesture_transformer_forward.1} parent=0 // pred_region
    _
  $region9: #{gesture_transformer_forward.1} parent=0 // pred_fallthru
    _
  %v12 = vld [vmem:[%s0] sm:$0xff]
  %v13 = vld [vmem:[%s0 + $0x8] sm:$0xff]
  %v14 = vld [vmem:[%s0 + $0x10] sm:$0xff]
  %v15 = vld [vmem:[%s0 + $0x18] sm:$0xff]
  %v16 = vpack.c.bf16 %v13, %v12
  %v17 = vld [vmem:[%s1] sm:$0x7]
  %v18 = vld [vmem:[%s0 + $0x40] sm:$0x1]
  %v19 = vlaneseq
  %v20 = vshrl.u32 %v19, 7
  %v21 = vsub.s32 0, %v20
  %v22 = vrot.slane %v18, %v21
  %vm23 = vcmask 48128
  %v25 = vsel %vm23, %v16, 0
  %vm27 = vcmask 1042432
  %v29 = vsel %vm27, %v17, 0
  %31 = vmatprep.subr.bf16.mxu0 0
  %32 = vmatpush1.bf16.msra.mxu0 %v29
  %33 = vmatprep.subr.bf16.mxu0 0
  %34 = vmatpush1.bf16.msra.mxu0 0
  %35 = vmatprep.subr.bf16.mxu0 0
  %36 = vmatpush1.bf16.msra.mxu0 0
  %37 = vmatprep.subr.bf16.mxu0 0
  %38 = vmatpush1.bf16.msra.mxu0 0
  %39 = vmatprep.subr.bf16.mxu0 0
  %40 = vmatpush1.bf16.msra.mxu0 0
  %41 = vmatprep.subr.bf16.mxu0 0
  %42 = vmatpush1.bf16.msra.mxu0 0
  %43 = vmatprep.subr.bf16.mxu0 0
  %44 = vmatpush1.bf16.msra.mxu0 0
  %45 = vmatprep.subr.bf16.mxu0 0
  %46 = vmatpush1.bf16.msra.mxu0 0
  %47 = vmatprep.subr.bf16.mxu0 0
  %48 = vmatpush1.bf16.msra.mxu0 0
  %49 = vmatprep.subr.bf16.mxu0 0
  %50 = vmatpush1.bf16.msra.mxu0 0
  %51 = vmatprep.subr.bf16.mxu0 0
  %52 = vmatpush1.bf16.msra.mxu0 0
  %53 = vmatprep.subr.bf16.mxu0 0
  %54 = vmatpush1.bf16.msra.mxu0 0
  %55 = vmatprep.subr.bf16.mxu0 0
  %56 = vmatpush1.bf16.msra.mxu0 0
  %57 = vmatprep.subr.bf16.mxu0 0
  %58 = vmatpush1.bf16.msra.mxu0 0
  %59 = vmatprep.subr.bf16.mxu0 0
  %60 = vmatpush1.bf16.msra.mxu0 0
  %61 = vmatprep.subr.bf16.mxu0 0
  %62 = vmatpush1.bf16.msra.mxu0 0
  %63 = vmatprep.mubr.bf16.mxu0 0
  %64 = vmatmul.mubr.bf16.gmra.mrb[0].mxu0 %v25
  %v65 = vpop.f32.mrb[0].mxu0
  %v66 = vadd.f32 %v22, %v65
  %v67 = vpop.f32.mrb[0].mxu0
  %v68 = vpop.f32.mrb[0].mxu0
  %v69 = vadd.f32 %v22, %v68
  %v70 = vpop.f32.mrb[0].mxu0
  %71 = vdwg.mxu0
  %v72 = vld [vmem:[%s0 + $0x20] sm:$0xff]
  %v73 = vld [vmem:[%s0 + $0x28] sm:$0xff]
  %v74 = vadd.f32 %v66, %v72
  %v75 = vadd.f32 %v69, %v73
  %v76 = vld [vmem:[%s0 + $0x50] sm:$0x1]
  %v77 = vld [vmem:[%s0 + $0x58] sm:$0x1]
  %vm78 = vcmask 261120
  %v79 = vsel %vm78, %v74, 0.0
  %80 = vadd.xlane.f32.xlu0 %v79
  %v81 = vpop.xlane.xlu0 %80
  %v82 = vsel %vm78, %v75, 0.0
  %83 = vadd.xlane.f32.xlu0 %v82
  %v84 = vpop.xlane.xlu0 %83
  %v85 = vrcp.pop 32.0
  %v86 = vmul.f32 %v81, %v85
  %v87 = vmul.f32 %v84, %v85
  %v88 = vsub.f32 %v74, %v86
  %v89 = vsub.f32 %v75, %v87
  %v90 = vmul.f32 %v88, %v88
  %v91 = vmul.f32 %v89, %v89
  %v92 = vsel %vm78, %v90, 0.0
  %93 = vadd.xlane.f32.xlu0 %v92
  %v94 = vpop.xlane.xlu0 %93
  %v95 = vsel %vm78, %v91, 0.0
  %96 = vadd.xlane.f32.xlu0 %v95
  %v97 = vpop.xlane.xlu0 %96
  %v98 = vmul.f32 %v94, %v85
  %v99 = vmul.f32 %v97, %v85
  %v100 = vadd.f32 %v98, 1e-05
  %v101 = vadd.f32 %v99, 1e-05
  %v102 = vrsqrt.pop %v100
  %v103 = vrsqrt.pop %v101
  %v104 = vmul.f32 %v88, %v102
  %v105 = vmul.f32 %v89, %v103
  %v106 = vlaneseq
  %v107 = vshrl.u32 %v106, 7
  %v108 = vsub.s32 0, %v107
  %v109 = vrot.slane %v76, %v108
  %v110 = vmul.f32 %v104, %v109
  %v111 = vmul.f32 %v105, %v109
  %v112 = vlaneseq
  %v113 = vshrl.u32 %v112, 7
  %v114 = vsub.s32 0, %v113
  %v115 = vrot.slane %v77, %v114
  %v116 = vadd.f32 %v110, %v115
  %v117 = vadd.f32 %v111, %v115
  %v118 = vpack.c.bf16 %v117, %v116
  %v119 = vld [vmem:[%s1 + $0x18] sm:$0xf]
  %v120 = vld [vmem:[%s1 + $0x1c] sm:$0xf]
  %v121 = vld [vmem:[%s1 + $0x20] sm:$0xf]
  %v122 = vld [vmem:[%s1 + $0x24] sm:$0xf]
  %v123 = vld [vmem:[%s0 + $0x60] sm:$0x1]
  %v124 = vlaneseq
  %v125 = vshrl.u32 %v124, 7
  %v126 = vsub.s32 0, %v125
  %v127 = vrot.slane %v123, %v126
  %v132 = vunpack.c.l.b16 %v119
  %v133 = vunpack.c.l.b16 %v120
  %v134 = vunpack.c.l.b16 %v121
  %v135 = vunpack.c.l.b16 %v122
  %v136 = vpack.c.b16 %v133, %v132
  %v137 = vpack.c.b16 %v135, %v134
  %v141 = vsel %vm78, %v118, 0
  %143 = vmatprep.subr.bf16.mxu0 0
  %144 = vmatpush1.bf16.msra.mxu0 %v136
  %145 = vmatprep.subr.bf16.mxu0 0
  %146 = vmatpush1.bf16.msra.mxu0 %v137
  %147 = vmatprep.subr.bf16.mxu0 0
  %148 = vmatpush1.bf16.msra.mxu0 0
  %149 = vmatprep.subr.bf16.mxu0 0
  %150 = vmatpush1.bf16.msra.mxu0 0
  %151 = vmatprep.subr.bf16.mxu0 0
  %152 = vmatpush1.bf16.msra.mxu0 0
  %153 = vmatprep.subr.bf16.mxu0 0
  %154 = vmatpush1.bf16.msra.mxu0 0
  %155 = vmatprep.subr.bf16.mxu0 0
  %156 = vmatpush1.bf16.msra.mxu0 0
  %157 = vmatprep.subr.bf16.mxu0 0
  %158 = vmatpush1.bf16.msra.mxu0 0
  %159 = vmatprep.subr.bf16.mxu0 0
  %160 = vmatpush1.bf16.msra.mxu0 0
  %161 = vmatprep.subr.bf16.mxu0 0
  %162 = vmatpush1.bf16.msra.mxu0 0
  %163 = vmatprep.subr.bf16.mxu0 0
  %164 = vmatpush1.bf16.msra.mxu0 0
  %165 = vmatprep.subr.bf16.mxu0 0
  %166 = vmatpush1.bf16.msra.mxu0 0
  %167 = vmatprep.subr.bf16.mxu0 0
  %168 = vmatpush1.bf16.msra.mxu0 0
  %169 = vmatprep.subr.bf16.mxu0 0
  %170 = vmatpush1.bf16.msra.mxu0 0
  %171 = vmatprep.subr.bf16.mxu0 0
  %172 = vmatpush1.bf16.msra.mxu0 0
  %173 = vmatprep.subr.bf16.mxu0 0
  %174 = vmatpush1.bf16.msra.mxu0 0
  %175 = vmatprep.mubr.bf16.mxu0 0
  %176 = vmatmul.mubr.bf16.gmra.mrb[0].mxu0 %v141
  %v177 = vpop.f32.mrb[0].mxu0
  %v178 = vadd.f32 %v127, %v177
  %v179 = vpop.f32.mrb[0].mxu0
  %v180 = vpop.f32.mrb[0].mxu0
  %v181 = vadd.f32 %v127, %v180
  %v182 = vpop.f32.mrb[0].mxu0
  %183 = vdwg.mxu0
  %185 = vrot.lane.b32.xlu0 %v178, 96
  %v186 = vpop.permute.xlu0 %185
  %vm187 = vcmask 64512
  %v188 = vsel %vm187, %v178, 0
  %v190 = vsel %vm187, %v186, 0
  %192 = vmatprep.subr.mxu0 0.0
  %193 = vmatpush1.xpose.msra.mxu0 %v190
  %194 = vmatprep.subr.mxu0 0.0
  %195 = vmatpush1.xpose.msra.mxu0 0.0
  %196 = vmatprep.subr.mxu0 0.0
  %197 = vmatpush1.xpose.msra.mxu0 0.0
  %198 = vmatprep.subr.mxu0 0.0
  %199 = vmatpush1.xpose.msra.mxu0 0.0
  %200 = vmatprep.subr.mxu0 0.0
  %201 = vmatpush1.xpose.msra.mxu0 0.0
  %202 = vmatprep.subr.mxu0 0.0
  %203 = vmatpush1.xpose.msra.mxu0 0.0
  %204 = vmatprep.subr.mxu0 0.0
  %205 = vmatpush1.xpose.msra.mxu0 0.0
  %206 = vmatprep.subr.mxu0 0.0
  %207 = vmatpush1.xpose.msra.mxu0 0.0
  %208 = vmatprep.subr.mxu0 0.0
  %209 = vmatpush1.xpose.msra.mxu0 0.0
  %210 = vmatprep.subr.mxu0 0.0
  %211 = vmatpush1.xpose.msra.mxu0 0.0
  %212 = vmatprep.subr.mxu0 0.0
  %213 = vmatpush1.xpose.msra.mxu0 0.0
  %214 = vmatprep.subr.mxu0 0.0
  %215 = vmatpush1.xpose.msra.mxu0 0.0
  %216 = vmatprep.subr.mxu0 0.0
  %217 = vmatpush1.xpose.msra.mxu0 0.0
  %218 = vmatprep.subr.mxu0 0.0
  %219 = vmatpush1.xpose.msra.mxu0 0.0
  %220 = vmatprep.subr.mxu0 0.0
  %221 = vmatpush1.xpose.msra.mxu0 0.0
  %222 = vmatprep.subr.mxu0 0.0
  %223 = vmatpush1.xpose.msra.mxu0 0.0
  %224 = vmatprep.subr.mxu0 0.0
  %225 = vmatpush1.xpose.msra.mxu0 0.0
  %226 = vmatprep.subr.mxu0 0.0
  %227 = vmatpush1.xpose.msra.mxu0 0.0
  %228 = vmatprep.subr.mxu0 0.0
  %229 = vmatpush1.xpose.msra.mxu0 0.0
  %230 = vmatprep.subr.mxu0 0.0
  %231 = vmatpush1.xpose.msra.mxu0 0.0
  %232 = vmatprep.subr.mxu0 0.0
  %233 = vmatpush1.xpose.msra.mxu0 0.0
  %234 = vmatprep.subr.mxu0 0.0
  %235 = vmatpush1.xpose.msra.mxu0 0.0
  %236 = vmatprep.subr.mxu0 0.0
  %237 = vmatpush1.xpose.msra.mxu0 0.0
  %238 = vmatprep.subr.mxu0 0.0
  %239 = vmatpush1.xpose.msra.mxu0 0.0
  %240 = vmatprep.subr.mxu0 0.0
  %241 = vmatpush1.xpose.msra.mxu0 0.0
  %242 = vmatprep.subr.mxu0 0.0
  %243 = vmatpush1.xpose.msra.mxu0 0.0
  %244 = vmatprep.subr.mxu0 0.0
  %245 = vmatpush1.xpose.msra.mxu0 0.0
  %246 = vmatprep.subr.mxu0 0.0
  %247 = vmatpush1.xpose.msra.mxu0 0.0
  %248 = vmatprep.subr.mxu0 0.0
  %249 = vmatpush1.xpose.msra.mxu0 0.0
  %250 = vmatprep.subr.mxu0 0.0
  %251 = vmatpush1.xpose.msra.mxu0 0.0
  %252 = vmatprep.subr.mxu0 0.0
  %253 = vmatpush1.xpose.msra.mxu0 0.0
  %254 = vmatprep.subr.mxu0 0.0
  %255 = vmatpush1.xpose.msra.mxu0 0.0
  %256 = vmatprep.mubr.f32.mxu0 0.0
  %257 = vmatmul.mubr.f32.gmra.mrb[0].mxu0 %v188
  %v258 = vpop.f32.mrb[0].mxu0
  %v259 = vadd.f32 0.0, %v258
  %v260 = vpop.f32.mrb[0].mxu0
  %261 = vdwg.mxu0
  %263 = vrot.lane.b32.xlu0 %v181, 96
  %v264 = vpop.permute.xlu0 %263
  %v265 = vsel %vm187, %v181, 0
  %v267 = vsel %vm187, %v264, 0
  %269 = vmatprep.subr.mxu0 0.0
  %270 = vmatpush1.xpose.msra.mxu0 %v267
  %271 = vmatprep.subr.mxu0 0.0
  %272 = vmatpush1.xpose.msra.mxu0 0.0
  %273 = vmatprep.subr.mxu0 0.0
  %274 = vmatpush1.xpose.msra.mxu0 0.0
  %275 = vmatprep.subr.mxu0 0.0
  %276 = vmatpush1.xpose.msra.mxu0 0.0
  %277 = vmatprep.subr.mxu0 0.0
  %278 = vmatpush1.xpose.msra.mxu0 0.0
  %279 = vmatprep.subr.mxu0 0.0
  %280 = vmatpush1.xpose.msra.mxu0 0.0
  %281 = vmatprep.subr.mxu0 0.0
  %282 = vmatpush1.xpose.msra.mxu0 0.0
  %283 = vmatprep.subr.mxu0 0.0
  %284 = vmatpush1.xpose.msra.mxu0 0.0
  %285 = vmatprep.subr.mxu0 0.0
  %286 = vmatpush1.xpose.msra.mxu0 0.0
  %287 = vmatprep.subr.mxu0 0.0
  %288 = vmatpush1.xpose.msra.mxu0 0.0
  %289 = vmatprep.subr.mxu0 0.0
  %290 = vmatpush1.xpose.msra.mxu0 0.0
  %291 = vmatprep.subr.mxu0 0.0
  %292 = vmatpush1.xpose.msra.mxu0 0.0
  %293 = vmatprep.subr.mxu0 0.0
  %294 = vmatpush1.xpose.msra.mxu0 0.0
  %295 = vmatprep.subr.mxu0 0.0
  %296 = vmatpush1.xpose.msra.mxu0 0.0
  %297 = vmatprep.subr.mxu0 0.0
  %298 = vmatpush1.xpose.msra.mxu0 0.0
  %299 = vmatprep.subr.mxu0 0.0
  %300 = vmatpush1.xpose.msra.mxu0 0.0
  %301 = vmatprep.subr.mxu0 0.0
  %302 = vmatpush1.xpose.msra.mxu0 0.0
  %303 = vmatprep.subr.mxu0 0.0
  %304 = vmatpush1.xpose.msra.mxu0 0.0
  %305 = vmatprep.subr.mxu0 0.0
  %306 = vmatpush1.xpose.msra.mxu0 0.0
  %307 = vmatprep.subr.mxu0 0.0
  %308 = vmatpush1.xpose.msra.mxu0 0.0
  %309 = vmatprep.subr.mxu0 0.0
  %310 = vmatpush1.xpose.msra.mxu0 0.0
  %311 = vmatprep.subr.mxu0 0.0
  %312 = vmatpush1.xpose.msra.mxu0 0.0
  %313 = vmatprep.subr.mxu0 0.0
  %314 = vmatpush1.xpose.msra.mxu0 0.0
  %315 = vmatprep.subr.mxu0 0.0
  %316 = vmatpush1.xpose.msra.mxu0 0.0
  %317 = vmatprep.subr.mxu0 0.0
  %318 = vmatpush1.xpose.msra.mxu0 0.0
  %319 = vmatprep.subr.mxu0 0.0
  %320 = vmatpush1.xpose.msra.mxu0 0.0
  %321 = vmatprep.subr.mxu0 0.0
  %322 = vmatpush1.xpose.msra.mxu0 0.0
  %323 = vmatprep.subr.mxu0 0.0
  %324 = vmatpush1.xpose.msra.mxu0 0.0
  %325 = vmatprep.subr.mxu0 0.0
  %326 = vmatpush1.xpose.msra.mxu0 0.0
  %327 = vmatprep.subr.mxu0 0.0
  %328 = vmatpush1.xpose.msra.mxu0 0.0
  %329 = vmatprep.subr.mxu0 0.0
  %330 = vmatpush1.xpose.msra.mxu0 0.0
  %331 = vmatprep.subr.mxu0 0.0
  %332 = vmatpush1.xpose.msra.mxu0 0.0
  %333 = vmatprep.mubr.f32.mxu0 0.0
  %334 = vmatmul.mubr.f32.gmra.mrb[0].mxu0 %v265
  %v335 = vpop.f32.mrb[0].mxu0
  %v336 = vadd.f32 0.0, %v335
  %v337 = vpop.f32.mrb[0].mxu0
  %338 = vdwg.mxu0
  %v339 = vmul.f32 %v259, 0.35355338
  %v340 = vmul.f32 %v336, 0.35355338
  %v341 = vsel %vm187, %v339, -inf
  %342 = vmax.xlane.f32.xlu0 %v341
  %v343 = vpop.xlane.xlu0 %342
  %v344 = vsel %vm187, %v340, -inf
  %345 = vmax.xlane.f32.xlu0 %v344
  %v346 = vpop.xlane.xlu0 %345
  %v347 = vsub.f32 %v339, %v343
  %v348 = vsub.f32 %v340, %v346
  %v349 = vmul.f32 %v347, 1.442695
  %v350 = vpow.pop %v349
  %v351 = vmul.f32 %v348, 1.442695
  %v352 = vpow.pop %v351
  %v353 = vsel %vm187, %v350, 0.0
  %354 = vadd.xlane.f32.xlu0 %v353
  %v355 = vpop.xlane.xlu0 %354
  %v356 = vsel %vm187, %v352, 0.0
  %357 = vadd.xlane.f32.xlu0 %v356
  %v358 = vpop.xlane.xlu0 %357
  %v359 = vrcp.pop %v355
  %v360 = vrcp.pop %v358
  %v361 = vmul.f32 %v350, %v359
  %v362 = vmul.f32 %v352, %v360
  %363 = vrot.lane.b32.xlu0 %v178, 64
  %v364 = vpop.permute.xlu0 %363
  %v367 = vsel %vm187, %v361, 0
  %369 = vmatprep.subr.mxu0 0.0
  %370 = vmatpush1.msra.mxu0 %v364
  %371 = vmatprep.subr.mxu0 0.0
  %372 = vmatpush1.msra.mxu0 0.0
  %373 = vmatprep.subr.mxu0 0.0
  %374 = vmatpush1.msra.mxu0 0.0
  %375 = vmatprep.subr.mxu0 0.0
  %376 = vmatpush1.msra.mxu0 0.0
  %377 = vmatprep.subr.mxu0 0.0
  %378 = vmatpush1.msra.mxu0 0.0
  %379 = vmatprep.subr.mxu0 0.0
  %380 = vmatpush1.msra.mxu0 0.0
  %381 = vmatprep.subr.mxu0 0.0
  %382 = vmatpush1.msra.mxu0 0.0
  %383 = vmatprep.subr.mxu0 0.0
  %384 = vmatpush1.msra.mxu0 0.0
  %385 = vmatprep.subr.mxu0 0.0
  %386 = vmatpush1.msra.mxu0 0.0
  %387 = vmatprep.subr.mxu0 0.0
  %388 = vmatpush1.msra.mxu0 0.0
  %389 = vmatprep.subr.mxu0 0.0
  %390 = vmatpush1.msra.mxu0 0.0
  %391 = vmatprep.subr.mxu0 0.0
  %392 = vmatpush1.msra.mxu0 0.0
  %393 = vmatprep.subr.mxu0 0.0
  %394 = vmatpush1.msra.mxu0 0.0
  %395 = vmatprep.subr.mxu0 0.0
  %396 = vmatpush1.msra.mxu0 0.0
  %397 = vmatprep.subr.mxu0 0.0
  %398 = vmatpush1.msra.mxu0 0.0
  %399 = vmatprep.subr.mxu0 0.0
  %400 = vmatpush1.msra.mxu0 0.0
  %401 = vmatprep.subr.mxu0 0.0
  %402 = vmatpush1.msra.mxu0 0.0
  %403 = vmatprep.subr.mxu0 0.0
  %404 = vmatpush1.msra.mxu0 0.0
  %405 = vmatprep.subr.mxu0 0.0
  %406 = vmatpush1.msra.mxu0 0.0
  %407 = vmatprep.subr.mxu0 0.0
  %408 = vmatpush1.msra.mxu0 0.0
  %409 = vmatprep.subr.mxu0 0.0
  %410 = vmatpush1.msra.mxu0 0.0
  %411 = vmatprep.subr.mxu0 0.0
  %412 = vmatpush1.msra.mxu0 0.0
  %413 = vmatprep.subr.mxu0 0.0
  %414 = vmatpush1.msra.mxu0 0.0
  %415 = vmatprep.subr.mxu0 0.0
  %416 = vmatpush1.msra.mxu0 0.0
  %417 = vmatprep.subr.mxu0 0.0
  %418 = vmatpush1.msra.mxu0 0.0
  %419 = vmatprep.subr.mxu0 0.0
  %420 = vmatpush1.msra.mxu0 0.0
  %421 = vmatprep.subr.mxu0 0.0
  %422 = vmatpush1.msra.mxu0 0.0
  %423 = vmatprep.subr.mxu0 0.0
  %424 = vmatpush1.msra.mxu0 0.0
  %425 = vmatprep.subr.mxu0 0.0
  %426 = vmatpush1.msra.mxu0 0.0
  %427 = vmatprep.subr.mxu0 0.0
  %428 = vmatpush1.msra.mxu0 0.0
  %429 = vmatprep.subr.mxu0 0.0
  %430 = vmatpush1.msra.mxu0 0.0
  %431 = vmatprep.subr.mxu0 0.0
  %432 = vmatpush1.msra.mxu0 0.0
  %433 = vmatprep.mubr.f32.mxu0 0.0
  %434 = vmatmul.mubr.f32.gmra.mrb[0].mxu0 %v367
  %v435 = vpop.f32.mrb[0].mxu0
  %v436 = vadd.f32 0.0, %v435
  %v437 = vpop.f32.mrb[0].mxu0
  %438 = vdwg.mxu0
  %439 = vrot.lane.b32.xlu0 %v181, 64
  %v440 = vpop.permute.xlu0 %439
  %v443 = vsel %vm187, %v362, 0
  %445 = vmatprep.subr.mxu0 0.0
  %446 = vmatpush1.msra.mxu0 %v440
  %447 = vmatprep.subr.mxu0 0.0
  %448 = vmatpush1.msra.mxu0 0.0
  %449 = vmatprep.subr.mxu0 0.0
  %450 = vmatpush1.msra.mxu0 0.0
  %451 = vmatprep.subr.mxu0 0.0
  %452 = vmatpush1.msra.mxu0 0.0
  %453 = vmatprep.subr.mxu0 0.0
  %454 = vmatpush1.msra.mxu0 0.0
  %455 = vmatprep.subr.mxu0 0.0
  %456 = vmatpush1.msra.mxu0 0.0
  %457 = vmatprep.subr.mxu0 0.0
  %458 = vmatpush1.msra.mxu0 0.0
  %459 = vmatprep.subr.mxu0 0.0
  %460 = vmatpush1.msra.mxu0 0.0
  %461 = vmatprep.subr.mxu0 0.0
  %462 = vmatpush1.msra.mxu0 0.0
  %463 = vmatprep.subr.mxu0 0.0
  %464 = vmatpush1.msra.mxu0 0.0
  %465 = vmatprep.subr.mxu0 0.0
  %466 = vmatpush1.msra.mxu0 0.0
  %467 = vmatprep.subr.mxu0 0.0
  %468 = vmatpush1.msra.mxu0 0.0
  %469 = vmatprep.subr.mxu0 0.0
  %470 = vmatpush1.msra.mxu0 0.0
  %471 = vmatprep.subr.mxu0 0.0
  %472 = vmatpush1.msra.mxu0 0.0
  %473 = vmatprep.subr.mxu0 0.0
  %474 = vmatpush1.msra.mxu0 0.0
  %475 = vmatprep.subr.mxu0 0.0
  %476 = vmatpush1.msra.mxu0 0.0
  %477 = vmatprep.subr.mxu0 0.0
  %478 = vmatpush1.msra.mxu0 0.0
  %479 = vmatprep.subr.mxu0 0.0
  %480 = vmatpush1.msra.mxu0 0.0
  %481 = vmatprep.subr.mxu0 0.0
  %482 = vmatpush1.msra.mxu0 0.0
  %483 = vmatprep.subr.mxu0 0.0
  %484 = vmatpush1.msra.mxu0 0.0
  %485 = vmatprep.subr.mxu0 0.0
  %486 = vmatpush1.msra.mxu0 0.0
  %487 = vmatprep.subr.mxu0 0.0
  %488 = vmatpush1.msra.mxu0 0.0
  %489 = vmatprep.subr.mxu0 0.0
  %490 = vmatpush1.msra.mxu0 0.0
  %491 = vmatprep.subr.mxu0 0.0
  %492 = vmatpush1.msra.mxu0 0.0
  %493 = vmatprep.subr.mxu0 0.0
  %494 = vmatpush1.msra.mxu0 0.0
  %495 = vmatprep.subr.mxu0 0.0
  %496 = vmatpush1.msra.mxu0 0.0
  %497 = vmatprep.subr.mxu0 0.0
  %498 = vmatpush1.msra.mxu0 0.0
  %499 = vmatprep.subr.mxu0 0.0
  %500 = vmatpush1.msra.mxu0 0.0
  %501 = vmatprep.subr.mxu0 0.0
  %502 = vmatpush1.msra.mxu0 0.0
  %503 = vmatprep.subr.mxu0 0.0
  %504 = vmatpush1.msra.mxu0 0.0
  %505 = vmatprep.subr.mxu0 0.0
  %506 = vmatpush1.msra.mxu0 0.0
  %507 = vmatprep.subr.mxu0 0.0
  %508 = vmatpush1.msra.mxu0 0.0
  %509 = vmatprep.mubr.f32.mxu0 0.0
  %510 = vmatmul.mubr.f32.gmra.mrb[0].mxu0 %v443
  %v511 = vpop.f32.mrb[0].mxu0
  %v512 = vadd.f32 0.0, %v511
  %v513 = vpop.f32.mrb[0].mxu0
  %514 = vdwg.mxu0
  %515 = vst.msk [vmem:[#allocation2] sm:$0xff] %vm187, %v436
  %516 = vst.msk [vmem:[#allocation2 + $0x8] sm:$0xff] %vm187, %v512
  %517 = vrot.lane.b32.xlu0 %v178, 120
  %v518 = vpop.permute.xlu0 %517
  %519 = vrot.lane.b32.xlu0 %v178, 88
  %v520 = vpop.permute.xlu0 %519
  %v521 = vsel %vm187, %v518, 0
  %v523 = vsel %vm187, %v520, 0
  %525 = vmatprep.subr.mxu0 0.0
  %526 = vmatpush1.xpose.msra.mxu0 %v523
  %527 = vmatprep.subr.mxu0 0.0
  %528 = vmatpush1.xpose.msra.mxu0 0.0
  %529 = vmatprep.subr.mxu0 0.0
  %530 = vmatpush1.xpose.msra.mxu0 0.0
  %531 = vmatprep.subr.mxu0 0.0
  %532 = vmatpush1.xpose.msra.mxu0 0.0
  %533 = vmatprep.subr.mxu0 0.0
  %534 = vmatpush1.xpose.msra.mxu0 0.0
  %535 = vmatprep.subr.mxu0 0.0
  %536 = vmatpush1.xpose.msra.mxu0 0.0
  %537 = vmatprep.subr.mxu0 0.0
  %538 = vmatpush1.xpose.msra.mxu0 0.0
  %539 = vmatprep.subr.mxu0 0.0
  %540 = vmatpush1.xpose.msra.mxu0 0.0
  %541 = vmatprep.subr.mxu0 0.0
  %542 = vmatpush1.xpose.msra.mxu0 0.0
  %543 = vmatprep.subr.mxu0 0.0
  %544 = vmatpush1.xpose.msra.mxu0 0.0
  %545 = vmatprep.subr.mxu0 0.0
  %546 = vmatpush1.xpose.msra.mxu0 0.0
  %547 = vmatprep.subr.mxu0 0.0
  %548 = vmatpush1.xpose.msra.mxu0 0.0
  %549 = vmatprep.subr.mxu0 0.0
  %550 = vmatpush1.xpose.msra.mxu0 0.0
  %551 = vmatprep.subr.mxu0 0.0
  %552 = vmatpush1.xpose.msra.mxu0 0.0
  %553 = vmatprep.subr.mxu0 0.0
  %554 = vmatpush1.xpose.msra.mxu0 0.0
  %555 = vmatprep.subr.mxu0 0.0
  %556 = vmatpush1.xpose.msra.mxu0 0.0
  %557 = vmatprep.subr.mxu0 0.0
  %558 = vmatpush1.xpose.msra.mxu0 0.0
  %559 = vmatprep.subr.mxu0 0.0
  %560 = vmatpush1.xpose.msra.mxu0 0.0
  %561 = vmatprep.subr.mxu0 0.0
  %562 = vmatpush1.xpose.msra.mxu0 0.0
  %563 = vmatprep.subr.mxu0 0.0
  %564 = vmatpush1.xpose.msra.mxu0 0.0
  %565 = vmatprep.subr.mxu0 0.0
  %566 = vmatpush1.xpose.msra.mxu0 0.0
  %567 = vmatprep.subr.mxu0 0.0
  %568 = vmatpush1.xpose.msra.mxu0 0.0
  %569 = vmatprep.subr.mxu0 0.0
  %570 = vmatpush1.xpose.msra.mxu0 0.0
  %571 = vmatprep.subr.mxu0 0.0
  %572 = vmatpush1.xpose.msra.mxu0 0.0
  %573 = vmatprep.subr.mxu0 0.0
  %574 = vmatpush1.xpose.msra.mxu0 0.0
  %575 = vmatprep.subr.mxu0 0.0
  %576 = vmatpush1.xpose.msra.mxu0 0.0
  %577 = vmatprep.subr.mxu0 0.0
  %578 = vmatpush1.xpose.msra.mxu0 0.0
  %579 = vmatprep.subr.mxu0 0.0
  %580 = vmatpush1.xpose.msra.mxu0 0.0
  %581 = vmatprep.subr.mxu0 0.0
  %582 = vmatpush1.xpose.msra.mxu0 0.0
  %583 = vmatprep.subr.mxu0 0.0
  %584 = vmatpush1.xpose.msra.mxu0 0.0
  %585 = vmatprep.subr.mxu0 0.0
  %586 = vmatpush1.xpose.msra.mxu0 0.0
  %587 = vmatprep.subr.mxu0 0.0
  %588 = vmatpush1.xpose.msra.mxu0 0.0
  %589 = vmatprep.mubr.f32.mxu0 0.0
  %590 = vmatmul.mubr.f32.gmra.mrb[0].mxu0 %v521
  %v591 = vpop.f32.mrb[0].mxu0
  %v592 = vadd.f32 0.0, %v591
  %v593 = vpop.f32.mrb[0].mxu0
  %594 = vdwg.mxu0
  %595 = vrot.lane.b32.xlu0 %v181, 120
  %v596 = vpop.permute.xlu0 %595
  %597 = vrot.lane.b32.xlu0 %v181, 88
  %v598 = vpop.permute.xlu0 %597
  %v599 = vsel %vm187, %v596, 0
  %v601 = vsel %vm187, %v598, 0
  %603 = vmatprep.subr.mxu0 0.0
  %604 = vmatpush1.xpose.msra.mxu0 %v601
  %605 = vmatprep.subr.mxu0 0.0
  %606 = vmatpush1.xpose.msra.mxu0 0.0
  %607 = vmatprep.subr.mxu0 0.0
  %608 = vmatpush1.xpose.msra.mxu0 0.0
  %609 = vmatprep.subr.mxu0 0.0
  %610 = vmatpush1.xpose.msra.mxu0 0.0
  %611 = vmatprep.subr.mxu0 0.0
  %612 = vmatpush1.xpose.msra.mxu0 0.0
  %613 = vmatprep.subr.mxu0 0.0
  %614 = vmatpush1.xpose.msra.mxu0 0.0
  %615 = vmatprep.subr.mxu0 0.0
  %616 = vmatpush1.xpose.msra.mxu0 0.0
  %617 = vmatprep.subr.mxu0 0.0
  %618 = vmatpush1.xpose.msra.mxu0 0.0
  %619 = vmatprep.subr.mxu0 0.0
  %620 = vmatpush1.xpose.msra.mxu0 0.0
  %621 = vmatprep.subr.mxu0 0.0
  %622 = vmatpush1.xpose.msra.mxu0 0.0
  %623 = vmatprep.subr.mxu0 0.0
  %624 = vmatpush1.xpose.msra.mxu0 0.0
  %625 = vmatprep.subr.mxu0 0.0
  %626 = vmatpush1.xpose.msra.mxu0 0.0
  %627 = vmatprep.subr.mxu0 0.0
  %628 = vmatpush1.xpose.msra.mxu0 0.0
  %629 = vmatprep.subr.mxu0 0.0
  %630 = vmatpush1.xpose.msra.mxu0 0.0
  %631 = vmatprep.subr.mxu0 0.0
  %632 = vmatpush1.xpose.msra.mxu0 0.0
  %633 = vmatprep.subr.mxu0 0.0
  %634 = vmatpush1.xpose.msra.mxu0 0.0
  %635 = vmatprep.subr.mxu0 0.0
  %636 = vmatpush1.xpose.msra.mxu0 0.0
  %637 = vmatprep.subr.mxu0 0.0
  %638 = vmatpush1.xpose.msra.mxu0 0.0
  %639 = vmatprep.subr.mxu0 0.0
  %640 = vmatpush1.xpose.msra.mxu0 0.0
  %641 = vmatprep.subr.mxu0 0.0
  %642 = vmatpush1.xpose.msra.mxu0 0.0
  %643 = vmatprep.subr.mxu0 0.0
  %644 = vmatpush1.xpose.msra.mxu0 0.0
  %645 = vmatprep.subr.mxu0 0.0
  %646 = vmatpush1.xpose.msra.mxu0 0.0
  %647 = vmatprep.subr.mxu0 0.0
  %648 = vmatpush1.xpose.msra.mxu0 0.0
  %649 = vmatprep.subr.mxu0 0.0
  %650 = vmatpush1.xpose.msra.mxu0 0.0
  %651 = vmatprep.subr.mxu0 0.0
  %652 = vmatpush1.xpose.msra.mxu0 0.0
  %653 = vmatprep.subr.mxu0 0.0
  %654 = vmatpush1.xpose.msra.mxu0 0.0
  %655 = vmatprep.subr.mxu0 0.0
  %656 = vmatpush1.xpose.msra.mxu0 0.0
  %657 = vmatprep.subr.mxu0 0.0
  %658 = vmatpush1.xpose.msra.mxu0 0.0
  %659 = vmatprep.subr.mxu0 0.0
  %660 = vmatpush1.xpose.msra.mxu0 0.0
  %661 = vmatprep.subr.mxu0 0.0
  %662 = vmatpush1.xpose.msra.mxu0 0.0
  %663 = vmatprep.subr.mxu0 0.0
  %664 = vmatpush1.xpose.msra.mxu0 0.0
  %665 = vmatprep.subr.mxu0 0.0
  %666 = vmatpush1.xpose.msra.mxu0 0.0
  %667 = vmatprep.mubr.f32.mxu0 0.0
  %668 = vmatmul.mubr.f32.gmra.mrb[0].mxu0 %v599
  %v669 = vpop.f32.mrb[0].mxu0
  %v670 = vadd.f32 0.0, %v669
  %v671 = vpop.f32.mrb[0].mxu0
  %672 = vdwg.mxu0
  %v673 = vmul.f32 %v592, 0.35355338
  %v674 = vmul.f32 %v670, 0.35355338
  %v675 = vsel %vm187, %v673, -inf
  %676 = vmax.xlane.f32.xlu0 %v675
  %v677 = vpop.xlane.xlu0 %676
  %v678 = vsel %vm187, %v674, -inf
  %679 = vmax.xlane.f32.xlu0 %v678
  %v680 = vpop.xlane.xlu0 %679
  %v681 = vsub.f32 %v673, %v677
  %v682 = vsub.f32 %v674, %v680
  %v683 = vmul.f32 %v681, 1.442695
  %v684 = vpow.pop %v683
  %v685 = vmul.f32 %v682, 1.442695
  %v686 = vpow.pop %v685
  %v687 = vsel %vm187, %v684, 0.0
  %688 = vadd.xlane.f32.xlu0 %v687
  %v689 = vpop.xlane.xlu0 %688
  %v690 = vsel %vm187, %v686, 0.0
  %691 = vadd.xlane.f32.xlu0 %v690
  %v692 = vpop.xlane.xlu0 %691
  %v693 = vrcp.pop %v689
  %v694 = vrcp.pop %v692
  %v695 = vmul.f32 %v684, %v693
  %v696 = vmul.f32 %v686, %v694
  %697 = vrot.lane.b32.xlu0 %v178, 56
  %v698 = vpop.permute.xlu0 %697
  %v701 = vsel %vm187, %v695, 0
  %703 = vmatprep.subr.mxu0 0.0
  %704 = vmatpush1.msra.mxu0 %v698
  %705 = vmatprep.subr.mxu0 0.0
  %706 = vmatpush1.msra.mxu0 0.0
  %707 = vmatprep.subr.mxu0 0.0
  %708 = vmatpush1.msra.mxu0 0.0
  %709 = vmatprep.subr.mxu0 0.0
  %710 = vmatpush1.msra.mxu0 0.0
  %711 = vmatprep.subr.mxu0 0.0
  %712 = vmatpush1.msra.mxu0 0.0
  %713 = vmatprep.subr.mxu0 0.0
  %714 = vmatpush1.msra.mxu0 0.0
  %715 = vmatprep.subr.mxu0 0.0
  %716 = vmatpush1.msra.mxu0 0.0
  %717 = vmatprep.subr.mxu0 0.0
  %718 = vmatpush1.msra.mxu0 0.0
  %719 = vmatprep.subr.mxu0 0.0
  %720 = vmatpush1.msra.mxu0 0.0
  %721 = vmatprep.subr.mxu0 0.0
  %722 = vmatpush1.msra.mxu0 0.0
  %723 = vmatprep.subr.mxu0 0.0
  %724 = vmatpush1.msra.mxu0 0.0
  %725 = vmatprep.subr.mxu0 0.0
  %726 = vmatpush1.msra.mxu0 0.0
  %727 = vmatprep.subr.mxu0 0.0
  %728 = vmatpush1.msra.mxu0 0.0
  %729 = vmatprep.subr.mxu0 0.0
  %730 = vmatpush1.msra.mxu0 0.0
  %731 = vmatprep.subr.mxu0 0.0
  %732 = vmatpush1.msra.mxu0 0.0
  %733 = vmatprep.subr.mxu0 0.0
  %734 = vmatpush1.msra.mxu0 0.0
  %735 = vmatprep.subr.mxu0 0.0
  %736 = vmatpush1.msra.mxu0 0.0
  %737 = vmatprep.subr.mxu0 0.0
  %738 = vmatpush1.msra.mxu0 0.0
  %739 = vmatprep.subr.mxu0 0.0
  %740 = vmatpush1.msra.mxu0 0.0
  %741 = vmatprep.subr.mxu0 0.0
  %742 = vmatpush1.msra.mxu0 0.0
  %743 = vmatprep.subr.mxu0 0.0
  %744 = vmatpush1.msra.mxu0 0.0
  %745 = vmatprep.subr.mxu0 0.0
  %746 = vmatpush1.msra.mxu0 0.0
  %747 = vmatprep.subr.mxu0 0.0
  %748 = vmatpush1.msra.mxu0 0.0
  %749 = vmatprep.subr.mxu0 0.0
  %750 = vmatpush1.msra.mxu0 0.0
  %751 = vmatprep.subr.mxu0 0.0
  %752 = vmatpush1.msra.mxu0 0.0
  %753 = vmatprep.subr.mxu0 0.0
  %754 = vmatpush1.msra.mxu0 0.0
  %755 = vmatprep.subr.mxu0 0.0
  %756 = vmatpush1.msra.mxu0 0.0
  %757 = vmatprep.subr.mxu0 0.0
  %758 = vmatpush1.msra.mxu0 0.0
  %759 = vmatprep.subr.mxu0 0.0
  %760 = vmatpush1.msra.mxu0 0.0
  %761 = vmatprep.subr.mxu0 0.0
  %762 = vmatpush1.msra.mxu0 0.0
  %763 = vmatprep.subr.mxu0 0.0
  %764 = vmatpush1.msra.mxu0 0.0
  %765 = vmatprep.subr.mxu0 0.0
  %766 = vmatpush1.msra.mxu0 0.0
  %767 = vmatprep.mubr.f32.mxu0 0.0
  %768 = vmatmul.mubr.f32.gmra.mrb[0].mxu0 %v701
  %v769 = vpop.f32.mrb[0].mxu0
  %v770 = vadd.f32 0.0, %v769
  %v771 = vpop.f32.mrb[0].mxu0
  %772 = vdwg.mxu0
  %773 = vrot.lane.b32.xlu0 %v181, 56
  %v774 = vpop.permute.xlu0 %773
  %v777 = vsel %vm187, %v696, 0
  %779 = vmatprep.subr.mxu0 0.0
  %780 = vmatpush1.msra.mxu0 %v774
  %781 = vmatprep.subr.mxu0 0.0
  %782 = vmatpush1.msra.mxu0 0.0
  %783 = vmatprep.subr.mxu0 0.0
  %784 = vmatpush1.msra.mxu0 0.0
  %785 = vmatprep.subr.mxu0 0.0
  %786 = vmatpush1.msra.mxu0 0.0
  %787 = vmatprep.subr.mxu0 0.0
  %788 = vmatpush1.msra.mxu0 0.0
  %789 = vmatprep.subr.mxu0 0.0
  %790 = vmatpush1.msra.mxu0 0.0
  %791 = vmatprep.subr.mxu0 0.0
  %792 = vmatpush1.msra.mxu0 0.0
  %793 = vmatprep.subr.mxu0 0.0
  %794 = vmatpush1.msra.mxu0 0.0
  %795 = vmatprep.subr.mxu0 0.0
  %796 = vmatpush1.msra.mxu0 0.0
  %797 = vmatprep.subr.mxu0 0.0
  %798 = vmatpush1.msra.mxu0 0.0
  %799 = vmatprep.subr.mxu0 0.0
  %800 = vmatpush1.msra.mxu0 0.0
  %801 = vmatprep.subr.mxu0 0.0
  %802 = vmatpush1.msra.mxu0 0.0
  %803 = vmatprep.subr.mxu0 0.0
  %804 = vmatpush1.msra.mxu0 0.0
  %805 = vmatprep.subr.mxu0 0.0
  %806 = vmatpush1.msra.mxu0 0.0
  %807 = vmatprep.subr.mxu0 0.0
  %808 = vmatpush1.msra.mxu0 0.0
  %809 = vmatprep.subr.mxu0 0.0
  %810 = vmatpush1.msra.mxu0 0.0
  %811 = vmatprep.subr.mxu0 0.0
  %812 = vmatpush1.msra.mxu0 0.0
  %813 = vmatprep.subr.mxu0 0.0
  %814 = vmatpush1.msra.mxu0 0.0
  %815 = vmatprep.subr.mxu0 0.0
  %816 = vmatpush1.msra.mxu0 0.0
  %817 = vmatprep.subr.mxu0 0.0
  %818 = vmatpush1.msra.mxu0 0.0
  %819 = vmatprep.subr.mxu0 0.0
  %820 = vmatpush1.msra.mxu0 0.0
  %821 = vmatprep.subr.mxu0 0.0
  %822 = vmatpush1.msra.mxu0 0.0
  %823 = vmatprep.subr.mxu0 0.0
  %824 = vmatpush1.msra.mxu0 0.0
  %825 = vmatprep.subr.mxu0 0.0
  %826 = vmatpush1.msra.mxu0 0.0
  %827 = vmatprep.subr.mxu0 0.0
  %828 = vmatpush1.msra.mxu0 0.0
  %829 = vmatprep.subr.mxu0 0.0
  %830 = vmatpush1.msra.mxu0 0.0
  %831 = vmatprep.subr.mxu0 0.0
  %832 = vmatpush1.msra.mxu0 0.0
  %833 = vmatprep.subr.mxu0 0.0
  %834 = vmatpush1.msra.mxu0 0.0
  %835 = vmatprep.subr.mxu0 0.0
  %836 = vmatpush1.msra.mxu0 0.0
  %837 = vmatprep.subr.mxu0 0.0
  %838 = vmatpush1.msra.mxu0 0.0
  %839 = vmatprep.subr.mxu0 0.0
  %840 = vmatpush1.msra.mxu0 0.0
  %841 = vmatprep.subr.mxu0 0.0
  %842 = vmatpush1.msra.mxu0 0.0
  %843 = vmatprep.mubr.f32.mxu0 0.0
  %844 = vmatmul.mubr.f32.gmra.mrb[0].mxu0 %v777
  %v845 = vpop.f32.mrb[0].mxu0
  %v846 = vadd.f32 0.0, %v845
  %v847 = vpop.f32.mrb[0].mxu0
  %848 = vdwg.mxu0
  %851 = vrot.lane.b32.xlu0 %v770, 8
  %v852 = vpop.permute.xlu0 %851
  %853 = vrot.lane.b32.xlu0 %v846, 8
  %v854 = vpop.permute.xlu0 %853
  %vm857 = vcmask 130112
  %858 = vst.msk [vmem:[#allocation2] sm:$0xff] %vm857, %v852
  %859 = vst.msk [vmem:[#allocation2 + $0x8] sm:$0xff] %vm857, %v854
  %860 = vrot.lane.b32.xlu0 %v178, 112
  %v861 = vpop.permute.xlu0 %860
  %862 = vrot.lane.b32.xlu0 %v178, 80
  %v863 = vpop.permute.xlu0 %862
  %v864 = vsel %vm187, %v861, 0
  %v866 = vsel %vm187, %v863, 0
  %868 = vmatprep.subr.mxu0 0.0
  %869 = vmatpush1.xpose.msra.mxu0 %v866
  %870 = vmatprep.subr.mxu0 0.0
  %871 = vmatpush1.xpose.msra.mxu0 0.0
  %872 = vmatprep.subr.mxu0 0.0
  %873 = vmatpush1.xpose.msra.mxu0 0.0
  %874 = vmatprep.subr.mxu0 0.0
  %875 = vmatpush1.xpose.msra.mxu0 0.0
  %876 = vmatprep.subr.mxu0 0.0
  %877 = vmatpush1.xpose.msra.mxu0 0.0
  %878 = vmatprep.subr.mxu0 0.0
  %879 = vmatpush1.xpose.msra.mxu0 0.0
  %880 = vmatprep.subr.mxu0 0.0
  %881 = vmatpush1.xpose.msra.mxu0 0.0
  %882 = vmatprep.subr.mxu0 0.0
  %883 = vmatpush1.xpose.msra.mxu0 0.0
  %884 = vmatprep.subr.mxu0 0.0
  %885 = vmatpush1.xpose.msra.mxu0 0.0
  %886 = vmatprep.subr.mxu0 0.0
  %887 = vmatpush1.xpose.msra.mxu0 0.0
  %888 = vmatprep.subr.mxu0 0.0
  %889 = vmatpush1.xpose.msra.mxu0 0.0
  %890 = vmatprep.subr.mxu0 0.0
  %891 = vmatpush1.xpose.msra.mxu0 0.0
  %892 = vmatprep.subr.mxu0 0.0
  %893 = vmatpush1.xpose.msra.mxu0 0.0
  %894 = vmatprep.subr.mxu0 0.0
  %895 = vmatpush1.xpose.msra.mxu0 0.0
  %896 = vmatprep.subr.mxu0 0.0
  %897 = vmatpush1.xpose.msra.mxu0 0.0
  %898 = vmatprep.subr.mxu0 0.0
  %899 = vmatpush1.xpose.msra.mxu0 0.0
  %900 = vmatprep.subr.mxu0 0.0
  %901 = vmatpush1.xpose.msra.mxu0 0.0
  %902 = vmatprep.subr.mxu0 0.0
  %903 = vmatpush1.xpose.msra.mxu0 0.0
  %904 = vmatprep.subr.mxu0 0.0
  %905 = vmatpush1.xpose.msra.mxu0 0.0
  %906 = vmatprep.subr.mxu0 0.0
  %907 = vmatpush1.xpose.msra.mxu0 0.0
  %908 = vmatprep.subr.mxu0 0.0
  %909 = vmatpush1.xpose.msra.mxu0 0.0
  %910 = vmatprep.subr.mxu0 0.0
  %911 = vmatpush1.xpose.msra.mxu0 0.0
  %912 = vmatprep.subr.mxu0 0.0
  %913 = vmatpush1.xpose.msra.mxu0 0.0
  %914 = vmatprep.subr.mxu0 0.0
  %915 = vmatpush1.xpose.msra.mxu0 0.0
  %916 = vmatprep.subr.mxu0 0.0
  %917 = vmatpush1.xpose.msra.mxu0 0.0
  %918 = vmatprep.subr.mxu0 0.0
  %919 = vmatpush1.xpose.msra.mxu0 0.0
  %920 = vmatprep.subr.mxu0 0.0
  %921 = vmatpush1.xpose.msra.mxu0 0.0
  %922 = vmatprep.subr.mxu0 0.0
  %923 = vmatpush1.xpose.msra.mxu0 0.0
  %924 = vmatprep.subr.mxu0 0.0
  %925 = vmatpush1.xpose.msra.mxu0 0.0
  %926 = vmatprep.subr.mxu0 0.0
  %927 = vmatpush1.xpose.msra.mxu0 0.0
  %928 = vmatprep.subr.mxu0 0.0
  %929 = vmatpush1.xpose.msra.mxu0 0.0
  %930 = vmatprep.subr.mxu0 0.0
  %931 = vmatpush1.xpose.msra.mxu0 0.0
  %932 = vmatprep.mubr.f32.mxu0 0.0
  %933 = vmatmul.mubr.f32.gmra.mrb[0].mxu0 %v864
  %v934 = vpop.f32.mrb[0].mxu0
  %v935 = vadd.f32 0.0, %v934
  %v936 = vpop.f32.mrb[0].mxu0
  %937 = vdwg.mxu0
  %938 = vrot.lane.b32.xlu0 %v181, 112
  %v939 = vpop.permute.xlu0 %938
  %940 = vrot.lane.b32.xlu0 %v181, 80
  %v941 = vpop.permute.xlu0 %940
  %v942 = vsel %vm187, %v939, 0
  %v944 = vsel %vm187, %v941, 0
  %946 = vmatprep.subr.mxu0 0.0
  %947 = vmatpush1.xpose.msra.mxu0 %v944
  %948 = vmatprep.subr.mxu0 0.0
  %949 = vmatpush1.xpose.msra.mxu0 0.0
  %950 = vmatprep.subr.mxu0 0.0
  %951 = vmatpush1.xpose.msra.mxu0 0.0
  %952 = vmatprep.subr.mxu0 0.0
  %953 = vmatpush1.xpose.msra.mxu0 0.0
  %954 = vmatprep.subr.mxu0 0.0
  %955 = vmatpush1.xpose.msra.mxu0 0.0
  %956 = vmatprep.subr.mxu0 0.0
  %957 = vmatpush1.xpose.msra.mxu0 0.0
  %958 = vmatprep.subr.mxu0 0.0
  %959 = vmatpush1.xpose.msra.mxu0 0.0
  %960 = vmatprep.subr.mxu0 0.0
  %961 = vmatpush1.xpose.msra.mxu0 0.0
  %962 = vmatprep.subr.mxu0 0.0
  %963 = vmatpush1.xpose.msra.mxu0 0.0
  %964 = vmatprep.subr.mxu0 0.0
  %965 = vmatpush1.xpose.msra.mxu0 0.0
  %966 = vmatprep.subr.mxu0 0.0
  %967 = vmatpush1.xpose.msra.mxu0 0.0
  %968 = vmatprep.subr.mxu0 0.0
  %969 = vmatpush1.xpose.msra.mxu0 0.0
  %970 = vmatprep.subr.mxu0 0.0
  %971 = vmatpush1.xpose.msra.mxu0 0.0
  %972 = vmatprep.subr.mxu0 0.0
  %973 = vmatpush1.xpose.msra.mxu0 0.0
  %974 = vmatprep.subr.mxu0 0.0
  %975 = vmatpush1.xpose.msra.mxu0 0.0
  %976 = vmatprep.subr.mxu0 0.0
  %977 = vmatpush1.xpose.msra.mxu0 0.0
  %978 = vmatprep.subr.mxu0 0.0
  %979 = vmatpush1.xpose.msra.mxu0 0.0
  %980 = vmatprep.subr.mxu0 0.0
  %981 = vmatpush1.xpose.msra.mxu0 0.0
  %982 = vmatprep.subr.mxu0 0.0
  %983 = vmatpush1.xpose.msra.mxu0 0.0
  %984 = vmatprep.subr.mxu0 0.0
  %985 = vmatpush1.xpose.msra.mxu0 0.0
  %986 = vmatprep.subr.mxu0 0.0
  %987 = vmatpush1.xpose.msra.mxu0 0.0
  %988 = vmatprep.subr.mxu0 0.0
  %989 = vmatpush1.xpose.msra.mxu0 0.0
  %990 = vmatprep.subr.mxu0 0.0
  %991 = vmatpush1.xpose.msra.mxu0 0.0
  %992 = vmatprep.subr.mxu0 0.0
  %993 = vmatpush1.xpose.msra.mxu0 0.0
  %994 = vmatprep.subr.mxu0 0.0
  %995 = vmatpush1.xpose.msra.mxu0 0.0
  %996 = vmatprep.subr.mxu0 0.0
  %997 = vmatpush1.xpose.msra.mxu0 0.0
  %998 = vmatprep.subr.mxu0 0.0
  %999 = vmatpush1.xpose.msra.mxu0 0.0
  %1000 = vmatprep.subr.mxu0 0.0
  %1001 = vmatpush1.xpose.msra.mxu0 0.0
  %1002 = vmatprep.subr.mxu0 0.0
  %1003 = vmatpush1.xpose.msra.mxu0 0.0
  %1004 = vmatprep.subr.mxu0 0.0
  %1005 = vmatpush1.xpose.msra.mxu0 0.0
  %1006 = vmatprep.subr.mxu0 0.0
  %1007 = vmatpush1.xpose.msra.mxu0 0.0
  %1008 = vmatprep.subr.mxu0 0.0
  %1009 = vmatpush1.xpose.msra.mxu0 0.0
  %1010 = vmatprep.mubr.f32.mxu0 0.0
  %1011 = vmatmul.mubr.f32.gmra.mrb[0].mxu0 %v942
  %v1012 = vpop.f32.mrb[0].mxu0
  %v1013 = vadd.f32 0.0, %v1012
  %v1014 = vpop.f32.mrb[0].mxu0
  %1015 = vdwg.mxu0
  %v1016 = vmul.f32 %v935, 0.35355338
  %v1017 = vmul.f32 %v1013, 0.35355338
  %v1018 = vsel %vm187, %v1016, -inf
  %1019 = vmax.xlane.f32.xlu0 %v1018
  %v1020 = vpop.xlane.xlu0 %1019
  %v1021 = vsel %vm187, %v1017, -inf
  %1022 = vmax.xlane.f32.xlu0 %v1021
  %v1023 = vpop.xlane.xlu0 %1022
  %v1024 = vsub.f32 %v1016, %v1020
  %v1025 = vsub.f32 %v1017, %v1023
  %v1026 = vmul.f32 %v1024, 1.442695
  %v1027 = vpow.pop %v1026
  %v1028 = vmul.f32 %v1025, 1.442695
  %v1029 = vpow.pop %v1028
  %v1030 = vsel %vm187, %v1027, 0.0
  %1031 = vadd.xlane.f32.xlu0 %v1030
  %v1032 = vpop.xlane.xlu0 %1031
  %v1033 = vsel %vm187, %v1029, 0.0
  %1034 = vadd.xlane.f32.xlu0 %v1033
  %v1035 = vpop.xlane.xlu0 %1034
  %v1036 = vrcp.pop %v1032
  %v1037 = vrcp.pop %v1035
  %v1038 = vmul.f32 %v1027, %v1036
  %v1039 = vmul.f32 %v1029, %v1037
  %1040 = vrot.lane.b32.xlu0 %v178, 48
  %v1041 = vpop.permute.xlu0 %1040
  %v1044 = vsel %vm187, %v1038, 0
  %1046 = vmatprep.subr.mxu0 0.0
  %1047 = vmatpush1.msra.mxu0 %v1041
  %1048 = vmatprep.subr.mxu0 0.0
  %1049 = vmatpush1.msra.mxu0 0.0
  %1050 = vmatprep.subr.mxu0 0.0
  %1051 = vmatpush1.msra.mxu0 0.0
  %1052 = vmatprep.subr.mxu0 0.0
  %1053 = vmatpush1.msra.mxu0 0.0
  %1054 = vmatprep.subr.mxu0 0.0
  %1055 = vmatpush1.msra.mxu0 0.0
  %1056 = vmatprep.subr.mxu0 0.0
  %1057 = vmatpush1.msra.mxu0 0.0
  %1058 = vmatprep.subr.mxu0 0.0
  %1059 = vmatpush1.msra.mxu0 0.0
  %1060 = vmatprep.subr.mxu0 0.0
  %1061 = vmatpush1.msra.mxu0 0.0
  %1062 = vmatprep.subr.mxu0 0.0
  %1063 = vmatpush1.msra.mxu0 0.0
  %1064 = vmatprep.subr.mxu0 0.0
  %1065 = vmatpush1.msra.mxu0 0.0
  %1066 = vmatprep.subr.mxu0 0.0
  %1067 = vmatpush1.msra.mxu0 0.0
  %1068 = vmatprep.subr.mxu0 0.0
  %1069 = vmatpush1.msra.mxu0 0.0
  %1070 = vmatprep.subr.mxu0 0.0
  %1071 = vmatpush1.msra.mxu0 0.0
  %1072 = vmatprep.subr.mxu0 0.0
  %1073 = vmatpush1.msra.mxu0 0.0
  %1074 = vmatprep.subr.mxu0 0.0
  %1075 = vmatpush1.msra.mxu0 0.0
  %1076 = vmatprep.subr.mxu0 0.0
  %1077 = vmatpush1.msra.mxu0 0.0
  %1078 = vmatprep.subr.mxu0 0.0
  %1079 = vmatpush1.msra.mxu0 0.0
  %1080 = vmatprep.subr.mxu0 0.0
  %1081 = vmatpush1.msra.mxu0 0.0
  %1082 = vmatprep.subr.mxu0 0.0
  %1083 = vmatpush1.msra.mxu0 0.0
  %1084 = vmatprep.subr.mxu0 0.0
  %1085 = vmatpush1.msra.mxu0 0.0
  %1086 = vmatprep.subr.mxu0 0.0
  %1087 = vmatpush1.msra.mxu0 0.0
  %1088 = vmatprep.subr.mxu0 0.0
  %1089 = vmatpush1.msra.mxu0 0.0
  %1090 = vmatprep.subr.mxu0 0.0
  %1091 = vmatpush1.msra.mxu0 0.0
  %1092 = vmatprep.subr.mxu0 0.0
  %1093 = vmatpush1.msra.mxu0 0.0
  %1094 = vmatprep.subr.mxu0 0.0
  %1095 = vmatpush1.msra.mxu0 0.0
  %1096 = vmatprep.subr.mxu0 0.0
  %1097 = vmatpush1.msra.mxu0 0.0
  %1098 = vmatprep.subr.mxu0 0.0
  %1099 = vmatpush1.msra.mxu0 0.0
  %1100 = vmatprep.subr.mxu0 0.0
  %1101 = vmatpush1.msra.mxu0 0.0
  %1102 = vmatprep.subr.mxu0 0.0
  %1103 = vmatpush1.msra.mxu0 0.0
  %1104 = vmatprep.subr.mxu0 0.0
  %1105 = vmatpush1.msra.mxu0 0.0
  %1106 = vmatprep.subr.mxu0 0.0
  %1107 = vmatpush1.msra.mxu0 0.0
  %1108 = vmatprep.subr.mxu0 0.0
  %1109 = vmatpush1.msra.mxu0 0.0
  %1110 = vmatprep.mubr.f32.mxu0 0.0
  %1111 = vmatmul.mubr.f32.gmra.mrb[0].mxu0 %v1044
  %v1112 = vpop.f32.mrb[0].mxu0
  %v1113 = vadd.f32 0.0, %v1112
  %v1114 = vpop.f32.mrb[0].mxu0
  %1115 = vdwg.mxu0
  %1116 = vrot.lane.b32.xlu0 %v181, 48
  %v1117 = vpop.permute.xlu0 %1116
  %v1120 = vsel %vm187, %v1039, 0
  %1122 = vmatprep.subr.mxu0 0.0
  %1123 = vmatpush1.msra.mxu0 %v1117
  %1124 = vmatprep.subr.mxu0 0.0
  %1125 = vmatpush1.msra.mxu0 0.0
  %1126 = vmatprep.subr.mxu0 0.0
  %1127 = vmatpush1.msra.mxu0 0.0
  %1128 = vmatprep.subr.mxu0 0.0
  %1129 = vmatpush1.msra.mxu0 0.0
  %1130 = vmatprep.subr.mxu0 0.0
  %1131 = vmatpush1.msra.mxu0 0.0
  %1132 = vmatprep.subr.mxu0 0.0
  %1133 = vmatpush1.msra.mxu0 0.0
  %1134 = vmatprep.subr.mxu0 0.0
  %1135 = vmatpush1.msra.mxu0 0.0
  %1136 = vmatprep.subr.mxu0 0.0
  %1137 = vmatpush1.msra.mxu0 0.0
  %1138 = vmatprep.subr.mxu0 0.0
  %1139 = vmatpush1.msra.mxu0 0.0
  %1140 = vmatprep.subr.mxu0 0.0
  %1141 = vmatpush1.msra.mxu0 0.0
  %1142 = vmatprep.subr.mxu0 0.0
  %1143 = vmatpush1.msra.mxu0 0.0
  %1144 = vmatprep.subr.mxu0 0.0
  %1145 = vmatpush1.msra.mxu0 0.0
  %1146 = vmatprep.subr.mxu0 0.0
  %1147 = vmatpush1.msra.mxu0 0.0
  %1148 = vmatprep.subr.mxu0 0.0
  %1149 = vmatpush1.msra.mxu0 0.0
  %1150 = vmatprep.subr.mxu0 0.0
  %1151 = vmatpush1.msra.mxu0 0.0
  %1152 = vmatprep.subr.mxu0 0.0
  %1153 = vmatpush1.msra.mxu0 0.0
  %1154 = vmatprep.subr.mxu0 0.0
  %1155 = vmatpush1.msra.mxu0 0.0
  %1156 = vmatprep.subr.mxu0 0.0
  %1157 = vmatpush1.msra.mxu0 0.0
  %1158 = vmatprep.subr.mxu0 0.0
  %1159 = vmatpush1.msra.mxu0 0.0
  %1160 = vmatprep.subr.mxu0 0.0
  %1161 = vmatpush1.msra.mxu0 0.0
  %1162 = vmatprep.subr.mxu0 0.0
  %1163 = vmatpush1.msra.mxu0 0.0
  %1164 = vmatprep.subr.mxu0 0.0
  %1165 = vmatpush1.msra.mxu0 0.0
  %1166 = vmatprep.subr.mxu0 0.0
  %1167 = vmatpush1.msra.mxu0 0.0
  %1168 = vmatprep.subr.mxu0 0.0
  %1169 = vmatpush1.msra.mxu0 0.0
  %1170 = vmatprep.subr.mxu0 0.0
  %1171 = vmatpush1.msra.mxu0 0.0
  %1172 = vmatprep.subr.mxu0 0.0
  %1173 = vmatpush1.msra.mxu0 0.0
  %1174 = vmatprep.subr.mxu0 0.0
  %1175 = vmatpush1.msra.mxu0 0.0
  %1176 = vmatprep.subr.mxu0 0.0
  %1177 = vmatpush1.msra.mxu0 0.0
  %1178 = vmatprep.subr.mxu0 0.0
  %1179 = vmatpush1.msra.mxu0 0.0
  %1180 = vmatprep.subr.mxu0 0.0
  %1181 = vmatpush1.msra.mxu0 0.0
  %1182 = vmatprep.subr.mxu0 0.0
  %1183 = vmatpush1.msra.mxu0 0.0
  %1184 = vmatprep.subr.mxu0 0.0
  %1185 = vmatpush1.msra.mxu0 0.0
  %1186 = vmatprep.mubr.f32.mxu0 0.0
  %1187 = vmatmul.mubr.f32.gmra.mrb[0].mxu0 %v1120
  %v1188 = vpop.f32.mrb[0].mxu0
  %v1189 = vadd.f32 0.0, %v1188
  %v1190 = vpop.f32.mrb[0].mxu0
  %1191 = vdwg.mxu0
  %1194 = vrot.lane.b32.xlu0 %v1113, 16
  %v1195 = vpop.permute.xlu0 %1194
  %1196 = vrot.lane.b32.xlu0 %v1189, 16
  %v1197 = vpop.permute.xlu0 %1196
  %vm1200 = vcmask 195712
  %1201 = vst.msk [vmem:[#allocation2] sm:$0xff] %vm1200, %v1195
  %1202 = vst.msk [vmem:[#allocation2 + $0x8] sm:$0xff] %vm1200, %v1197
  %1203 = vrot.lane.b32.xlu0 %v178, 104
  %v1204 = vpop.permute.xlu0 %1203
  %1205 = vrot.lane.b32.xlu0 %v178, 72
  %v1206 = vpop.permute.xlu0 %1205
  %v1207 = vsel %vm187, %v1204, 0
  %v1209 = vsel %vm187, %v1206, 0
  %1211 = vmatprep.subr.mxu0 0.0
  %1212 = vmatpush1.xpose.msra.mxu0 %v1209
  %1213 = vmatprep.subr.mxu0 0.0
  %1214 = vmatpush1.xpose.msra.mxu0 0.0
  %1215 = vmatprep.subr.mxu0 0.0
  %1216 = vmatpush1.xpose.msra.mxu0 0.0
  %1217 = vmatprep.subr.mxu0 0.0
  %1218 = vmatpush1.xpose.msra.mxu0 0.0
  %1219 = vmatprep.subr.mxu0 0.0
  %1220 = vmatpush1.xpose.msra.mxu0 0.0
  %1221 = vmatprep.subr.mxu0 0.0
  %1222 = vmatpush1.xpose.msra.mxu0 0.0
  %1223 = vmatprep.subr.mxu0 0.0
  %1224 = vmatpush1.xpose.msra.mxu0 0.0
  %1225 = vmatprep.subr.mxu0 0.0
  %1226 = vmatpush1.xpose.msra.mxu0 0.0
  %1227 = vmatprep.subr.mxu0 0.0
  %1228 = vmatpush1.xpose.msra.mxu0 0.0
  %1229 = vmatprep.subr.mxu0 0.0
  %1230 = vmatpush1.xpose.msra.mxu0 0.0
  %1231 = vmatprep.subr.mxu0 0.0
  %1232 = vmatpush1.xpose.msra.mxu0 0.0
  %1233 = vmatprep.subr.mxu0 0.0
  %1234 = vmatpush1.xpose.msra.mxu0 0.0
  %1235 = vmatprep.subr.mxu0 0.0
  %1236 = vmatpush1.xpose.msra.mxu0 0.0
  %1237 = vmatprep.subr.mxu0 0.0
  %1238 = vmatpush1.xpose.msra.mxu0 0.0
  %1239 = vmatprep.subr.mxu0 0.0
  %1240 = vmatpush1.xpose.msra.mxu0 0.0
  %1241 = vmatprep.subr.mxu0 0.0
  %1242 = vmatpush1.xpose.msra.mxu0 0.0
  %1243 = vmatprep.subr.mxu0 0.0
  %1244 = vmatpush1.xpose.msra.mxu0 0.0
  %1245 = vmatprep.subr.mxu0 0.0
  %1246 = vmatpush1.xpose.msra.mxu0 0.0
  %1247 = vmatprep.subr.mxu0 0.0
  %1248 = vmatpush1.xpose.msra.mxu0 0.0
  %1249 = vmatprep.subr.mxu0 0.0
  %1250 = vmatpush1.xpose.msra.mxu0 0.0
  %1251 = vmatprep.subr.mxu0 0.0
  %1252 = vmatpush1.xpose.msra.mxu0 0.0
  %1253 = vmatprep.subr.mxu0 0.0
  %1254 = vmatpush1.xpose.msra.mxu0 0.0
  %1255 = vmatprep.subr.mxu0 0.0
  %1256 = vmatpush1.xpose.msra.mxu0 0.0
  %1257 = vmatprep.subr.mxu0 0.0
  %1258 = vmatpush1.xpose.msra.mxu0 0.0
  %1259 = vmatprep.subr.mxu0 0.0
  %1260 = vmatpush1.xpose.msra.mxu0 0.0
  %1261 = vmatprep.subr.mxu0 0.0
  %1262 = vmatpush1.xpose.msra.mxu0 0.0
  %1263 = vmatprep.subr.mxu0 0.0
  %1264 = vmatpush1.xpose.msra.mxu0 0.0
  %1265 = vmatprep.subr.mxu0 0.0
  %1266 = vmatpush1.xpose.msra.mxu0 0.0
  %1267 = vmatprep.subr.mxu0 0.0
  %1268 = vmatpush1.xpose.msra.mxu0 0.0
  %1269 = vmatprep.subr.mxu0 0.0
  %1270 = vmatpush1.xpose.msra.mxu0 0.0
  %1271 = vmatprep.subr.mxu0 0.0
  %1272 = vmatpush1.xpose.msra.mxu0 0.0
  %1273 = vmatprep.subr.mxu0 0.0
  %1274 = vmatpush1.xpose.msra.mxu0 0.0
  %1275 = vmatprep.mubr.f32.mxu0 0.0
  %1276 = vmatmul.mubr.f32.gmra.mrb[0].mxu0 %v1207
  %v1277 = vpop.f32.mrb[0].mxu0
  %v1278 = vadd.f32 0.0, %v1277
  %v1279 = vpop.f32.mrb[0].mxu0
  %1280 = vdwg.mxu0
  %1281 = vrot.lane.b32.xlu0 %v181, 104
  %v1282 = vpop.permute.xlu0 %1281
  %1283 = vrot.lane.b32.xlu0 %v181, 72
  %v1284 = vpop.permute.xlu0 %1283
  %v1285 = vsel %vm187, %v1282, 0
  %v1287 = vsel %vm187, %v1284, 0
  %1289 = vmatprep.subr.mxu0 0.0
  %1290 = vmatpush1.xpose.msra.mxu0 %v1287
  %1291 = vmatprep.subr.mxu0 0.0
  %1292 = vmatpush1.xpose.msra.mxu0 0.0
  %1293 = vmatprep.subr.mxu0 0.0
  %1294 = vmatpush1.xpose.msra.mxu0 0.0
  %1295 = vmatprep.subr.mxu0 0.0
  %1296 = vmatpush1.xpose.msra.mxu0 0.0
  %1297 = vmatprep.subr.mxu0 0.0
  %1298 = vmatpush1.xpose.msra.mxu0 0.0
  %1299 = vmatprep.subr.mxu0 0.0
  %1300 = vmatpush1.xpose.msra.mxu0 0.0
  %1301 = vmatprep.subr.mxu0 0.0
  %1302 = vmatpush1.xpose.msra.mxu0 0.0
  %1303 = vmatprep.subr.mxu0 0.0
  %1304 = vmatpush1.xpose.msra.mxu0 0.0
  %1305 = vmatprep.subr.mxu0 0.0
  %1306 = vmatpush1.xpose.msra.mxu0 0.0
  %1307 = vmatprep.subr.mxu0 0.0
  %1308 = vmatpush1.xpose.msra.mxu0 0.0
  %1309 = vmatprep.subr.mxu0 0.0
  %1310 = vmatpush1.xpose.msra.mxu0 0.0
  %1311 = vmatprep.subr.mxu0 0.0
  %1312 = vmatpush1.xpose.msra.mxu0 0.0
  %1313 = vmatprep.subr.mxu0 0.0
  %1314 = vmatpush1.xpose.msra.mxu0 0.0
  %1315 = vmatprep.subr.mxu0 0.0
  %1316 = vmatpush1.xpose.msra.mxu0 0.0
  %1317 = vmatprep.subr.mxu0 0.0
  %1318 = vmatpush1.xpose.msra.mxu0 0.0
  %1319 = vmatprep.subr.mxu0 0.0
  %1320 = vmatpush1.xpose.msra.mxu0 0.0
  %1321 = vmatprep.subr.mxu0 0.0
  %1322 = vmatpush1.xpose.msra.mxu0 0.0
  %1323 = vmatprep.subr.mxu0 0.0
  %1324 = vmatpush1.xpose.msra.mxu0 0.0
  %1325 = vmatprep.subr.mxu0 0.0
  %1326 = vmatpush1.xpose.msra.mxu0 0.0
  %1327 = vmatprep.subr.mxu0 0.0
  %1328 = vmatpush1.xpose.msra.mxu0 0.0
  %1329 = vmatprep.subr.mxu0 0.0
  %1330 = vmatpush1.xpose.msra.mxu0 0.0
  %1331 = vmatprep.subr.mxu0 0.0
  %1332 = vmatpush1.xpose.msra.mxu0 0.0
  %1333 = vmatprep.subr.mxu0 0.0
  %1334 = vmatpush1.xpose.msra.mxu0 0.0
  %1335 = vmatprep.subr.mxu0 0.0
  %1336 = vmatpush1.xpose.msra.mxu0 0.0
  %1337 = vmatprep.subr.mxu0 0.0
  %1338 = vmatpush1.xpose.msra.mxu0 0.0
  %1339 = vmatprep.subr.mxu0 0.0
  %1340 = vmatpush1.xpose.msra.mxu0 0.0
  %1341 = vmatprep.subr.mxu0 0.0
  %1342 = vmatpush1.xpose.msra.mxu0 0.0
  %1343 = vmatprep.subr.mxu0 0.0
  %1344 = vmatpush1.xpose.msra.mxu0 0.0
  %1345 = vmatprep.subr.mxu0 0.0
  %1346 = vmatpush1.xpose.msra.mxu0 0.0
  %1347 = vmatprep.subr.mxu0 0.0
  %1348 = vmatpush1.xpose.msra.mxu0 0.0
  %1349 = vmatprep.subr.mxu0 0.0
  %1350 = vmatpush1.xpose.msra.mxu0 0.0
  %1351 = vmatprep.subr.mxu0 0.0
  %1352 = vmatpush1.xpose.msra.mxu0 0.0
  %1353 = vmatprep.mubr.f32.mxu0 0.0
  %1354 = vmatmul.mubr.f32.gmra.mrb[0].mxu0 %v1285
  %v1355 = vpop.f32.mrb[0].mxu0
  %v1356 = vadd.f32 0.0, %v1355
  %v1357 = vpop.f32.mrb[0].mxu0
  %1358 = vdwg.mxu0
  %v1359 = vmul.f32 %v1278, 0.35355338
  %v1360 = vmul.f32 %v1356, 0.35355338
  %v1361 = vsel %vm187, %v1359, -inf
  %1362 = vmax.xlane.f32.xlu0 %v1361
  %v1363 = vpop.xlane.xlu0 %1362
  %v1364 = vsel %vm187, %v1360, -inf
  %1365 = vmax.xlane.f32.xlu0 %v1364
  %v1366 = vpop.xlane.xlu0 %1365
  %v1367 = vsub.f32 %v1359, %v1363
  %v1368 = vsub.f32 %v1360, %v1366
  %v1369 = vmul.f32 %v1367, 1.442695
  %v1370 = vpow.pop %v1369
  %v1371 = vmul.f32 %v1368, 1.442695
  %v1372 = vpow.pop %v1371
  %v1373 = vsel %vm187, %v1370, 0.0
  %1374 = vadd.xlane.f32.xlu0 %v1373
  %v1375 = vpop.xlane.xlu0 %1374
  %v1376 = vsel %vm187, %v1372, 0.0
  %1377 = vadd.xlane.f32.xlu0 %v1376
  %v1378 = vpop.xlane.xlu0 %1377
  %v1379 = vrcp.pop %v1375
  %v1380 = vrcp.pop %v1378
  %v1381 = vmul.f32 %v1370, %v1379
  %v1382 = vmul.f32 %v1372, %v1380
  %1383 = vrot.lane.b32.xlu0 %v178, 40
  %v1384 = vpop.permute.xlu0 %1383
  %v1387 = vsel %vm187, %v1381, 0
  %1389 = vmatprep.subr.mxu0 0.0
  %1390 = vmatpush1.msra.mxu0 %v1384
  %1391 = vmatprep.subr.mxu0 0.0
  %1392 = vmatpush1.msra.mxu0 0.0
  %1393 = vmatprep.subr.mxu0 0.0
  %1394 = vmatpush1.msra.mxu0 0.0
  %1395 = vmatprep.subr.mxu0 0.0
  %1396 = vmatpush1.msra.mxu0 0.0
  %1397 = vmatprep.subr.mxu0 0.0
  %1398 = vmatpush1.msra.mxu0 0.0
  %1399 = vmatprep.subr.mxu0 0.0
  %1400 = vmatpush1.msra.mxu0 0.0
  %1401 = vmatprep.subr.mxu0 0.0
  %1402 = vmatpush1.msra.mxu0 0.0
  %1403 = vmatprep.subr.mxu0 0.0
  %1404 = vmatpush1.msra.mxu0 0.0
  %1405 = vmatprep.subr.mxu0 0.0
  %1406 = vmatpush1.msra.mxu0 0.0
  %1407 = vmatprep.subr.mxu0 0.0
  %1408 = vmatpush1.msra.mxu0 0.0
  %1409 = vmatprep.subr.mxu0 0.0
  %1410 = vmatpush1.msra.mxu0 0.0
  %1411 = vmatprep.subr.mxu0 0.0
  %1412 = vmatpush1.msra.mxu0 0.0
  %1413 = vmatprep.subr.mxu0 0.0
  %1414 = vmatpush1.msra.mxu0 0.0
  %1415 = vmatprep.subr.mxu0 0.0
  %1416 = vmatpush1.msra.mxu0 0.0
  %1417 = vmatprep.subr.mxu0 0.0
  %1418 = vmatpush1.msra.mxu0 0.0
  %1419 = vmatprep.subr.mxu0 0.0
  %1420 = vmatpush1.msra.mxu0 0.0
  %1421 = vmatprep.subr.mxu0 0.0
  %1422 = vmatpush1.msra.mxu0 0.0
  %1423 = vmatprep.subr.mxu0 0.0
  %1424 = vmatpush1.msra.mxu0 0.0
  %1425 = vmatprep.subr.mxu0 0.0
  %1426 = vmatpush1.msra.mxu0 0.0
  %1427 = vmatprep.subr.mxu0 0.0
  %1428 = vmatpush1.msra.mxu0 0.0
  %1429 = vmatprep.subr.mxu0 0.0
  %1430 = vmatpush1.msra.mxu0 0.0
  %1431 = vmatprep.subr.mxu0 0.0
  %1432 = vmatpush1.msra.mxu0 0.0
  %1433 = vmatprep.subr.mxu0 0.0
  %1434 = vmatpush1.msra.mxu0 0.0
  %1435 = vmatprep.subr.mxu0 0.0
  %1436 = vmatpush1.msra.mxu0 0.0
  %1437 = vmatprep.subr.mxu0 0.0
  %1438 = vmatpush1.msra.mxu0 0.0
  %1439 = vmatprep.subr.mxu0 0.0
  %1440 = vmatpush1.msra.mxu0 0.0
  %1441 = vmatprep.subr.mxu0 0.0
  %1442 = vmatpush1.msra.mxu0 0.0
  %1443 = vmatprep.subr.mxu0 0.0
  %1444 = vmatpush1.msra.mxu0 0.0
  %1445 = vmatprep.subr.mxu0 0.0
  %1446 = vmatpush1.msra.mxu0 0.0
  %1447 = vmatprep.subr.mxu0 0.0
  %1448 = vmatpush1.msra.mxu0 0.0
  %1449 = vmatprep.subr.mxu0 0.0
  %1450 = vmatpush1.msra.mxu0 0.0
  %1451 = vmatprep.subr.mxu0 0.0
  %1452 = vmatpush1.msra.mxu0 0.0
  %1453 = vmatprep.mubr.f32.mxu0 0.0
  %1454 = vmatmul.mubr.f32.gmra.mrb[0].mxu0 %v1387
  %v1455 = vpop.f32.mrb[0].mxu0
  %v1456 = vadd.f32 0.0, %v1455
  %v1457 = vpop.f32.mrb[0].mxu0
  %1458 = vdwg.mxu0
  %1459 = vrot.lane.b32.xlu0 %v181, 40
  %v1460 = vpop.permute.xlu0 %1459
  %v1463 = vsel %vm187, %v1382, 0
  %1465 = vmatprep.subr.mxu0 0.0
  %1466 = vmatpush1.msra.mxu0 %v1460
  %1467 = vmatprep.subr.mxu0 0.0
  %1468 = vmatpush1.msra.mxu0 0.0
  %1469 = vmatprep.subr.mxu0 0.0
  %1470 = vmatpush1.msra.mxu0 0.0
  %1471 = vmatprep.subr.mxu0 0.0
  %1472 = vmatpush1.msra.mxu0 0.0
  %1473 = vmatprep.subr.mxu0 0.0
  %1474 = vmatpush1.msra.mxu0 0.0
  %1475 = vmatprep.subr.mxu0 0.0
  %1476 = vmatpush1.msra.mxu0 0.0
  %1477 = vmatprep.subr.mxu0 0.0
  %1478 = vmatpush1.msra.mxu0 0.0
  %1479 = vmatprep.subr.mxu0 0.0
  %1480 = vmatpush1.msra.mxu0 0.0
  %1481 = vmatprep.subr.mxu0 0.0
  %1482 = vmatpush1.msra.mxu0 0.0
  %1483 = vmatprep.subr.mxu0 0.0
  %1484 = vmatpush1.msra.mxu0 0.0
  %1485 = vmatprep.subr.mxu0 0.0
  %1486 = vmatpush1.msra.mxu0 0.0
  %1487 = vmatprep.subr.mxu0 0.0
  %1488 = vmatpush1.msra.mxu0 0.0
  %1489 = vmatprep.subr.mxu0 0.0
  %1490 = vmatpush1.msra.mxu0 0.0
  %1491 = vmatprep.subr.mxu0 0.0
  %1492 = vmatpush1.msra.mxu0 0.0
  %1493 = vmatprep.subr.mxu0 0.0
  %1494 = vmatpush1.msra.mxu0 0.0
  %1495 = vmatprep.subr.mxu0 0.0
  %1496 = vmatpush1.msra.mxu0 0.0
  %1497 = vmatprep.subr.mxu0 0.0
  %1498 = vmatpush1.msra.mxu0 0.0
  %1499 = vmatprep.subr.mxu0 0.0
  %1500 = vmatpush1.msra.mxu0 0.0
  %1501 = vmatprep.subr.mxu0 0.0
  %1502 = vmatpush1.msra.mxu0 0.0
  %1503 = vmatprep.subr.mxu0 0.0
  %1504 = vmatpush1.msra.mxu0 0.0
  %1505 = vmatprep.subr.mxu0 0.0
  %1506 = vmatpush1.msra.mxu0 0.0
  %1507 = vmatprep.subr.mxu0 0.0
  %1508 = vmatpush1.msra.mxu0 0.0
  %1509 = vmatprep.subr.mxu0 0.0
  %1510 = vmatpush1.msra.mxu0 0.0
  %1511 = vmatprep.subr.mxu0 0.0
  %1512 = vmatpush1.msra.mxu0 0.0
  %1513 = vmatprep.subr.mxu0 0.0
  %1514 = vmatpush1.msra.mxu0 0.0
  %1515 = vmatprep.subr.mxu0 0.0
  %1516 = vmatpush1.msra.mxu0 0.0
  %1517 = vmatprep.subr.mxu0 0.0
  %1518 = vmatpush1.msra.mxu0 0.0
  %1519 = vmatprep.subr.mxu0 0.0
  %1520 = vmatpush1.msra.mxu0 0.0
  %1521 = vmatprep.subr.mxu0 0.0
  %1522 = vmatpush1.msra.mxu0 0.0
  %1523 = vmatprep.subr.mxu0 0.0
  %1524 = vmatpush1.msra.mxu0 0.0
  %1525 = vmatprep.subr.mxu0 0.0
  %1526 = vmatpush1.msra.mxu0 0.0
  %1527 = vmatprep.subr.mxu0 0.0
  %1528 = vmatpush1.msra.mxu0 0.0
  %1529 = vmatprep.mubr.f32.mxu0 0.0
  %1530 = vmatmul.mubr.f32.gmra.mrb[0].mxu0 %v1463
  %v1531 = vpop.f32.mrb[0].mxu0
  %v1532 = vadd.f32 0.0, %v1531
  %v1533 = vpop.f32.mrb[0].mxu0
  %1534 = vdwg.mxu0
  %1537 = vrot.lane.b32.xlu0 %v1456, 24
  %v1538 = vpop.permute.xlu0 %1537
  %1539 = vrot.lane.b32.xlu0 %v1532, 24
  %v1540 = vpop.permute.xlu0 %1539
  %vm1543 = vcmask 261312
  %1544 = vst.msk [vmem:[#allocation2] sm:$0xff] %vm1543, %v1538
  %1545 = vst.msk [vmem:[#allocation2 + $0x8] sm:$0xff] %vm1543, %v1540
  %v1546 = vld [vmem:[#allocation2] sm:$0xff]
  %v1547 = vld [vmem:[#allocation2 + $0x8] sm:$0xff]
  %v1548 = vld [vmem:[%s0 + $0x68] sm:$0xff]
  %v1549 = vld [vmem:[%s0 + $0x70] sm:$0xff]
  %v1550 = vld [vmem:[%s0 + $0x78] sm:$0x1]
  %v1551 = vld [vmem:[%s0 + $0x80] sm:$0x1]
  %v1552 = vsel %vm78, %v1546, 0.0
  %1553 = vadd.xlane.f32.xlu0 %v1552
  %v1554 = vpop.xlane.xlu0 %1553
  %v1555 = vsel %vm78, %v1547, 0.0
  %1556 = vadd.xlane.f32.xlu0 %v1555
  %v1557 = vpop.xlane.xlu0 %1556
  %v1558 = vmul.f32 %v1554, %v85
  %v1559 = vmul.f32 %v1557, %v85
  %v1560 = vsub.f32 %v1546, %v1558
  %v1561 = vsub.f32 %v1547, %v1559
  %v1562 = vmul.f32 %v1560, %v1560
  %v1563 = vmul.f32 %v1561, %v1561
  %v1564 = vsel %vm78, %v1562, 0.0
  %1565 = vadd.xlane.f32.xlu0 %v1564
  %v1566 = vpop.xlane.xlu0 %1565
  %v1567 = vsel %vm78, %v1563, 0.0
  %1568 = vadd.xlane.f32.xlu0 %v1567
  %v1569 = vpop.xlane.xlu0 %1568
  %v1570 = vmul.f32 %v1566, %v85
  %v1571 = vmul.f32 %v1569, %v85
  %v1572 = vadd.f32 %v1570, 1e-05
  %v1573 = vadd.f32 %v1571, 1e-05
  %v1574 = vrsqrt.pop %v1572
  %v1575 = vrsqrt.pop %v1573
  %v1576 = vmul.f32 %v1560, %v1574
  %v1577 = vmul.f32 %v1561, %v1575
  %v1578 = vlaneseq
  %v1579 = vshrl.u32 %v1578, 7
  %v1580 = vsub.s32 0, %v1579
  %v1581 = vrot.slane %v1550, %v1580
  %v1582 = vmul.f32 %v1576, %v1581
  %v1583 = vmul.f32 %v1577, %v1581
  %v1584 = vlaneseq
  %v1585 = vshrl.u32 %v1584, 7
  %v1586 = vsub.s32 0, %v1585
  %v1587 = vrot.slane %v1551, %v1586
  %v1588 = vadd.f32 %v1582, %v1587
  %v1589 = vadd.f32 %v1583, %v1587
  %v1590 = vadd.f32 %v1548, 1.0
  %v1591 = vadd.f32 %v1549, 1.0
  %v1592 = vmul.f32 %v1588, %v1590
  %v1593 = vmul.f32 %v1589, %v1591
  %1596 = vrot.lane.b32.xlu0 %v1548, 96
  %v1597 = vpop.permute.xlu0 %1596
  %1598 = vrot.lane.b32.xlu0 %v1549, 96
  %v1599 = vpop.permute.xlu0 %1598
  %v1602 = vadd.f32 %v1592, %v1597
  %v1603 = vadd.f32 %v1593, %v1599
  %v1604 = vxor.u32 %v1602, 2147483648
  %v1605 = vxor.u32 %v1603, 2147483648
  %v1606 = vmul.f32 %v1604, 1.442695
  %v1607 = vpow.pop %v1606
  %v1608 = vmul.f32 %v1605, 1.442695
  %v1609 = vpow.pop %v1608
  %v1610 = vadd.f32 %v1607, 1.0
  %v1611 = vadd.f32 %v1609, 1.0
  %v1612 = vrcp.pop %v1610
  %v1613 = vmul.f32 1.0, %v1612
  %v1614 = vrcp.pop %v1611
  %v1615 = vmul.f32 1.0, %v1614
  %v1616 = vmul.f32 %v1602, %v1613
  %v1617 = vmul.f32 %v1603, %v1615
  %v1618 = vpack.c.bf16 %v1617, %v1616
  %v1619 = vld [vmem:[%s1 + $0x28] sm:$0xf]
  %v1620 = vld [vmem:[%s1 + $0x2c] sm:$0xf]
  %v1621 = vld [vmem:[%s1 + $0x30] sm:$0xf]
  %v1622 = vld [vmem:[%s1 + $0x34] sm:$0xf]
  %v1623 = vld [vmem:[%s0 + $0x88] sm:$0x1]
  %v1624 = vlaneseq
  %v1625 = vshrl.u32 %v1624, 7
  %v1626 = vsub.s32 0, %v1625
  %v1627 = vrot.slane %v1623, %v1626
  %v1632 = vunpack.c.l.b16 %v1619
  %v1633 = vunpack.c.l.b16 %v1620
  %v1634 = vunpack.c.l.b16 %v1621
  %v1635 = vunpack.c.l.b16 %v1622
  %v1636 = vpack.c.b16 %v1633, %v1632
  %v1637 = vpack.c.b16 %v1635, %v1634
  %v1641 = vsel %vm78, %v1618, 0
  %1643 = vmatprep.subr.bf16.mxu0 0
  %1644 = vmatpush1.bf16.msra.mxu0 %v1636
  %1645 = vmatprep.subr.bf16.mxu0 0
  %1646 = vmatpush1.bf16.msra.mxu0 %v1637
  %1647 = vmatprep.subr.bf16.mxu0 0
  %1648 = vmatpush1.bf16.msra.mxu0 0
  %1649 = vmatprep.subr.bf16.mxu0 0
  %1650 = vmatpush1.bf16.msra.mxu0 0
  %1651 = vmatprep.subr.bf16.mxu0 0
  %1652 = vmatpush1.bf16.msra.mxu0 0
  %1653 = vmatprep.subr.bf16.mxu0 0
  %1654 = vmatpush1.bf16.msra.mxu0 0
  %1655 = vmatprep.subr.bf16.mxu0 0
  %1656 = vmatpush1.bf16.msra.mxu0 0
  %1657 = vmatprep.subr.bf16.mxu0 0
  %1658 = vmatpush1.bf16.msra.mxu0 0
  %1659 = vmatprep.subr.bf16.mxu0 0
  %1660 = vmatpush1.bf16.msra.mxu0 0
  %1661 = vmatprep.subr.bf16.mxu0 0
  %1662 = vmatpush1.bf16.msra.mxu0 0
  %1663 = vmatprep.subr.bf16.mxu0 0
  %1664 = vmatpush1.bf16.msra.mxu0 0
  %1665 = vmatprep.subr.bf16.mxu0 0
  %1666 = vmatpush1.bf16.msra.mxu0 0
  %1667 = vmatprep.subr.bf16.mxu0 0
  %1668 = vmatpush1.bf16.msra.mxu0 0
  %1669 = vmatprep.subr.bf16.mxu0 0
  %1670 = vmatpush1.bf16.msra.mxu0 0
  %1671 = vmatprep.subr.bf16.mxu0 0
  %1672 = vmatpush1.bf16.msra.mxu0 0
  %1673 = vmatprep.subr.bf16.mxu0 0
  %1674 = vmatpush1.bf16.msra.mxu0 0
  %1675 = vmatprep.mubr.bf16.mxu0 0
  %1676 = vmatmul.mubr.bf16.gmra.mrb[0].mxu0 %v1641
  %v1677 = vpop.f32.mrb[0].mxu0
  %v1678 = vadd.f32 %v1627, %v1677
  %v1679 = vpop.f32.mrb[0].mxu0
  %v1680 = vpop.f32.mrb[0].mxu0
  %v1681 = vadd.f32 %v1627, %v1680
  %v1682 = vpop.f32.mrb[0].mxu0
  %1683 = vdwg.mxu0
  %v1684 = vadd.f32 %v74, %v1678
  %v1685 = vadd.f32 %v75, %v1681
  %v1686 = vld [vmem:[%s0 + $0x90] sm:$0x1]
  %v1687 = vld [vmem:[%s0 + $0x98] sm:$0x1]
  %v1688 = vsel %vm78, %v1684, 0.0
  %1689 = vadd.xlane.f32.xlu0 %v1688
  %v1690 = vpop.xlane.xlu0 %1689
  %v1691 = vsel %vm78, %v1685, 0.0
  %1692 = vadd.xlane.f32.xlu0 %v1691
  %v1693 = vpop.xlane.xlu0 %1692
  %v1694 = vmul.f32 %v1690, %v85
  %v1695 = vmul.f32 %v1693, %v85
  %v1696 = vsub.f32 %v1684, %v1694
  %v1697 = vsub.f32 %v1685, %v1695
  %v1698 = vmul.f32 %v1696, %v1696
  %v1699 = vmul.f32 %v1697, %v1697
  %v1700 = vsel %vm78, %v1698, 0.0
  %1701 = vadd.xlane.f32.xlu0 %v1700
  %v1702 = vpop.xlane.xlu0 %1701
  %v1703 = vsel %vm78, %v1699, 0.0
  %1704 = vadd.xlane.f32.xlu0 %v1703
  %v1705 = vpop.xlane.xlu0 %1704
  %v1706 = vmul.f32 %v1702, %v85
  %v1707 = vmul.f32 %v1705, %v85
  %v1708 = vadd.f32 %v1706, 1e-05
  %v1709 = vadd.f32 %v1707, 1e-05
  %v1710 = vrsqrt.pop %v1708
  %v1711 = vrsqrt.pop %v1709
  %v1712 = vmul.f32 %v1696, %v1710
  %v1713 = vmul.f32 %v1697, %v1711
  %v1714 = vlaneseq
  %v1715 = vshrl.u32 %v1714, 7
  %v1716 = vsub.s32 0, %v1715
  %v1717 = vrot.slane %v1686, %v1716
  %v1718 = vmul.f32 %v1712, %v1717
  %v1719 = vmul.f32 %v1713, %v1717
  %v1720 = vlaneseq
  %v1721 = vshrl.u32 %v1720, 7
  %v1722 = vsub.s32 0, %v1721
  %v1723 = vrot.slane %v1687, %v1722
  %v1724 = vadd.f32 %v1718, %v1723
  %v1725 = vadd.f32 %v1719, %v1723
  %v1726 = vld [vmem:[%s0 + $0xa0] sm:$0x1]
  %v1727 = vld [vmem:[%s0 + $0xa8] sm:$0x1]
  %vm1728 = vcmask 130048
  %v1729 = vsel %vm1728, %v14, 0.0
  %1730 = vadd.xlane.f32.xlu0 %v1729
  %v1731 = vpop.xlane.xlu0 %1730
  %v1732 = vsel %vm1728, %v15, 0.0
  %1733 = vadd.xlane.f32.xlu0 %v1732
  %v1734 = vpop.xlane.xlu0 %1733
  %v1735 = vrcp.pop 16.0
  %v1736 = vmul.f32 %v1731, %v1735
  %v1737 = vmul.f32 %v1734, %v1735
  %v1738 = vsub.f32 %v14, %v1736
  %v1739 = vsub.f32 %v15, %v1737
  %v1740 = vmul.f32 %v1738, %v1738
  %v1741 = vmul.f32 %v1739, %v1739
  %v1742 = vsel %vm1728, %v1740, 0.0
  %1743 = vadd.xlane.f32.xlu0 %v1742
  %v1744 = vpop.xlane.xlu0 %1743
  %v1745 = vsel %vm1728, %v1741, 0.0
  %1746 = vadd.xlane.f32.xlu0 %v1745
  %v1747 = vpop.xlane.xlu0 %1746
  %v1748 = vmul.f32 %v1744, %v1735
  %v1749 = vmul.f32 %v1747, %v1735
  %v1750 = vadd.f32 %v1748, 1e-05
  %v1751 = vadd.f32 %v1749, 1e-05
  %v1752 = vrsqrt.pop %v1750
  %v1753 = vrsqrt.pop %v1751
  %v1754 = vmul.f32 %v1738, %v1752
  %v1755 = vmul.f32 %v1739, %v1753
  %v1756 = vlaneseq
  %v1757 = vshrl.u32 %v1756, 7
  %v1758 = vsub.s32 0, %v1757
  %v1759 = vrot.slane %v1726, %v1758
  %v1760 = vmul.f32 %v1754, %v1759
  %v1761 = vmul.f32 %v1755, %v1759
  %v1762 = vlaneseq
  %v1763 = vshrl.u32 %v1762, 7
  %v1764 = vsub.s32 0, %v1763
  %v1765 = vrot.slane %v1727, %v1764
  %v1766 = vadd.f32 %v1760, %v1765
  %v1767 = vadd.f32 %v1761, %v1765
  %v1768 = vpack.c.bf16 %v1725, %v1724
  %v1769 = vld [vmem:[%s1 + $0x38] sm:$0xf]
  %v1770 = vld [vmem:[%s1 + $0x3c] sm:$0xf]
  %v1771 = vld [vmem:[%s1 + $0x40] sm:$0xf]
  %v1772 = vld [vmem:[%s1 + $0x44] sm:$0xf]
  %v1773 = vld [vmem:[%s0 + $0xb0] sm:$0x1]
  %v1774 = vlaneseq
  %v1775 = vshrl.u32 %v1774, 7
  %v1776 = vsub.s32 0, %v1775
  %v1777 = vrot.slane %v1773, %v1776
  %v1782 = vunpack.c.l.b16 %v1769
  %v1783 = vunpack.c.l.b16 %v1770
  %v1784 = vunpack.c.l.b16 %v1771
  %v1785 = vunpack.c.l.b16 %v1772
  %v1786 = vpack.c.b16 %v1783, %v1782
  %v1787 = vpack.c.b16 %v1785, %v1784
  %v1791 = vsel %vm78, %v1768, 0
  %1793 = vmatprep.subr.bf16.mxu0 0
  %1794 = vmatpush1.bf16.msra.mxu0 %v1786
  %1795 = vmatprep.subr.bf16.mxu0 0
  %1796 = vmatpush1.bf16.msra.mxu0 %v1787
  %1797 = vmatprep.subr.bf16.mxu0 0
  %1798 = vmatpush1.bf16.msra.mxu0 0
  %1799 = vmatprep.subr.bf16.mxu0 0
  %1800 = vmatpush1.bf16.msra.mxu0 0
  %1801 = vmatprep.subr.bf16.mxu0 0
  %1802 = vmatpush1.bf16.msra.mxu0 0
  %1803 = vmatprep.subr.bf16.mxu0 0
  %1804 = vmatpush1.bf16.msra.mxu0 0
  %1805 = vmatprep.subr.bf16.mxu0 0
  %1806 = vmatpush1.bf16.msra.mxu0 0
  %1807 = vmatprep.subr.bf16.mxu0 0
  %1808 = vmatpush1.bf16.msra.mxu0 0
  %1809 = vmatprep.subr.bf16.mxu0 0
  %1810 = vmatpush1.bf16.msra.mxu0 0
  %1811 = vmatprep.subr.bf16.mxu0 0
  %1812 = vmatpush1.bf16.msra.mxu0 0
  %1813 = vmatprep.subr.bf16.mxu0 0
  %1814 = vmatpush1.bf16.msra.mxu0 0
  %1815 = vmatprep.subr.bf16.mxu0 0
  %1816 = vmatpush1.bf16.msra.mxu0 0
  %1817 = vmatprep.subr.bf16.mxu0 0
  %1818 = vmatpush1.bf16.msra.mxu0 0
  %1819 = vmatprep.subr.bf16.mxu0 0
  %1820 = vmatpush1.bf16.msra.mxu0 0
  %1821 = vmatprep.subr.bf16.mxu0 0
  %1822 = vmatpush1.bf16.msra.mxu0 0
  %1823 = vmatprep.subr.bf16.mxu0 0
  %1824 = vmatpush1.bf16.msra.mxu0 0
  %1825 = vmatprep.mubr.bf16.mxu0 0
  %1826 = vmatmul.mubr.bf16.gmra.mrb[0].mxu0 %v1791
  %v1827 = vpop.f32.mrb[0].mxu0
  %v1828 = vadd.f32 %v1777, %v1827
  %v1829 = vpop.f32.mrb[0].mxu0
  %v1830 = vpop.f32.mrb[0].mxu0
  %v1831 = vadd.f32 %v1777, %v1830
  %v1832 = vpop.f32.mrb[0].mxu0
  %1833 = vdwg.mxu0
  %v1834 = vpack.c.bf16 %v1767, %v1766
  %v1835 = vld [vmem:[%s1 + $0x48] sm:$0xf]
  %v1836 = vld [vmem:[%s1 + $0x4c] sm:$0xf]
  %v1837 = vld [vmem:[%s0 + $0xb8] sm:$0x1]
  %v1838 = vlaneseq
  %v1839 = vshrl.u32 %v1838, 7
  %v1840 = vsub.s32 0, %v1839
  %v1841 = vrot.slane %v1837, %v1840
  %v1844 = vunpack.c.l.b16 %v1835
  %v1845 = vunpack.c.l.b16 %v1836
  %v1846 = vpack.c.b16 %v1845, %v1844
  %v1849 = vsel %vm1728, %v1834, 0
  %1851 = vmatprep.subr.bf16.mxu0 0
  %1852 = vmatpush1.bf16.msra.mxu0 %v1846
  %1853 = vmatprep.subr.bf16.mxu0 0
  %1854 = vmatpush1.bf16.msra.mxu0 0
  %1855 = vmatprep.subr.bf16.mxu0 0
  %1856 = vmatpush1.bf16.msra.mxu0 0
  %1857 = vmatprep.subr.bf16.mxu0 0
  %1858 = vmatpush1.bf16.msra.mxu0 0
  %1859 = vmatprep.subr.bf16.mxu0 0
  %1860 = vmatpush1.bf16.msra.mxu0 0
  %1861 = vmatprep.subr.bf16.mxu0 0
  %1862 = vmatpush1.bf16.msra.mxu0 0
  %1863 = vmatprep.subr.bf16.mxu0 0
  %1864 = vmatpush1.bf16.msra.mxu0 0
  %1865 = vmatprep.subr.bf16.mxu0 0
  %1866 = vmatpush1.bf16.msra.mxu0 0
  %1867 = vmatprep.subr.bf16.mxu0 0
  %1868 = vmatpush1.bf16.msra.mxu0 0
  %1869 = vmatprep.subr.bf16.mxu0 0
  %1870 = vmatpush1.bf16.msra.mxu0 0
  %1871 = vmatprep.subr.bf16.mxu0 0
  %1872 = vmatpush1.bf16.msra.mxu0 0
  %1873 = vmatprep.subr.bf16.mxu0 0
  %1874 = vmatpush1.bf16.msra.mxu0 0
  %1875 = vmatprep.subr.bf16.mxu0 0
  %1876 = vmatpush1.bf16.msra.mxu0 0
  %1877 = vmatprep.subr.bf16.mxu0 0
  %1878 = vmatpush1.bf16.msra.mxu0 0
  %1879 = vmatprep.subr.bf16.mxu0 0
  %1880 = vmatpush1.bf16.msra.mxu0 0
  %1881 = vmatprep.subr.bf16.mxu0 0
  %1882 = vmatpush1.bf16.msra.mxu0 0
  %1883 = vmatprep.mubr.bf16.mxu0 0
  %1884 = vmatmul.mubr.bf16.gmra.mrb[0].mxu0 %v1849
  %v1885 = vpop.f32.mrb[0].mxu0
  %v1886 = vadd.f32 %v1841, %v1885
  %v1887 = vpop.f32.mrb[0].mxu0
  %v1888 = vpop.f32.mrb[0].mxu0
  %v1889 = vadd.f32 %v1841, %v1888
  %v1890 = vpop.f32.mrb[0].mxu0
  %1891 = vdwg.mxu0
  %v1893 = vsel %vm187, %v1828, 0
  %v1896 = vsel %vm187, %v1886, 0
  %1898 = vmatprep.subr.mxu0 0.0
  %1899 = vmatpush1.xpose.msra.mxu0 %v1896
  %1900 = vmatprep.subr.mxu0 0.0
  %1901 = vmatpush1.xpose.msra.mxu0 0.0
  %1902 = vmatprep.subr.mxu0 0.0
  %1903 = vmatpush1.xpose.msra.mxu0 0.0
  %1904 = vmatprep.subr.mxu0 0.0
  %1905 = vmatpush1.xpose.msra.mxu0 0.0
  %1906 = vmatprep.subr.mxu0 0.0
  %1907 = vmatpush1.xpose.msra.mxu0 0.0
  %1908 = vmatprep.subr.mxu0 0.0
  %1909 = vmatpush1.xpose.msra.mxu0 0.0
  %1910 = vmatprep.subr.mxu0 0.0
  %1911 = vmatpush1.xpose.msra.mxu0 0.0
  %1912 = vmatprep.subr.mxu0 0.0
  %1913 = vmatpush1.xpose.msra.mxu0 0.0
  %1914 = vmatprep.subr.mxu0 0.0
  %1915 = vmatpush1.xpose.msra.mxu0 0.0
  %1916 = vmatprep.subr.mxu0 0.0
  %1917 = vmatpush1.xpose.msra.mxu0 0.0
  %1918 = vmatprep.subr.mxu0 0.0
  %1919 = vmatpush1.xpose.msra.mxu0 0.0
  %1920 = vmatprep.subr.mxu0 0.0
  %1921 = vmatpush1.xpose.msra.mxu0 0.0
  %1922 = vmatprep.subr.mxu0 0.0
  %1923 = vmatpush1.xpose.msra.mxu0 0.0
  %1924 = vmatprep.subr.mxu0 0.0
  %1925 = vmatpush1.xpose.msra.mxu0 0.0
  %1926 = vmatprep.subr.mxu0 0.0
  %1927 = vmatpush1.xpose.msra.mxu0 0.0
  %1928 = vmatprep.subr.mxu0 0.0
  %1929 = vmatpush1.xpose.msra.mxu0 0.0
  %1930 = vmatprep.subr.mxu0 0.0
  %1931 = vmatpush1.xpose.msra.mxu0 0.0
  %1932 = vmatprep.subr.mxu0 0.0
  %1933 = vmatpush1.xpose.msra.mxu0 0.0
  %1934 = vmatprep.subr.mxu0 0.0
  %1935 = vmatpush1.xpose.msra.mxu0 0.0
  %1936 = vmatprep.subr.mxu0 0.0
  %1937 = vmatpush1.xpose.msra.mxu0 0.0
  %1938 = vmatprep.subr.mxu0 0.0
  %1939 = vmatpush1.xpose.msra.mxu0 0.0
  %1940 = vmatprep.subr.mxu0 0.0
  %1941 = vmatpush1.xpose.msra.mxu0 0.0
  %1942 = vmatprep.subr.mxu0 0.0
  %1943 = vmatpush1.xpose.msra.mxu0 0.0
  %1944 = vmatprep.subr.mxu0 0.0
  %1945 = vmatpush1.xpose.msra.mxu0 0.0
  %1946 = vmatprep.subr.mxu0 0.0
  %1947 = vmatpush1.xpose.msra.mxu0 0.0
  %1948 = vmatprep.subr.mxu0 0.0
  %1949 = vmatpush1.xpose.msra.mxu0 0.0
  %1950 = vmatprep.subr.mxu0 0.0
  %1951 = vmatpush1.xpose.msra.mxu0 0.0
  %1952 = vmatprep.subr.mxu0 0.0
  %1953 = vmatpush1.xpose.msra.mxu0 0.0
  %1954 = vmatprep.subr.mxu0 0.0
  %1955 = vmatpush1.xpose.msra.mxu0 0.0
  %1956 = vmatprep.subr.mxu0 0.0
  %1957 = vmatpush1.xpose.msra.mxu0 0.0
  %1958 = vmatprep.subr.mxu0 0.0
  %1959 = vmatpush1.xpose.msra.mxu0 0.0
  %1960 = vmatprep.subr.mxu0 0.0
  %1961 = vmatpush1.xpose.msra.mxu0 0.0
  %1962 = vmatprep.mubr.f32.mxu0 0.0
  %1963 = vmatmul.mubr.f32.gmra.mrb[0].mxu0 %v1893
  %v1964 = vpop.f32.mrb[0].mxu0
  %v1965 = vadd.f32 0.0, %v1964
  %v1966 = vpop.f32.mrb[0].mxu0
  %1967 = vdwg.mxu0
  %v1969 = vsel %vm187, %v1831, 0
  %v1972 = vsel %vm187, %v1889, 0
  %1974 = vmatprep.subr.mxu0 0.0
  %1975 = vmatpush1.xpose.msra.mxu0 %v1972
  %1976 = vmatprep.subr.mxu0 0.0
  %1977 = vmatpush1.xpose.msra.mxu0 0.0
  %1978 = vmatprep.subr.mxu0 0.0
  %1979 = vmatpush1.xpose.msra.mxu0 0.0
  %1980 = vmatprep.subr.mxu0 0.0
  %1981 = vmatpush1.xpose.msra.mxu0 0.0
  %1982 = vmatprep.subr.mxu0 0.0
  %1983 = vmatpush1.xpose.msra.mxu0 0.0
  %1984 = vmatprep.subr.mxu0 0.0
  %1985 = vmatpush1.xpose.msra.mxu0 0.0
  %1986 = vmatprep.subr.mxu0 0.0
  %1987 = vmatpush1.xpose.msra.mxu0 0.0
  %1988 = vmatprep.subr.mxu0 0.0
  %1989 = vmatpush1.xpose.msra.mxu0 0.0
  %1990 = vmatprep.subr.mxu0 0.0
  %1991 = vmatpush1.xpose.msra.mxu0 0.0
  %1992 = vmatprep.subr.mxu0 0.0
  %1993 = vmatpush1.xpose.msra.mxu0 0.0
  %1994 = vmatprep.subr.mxu0 0.0
  %1995 = vmatpush1.xpose.msra.mxu0 0.0
  %1996 = vmatprep.subr.mxu0 0.0
  %1997 = vmatpush1.xpose.msra.mxu0 0.0
  %1998 = vmatprep.subr.mxu0 0.0
  %1999 = vmatpush1.xpose.msra.mxu0 0.0
  %2000 = vmatprep.subr.mxu0 0.0
  %2001 = vmatpush1.xpose.msra.mxu0 0.0
  %2002 = vmatprep.subr.mxu0 0.0
  %2003 = vmatpush1.xpose.msra.mxu0 0.0
  %2004 = vmatprep.subr.mxu0 0.0
  %2005 = vmatpush1.xpose.msra.mxu0 0.0
  %2006 = vmatprep.subr.mxu0 0.0
  %2007 = vmatpush1.xpose.msra.mxu0 0.0
  %2008 = vmatprep.subr.mxu0 0.0
  %2009 = vmatpush1.xpose.msra.mxu0 0.0
  %2010 = vmatprep.subr.mxu0 0.0
  %2011 = vmatpush1.xpose.msra.mxu0 0.0
  %2012 = vmatprep.subr.mxu0 0.0
  %2013 = vmatpush1.xpose.msra.mxu0 0.0
  %2014 = vmatprep.subr.mxu0 0.0
  %2015 = vmatpush1.xpose.msra.mxu0 0.0
  %2016 = vmatprep.subr.mxu0 0.0
  %2017 = vmatpush1.xpose.msra.mxu0 0.0
  %2018 = vmatprep.subr.mxu0 0.0
  %2019 = vmatpush1.xpose.msra.mxu0 0.0
  %2020 = vmatprep.subr.mxu0 0.0
  %2021 = vmatpush1.xpose.msra.mxu0 0.0
  %2022 = vmatprep.subr.mxu0 0.0
  %2023 = vmatpush1.xpose.msra.mxu0 0.0
  %2024 = vmatprep.subr.mxu0 0.0
  %2025 = vmatpush1.xpose.msra.mxu0 0.0
  %2026 = vmatprep.subr.mxu0 0.0
  %2027 = vmatpush1.xpose.msra.mxu0 0.0
  %2028 = vmatprep.subr.mxu0 0.0
  %2029 = vmatpush1.xpose.msra.mxu0 0.0
  %2030 = vmatprep.subr.mxu0 0.0
  %2031 = vmatpush1.xpose.msra.mxu0 0.0
  %2032 = vmatprep.subr.mxu0 0.0
  %2033 = vmatpush1.xpose.msra.mxu0 0.0
  %2034 = vmatprep.subr.mxu0 0.0
  %2035 = vmatpush1.xpose.msra.mxu0 0.0
  %2036 = vmatprep.subr.mxu0 0.0
  %2037 = vmatpush1.xpose.msra.mxu0 0.0
  %2038 = vmatprep.mubr.f32.mxu0 0.0
  %2039 = vmatmul.mubr.f32.gmra.mrb[0].mxu0 %v1969
  %v2040 = vpop.f32.mrb[0].mxu0
  %v2041 = vadd.f32 0.0, %v2040
  %v2042 = vpop.f32.mrb[0].mxu0
  %2043 = vdwg.mxu0
  %v2044 = vmul.f32 %v1965, 0.35355338
  %v2045 = vmul.f32 %v2041, 0.35355338
  %v2046 = vsel %vm187, %v2044, -inf
  %2047 = vmax.xlane.f32.xlu0 %v2046
  %v2048 = vpop.xlane.xlu0 %2047
  %v2049 = vsel %vm187, %v2045, -inf
  %2050 = vmax.xlane.f32.xlu0 %v2049
  %v2051 = vpop.xlane.xlu0 %2050
  %v2052 = vsub.f32 %v2044, %v2048
  %v2053 = vsub.f32 %v2045, %v2051
  %v2054 = vmul.f32 %v2052, 1.442695
  %v2055 = vpow.pop %v2054
  %v2056 = vmul.f32 %v2053, 1.442695
  %v2057 = vpow.pop %v2056
  %v2058 = vsel %vm187, %v2055, 0.0
  %2059 = vadd.xlane.f32.xlu0 %v2058
  %v2060 = vpop.xlane.xlu0 %2059
  %v2061 = vsel %vm187, %v2057, 0.0
  %2062 = vadd.xlane.f32.xlu0 %v2061
  %v2063 = vpop.xlane.xlu0 %2062
  %v2064 = vrcp.pop %v2060
  %v2065 = vrcp.pop %v2063
  %v2066 = vmul.f32 %v2055, %v2064
  %v2067 = vmul.f32 %v2057, %v2065
  %2068 = vrot.lane.b32.xlu0 %v1886, 96
  %v2069 = vpop.permute.xlu0 %2068
  %v2072 = vsel %vm187, %v2066, 0
  %2074 = vmatprep.subr.mxu0 0.0
  %2075 = vmatpush1.msra.mxu0 %v2069
  %2076 = vmatprep.subr.mxu0 0.0
  %2077 = vmatpush1.msra.mxu0 0.0
  %2078 = vmatprep.subr.mxu0 0.0
  %2079 = vmatpush1.msra.mxu0 0.0
  %2080 = vmatprep.subr.mxu0 0.0
  %2081 = vmatpush1.msra.mxu0 0.0
  %2082 = vmatprep.subr.mxu0 0.0
  %2083 = vmatpush1.msra.mxu0 0.0
  %2084 = vmatprep.subr.mxu0 0.0
  %2085 = vmatpush1.msra.mxu0 0.0
  %2086 = vmatprep.subr.mxu0 0.0
  %2087 = vmatpush1.msra.mxu0 0.0
  %2088 = vmatprep.subr.mxu0 0.0
  %2089 = vmatpush1.msra.mxu0 0.0
  %2090 = vmatprep.subr.mxu0 0.0
  %2091 = vmatpush1.msra.mxu0 0.0
  %2092 = vmatprep.subr.mxu0 0.0
  %2093 = vmatpush1.msra.mxu0 0.0
  %2094 = vmatprep.subr.mxu0 0.0
  %2095 = vmatpush1.msra.mxu0 0.0
  %2096 = vmatprep.subr.mxu0 0.0
  %2097 = vmatpush1.msra.mxu0 0.0
  %2098 = vmatprep.subr.mxu0 0.0
  %2099 = vmatpush1.msra.mxu0 0.0
  %2100 = vmatprep.subr.mxu0 0.0
  %2101 = vmatpush1.msra.mxu0 0.0
  %2102 = vmatprep.subr.mxu0 0.0
  %2103 = vmatpush1.msra.mxu0 0.0
  %2104 = vmatprep.subr.mxu0 0.0
  %2105 = vmatpush1.msra.mxu0 0.0
  %2106 = vmatprep.subr.mxu0 0.0
  %2107 = vmatpush1.msra.mxu0 0.0
  %2108 = vmatprep.subr.mxu0 0.0
  %2109 = vmatpush1.msra.mxu0 0.0
  %2110 = vmatprep.subr.mxu0 0.0
  %2111 = vmatpush1.msra.mxu0 0.0
  %2112 = vmatprep.subr.mxu0 0.0
  %2113 = vmatpush1.msra.mxu0 0.0
  %2114 = vmatprep.subr.mxu0 0.0
  %2115 = vmatpush1.msra.mxu0 0.0
  %2116 = vmatprep.subr.mxu0 0.0
  %2117 = vmatpush1.msra.mxu0 0.0
  %2118 = vmatprep.subr.mxu0 0.0
  %2119 = vmatpush1.msra.mxu0 0.0
  %2120 = vmatprep.subr.mxu0 0.0
  %2121 = vmatpush1.msra.mxu0 0.0
  %2122 = vmatprep.subr.mxu0 0.0
  %2123 = vmatpush1.msra.mxu0 0.0
  %2124 = vmatprep.subr.mxu0 0.0
  %2125 = vmatpush1.msra.mxu0 0.0
  %2126 = vmatprep.subr.mxu0 0.0
  %2127 = vmatpush1.msra.mxu0 0.0
  %2128 = vmatprep.subr.mxu0 0.0
  %2129 = vmatpush1.msra.mxu0 0.0
  %2130 = vmatprep.subr.mxu0 0.0
  %2131 = vmatpush1.msra.mxu0 0.0
  %2132 = vmatprep.subr.mxu0 0.0
  %2133 = vmatpush1.msra.mxu0 0.0
  %2134 = vmatprep.subr.mxu0 0.0
  %2135 = vmatpush1.msra.mxu0 0.0
  %2136 = vmatprep.subr.mxu0 0.0
  %2137 = vmatpush1.msra.mxu0 0.0
  %2138 = vmatprep.mubr.f32.mxu0 0.0
  %2139 = vmatmul.mubr.f32.gmra.mrb[0].mxu0 %v2072
  %v2140 = vpop.f32.mrb[0].mxu0
  %v2141 = vadd.f32 0.0, %v2140
  %v2142 = vpop.f32.mrb[0].mxu0
  %2143 = vdwg.mxu0
  %2144 = vrot.lane.b32.xlu0 %v1889, 96
  %v2145 = vpop.permute.xlu0 %2144
  %v2148 = vsel %vm187, %v2067, 0
  %2150 = vmatprep.subr.mxu0 0.0
  %2151 = vmatpush1.msra.mxu0 %v2145
  %2152 = vmatprep.subr.mxu0 0.0
  %2153 = vmatpush1.msra.mxu0 0.0
  %2154 = vmatprep.subr.mxu0 0.0
  %2155 = vmatpush1.msra.mxu0 0.0
  %2156 = vmatprep.subr.mxu0 0.0
  %2157 = vmatpush1.msra.mxu0 0.0
  %2158 = vmatprep.subr.mxu0 0.0
  %2159 = vmatpush1.msra.mxu0 0.0
  %2160 = vmatprep.subr.mxu0 0.0
  %2161 = vmatpush1.msra.mxu0 0.0
  %2162 = vmatprep.subr.mxu0 0.0
  %2163 = vmatpush1.msra.mxu0 0.0
  %2164 = vmatprep.subr.mxu0 0.0
  %2165 = vmatpush1.msra.mxu0 0.0
  %2166 = vmatprep.subr.mxu0 0.0
  %2167 = vmatpush1.msra.mxu0 0.0
  %2168 = vmatprep.subr.mxu0 0.0
  %2169 = vmatpush1.msra.mxu0 0.0
  %2170 = vmatprep.subr.mxu0 0.0
  %2171 = vmatpush1.msra.mxu0 0.0
  %2172 = vmatprep.subr.mxu0 0.0
  %2173 = vmatpush1.msra.mxu0 0.0
  %2174 = vmatprep.subr.mxu0 0.0
  %2175 = vmatpush1.msra.mxu0 0.0
  %2176 = vmatprep.subr.mxu0 0.0
  %2177 = vmatpush1.msra.mxu0 0.0
  %2178 = vmatprep.subr.mxu0 0.0
  %2179 = vmatpush1.msra.mxu0 0.0
  %2180 = vmatprep.subr.mxu0 0.0
  %2181 = vmatpush1.msra.mxu0 0.0
  %2182 = vmatprep.subr.mxu0 0.0
  %2183 = vmatpush1.msra.mxu0 0.0
  %2184 = vmatprep.subr.mxu0 0.0
  %2185 = vmatpush1.msra.mxu0 0.0
  %2186 = vmatprep.subr.mxu0 0.0
  %2187 = vmatpush1.msra.mxu0 0.0
  %2188 = vmatprep.subr.mxu0 0.0
  %2189 = vmatpush1.msra.mxu0 0.0
  %2190 = vmatprep.subr.mxu0 0.0
  %2191 = vmatpush1.msra.mxu0 0.0
  %2192 = vmatprep.subr.mxu0 0.0
  %2193 = vmatpush1.msra.mxu0 0.0
  %2194 = vmatprep.subr.mxu0 0.0
  %2195 = vmatpush1.msra.mxu0 0.0
  %2196 = vmatprep.subr.mxu0 0.0
  %2197 = vmatpush1.msra.mxu0 0.0
  %2198 = vmatprep.subr.mxu0 0.0
  %2199 = vmatpush1.msra.mxu0 0.0
  %2200 = vmatprep.subr.mxu0 0.0
  %2201 = vmatpush1.msra.mxu0 0.0
  %2202 = vmatprep.subr.mxu0 0.0
  %2203 = vmatpush1.msra.mxu0 0.0
  %2204 = vmatprep.subr.mxu0 0.0
  %2205 = vmatpush1.msra.mxu0 0.0
  %2206 = vmatprep.subr.mxu0 0.0
  %2207 = vmatpush1.msra.mxu0 0.0
  %2208 = vmatprep.subr.mxu0 0.0
  %2209 = vmatpush1.msra.mxu0 0.0
  %2210 = vmatprep.subr.mxu0 0.0
  %2211 = vmatpush1.msra.mxu0 0.0
  %2212 = vmatprep.subr.mxu0 0.0
  %2213 = vmatpush1.msra.mxu0 0.0
  %2214 = vmatprep.mubr.f32.mxu0 0.0
  %2215 = vmatmul.mubr.f32.gmra.mrb[0].mxu0 %v2148
  %v2216 = vpop.f32.mrb[0].mxu0
  %v2217 = vadd.f32 0.0, %v2216
  %v2218 = vpop.f32.mrb[0].mxu0
  %2219 = vdwg.mxu0
  %2220 = vst.msk [vmem:[#allocation2] sm:$0xff] %vm187, %v2141
  %2221 = vst.msk [vmem:[#allocation2 + $0x8] sm:$0xff] %vm187, %v2217
  %2222 = vrot.lane.b32.xlu0 %v1828, 120
  %v2223 = vpop.permute.xlu0 %2222
  %2224 = vrot.lane.b32.xlu0 %v1886, 120
  %v2225 = vpop.permute.xlu0 %2224
  %v2226 = vsel %vm187, %v2223, 0
  %v2228 = vsel %vm187, %v2225, 0
  %2230 = vmatprep.subr.mxu0 0.0
  %2231 = vmatpush1.xpose.msra.mxu0 %v2228
  %2232 = vmatprep.subr.mxu0 0.0
  %2233 = vmatpush1.xpose.msra.mxu0 0.0
  %2234 = vmatprep.subr.mxu0 0.0
  %2235 = vmatpush1.xpose.msra.mxu0 0.0
  %2236 = vmatprep.subr.mxu0 0.0
  %2237 = vmatpush1.xpose.msra.mxu0 0.0
  %2238 = vmatprep.subr.mxu0 0.0
  %2239 = vmatpush1.xpose.msra.mxu0 0.0
  %2240 = vmatprep.subr.mxu0 0.0
  %2241 = vmatpush1.xpose.msra.mxu0 0.0
  %2242 = vmatprep.subr.mxu0 0.0
  %2243 = vmatpush1.xpose.msra.mxu0 0.0
  %2244 = vmatprep.subr.mxu0 0.0
  %2245 = vmatpush1.xpose.msra.mxu0 0.0
  %2246 = vmatprep.subr.mxu0 0.0
  %2247 = vmatpush1.xpose.msra.mxu0 0.0
  %2248 = vmatprep.subr.mxu0 0.0
  %2249 = vmatpush1.xpose.msra.mxu0 0.0
  %2250 = vmatprep.subr.mxu0 0.0
  %2251 = vmatpush1.xpose.msra.mxu0 0.0
  %2252 = vmatprep.subr.mxu0 0.0
  %2253 = vmatpush1.xpose.msra.mxu0 0.0
  %2254 = vmatprep.subr.mxu0 0.0
  %2255 = vmatpush1.xpose.msra.mxu0 0.0
  %2256 = vmatprep.subr.mxu0 0.0
  %2257 = vmatpush1.xpose.msra.mxu0 0.0
  %2258 = vmatprep.subr.mxu0 0.0
  %2259 = vmatpush1.xpose.msra.mxu0 0.0
  %2260 = vmatprep.subr.mxu0 0.0
  %2261 = vmatpush1.xpose.msra.mxu0 0.0
  %2262 = vmatprep.subr.mxu0 0.0
  %2263 = vmatpush1.xpose.msra.mxu0 0.0
  %2264 = vmatprep.subr.mxu0 0.0
  %2265 = vmatpush1.xpose.msra.mxu0 0.0
  %2266 = vmatprep.subr.mxu0 0.0
  %2267 = vmatpush1.xpose.msra.mxu0 0.0
  %2268 = vmatprep.subr.mxu0 0.0
  %2269 = vmatpush1.xpose.msra.mxu0 0.0
  %2270 = vmatprep.subr.mxu0 0.0
  %2271 = vmatpush1.xpose.msra.mxu0 0.0
  %2272 = vmatprep.subr.mxu0 0.0
  %2273 = vmatpush1.xpose.msra.mxu0 0.0
  %2274 = vmatprep.subr.mxu0 0.0
  %2275 = vmatpush1.xpose.msra.mxu0 0.0
  %2276 = vmatprep.subr.mxu0 0.0
  %2277 = vmatpush1.xpose.msra.mxu0 0.0
  %2278 = vmatprep.subr.mxu0 0.0
  %2279 = vmatpush1.xpose.msra.mxu0 0.0
  %2280 = vmatprep.subr.mxu0 0.0
  %2281 = vmatpush1.xpose.msra.mxu0 0.0
  %2282 = vmatprep.subr.mxu0 0.0
  %2283 = vmatpush1.xpose.msra.mxu0 0.0
  %2284 = vmatprep.subr.mxu0 0.0
  %2285 = vmatpush1.xpose.msra.mxu0 0.0
  %2286 = vmatprep.subr.mxu0 0.0
  %2287 = vmatpush1.xpose.msra.mxu0 0.0
  %2288 = vmatprep.subr.mxu0 0.0
  %2289 = vmatpush1.xpose.msra.mxu0 0.0
  %2290 = vmatprep.subr.mxu0 0.0
  %2291 = vmatpush1.xpose.msra.mxu0 0.0
  %2292 = vmatprep.subr.mxu0 0.0
  %2293 = vmatpush1.xpose.msra.mxu0 0.0
  %2294 = vmatprep.mubr.f32.mxu0 0.0
  %2295 = vmatmul.mubr.f32.gmra.mrb[0].mxu0 %v2226
  %v2296 = vpop.f32.mrb[0].mxu0
  %v2297 = vadd.f32 0.0, %v2296
  %v2298 = vpop.f32.mrb[0].mxu0
  %2299 = vdwg.mxu0
  %2300 = vrot.lane.b32.xlu0 %v1831, 120
  %v2301 = vpop.permute.xlu0 %2300
  %2302 = vrot.lane.b32.xlu0 %v1889, 120
  %v2303 = vpop.permute.xlu0 %2302
  %v2304 = vsel %vm187, %v2301, 0
  %v2306 = vsel %vm187, %v2303, 0
  %2308 = vmatprep.subr.mxu0 0.0
  %2309 = vmatpush1.xpose.msra.mxu0 %v2306
  %2310 = vmatprep.subr.mxu0 0.0
  %2311 = vmatpush1.xpose.msra.mxu0 0.0
  %2312 = vmatprep.subr.mxu0 0.0
  %2313 = vmatpush1.xpose.msra.mxu0 0.0
  %2314 = vmatprep.subr.mxu0 0.0
  %2315 = vmatpush1.xpose.msra.mxu0 0.0
  %2316 = vmatprep.subr.mxu0 0.0
  %2317 = vmatpush1.xpose.msra.mxu0 0.0
  %2318 = vmatprep.subr.mxu0 0.0
  %2319 = vmatpush1.xpose.msra.mxu0 0.0
  %2320 = vmatprep.subr.mxu0 0.0
  %2321 = vmatpush1.xpose.msra.mxu0 0.0
  %2322 = vmatprep.subr.mxu0 0.0
  %2323 = vmatpush1.xpose.msra.mxu0 0.0
  %2324 = vmatprep.subr.mxu0 0.0
  %2325 = vmatpush1.xpose.msra.mxu0 0.0
  %2326 = vmatprep.subr.mxu0 0.0
  %2327 = vmatpush1.xpose.msra.mxu0 0.0
  %2328 = vmatprep.subr.mxu0 0.0
  %2329 = vmatpush1.xpose.msra.mxu0 0.0
  %2330 = vmatprep.subr.mxu0 0.0
  %2331 = vmatpush1.xpose.msra.mxu0 0.0
  %2332 = vmatprep.subr.mxu0 0.0
  %2333 = vmatpush1.xpose.msra.mxu0 0.0
  %2334 = vmatprep.subr.mxu0 0.0
  %2335 = vmatpush1.xpose.msra.mxu0 0.0
  %2336 = vmatprep.subr.mxu0 0.0
  %2337 = vmatpush1.xpose.msra.mxu0 0.0
  %2338 = vmatprep.subr.mxu0 0.0
  %2339 = vmatpush1.xpose.msra.mxu0 0.0
  %2340 = vmatprep.subr.mxu0 0.0
  %2341 = vmatpush1.xpose.msra.mxu0 0.0
  %2342 = vmatprep.subr.mxu0 0.0
  %2343 = vmatpush1.xpose.msra.mxu0 0.0
  %2344 = vmatprep.subr.mxu0 0.0
  %2345 = vmatpush1.xpose.msra.mxu0 0.0
  %2346 = vmatprep.subr.mxu0 0.0
  %2347 = vmatpush1.xpose.msra.mxu0 0.0
  %2348 = vmatprep.subr.mxu0 0.0
  %2349 = vmatpush1.xpose.msra.mxu0 0.0
  %2350 = vmatprep.subr.mxu0 0.0
  %2351 = vmatpush1.xpose.msra.mxu0 0.0
  %2352 = vmatprep.subr.mxu0 0.0
  %2353 = vmatpush1.xpose.msra.mxu0 0.0
  %2354 = vmatprep.subr.mxu0 0.0
  %2355 = vmatpush1.xpose.msra.mxu0 0.0
  %2356 = vmatprep.subr.mxu0 0.0
  %2357 = vmatpush1.xpose.msra.mxu0 0.0
  %2358 = vmatprep.subr.mxu0 0.0
  %2359 = vmatpush1.xpose.msra.mxu0 0.0
  %2360 = vmatprep.subr.mxu0 0.0
  %2361 = vmatpush1.xpose.msra.mxu0 0.0
  %2362 = vmatprep.subr.mxu0 0.0
  %2363 = vmatpush1.xpose.msra.mxu0 0.0
  %2364 = vmatprep.subr.mxu0 0.0
  %2365 = vmatpush1.xpose.msra.mxu0 0.0
  %2366 = vmatprep.subr.mxu0 0.0
  %2367 = vmatpush1.xpose.msra.mxu0 0.0
  %2368 = vmatprep.subr.mxu0 0.0
  %2369 = vmatpush1.xpose.msra.mxu0 0.0
  %2370 = vmatprep.subr.mxu0 0.0
  %2371 = vmatpush1.xpose.msra.mxu0 0.0
  %2372 = vmatprep.mubr.f32.mxu0 0.0
  %2373 = vmatmul.mubr.f32.gmra.mrb[0].mxu0 %v2304
  %v2374 = vpop.f32.mrb[0].mxu0
  %v2375 = vadd.f32 0.0, %v2374
  %v2376 = vpop.f32.mrb[0].mxu0
  %2377 = vdwg.mxu0
  %v2378 = vmul.f32 %v2297, 0.35355338
  %v2379 = vmul.f32 %v2375, 0.35355338
  %v2380 = vsel %vm187, %v2378, -inf
  %2381 = vmax.xlane.f32.xlu0 %v2380
  %v2382 = vpop.xlane.xlu0 %2381
  %v2383 = vsel %vm187, %v2379, -inf
  %2384 = vmax.xlane.f32.xlu0 %v2383
  %v2385 = vpop.xlane.xlu0 %2384
  %v2386 = vsub.f32 %v2378, %v2382
  %v2387 = vsub.f32 %v2379, %v2385
  %v2388 = vmul.f32 %v2386, 1.442695
  %v2389 = vpow.pop %v2388
  %v2390 = vmul.f32 %v2387, 1.442695
  %v2391 = vpow.pop %v2390
  %v2392 = vsel %vm187, %v2389, 0.0
  %2393 = vadd.xlane.f32.xlu0 %v2392
  %v2394 = vpop.xlane.xlu0 %2393
  %v2395 = vsel %vm187, %v2391, 0.0
  %2396 = vadd.xlane.f32.xlu0 %v2395
  %v2397 = vpop.xlane.xlu0 %2396
  %v2398 = vrcp.pop %v2394
  %v2399 = vrcp.pop %v2397
  %v2400 = vmul.f32 %v2389, %v2398
  %v2401 = vmul.f32 %v2391, %v2399
  %2402 = vrot.lane.b32.xlu0 %v1886, 88
  %v2403 = vpop.permute.xlu0 %2402
  %v2406 = vsel %vm187, %v2400, 0
  %2408 = vmatprep.subr.mxu0 0.0
  %2409 = vmatpush1.msra.mxu0 %v2403
  %2410 = vmatprep.subr.mxu0 0.0
  %2411 = vmatpush1.msra.mxu0 0.0
  %2412 = vmatprep.subr.mxu0 0.0
  %2413 = vmatpush1.msra.mxu0 0.0
  %2414 = vmatprep.subr.mxu0 0.0
  %2415 = vmatpush1.msra.mxu0 0.0
  %2416 = vmatprep.subr.mxu0 0.0
  %2417 = vmatpush1.msra.mxu0 0.0
  %2418 = vmatprep.subr.mxu0 0.0
  %2419 = vmatpush1.msra.mxu0 0.0
  %2420 = vmatprep.subr.mxu0 0.0
  %2421 = vmatpush1.msra.mxu0 0.0
  %2422 = vmatprep.subr.mxu0 0.0
  %2423 = vmatpush1.msra.mxu0 0.0
  %2424 = vmatprep.subr.mxu0 0.0
  %2425 = vmatpush1.msra.mxu0 0.0
  %2426 = vmatprep.subr.mxu0 0.0
  %2427 = vmatpush1.msra.mxu0 0.0
  %2428 = vmatprep.subr.mxu0 0.0
  %2429 = vmatpush1.msra.mxu0 0.0
  %2430 = vmatprep.subr.mxu0 0.0
  %2431 = vmatpush1.msra.mxu0 0.0
  %2432 = vmatprep.subr.mxu0 0.0
  %2433 = vmatpush1.msra.mxu0 0.0
  %2434 = vmatprep.subr.mxu0 0.0
  %2435 = vmatpush1.msra.mxu0 0.0
  %2436 = vmatprep.subr.mxu0 0.0
  %2437 = vmatpush1.msra.mxu0 0.0
  %2438 = vmatprep.subr.mxu0 0.0
  %2439 = vmatpush1.msra.mxu0 0.0
  %2440 = vmatprep.subr.mxu0 0.0
  %2441 = vmatpush1.msra.mxu0 0.0
  %2442 = vmatprep.subr.mxu0 0.0
  %2443 = vmatpush1.msra.mxu0 0.0
  %2444 = vmatprep.subr.mxu0 0.0
  %2445 = vmatpush1.msra.mxu0 0.0
  %2446 = vmatprep.subr.mxu0 0.0
  %2447 = vmatpush1.msra.mxu0 0.0
  %2448 = vmatprep.subr.mxu0 0.0
  %2449 = vmatpush1.msra.mxu0 0.0
  %2450 = vmatprep.subr.mxu0 0.0
  %2451 = vmatpush1.msra.mxu0 0.0
  %2452 = vmatprep.subr.mxu0 0.0
  %2453 = vmatpush1.msra.mxu0 0.0
  %2454 = vmatprep.subr.mxu0 0.0
  %2455 = vmatpush1.msra.mxu0 0.0
  %2456 = vmatprep.subr.mxu0 0.0
  %2457 = vmatpush1.msra.mxu0 0.0
  %2458 = vmatprep.subr.mxu0 0.0
  %2459 = vmatpush1.msra.mxu0 0.0
  %2460 = vmatprep.subr.mxu0 0.0
  %2461 = vmatpush1.msra.mxu0 0.0
  %2462 = vmatprep.subr.mxu0 0.0
  %2463 = vmatpush1.msra.mxu0 0.0
  %2464 = vmatprep.subr.mxu0 0.0
  %2465 = vmatpush1.msra.mxu0 0.0
  %2466 = vmatprep.subr.mxu0 0.0
  %2467 = vmatpush1.msra.mxu0 0.0
  %2468 = vmatprep.subr.mxu0 0.0
  %2469 = vmatpush1.msra.mxu0 0.0
  %2470 = vmatprep.subr.mxu0 0.0
  %2471 = vmatpush1.msra.mxu0 0.0
  %2472 = vmatprep.mubr.f32.mxu0 0.0
  %2473 = vmatmul.mubr.f32.gmra.mrb[0].mxu0 %v2406
  %v2474 = vpop.f32.mrb[0].mxu0
  %v2475 = vadd.f32 0.0, %v2474
  %v2476 = vpop.f32.mrb[0].mxu0
  %2477 = vdwg.mxu0
  %2478 = vrot.lane.b32.xlu0 %v1889, 88
  %v2479 = vpop.permute.xlu0 %2478
  %v2482 = vsel %vm187, %v2401, 0
  %2484 = vmatprep.subr.mxu0 0.0
  %2485 = vmatpush1.msra.mxu0 %v2479
  %2486 = vmatprep.subr.mxu0 0.0
  %2487 = vmatpush1.msra.mxu0 0.0
  %2488 = vmatprep.subr.mxu0 0.0
  %2489 = vmatpush1.msra.mxu0 0.0
  %2490 = vmatprep.subr.mxu0 0.0
  %2491 = vmatpush1.msra.mxu0 0.0
  %2492 = vmatprep.subr.mxu0 0.0
  %2493 = vmatpush1.msra.mxu0 0.0
  %2494 = vmatprep.subr.mxu0 0.0
  %2495 = vmatpush1.msra.mxu0 0.0
  %2496 = vmatprep.subr.mxu0 0.0
  %2497 = vmatpush1.msra.mxu0 0.0
  %2498 = vmatprep.subr.mxu0 0.0
  %2499 = vmatpush1.msra.mxu0 0.0
  %2500 = vmatprep.subr.mxu0 0.0
  %2501 = vmatpush1.msra.mxu0 0.0
  %2502 = vmatprep.subr.mxu0 0.0
  %2503 = vmatpush1.msra.mxu0 0.0
  %2504 = vmatprep.subr.mxu0 0.0
  %2505 = vmatpush1.msra.mxu0 0.0
  %2506 = vmatprep.subr.mxu0 0.0
  %2507 = vmatpush1.msra.mxu0 0.0
  %2508 = vmatprep.subr.mxu0 0.0
  %2509 = vmatpush1.msra.mxu0 0.0
  %2510 = vmatprep.subr.mxu0 0.0
  %2511 = vmatpush1.msra.mxu0 0.0
  %2512 = vmatprep.subr.mxu0 0.0
  %2513 = vmatpush1.msra.mxu0 0.0
  %2514 = vmatprep.subr.mxu0 0.0
  %2515 = vmatpush1.msra.mxu0 0.0
  %2516 = vmatprep.subr.mxu0 0.0
  %2517 = vmatpush1.msra.mxu0 0.0
  %2518 = vmatprep.subr.mxu0 0.0
  %2519 = vmatpush1.msra.mxu0 0.0
  %2520 = vmatprep.subr.mxu0 0.0
  %2521 = vmatpush1.msra.mxu0 0.0
  %2522 = vmatprep.subr.mxu0 0.0
  %2523 = vmatpush1.msra.mxu0 0.0
  %2524 = vmatprep.subr.mxu0 0.0
  %2525 = vmatpush1.msra.mxu0 0.0
  %2526 = vmatprep.subr.mxu0 0.0
  %2527 = vmatpush1.msra.mxu0 0.0
  %2528 = vmatprep.subr.mxu0 0.0
  %2529 = vmatpush1.msra.mxu0 0.0
  %2530 = vmatprep.subr.mxu0 0.0
  %2531 = vmatpush1.msra.mxu0 0.0
  %2532 = vmatprep.subr.mxu0 0.0
  %2533 = vmatpush1.msra.mxu0 0.0
  %2534 = vmatprep.subr.mxu0 0.0
  %2535 = vmatpush1.msra.mxu0 0.0
  %2536 = vmatprep.subr.mxu0 0.0
  %2537 = vmatpush1.msra.mxu0 0.0
  %2538 = vmatprep.subr.mxu0 0.0
  %2539 = vmatpush1.msra.mxu0 0.0
  %2540 = vmatprep.subr.mxu0 0.0
  %2541 = vmatpush1.msra.mxu0 0.0
  %2542 = vmatprep.subr.mxu0 0.0
  %2543 = vmatpush1.msra.mxu0 0.0
  %2544 = vmatprep.subr.mxu0 0.0
  %2545 = vmatpush1.msra.mxu0 0.0
  %2546 = vmatprep.subr.mxu0 0.0
  %2547 = vmatpush1.msra.mxu0 0.0
  %2548 = vmatprep.mubr.f32.mxu0 0.0
  %2549 = vmatmul.mubr.f32.gmra.mrb[0].mxu0 %v2482
  %v2550 = vpop.f32.mrb[0].mxu0
  %v2551 = vadd.f32 0.0, %v2550
  %v2552 = vpop.f32.mrb[0].mxu0
  %2553 = vdwg.mxu0
  %2556 = vrot.lane.b32.xlu0 %v2475, 8
  %v2557 = vpop.permute.xlu0 %2556
  %2558 = vrot.lane.b32.xlu0 %v2551, 8
  %v2559 = vpop.permute.xlu0 %2558
  %2562 = vst.msk [vmem:[#allocation2] sm:$0xff] %vm857, %v2557
  %2563 = vst.msk [vmem:[#allocation2 + $0x8] sm:$0xff] %vm857, %v2559
  %2564 = vrot.lane.b32.xlu0 %v1828, 112
  %v2565 = vpop.permute.xlu0 %2564
  %2566 = vrot.lane.b32.xlu0 %v1886, 112
  %v2567 = vpop.permute.xlu0 %2566
  %v2568 = vsel %vm187, %v2565, 0
  %v2570 = vsel %vm187, %v2567, 0
  %2572 = vmatprep.subr.mxu0 0.0
  %2573 = vmatpush1.xpose.msra.mxu0 %v2570
  %2574 = vmatprep.subr.mxu0 0.0
  %2575 = vmatpush1.xpose.msra.mxu0 0.0
  %2576 = vmatprep.subr.mxu0 0.0
  %2577 = vmatpush1.xpose.msra.mxu0 0.0
  %2578 = vmatprep.subr.mxu0 0.0
  %2579 = vmatpush1.xpose.msra.mxu0 0.0
  %2580 = vmatprep.subr.mxu0 0.0
  %2581 = vmatpush1.xpose.msra.mxu0 0.0
  %2582 = vmatprep.subr.mxu0 0.0
  %2583 = vmatpush1.xpose.msra.mxu0 0.0
  %2584 = vmatprep.subr.mxu0 0.0
  %2585 = vmatpush1.xpose.msra.mxu0 0.0
  %2586 = vmatprep.subr.mxu0 0.0
  %2587 = vmatpush1.xpose.msra.mxu0 0.0
  %2588 = vmatprep.subr.mxu0 0.0
  %2589 = vmatpush1.xpose.msra.mxu0 0.0
  %2590 = vmatprep.subr.mxu0 0.0
  %2591 = vmatpush1.xpose.msra.mxu0 0.0
  %2592 = vmatprep.subr.mxu0 0.0
  %2593 = vmatpush1.xpose.msra.mxu0 0.0
  %2594 = vmatprep.subr.mxu0 0.0
  %2595 = vmatpush1.xpose.msra.mxu0 0.0
  %2596 = vmatprep.subr.mxu0 0.0
  %2597 = vmatpush1.xpose.msra.mxu0 0.0
  %2598 = vmatprep.subr.mxu0 0.0
  %2599 = vmatpush1.xpose.msra.mxu0 0.0
  %2600 = vmatprep.subr.mxu0 0.0
  %2601 = vmatpush1.xpose.msra.mxu0 0.0
  %2602 = vmatprep.subr.mxu0 0.0
  %2603 = vmatpush1.xpose.msra.mxu0 0.0
  %2604 = vmatprep.subr.mxu0 0.0
  %2605 = vmatpush1.xpose.msra.mxu0 0.0
  %2606 = vmatprep.subr.mxu0 0.0
  %2607 = vmatpush1.xpose.msra.mxu0 0.0
  %2608 = vmatprep.subr.mxu0 0.0
  %2609 = vmatpush1.xpose.msra.mxu0 0.0
  %2610 = vmatprep.subr.mxu0 0.0
  %2611 = vmatpush1.xpose.msra.mxu0 0.0
  %2612 = vmatprep.subr.mxu0 0.0
  %2613 = vmatpush1.xpose.msra.mxu0 0.0
  %2614 = vmatprep.subr.mxu0 0.0
  %2615 = vmatpush1.xpose.msra.mxu0 0.0
  %2616 = vmatprep.subr.mxu0 0.0
  %2617 = vmatpush1.xpose.msra.mxu0 0.0
  %2618 = vmatprep.subr.mxu0 0.0
  %2619 = vmatpush1.xpose.msra.mxu0 0.0
  %2620 = vmatprep.subr.mxu0 0.0
  %2621 = vmatpush1.xpose.msra.mxu0 0.0
  %2622 = vmatprep.subr.mxu0 0.0
  %2623 = vmatpush1.xpose.msra.mxu0 0.0
  %2624 = vmatprep.subr.mxu0 0.0
  %2625 = vmatpush1.xpose.msra.mxu0 0.0
  %2626 = vmatprep.subr.mxu0 0.0
  %2627 = vmatpush1.xpose.msra.mxu0 0.0
  %2628 = vmatprep.subr.mxu0 0.0
  %2629 = vmatpush1.xpose.msra.mxu0 0.0
  %2630 = vmatprep.subr.mxu0 0.0
  %2631 = vmatpush1.xpose.msra.mxu0 0.0
  %2632 = vmatprep.subr.mxu0 0.0
  %2633 = vmatpush1.xpose.msra.mxu0 0.0
  %2634 = vmatprep.subr.mxu0 0.0
  %2635 = vmatpush1.xpose.msra.mxu0 0.0
  %2636 = vmatprep.mubr.f32.mxu0 0.0
  %2637 = vmatmul.mubr.f32.gmra.mrb[0].mxu0 %v2568
  %v2638 = vpop.f32.mrb[0].mxu0
  %v2639 = vadd.f32 0.0, %v2638
  %v2640 = vpop.f32.mrb[0].mxu0
  %2641 = vdwg.mxu0
  %2642 = vrot.lane.b32.xlu0 %v1831, 112
  %v2643 = vpop.permute.xlu0 %2642
  %2644 = vrot.lane.b32.xlu0 %v1889, 112
  %v2645 = vpop.permute.xlu0 %2644
  %v2646 = vsel %vm187, %v2643, 0
  %v2648 = vsel %vm187, %v2645, 0
  %2650 = vmatprep.subr.mxu0 0.0
  %2651 = vmatpush1.xpose.msra.mxu0 %v2648
  %2652 = vmatprep.subr.mxu0 0.0
  %2653 = vmatpush1.xpose.msra.mxu0 0.0
  %2654 = vmatprep.subr.mxu0 0.0
  %2655 = vmatpush1.xpose.msra.mxu0 0.0
  %2656 = vmatprep.subr.mxu0 0.0
  %2657 = vmatpush1.xpose.msra.mxu0 0.0
  %2658 = vmatprep.subr.mxu0 0.0
  %2659 = vmatpush1.xpose.msra.mxu0 0.0
  %2660 = vmatprep.subr.mxu0 0.0
  %2661 = vmatpush1.xpose.msra.mxu0 0.0
  %2662 = vmatprep.subr.mxu0 0.0
  %2663 = vmatpush1.xpose.msra.mxu0 0.0
  %2664 = vmatprep.subr.mxu0 0.0
  %2665 = vmatpush1.xpose.msra.mxu0 0.0
  %2666 = vmatprep.subr.mxu0 0.0
  %2667 = vmatpush1.xpose.msra.mxu0 0.0
  %2668 = vmatprep.subr.mxu0 0.0
  %2669 = vmatpush1.xpose.msra.mxu0 0.0
  %2670 = vmatprep.subr.mxu0 0.0
  %2671 = vmatpush1.xpose.msra.mxu0 0.0
  %2672 = vmatprep.subr.mxu0 0.0
  %2673 = vmatpush1.xpose.msra.mxu0 0.0
  %2674 = vmatprep.subr.mxu0 0.0
  %2675 = vmatpush1.xpose.msra.mxu0 0.0
  %2676 = vmatprep.subr.mxu0 0.0
  %2677 = vmatpush1.xpose.msra.mxu0 0.0
  %2678 = vmatprep.subr.mxu0 0.0
  %2679 = vmatpush1.xpose.msra.mxu0 0.0
  %2680 = vmatprep.subr.mxu0 0.0
  %2681 = vmatpush1.xpose.msra.mxu0 0.0
  %2682 = vmatprep.subr.mxu0 0.0
  %2683 = vmatpush1.xpose.msra.mxu0 0.0
  %2684 = vmatprep.subr.mxu0 0.0
  %2685 = vmatpush1.xpose.msra.mxu0 0.0
  %2686 = vmatprep.subr.mxu0 0.0
  %2687 = vmatpush1.xpose.msra.mxu0 0.0
  %2688 = vmatprep.subr.mxu0 0.0
  %2689 = vmatpush1.xpose.msra.mxu0 0.0
  %2690 = vmatprep.subr.mxu0 0.0
  %2691 = vmatpush1.xpose.msra.mxu0 0.0
  %2692 = vmatprep.subr.mxu0 0.0
  %2693 = vmatpush1.xpose.msra.mxu0 0.0
  %2694 = vmatprep.subr.mxu0 0.0
  %2695 = vmatpush1.xpose.msra.mxu0 0.0
  %2696 = vmatprep.subr.mxu0 0.0
  %2697 = vmatpush1.xpose.msra.mxu0 0.0
  %2698 = vmatprep.subr.mxu0 0.0
  %2699 = vmatpush1.xpose.msra.mxu0 0.0
  %2700 = vmatprep.subr.mxu0 0.0
  %2701 = vmatpush1.xpose.msra.mxu0 0.0
  %2702 = vmatprep.subr.mxu0 0.0
  %2703 = vmatpush1.xpose.msra.mxu0 0.0
  %2704 = vmatprep.subr.mxu0 0.0
  %2705 = vmatpush1.xpose.msra.mxu0 0.0
  %2706 = vmatprep.subr.mxu0 0.0
  %2707 = vmatpush1.xpose.msra.mxu0 0.0
  %2708 = vmatprep.subr.mxu0 0.0
  %2709 = vmatpush1.xpose.msra.mxu0 0.0
  %2710 = vmatprep.subr.mxu0 0.0
  %2711 = vmatpush1.xpose.msra.mxu0 0.0
  %2712 = vmatprep.subr.mxu0 0.0
  %2713 = vmatpush1.xpose.msra.mxu0 0.0
  %2714 = vmatprep.mubr.f32.mxu0 0.0
  %2715 = vmatmul.mubr.f32.gmra.mrb[0].mxu0 %v2646
  %v2716 = vpop.f32.mrb[0].mxu0
  %v2717 = vadd.f32 0.0, %v2716
  %v2718 = vpop.f32.mrb[0].mxu0
  %2719 = vdwg.mxu0
  %v2720 = vmul.f32 %v2639, 0.35355338
  %v2721 = vmul.f32 %v2717, 0.35355338
  %v2722 = vsel %vm187, %v2720, -inf
  %2723 = vmax.xlane.f32.xlu0 %v2722
  %v2724 = vpop.xlane.xlu0 %2723
  %v2725 = vsel %vm187, %v2721, -inf
  %2726 = vmax.xlane.f32.xlu0 %v2725
  %v2727 = vpop.xlane.xlu0 %2726
  %v2728 = vsub.f32 %v2720, %v2724
  %v2729 = vsub.f32 %v2721, %v2727
  %v2730 = vmul.f32 %v2728, 1.442695
  %v2731 = vpow.pop %v2730
  %v2732 = vmul.f32 %v2729, 1.442695
  %v2733 = vpow.pop %v2732
  %v2734 = vsel %vm187, %v2731, 0.0
  %2735 = vadd.xlane.f32.xlu0 %v2734
  %v2736 = vpop.xlane.xlu0 %2735
  %v2737 = vsel %vm187, %v2733, 0.0
  %2738 = vadd.xlane.f32.xlu0 %v2737
  %v2739 = vpop.xlane.xlu0 %2738
  %v2740 = vrcp.pop %v2736
  %v2741 = vrcp.pop %v2739
  %v2742 = vmul.f32 %v2731, %v2740
  %v2743 = vmul.f32 %v2733, %v2741
  %2744 = vrot.lane.b32.xlu0 %v1886, 80
  %v2745 = vpop.permute.xlu0 %2744
  %v2748 = vsel %vm187, %v2742, 0
  %2750 = vmatprep.subr.mxu0 0.0
  %2751 = vmatpush1.msra.mxu0 %v2745
  %2752 = vmatprep.subr.mxu0 0.0
  %2753 = vmatpush1.msra.mxu0 0.0
  %2754 = vmatprep.subr.mxu0 0.0
  %2755 = vmatpush1.msra.mxu0 0.0
  %2756 = vmatprep.subr.mxu0 0.0
  %2757 = vmatpush1.msra.mxu0 0.0
  %2758 = vmatprep.subr.mxu0 0.0
  %2759 = vmatpush1.msra.mxu0 0.0
  %2760 = vmatprep.subr.mxu0 0.0
  %2761 = vmatpush1.msra.mxu0 0.0
  %2762 = vmatprep.subr.mxu0 0.0
  %2763 = vmatpush1.msra.mxu0 0.0
  %2764 = vmatprep.subr.mxu0 0.0
  %2765 = vmatpush1.msra.mxu0 0.0
  %2766 = vmatprep.subr.mxu0 0.0
  %2767 = vmatpush1.msra.mxu0 0.0
  %2768 = vmatprep.subr.mxu0 0.0
  %2769 = vmatpush1.msra.mxu0 0.0
  %2770 = vmatprep.subr.mxu0 0.0
  %2771 = vmatpush1.msra.mxu0 0.0
  %2772 = vmatprep.subr.mxu0 0.0
  %2773 = vmatpush1.msra.mxu0 0.0
  %2774 = vmatprep.subr.mxu0 0.0
  %2775 = vmatpush1.msra.mxu0 0.0
  %2776 = vmatprep.subr.mxu0 0.0
  %2777 = vmatpush1.msra.mxu0 0.0
  %2778 = vmatprep.subr.mxu0 0.0
  %2779 = vmatpush1.msra.mxu0 0.0
  %2780 = vmatprep.subr.mxu0 0.0
  %2781 = vmatpush1.msra.mxu0 0.0
  %2782 = vmatprep.subr.mxu0 0.0
  %2783 = vmatpush1.msra.mxu0 0.0
  %2784 = vmatprep.subr.mxu0 0.0
  %2785 = vmatpush1.msra.mxu0 0.0
  %2786 = vmatprep.subr.mxu0 0.0
  %2787 = vmatpush1.msra.mxu0 0.0
  %2788 = vmatprep.subr.mxu0 0.0
  %2789 = vmatpush1.msra.mxu0 0.0
  %2790 = vmatprep.subr.mxu0 0.0
  %2791 = vmatpush1.msra.mxu0 0.0
  %2792 = vmatprep.subr.mxu0 0.0
  %2793 = vmatpush1.msra.mxu0 0.0
  %2794 = vmatprep.subr.mxu0 0.0
  %2795 = vmatpush1.msra.mxu0 0.0
  %2796 = vmatprep.subr.mxu0 0.0
  %2797 = vmatpush1.msra.mxu0 0.0
  %2798 = vmatprep.subr.mxu0 0.0
  %2799 = vmatpush1.msra.mxu0 0.0
  %2800 = vmatprep.subr.mxu0 0.0
  %2801 = vmatpush1.msra.mxu0 0.0
  %2802 = vmatprep.subr.mxu0 0.0
  %2803 = vmatpush1.msra.mxu0 0.0
  %2804 = vmatprep.subr.mxu0 0.0
  %2805 = vmatpush1.msra.mxu0 0.0
  %2806 = vmatprep.subr.mxu0 0.0
  %2807 = vmatpush1.msra.mxu0 0.0
  %2808 = vmatprep.subr.mxu0 0.0
  %2809 = vmatpush1.msra.mxu0 0.0
  %2810 = vmatprep.subr.mxu0 0.0
  %2811 = vmatpush1.msra.mxu0 0.0
  %2812 = vmatprep.subr.mxu0 0.0
  %2813 = vmatpush1.msra.mxu0 0.0
  %2814 = vmatprep.mubr.f32.mxu0 0.0
  %2815 = vmatmul.mubr.f32.gmra.mrb[0].mxu0 %v2748
  %v2816 = vpop.f32.mrb[0].mxu0
  %v2817 = vadd.f32 0.0, %v2816
  %v2818 = vpop.f32.mrb[0].mxu0
  %2819 = vdwg.mxu0
  %2820 = vrot.lane.b32.xlu0 %v1889, 80
  %v2821 = vpop.permute.xlu0 %2820
  %v2824 = vsel %vm187, %v2743, 0
  %2826 = vmatprep.subr.mxu0 0.0
  %2827 = vmatpush1.msra.mxu0 %v2821
  %2828 = vmatprep.subr.mxu0 0.0
  %2829 = vmatpush1.msra.mxu0 0.0
  %2830 = vmatprep.subr.mxu0 0.0
  %2831 = vmatpush1.msra.mxu0 0.0
  %2832 = vmatprep.subr.mxu0 0.0
  %2833 = vmatpush1.msra.mxu0 0.0
  %2834 = vmatprep.subr.mxu0 0.0
  %2835 = vmatpush1.msra.mxu0 0.0
  %2836 = vmatprep.subr.mxu0 0.0
  %2837 = vmatpush1.msra.mxu0 0.0
  %2838 = vmatprep.subr.mxu0 0.0
  %2839 = vmatpush1.msra.mxu0 0.0
  %2840 = vmatprep.subr.mxu0 0.0
  %2841 = vmatpush1.msra.mxu0 0.0
  %2842 = vmatprep.subr.mxu0 0.0
  %2843 = vmatpush1.msra.mxu0 0.0
  %2844 = vmatprep.subr.mxu0 0.0
  %2845 = vmatpush1.msra.mxu0 0.0
  %2846 = vmatprep.subr.mxu0 0.0
  %2847 = vmatpush1.msra.mxu0 0.0
  %2848 = vmatprep.subr.mxu0 0.0
  %2849 = vmatpush1.msra.mxu0 0.0
  %2850 = vmatprep.subr.mxu0 0.0
  %2851 = vmatpush1.msra.mxu0 0.0
  %2852 = vmatprep.subr.mxu0 0.0
  %2853 = vmatpush1.msra.mxu0 0.0
  %2854 = vmatprep.subr.mxu0 0.0
  %2855 = vmatpush1.msra.mxu0 0.0
  %2856 = vmatprep.subr.mxu0 0.0
  %2857 = vmatpush1.msra.mxu0 0.0
  %2858 = vmatprep.subr.mxu0 0.0
  %2859 = vmatpush1.msra.mxu0 0.0
  %2860 = vmatprep.subr.mxu0 0.0
  %2861 = vmatpush1.msra.mxu0 0.0
  %2862 = vmatprep.subr.mxu0 0.0
  %2863 = vmatpush1.msra.mxu0 0.0
  %2864 = vmatprep.subr.mxu0 0.0
  %2865 = vmatpush1.msra.mxu0 0.0
  %2866 = vmatprep.subr.mxu0 0.0
  %2867 = vmatpush1.msra.mxu0 0.0
  %2868 = vmatprep.subr.mxu0 0.0
  %2869 = vmatpush1.msra.mxu0 0.0
  %2870 = vmatprep.subr.mxu0 0.0
  %2871 = vmatpush1.msra.mxu0 0.0
  %2872 = vmatprep.subr.mxu0 0.0
  %2873 = vmatpush1.msra.mxu0 0.0
  %2874 = vmatprep.subr.mxu0 0.0
  %2875 = vmatpush1.msra.mxu0 0.0
  %2876 = vmatprep.subr.mxu0 0.0
  %2877 = vmatpush1.msra.mxu0 0.0
  %2878 = vmatprep.subr.mxu0 0.0
  %2879 = vmatpush1.msra.mxu0 0.0
  %2880 = vmatprep.subr.mxu0 0.0
  %2881 = vmatpush1.msra.mxu0 0.0
  %2882 = vmatprep.subr.mxu0 0.0
  %2883 = vmatpush1.msra.mxu0 0.0
  %2884 = vmatprep.subr.mxu0 0.0
  %2885 = vmatpush1.msra.mxu0 0.0
  %2886 = vmatprep.subr.mxu0 0.0
  %2887 = vmatpush1.msra.mxu0 0.0
  %2888 = vmatprep.subr.mxu0 0.0
  %2889 = vmatpush1.msra.mxu0 0.0
  %2890 = vmatprep.mubr.f32.mxu0 0.0
  %2891 = vmatmul.mubr.f32.gmra.mrb[0].mxu0 %v2824
  %v2892 = vpop.f32.mrb[0].mxu0
  %v2893 = vadd.f32 0.0, %v2892
  %v2894 = vpop.f32.mrb[0].mxu0
  %2895 = vdwg.mxu0
  %2898 = vrot.lane.b32.xlu0 %v2817, 16
  %v2899 = vpop.permute.xlu0 %2898
  %2900 = vrot.lane.b32.xlu0 %v2893, 16
  %v2901 = vpop.permute.xlu0 %2900
  %2904 = vst.msk [vmem:[#allocation2] sm:$0xff] %vm1200, %v2899
  %2905 = vst.msk [vmem:[#allocation2 + $0x8] sm:$0xff] %vm1200, %v2901
  %2906 = vrot.lane.b32.xlu0 %v1828, 104
  %v2907 = vpop.permute.xlu0 %2906
  %2908 = vrot.lane.b32.xlu0 %v1886, 104
  %v2909 = vpop.permute.xlu0 %2908
  %v2910 = vsel %vm187, %v2907, 0
  %v2912 = vsel %vm187, %v2909, 0
  %2914 = vmatprep.subr.mxu0 0.0
  %2915 = vmatpush1.xpose.msra.mxu0 %v2912
  %2916 = vmatprep.subr.mxu0 0.0
  %2917 = vmatpush1.xpose.msra.mxu0 0.0
  %2918 = vmatprep.subr.mxu0 0.0
  %2919 = vmatpush1.xpose.msra.mxu0 0.0
  %2920 = vmatprep.subr.mxu0 0.0
  %2921 = vmatpush1.xpose.msra.mxu0 0.0
  %2922 = vmatprep.subr.mxu0 0.0
  %2923 = vmatpush1.xpose.msra.mxu0 0.0
  %2924 = vmatprep.subr.mxu0 0.0
  %2925 = vmatpush1.xpose.msra.mxu0 0.0
  %2926 = vmatprep.subr.mxu0 0.0
  %2927 = vmatpush1.xpose.msra.mxu0 0.0
  %2928 = vmatprep.subr.mxu0 0.0
  %2929 = vmatpush1.xpose.msra.mxu0 0.0
  %2930 = vmatprep.subr.mxu0 0.0
  %2931 = vmatpush1.xpose.msra.mxu0 0.0
  %2932 = vmatprep.subr.mxu0 0.0
  %2933 = vmatpush1.xpose.msra.mxu0 0.0
  %2934 = vmatprep.subr.mxu0 0.0
  %2935 = vmatpush1.xpose.msra.mxu0 0.0
  %2936 = vmatprep.subr.mxu0 0.0
  %2937 = vmatpush1.xpose.msra.mxu0 0.0
  %2938 = vmatprep.subr.mxu0 0.0
  %2939 = vmatpush1.xpose.msra.mxu0 0.0
  %2940 = vmatprep.subr.mxu0 0.0
  %2941 = vmatpush1.xpose.msra.mxu0 0.0
  %2942 = vmatprep.subr.mxu0 0.0
  %2943 = vmatpush1.xpose.msra.mxu0 0.0
  %2944 = vmatprep.subr.mxu0 0.0
  %2945 = vmatpush1.xpose.msra.mxu0 0.0
  %2946 = vmatprep.subr.mxu0 0.0
  %2947 = vmatpush1.xpose.msra.mxu0 0.0
  %2948 = vmatprep.subr.mxu0 0.0
  %2949 = vmatpush1.xpose.msra.mxu0 0.0
  %2950 = vmatprep.subr.mxu0 0.0
  %2951 = vmatpush1.xpose.msra.mxu0 0.0
  %2952 = vmatprep.subr.mxu0 0.0
  %2953 = vmatpush1.xpose.msra.mxu0 0.0
  %2954 = vmatprep.subr.mxu0 0.0
  %2955 = vmatpush1.xpose.msra.mxu0 0.0
  %2956 = vmatprep.subr.mxu0 0.0
  %2957 = vmatpush1.xpose.msra.mxu0 0.0
  %2958 = vmatprep.subr.mxu0 0.0
  %2959 = vmatpush1.xpose.msra.mxu0 0.0
  %2960 = vmatprep.subr.mxu0 0.0
  %2961 = vmatpush1.xpose.msra.mxu0 0.0
  %2962 = vmatprep.subr.mxu0 0.0
  %2963 = vmatpush1.xpose.msra.mxu0 0.0
  %2964 = vmatprep.subr.mxu0 0.0
  %2965 = vmatpush1.xpose.msra.mxu0 0.0
  %2966 = vmatprep.subr.mxu0 0.0
  %2967 = vmatpush1.xpose.msra.mxu0 0.0
  %2968 = vmatprep.subr.mxu0 0.0
  %2969 = vmatpush1.xpose.msra.mxu0 0.0
  %2970 = vmatprep.subr.mxu0 0.0
  %2971 = vmatpush1.xpose.msra.mxu0 0.0
  %2972 = vmatprep.subr.mxu0 0.0
  %2973 = vmatpush1.xpose.msra.mxu0 0.0
  %2974 = vmatprep.subr.mxu0 0.0
  %2975 = vmatpush1.xpose.msra.mxu0 0.0
  %2976 = vmatprep.subr.mxu0 0.0
  %2977 = vmatpush1.xpose.msra.mxu0 0.0
  %2978 = vmatprep.mubr.f32.mxu0 0.0
  %2979 = vmatmul.mubr.f32.gmra.mrb[0].mxu0 %v2910
  %v2980 = vpop.f32.mrb[0].mxu0
  %v2981 = vadd.f32 0.0, %v2980
  %v2982 = vpop.f32.mrb[0].mxu0
  %2983 = vdwg.mxu0
  %2984 = vrot.lane.b32.xlu0 %v1831, 104
  %v2985 = vpop.permute.xlu0 %2984
  %2986 = vrot.lane.b32.xlu0 %v1889, 104
  %v2987 = vpop.permute.xlu0 %2986
  %v2988 = vsel %vm187, %v2985, 0
  %v2990 = vsel %vm187, %v2987, 0
  %2992 = vmatprep.subr.mxu0 0.0
  %2993 = vmatpush1.xpose.msra.mxu0 %v2990
  %2994 = vmatprep.subr.mxu0 0.0
  %2995 = vmatpush1.xpose.msra.mxu0 0.0
  %2996 = vmatprep.subr.mxu0 0.0
  %2997 = vmatpush1.xpose.msra.mxu0 0.0
  %2998 = vmatprep.subr.mxu0 0.0
  %2999 = vmatpush1.xpose.msra.mxu0 0.0
  %3000 = vmatprep.subr.mxu0 0.0
  %3001 = vmatpush1.xpose.msra.mxu0 0.0
  %3002 = vmatprep.subr.mxu0 0.0
  %3003 = vmatpush1.xpose.msra.mxu0 0.0
  %3004 = vmatprep.subr.mxu0 0.0
  %3005 = vmatpush1.xpose.msra.mxu0 0.0
  %3006 = vmatprep.subr.mxu0 0.0
  %3007 = vmatpush1.xpose.msra.mxu0 0.0
  %3008 = vmatprep.subr.mxu0 0.0
  %3009 = vmatpush1.xpose.msra.mxu0 0.0
  %3010 = vmatprep.subr.mxu0 0.0
  %3011 = vmatpush1.xpose.msra.mxu0 0.0
  %3012 = vmatprep.subr.mxu0 0.0
  %3013 = vmatpush1.xpose.msra.mxu0 0.0
  %3014 = vmatprep.subr.mxu0 0.0
  %3015 = vmatpush1.xpose.msra.mxu0 0.0
  %3016 = vmatprep.subr.mxu0 0.0
  %3017 = vmatpush1.xpose.msra.mxu0 0.0
  %3018 = vmatprep.subr.mxu0 0.0
  %3019 = vmatpush1.xpose.msra.mxu0 0.0
  %3020 = vmatprep.subr.mxu0 0.0
  %3021 = vmatpush1.xpose.msra.mxu0 0.0
  %3022 = vmatprep.subr.mxu0 0.0
  %3023 = vmatpush1.xpose.msra.mxu0 0.0
  %3024 = vmatprep.subr.mxu0 0.0
  %3025 = vmatpush1.xpose.msra.mxu0 0.0
  %3026 = vmatprep.subr.mxu0 0.0
  %3027 = vmatpush1.xpose.msra.mxu0 0.0
  %3028 = vmatprep.subr.mxu0 0.0
  %3029 = vmatpush1.xpose.msra.mxu0 0.0
  %3030 = vmatprep.subr.mxu0 0.0
  %3031 = vmatpush1.xpose.msra.mxu0 0.0
  %3032 = vmatprep.subr.mxu0 0.0
  %3033 = vmatpush1.xpose.msra.mxu0 0.0
  %3034 = vmatprep.subr.mxu0 0.0
  %3035 = vmatpush1.xpose.msra.mxu0 0.0
  %3036 = vmatprep.subr.mxu0 0.0
  %3037 = vmatpush1.xpose.msra.mxu0 0.0
  %3038 = vmatprep.subr.mxu0 0.0
  %3039 = vmatpush1.xpose.msra.mxu0 0.0
  %3040 = vmatprep.subr.mxu0 0.0
  %3041 = vmatpush1.xpose.msra.mxu0 0.0
  %3042 = vmatprep.subr.mxu0 0.0
  %3043 = vmatpush1.xpose.msra.mxu0 0.0
  %3044 = vmatprep.subr.mxu0 0.0
  %3045 = vmatpush1.xpose.msra.mxu0 0.0
  %3046 = vmatprep.subr.mxu0 0.0
  %3047 = vmatpush1.xpose.msra.mxu0 0.0
  %3048 = vmatprep.subr.mxu0 0.0
  %3049 = vmatpush1.xpose.msra.mxu0 0.0
  %3050 = vmatprep.subr.mxu0 0.0
  %3051 = vmatpush1.xpose.msra.mxu0 0.0
  %3052 = vmatprep.subr.mxu0 0.0
  %3053 = vmatpush1.xpose.msra.mxu0 0.0
  %3054 = vmatprep.subr.mxu0 0.0
  %3055 = vmatpush1.xpose.msra.mxu0 0.0
  %3056 = vmatprep.mubr.f32.mxu0 0.0
  %3057 = vmatmul.mubr.f32.gmra.mrb[0].mxu0 %v2988
  %v3058 = vpop.f32.mrb[0].mxu0
  %v3059 = vadd.f32 0.0, %v3058
  %v3060 = vpop.f32.mrb[0].mxu0
  %3061 = vdwg.mxu0
  %v3062 = vmul.f32 %v2981, 0.35355338
  %v3063 = vmul.f32 %v3059, 0.35355338
  %v3064 = vsel %vm187, %v3062, -inf
  %3065 = vmax.xlane.f32.xlu0 %v3064
  %v3066 = vpop.xlane.xlu0 %3065
  %v3067 = vsel %vm187, %v3063, -inf
  %3068 = vmax.xlane.f32.xlu0 %v3067
  %v3069 = vpop.xlane.xlu0 %3068
  %v3070 = vsub.f32 %v3062, %v3066
  %v3071 = vsub.f32 %v3063, %v3069
  %v3072 = vmul.f32 %v3070, 1.442695
  %v3073 = vpow.pop %v3072
  %v3074 = vmul.f32 %v3071, 1.442695
  %v3075 = vpow.pop %v3074
  %v3076 = vsel %vm187, %v3073, 0.0
  %3077 = vadd.xlane.f32.xlu0 %v3076
  %v3078 = vpop.xlane.xlu0 %3077
  %v3079 = vsel %vm187, %v3075, 0.0
  %3080 = vadd.xlane.f32.xlu0 %v3079
  %v3081 = vpop.xlane.xlu0 %3080
  %v3082 = vrcp.pop %v3078
  %v3083 = vrcp.pop %v3081
  %v3084 = vmul.f32 %v3073, %v3082
  %v3085 = vmul.f32 %v3075, %v3083
  %3086 = vrot.lane.b32.xlu0 %v1886, 72
  %v3087 = vpop.permute.xlu0 %3086
  %v3090 = vsel %vm187, %v3084, 0
  %3092 = vmatprep.subr.mxu0 0.0
  %3093 = vmatpush1.msra.mxu0 %v3087
  %3094 = vmatprep.subr.mxu0 0.0
  %3095 = vmatpush1.msra.mxu0 0.0
  %3096 = vmatprep.subr.mxu0 0.0
  %3097 = vmatpush1.msra.mxu0 0.0
  %3098 = vmatprep.subr.mxu0 0.0
  %3099 = vmatpush1.msra.mxu0 0.0
  %3100 = vmatprep.subr.mxu0 0.0
  %3101 = vmatpush1.msra.mxu0 0.0
  %3102 = vmatprep.subr.mxu0 0.0
  %3103 = vmatpush1.msra.mxu0 0.0
  %3104 = vmatprep.subr.mxu0 0.0
  %3105 = vmatpush1.msra.mxu0 0.0
  %3106 = vmatprep.subr.mxu0 0.0
  %3107 = vmatpush1.msra.mxu0 0.0
  %3108 = vmatprep.subr.mxu0 0.0
  %3109 = vmatpush1.msra.mxu0 0.0
  %3110 = vmatprep.subr.mxu0 0.0
  %3111 = vmatpush1.msra.mxu0 0.0
  %3112 = vmatprep.subr.mxu0 0.0
  %3113 = vmatpush1.msra.mxu0 0.0
  %3114 = vmatprep.subr.mxu0 0.0
  %3115 = vmatpush1.msra.mxu0 0.0
  %3116 = vmatprep.subr.mxu0 0.0
  %3117 = vmatpush1.msra.mxu0 0.0
  %3118 = vmatprep.subr.mxu0 0.0
  %3119 = vmatpush1.msra.mxu0 0.0
  %3120 = vmatprep.subr.mxu0 0.0
  %3121 = vmatpush1.msra.mxu0 0.0
  %3122 = vmatprep.subr.mxu0 0.0
  %3123 = vmatpush1.msra.mxu0 0.0
  %3124 = vmatprep.subr.mxu0 0.0
  %3125 = vmatpush1.msra.mxu0 0.0
  %3126 = vmatprep.subr.mxu0 0.0
  %3127 = vmatpush1.msra.mxu0 0.0
  %3128 = vmatprep.subr.mxu0 0.0
  %3129 = vmatpush1.msra.mxu0 0.0
  %3130 = vmatprep.subr.mxu0 0.0
  %3131 = vmatpush1.msra.mxu0 0.0
  %3132 = vmatprep.subr.mxu0 0.0
  %3133 = vmatpush1.msra.mxu0 0.0
  %3134 = vmatprep.subr.mxu0 0.0
  %3135 = vmatpush1.msra.mxu0 0.0
  %3136 = vmatprep.subr.mxu0 0.0
  %3137 = vmatpush1.msra.mxu0 0.0
  %3138 = vmatprep.subr.mxu0 0.0
  %3139 = vmatpush1.msra.mxu0 0.0
  %3140 = vmatprep.subr.mxu0 0.0
  %3141 = vmatpush1.msra.mxu0 0.0
  %3142 = vmatprep.subr.mxu0 0.0
  %3143 = vmatpush1.msra.mxu0 0.0
  %3144 = vmatprep.subr.mxu0 0.0
  %3145 = vmatpush1.msra.mxu0 0.0
  %3146 = vmatprep.subr.mxu0 0.0
  %3147 = vmatpush1.msra.mxu0 0.0
  %3148 = vmatprep.subr.mxu0 0.0
  %3149 = vmatpush1.msra.mxu0 0.0
  %3150 = vmatprep.subr.mxu0 0.0
  %3151 = vmatpush1.msra.mxu0 0.0
  %3152 = vmatprep.subr.mxu0 0.0
  %3153 = vmatpush1.msra.mxu0 0.0
  %3154 = vmatprep.subr.mxu0 0.0
  %3155 = vmatpush1.msra.mxu0 0.0
  %3156 = vmatprep.mubr.f32.mxu0 0.0
  %3157 = vmatmul.mubr.f32.gmra.mrb[0].mxu0 %v3090
  %v3158 = vpop.f32.mrb[0].mxu0
  %v3159 = vadd.f32 0.0, %v3158
  %v3160 = vpop.f32.mrb[0].mxu0
  %3161 = vdwg.mxu0
  %3162 = vrot.lane.b32.xlu0 %v1889, 72
  %v3163 = vpop.permute.xlu0 %3162
  %v3166 = vsel %vm187, %v3085, 0
  %3168 = vmatprep.subr.mxu0 0.0
  %3169 = vmatpush1.msra.mxu0 %v3163
  %3170 = vmatprep.subr.mxu0 0.0
  %3171 = vmatpush1.msra.mxu0 0.0
  %3172 = vmatprep.subr.mxu0 0.0
  %3173 = vmatpush1.msra.mxu0 0.0
  %3174 = vmatprep.subr.mxu0 0.0
  %3175 = vmatpush1.msra.mxu0 0.0
  %3176 = vmatprep.subr.mxu0 0.0
  %3177 = vmatpush1.msra.mxu0 0.0
  %3178 = vmatprep.subr.mxu0 0.0
  %3179 = vmatpush1.msra.mxu0 0.0
  %3180 = vmatprep.subr.mxu0 0.0
  %3181 = vmatpush1.msra.mxu0 0.0
  %3182 = vmatprep.subr.mxu0 0.0
  %3183 = vmatpush1.msra.mxu0 0.0
  %3184 = vmatprep.subr.mxu0 0.0
  %3185 = vmatpush1.msra.mxu0 0.0
  %3186 = vmatprep.subr.mxu0 0.0
  %3187 = vmatpush1.msra.mxu0 0.0
  %3188 = vmatprep.subr.mxu0 0.0
  %3189 = vmatpush1.msra.mxu0 0.0
  %3190 = vmatprep.subr.mxu0 0.0
  %3191 = vmatpush1.msra.mxu0 0.0
  %3192 = vmatprep.subr.mxu0 0.0
  %3193 = vmatpush1.msra.mxu0 0.0
  %3194 = vmatprep.subr.mxu0 0.0
  %3195 = vmatpush1.msra.mxu0 0.0
  %3196 = vmatprep.subr.mxu0 0.0
  %3197 = vmatpush1.msra.mxu0 0.0
  %3198 = vmatprep.subr.mxu0 0.0
  %3199 = vmatpush1.msra.mxu0 0.0
  %3200 = vmatprep.subr.mxu0 0.0
  %3201 = vmatpush1.msra.mxu0 0.0
  %3202 = vmatprep.subr.mxu0 0.0
  %3203 = vmatpush1.msra.mxu0 0.0
  %3204 = vmatprep.subr.mxu0 0.0
  %3205 = vmatpush1.msra.mxu0 0.0
  %3206 = vmatprep.subr.mxu0 0.0
  %3207 = vmatpush1.msra.mxu0 0.0
  %3208 = vmatprep.subr.mxu0 0.0
  %3209 = vmatpush1.msra.mxu0 0.0
  %3210 = vmatprep.subr.mxu0 0.0
  %3211 = vmatpush1.msra.mxu0 0.0
  %3212 = vmatprep.subr.mxu0 0.0
  %3213 = vmatpush1.msra.mxu0 0.0
  %3214 = vmatprep.subr.mxu0 0.0
  %3215 = vmatpush1.msra.mxu0 0.0
  %3216 = vmatprep.subr.mxu0 0.0
  %3217 = vmatpush1.msra.mxu0 0.0
  %3218 = vmatprep.subr.mxu0 0.0
  %3219 = vmatpush1.msra.mxu0 0.0
  %3220 = vmatprep.subr.mxu0 0.0
  %3221 = vmatpush1.msra.mxu0 0.0
  %3222 = vmatprep.subr.mxu0 0.0
  %3223 = vmatpush1.msra.mxu0 0.0
  %3224 = vmatprep.subr.mxu0 0.0
  %3225 = vmatpush1.msra.mxu0 0.0
  %3226 = vmatprep.subr.mxu0 0.0
  %3227 = vmatpush1.msra.mxu0 0.0
  %3228 = vmatprep.subr.mxu0 0.0
  %3229 = vmatpush1.msra.mxu0 0.0
  %3230 = vmatprep.subr.mxu0 0.0
  %3231 = vmatpush1.msra.mxu0 0.0
  %3232 = vmatprep.mubr.f32.mxu0 0.0
  %3233 = vmatmul.mubr.f32.gmra.mrb[0].mxu0 %v3166
  %v3234 = vpop.f32.mrb[0].mxu0
  %v3235 = vadd.f32 0.0, %v3234
  %v3236 = vpop.f32.mrb[0].mxu0
  %3237 = vdwg.mxu0
  %3240 = vrot.lane.b32.xlu0 %v3159, 24
  %v3241 = vpop.permute.xlu0 %3240
  %3242 = vrot.lane.b32.xlu0 %v3235, 24
  %v3243 = vpop.permute.xlu0 %3242
  %3246 = vst.msk [vmem:[#allocation2] sm:$0xff] %vm1543, %v3241
  %3247 = vst.msk [vmem:[#allocation2 + $0x8] sm:$0xff] %vm1543, %v3243
  %v3248 = vld [vmem:[#allocation2] sm:$0xff]
  %v3249 = vld [vmem:[#allocation2 + $0x8] sm:$0xff]
  %v3250 = vld [vmem:[%s0 + $0xc0] sm:$0xff]
  %v3251 = vld [vmem:[%s0 + $0xc8] sm:$0xff]
  %v3252 = vld [vmem:[%s0 + $0xd0] sm:$0x1]
  %v3253 = vld [vmem:[%s0 + $0xd8] sm:$0x1]
  %v3254 = vsel %vm78, %v3248, 0.0
  %3255 = vadd.xlane.f32.xlu0 %v3254
  %v3256 = vpop.xlane.xlu0 %3255
  %v3257 = vsel %vm78, %v3249, 0.0
  %3258 = vadd.xlane.f32.xlu0 %v3257
  %v3259 = vpop.xlane.xlu0 %3258
  %v3260 = vmul.f32 %v3256, %v85
  %v3261 = vmul.f32 %v3259, %v85
  %v3262 = vsub.f32 %v3248, %v3260
  %v3263 = vsub.f32 %v3249, %v3261
  %v3264 = vmul.f32 %v3262, %v3262
  %v3265 = vmul.f32 %v3263, %v3263
  %v3266 = vsel %vm78, %v3264, 0.0
  %3267 = vadd.xlane.f32.xlu0 %v3266
  %v3268 = vpop.xlane.xlu0 %3267
  %v3269 = vsel %vm78, %v3265, 0.0
  %3270 = vadd.xlane.f32.xlu0 %v3269
  %v3271 = vpop.xlane.xlu0 %3270
  %v3272 = vmul.f32 %v3268, %v85
  %v3273 = vmul.f32 %v3271, %v85
  %v3274 = vadd.f32 %v3272, 1e-05
  %v3275 = vadd.f32 %v3273, 1e-05
  %v3276 = vrsqrt.pop %v3274
  %v3277 = vrsqrt.pop %v3275
  %v3278 = vmul.f32 %v3262, %v3276
  %v3279 = vmul.f32 %v3263, %v3277
  %v3280 = vlaneseq
  %v3281 = vshrl.u32 %v3280, 7
  %v3282 = vsub.s32 0, %v3281
  %v3283 = vrot.slane %v3252, %v3282
  %v3284 = vmul.f32 %v3278, %v3283
  %v3285 = vmul.f32 %v3279, %v3283
  %v3286 = vlaneseq
  %v3287 = vshrl.u32 %v3286, 7
  %v3288 = vsub.s32 0, %v3287
  %v3289 = vrot.slane %v3253, %v3288
  %v3290 = vadd.f32 %v3284, %v3289
  %v3291 = vadd.f32 %v3285, %v3289
  %v3292 = vadd.f32 %v3250, 1.0
  %v3293 = vadd.f32 %v3251, 1.0
  %v3294 = vmul.f32 %v3290, %v3292
  %v3295 = vmul.f32 %v3291, %v3293
  %3298 = vrot.lane.b32.xlu0 %v3250, 96
  %v3299 = vpop.permute.xlu0 %3298
  %3300 = vrot.lane.b32.xlu0 %v3251, 96
  %v3301 = vpop.permute.xlu0 %3300
  %v3304 = vadd.f32 %v3294, %v3299
  %v3305 = vadd.f32 %v3295, %v3301
  %v3306 = vxor.u32 %v3304, 2147483648
  %v3307 = vxor.u32 %v3305, 2147483648
  %v3308 = vmul.f32 %v3306, 1.442695
  %v3309 = vpow.pop %v3308
  %v3310 = vmul.f32 %v3307, 1.442695
  %v3311 = vpow.pop %v3310
  %v3312 = vadd.f32 %v3309, 1.0
  %v3313 = vadd.f32 %v3311, 1.0
  %v3314 = vrcp.pop %v3312
  %v3315 = vmul.f32 1.0, %v3314
  %v3316 = vrcp.pop %v3313
  %v3317 = vmul.f32 1.0, %v3316
  %v3318 = vmul.f32 %v3304, %v3315
  %v3319 = vmul.f32 %v3305, %v3317
  %v3320 = vpack.c.bf16 %v3319, %v3318
  %v3321 = vld [vmem:[%s1 + $0x50] sm:$0xf]
  %v3322 = vld [vmem:[%s1 + $0x54] sm:$0xf]
  %v3323 = vld [vmem:[%s1 + $0x58] sm:$0xf]
  %v3324 = vld [vmem:[%s1 + $0x5c] sm:$0xf]
  %v3325 = vld [vmem:[%s0 + $0xe0] sm:$0x1]
  %v3326 = vlaneseq
  %v3327 = vshrl.u32 %v3326, 7
  %v3328 = vsub.s32 0, %v3327
  %v3329 = vrot.slane %v3325, %v3328
  %v3334 = vunpack.c.l.b16 %v3321
  %v3335 = vunpack.c.l.b16 %v3322
  %v3336 = vunpack.c.l.b16 %v3323
  %v3337 = vunpack.c.l.b16 %v3324
  %v3338 = vpack.c.b16 %v3335, %v3334
  %v3339 = vpack.c.b16 %v3337, %v3336
  %v3343 = vsel %vm78, %v3320, 0
  %3345 = vmatprep.subr.bf16.mxu0 0
  %3346 = vmatpush1.bf16.msra.mxu0 %v3338
  %3347 = vmatprep.subr.bf16.mxu0 0
  %3348 = vmatpush1.bf16.msra.mxu0 %v3339
  %3349 = vmatprep.subr.bf16.mxu0 0
  %3350 = vmatpush1.bf16.msra.mxu0 0
  %3351 = vmatprep.subr.bf16.mxu0 0
  %3352 = vmatpush1.bf16.msra.mxu0 0
  %3353 = vmatprep.subr.bf16.mxu0 0
  %3354 = vmatpush1.bf16.msra.mxu0 0
  %3355 = vmatprep.subr.bf16.mxu0 0
  %3356 = vmatpush1.bf16.msra.mxu0 0
  %3357 = vmatprep.subr.bf16.mxu0 0
  %3358 = vmatpush1.bf16.msra.mxu0 0
  %3359 = vmatprep.subr.bf16.mxu0 0
  %3360 = vmatpush1.bf16.msra.mxu0 0
  %3361 = vmatprep.subr.bf16.mxu0 0
  %3362 = vmatpush1.bf16.msra.mxu0 0
  %3363 = vmatprep.subr.bf16.mxu0 0
  %3364 = vmatpush1.bf16.msra.mxu0 0
  %3365 = vmatprep.subr.bf16.mxu0 0
  %3366 = vmatpush1.bf16.msra.mxu0 0
  %3367 = vmatprep.subr.bf16.mxu0 0
  %3368 = vmatpush1.bf16.msra.mxu0 0
  %3369 = vmatprep.subr.bf16.mxu0 0
  %3370 = vmatpush1.bf16.msra.mxu0 0
  %3371 = vmatprep.subr.bf16.mxu0 0
  %3372 = vmatpush1.bf16.msra.mxu0 0
  %3373 = vmatprep.subr.bf16.mxu0 0
  %3374 = vmatpush1.bf16.msra.mxu0 0
  %3375 = vmatprep.subr.bf16.mxu0 0
  %3376 = vmatpush1.bf16.msra.mxu0 0
  %3377 = vmatprep.mubr.bf16.mxu0 0
  %3378 = vmatmul.mubr.bf16.gmra.mrb[0].mxu0 %v3343
  %v3379 = vpop.f32.mrb[0].mxu0
  %v3380 = vadd.f32 %v3329, %v3379
  %v3381 = vpop.f32.mrb[0].mxu0
  %v3382 = vpop.f32.mrb[0].mxu0
  %v3383 = vadd.f32 %v3329, %v3382
  %v3384 = vpop.f32.mrb[0].mxu0
  %3385 = vdwg.mxu0
  %v3386 = vadd.f32 %v1684, %v3380
  %v3387 = vadd.f32 %v1685, %v3383
  %v3388 = vpack.c.bf16 %v3387, %v3386
  %v3389 = vld [vmem:[%s1 + $0x60] sm:$0xf]
  %v3390 = vld [vmem:[%s1 + $0x64] sm:$0xf]
  %v3391 = vld [vmem:[%s1 + $0x68] sm:$0xf]
  %v3392 = vld [vmem:[%s1 + $0x6c] sm:$0xf]
  %v3393 = vld [vmem:[%s0 + $0xe8] sm:$0x1]
  %v3394 = vlaneseq
  %v3395 = vshrl.u32 %v3394, 7
  %v3396 = vsub.s32 0, %v3395
  %v3397 = vrot.slane %v3393, %v3396
  %v3402 = vunpack.c.l.b16 %v3389
  %v3403 = vunpack.c.l.b16 %v3390
  %v3404 = vunpack.c.l.b16 %v3391
  %v3405 = vunpack.c.l.b16 %v3392
  %v3406 = vpack.c.b16 %v3403, %v3402
  %v3407 = vpack.c.b16 %v3405, %v3404
  %v3411 = vsel %vm78, %v3388, 0
  %3413 = vmatprep.subr.bf16.mxu0 0
  %3414 = vmatpush1.bf16.msra.mxu0 %v3406
  %3415 = vmatprep.subr.bf16.mxu0 0
  %3416 = vmatpush1.bf16.msra.mxu0 %v3407
  %3417 = vmatprep.subr.bf16.mxu0 0
  %3418 = vmatpush1.bf16.msra.mxu0 0
  %3419 = vmatprep.subr.bf16.mxu0 0
  %3420 = vmatpush1.bf16.msra.mxu0 0
  %3421 = vmatprep.subr.bf16.mxu0 0
  %3422 = vmatpush1.bf16.msra.mxu0 0
  %3423 = vmatprep.subr.bf16.mxu0 0
  %3424 = vmatpush1.bf16.msra.mxu0 0
  %3425 = vmatprep.subr.bf16.mxu0 0
  %3426 = vmatpush1.bf16.msra.mxu0 0
  %3427 = vmatprep.subr.bf16.mxu0 0
  %3428 = vmatpush1.bf16.msra.mxu0 0
  %3429 = vmatprep.subr.bf16.mxu0 0
  %3430 = vmatpush1.bf16.msra.mxu0 0
  %3431 = vmatprep.subr.bf16.mxu0 0
  %3432 = vmatpush1.bf16.msra.mxu0 0
  %3433 = vmatprep.subr.bf16.mxu0 0
  %3434 = vmatpush1.bf16.msra.mxu0 0
  %3435 = vmatprep.subr.bf16.mxu0 0
  %3436 = vmatpush1.bf16.msra.mxu0 0
  %3437 = vmatprep.subr.bf16.mxu0 0
  %3438 = vmatpush1.bf16.msra.mxu0 0
  %3439 = vmatprep.subr.bf16.mxu0 0
  %3440 = vmatpush1.bf16.msra.mxu0 0
  %3441 = vmatprep.subr.bf16.mxu0 0
  %3442 = vmatpush1.bf16.msra.mxu0 0
  %3443 = vmatprep.subr.bf16.mxu0 0
  %3444 = vmatpush1.bf16.msra.mxu0 0
  %3445 = vmatprep.mubr.bf16.mxu0 0
  %3446 = vmatmul.mubr.bf16.gmra.mrb[0].mxu0 %v3411
  %v3447 = vpop.f32.mrb[0].mxu0
  %v3448 = vadd.f32 %v3397, %v3447
  %v3449 = vpop.f32.mrb[0].mxu0
  %v3450 = vpop.f32.mrb[0].mxu0
  %v3451 = vadd.f32 %v3397, %v3450
  %v3452 = vpop.f32.mrb[0].mxu0
  %3453 = vdwg.mxu0
  %v3454 = vmul.f32 %v3448, 0.5
  %v3455 = vmul.f32 %v3451, 0.5
  %v3456 = vmul.f32 %v3448, 0.044715
  %v3457 = vmul.f32 %v3451, 0.044715
  %v3458 = vmul.f32 %v3456, %v3448
  %v3459 = vmul.f32 %v3457, %v3451
  %v3460 = vmul.f32 %v3458, %v3448
  %v3461 = vmul.f32 %v3459, %v3451
  %v3462 = vadd.f32 %v3448, %v3460
  %v3463 = vadd.f32 %v3451, %v3461
  %v3464 = vmul.f32 %v3462, 0.7978846
  %v3465 = vmul.f32 %v3463, 0.7978846
  %v3466 = vtanh.pop %v3464
  %v3467 = vtanh.pop %v3465
  %v3468 = vadd.f32 %v3466, 1.0
  %v3469 = vadd.f32 %v3467, 1.0
  %v3470 = vmul.f32 %v3454, %v3468
  %v3471 = vmul.f32 %v3455, %v3469
  %v3472 = vpack.c.bf16 %v3471, %v3470
  %v3473 = vld [vmem:[%s1 + $0x70] sm:$0xf]
  %v3474 = vld [vmem:[%s1 + $0x74] sm:$0xf]
  %v3475 = vld [vmem:[%s1 + $0x78] sm:$0xf]
  %v3476 = vld [vmem:[%s1 + $0x7c] sm:$0xf]
  %v3477 = vld [vmem:[%s1 + $0x80] sm:$0xf]
  %v3478 = vld [vmem:[%s1 + $0x84] sm:$0xf]
  %v3479 = vld [vmem:[%s1 + $0x88] sm:$0xf]
  %v3480 = vld [vmem:[%s1 + $0x8c] sm:$0xf]
  %v3481 = vld [vmem:[%s0 + $0xf0] sm:$0x1]
  %v3482 = vlaneseq
  %v3483 = vshrl.u32 %v3482, 7
  %v3484 = vsub.s32 0, %v3483
  %v3485 = vrot.slane %v3481, %v3484
  %v3494 = vunpack.c.l.b16 %v3473
  %v3495 = vunpack.c.l.b16 %v3474
  %v3496 = vunpack.c.l.b16 %v3475
  %v3497 = vunpack.c.l.b16 %v3476
  %v3498 = vunpack.c.l.b16 %v3477
  %v3499 = vunpack.c.l.b16 %v3478
  %v3500 = vunpack.c.l.b16 %v3479
  %v3501 = vunpack.c.l.b16 %v3480
  %v3502 = vpack.c.b16 %v3495, %v3494
  %v3503 = vpack.c.b16 %v3497, %v3496
  %v3504 = vpack.c.b16 %v3499, %v3498
  %v3505 = vpack.c.b16 %v3501, %v3500
  %vm3510 = vcmask 523264
  %v3512 = vsel %vm3510, %v3472, 0
  %3514 = vmatprep.subr.bf16.mxu0 0
  %3515 = vmatpush1.bf16.msra.mxu0 %v3502
  %3516 = vmatprep.subr.bf16.mxu0 0
  %3517 = vmatpush1.bf16.msra.mxu0 %v3503
  %3518 = vmatprep.subr.bf16.mxu0 0
  %3519 = vmatpush1.bf16.msra.mxu0 %v3504
  %3520 = vmatprep.subr.bf16.mxu0 0
  %3521 = vmatpush1.bf16.msra.mxu0 %v3505
  %3522 = vmatprep.subr.bf16.mxu0 0
  %3523 = vmatpush1.bf16.msra.mxu0 0
  %3524 = vmatprep.subr.bf16.mxu0 0
  %3525 = vmatpush1.bf16.msra.mxu0 0
  %3526 = vmatprep.subr.bf16.mxu0 0
  %3527 = vmatpush1.bf16.msra.mxu0 0
  %3528 = vmatprep.subr.bf16.mxu0 0
  %3529 = vmatpush1.bf16.msra.mxu0 0
  %3530 = vmatprep.subr.bf16.mxu0 0
  %3531 = vmatpush1.bf16.msra.mxu0 0
  %3532 = vmatprep.subr.bf16.mxu0 0
  %3533 = vmatpush1.bf16.msra.mxu0 0
  %3534 = vmatprep.subr.bf16.mxu0 0
  %3535 = vmatpush1.bf16.msra.mxu0 0
  %3536 = vmatprep.subr.bf16.mxu0 0
  %3537 = vmatpush1.bf16.msra.mxu0 0
  %3538 = vmatprep.subr.bf16.mxu0 0
  %3539 = vmatpush1.bf16.msra.mxu0 0
  %3540 = vmatprep.subr.bf16.mxu0 0
  %3541 = vmatpush1.bf16.msra.mxu0 0
  %3542 = vmatprep.subr.bf16.mxu0 0
  %3543 = vmatpush1.bf16.msra.mxu0 0
  %3544 = vmatprep.subr.bf16.mxu0 0
  %3545 = vmatpush1.bf16.msra.mxu0 0
  %3546 = vmatprep.mubr.bf16.mxu0 0
  %3547 = vmatmul.mubr.bf16.gmra.mrb[0].mxu0 %v3512
  %v3548 = vpop.f32.mrb[0].mxu0
  %v3549 = vadd.f32 %v3485, %v3548
  %v3550 = vpop.f32.mrb[0].mxu0
  %v3551 = vpop.f32.mrb[0].mxu0
  %v3552 = vadd.f32 %v3485, %v3551
  %v3553 = vpop.f32.mrb[0].mxu0
  %3554 = vdwg.mxu0
  %v3555 = vld [vmem:[%s0 + $0xf8] sm:$0xff]
  %v3556 = vld [vmem:[%s0 + $0x100] sm:$0xff]
  %v3557 = vld [vmem:[%s0 + $0x108] sm:$0x1]
  %v3558 = vld [vmem:[%s0 + $0x110] sm:$0x1]
  %v3559 = vsel %vm78, %v3549, 0.0
  %3560 = vadd.xlane.f32.xlu0 %v3559
  %v3561 = vpop.xlane.xlu0 %3560
  %v3562 = vsel %vm78, %v3552, 0.0
  %3563 = vadd.xlane.f32.xlu0 %v3562
  %v3564 = vpop.xlane.xlu0 %3563
  %v3565 = vmul.f32 %v3561, %v85
  %v3566 = vmul.f32 %v3564, %v85
  %v3567 = vsub.f32 %v3549, %v3565
  %v3568 = vsub.f32 %v3552, %v3566
  %v3569 = vmul.f32 %v3567, %v3567
  %v3570 = vmul.f32 %v3568, %v3568
  %v3571 = vsel %vm78, %v3569, 0.0
  %3572 = vadd.xlane.f32.xlu0 %v3571
  %v3573 = vpop.xlane.xlu0 %3572
  %v3574 = vsel %vm78, %v3570, 0.0
  %3575 = vadd.xlane.f32.xlu0 %v3574
  %v3576 = vpop.xlane.xlu0 %3575
  %v3577 = vmul.f32 %v3573, %v85
  %v3578 = vmul.f32 %v3576, %v85
  %v3579 = vadd.f32 %v3577, 1e-05
  %v3580 = vadd.f32 %v3578, 1e-05
  %v3581 = vrsqrt.pop %v3579
  %v3582 = vrsqrt.pop %v3580
  %v3583 = vmul.f32 %v3567, %v3581
  %v3584 = vmul.f32 %v3568, %v3582
  %v3585 = vlaneseq
  %v3586 = vshrl.u32 %v3585, 7
  %v3587 = vsub.s32 0, %v3586
  %v3588 = vrot.slane %v3557, %v3587
  %v3589 = vmul.f32 %v3583, %v3588
  %v3590 = vmul.f32 %v3584, %v3588
  %v3591 = vlaneseq
  %v3592 = vshrl.u32 %v3591, 7
  %v3593 = vsub.s32 0, %v3592
  %v3594 = vrot.slane %v3558, %v3593
  %v3595 = vadd.f32 %v3589, %v3594
  %v3596 = vadd.f32 %v3590, %v3594
  %v3597 = vadd.f32 %v3555, 1.0
  %v3598 = vadd.f32 %v3556, 1.0
  %v3599 = vmul.f32 %v3595, %v3597
  %v3600 = vmul.f32 %v3596, %v3598
  %3603 = vrot.lane.b32.xlu0 %v3555, 96
  %v3604 = vpop.permute.xlu0 %3603
  %3605 = vrot.lane.b32.xlu0 %v3556, 96
  %v3606 = vpop.permute.xlu0 %3605
  %v3609 = vadd.f32 %v3599, %v3604
  %v3610 = vadd.f32 %v3600, %v3606
  %v3611 = vxor.u32 %v3609, 2147483648
  %v3612 = vxor.u32 %v3610, 2147483648
  %v3613 = vmul.f32 %v3611, 1.442695
  %v3614 = vpow.pop %v3613
  %v3615 = vmul.f32 %v3612, 1.442695
  %v3616 = vpow.pop %v3615
  %v3617 = vadd.f32 %v3614, 1.0
  %v3618 = vadd.f32 %v3616, 1.0
  %v3619 = vrcp.pop %v3617
  %v3620 = vmul.f32 1.0, %v3619
  %v3621 = vrcp.pop %v3618
  %v3622 = vmul.f32 1.0, %v3621
  %v3623 = vmul.f32 %v3609, %v3620
  %v3624 = vmul.f32 %v3610, %v3622
  %v3625 = vpack.c.bf16 %v3624, %v3623
  %v3626 = vld [vmem:[%s1 + $0x90] sm:$0xf]
  %v3627 = vld [vmem:[%s1 + $0x94] sm:$0xf]
  %v3628 = vld [vmem:[%s1 + $0x98] sm:$0xf]
  %v3629 = vld [vmem:[%s1 + $0x9c] sm:$0xf]
  %v3630 = vld [vmem:[%s0 + $0x118] sm:$0x1]
  %v3631 = vlaneseq
  %v3632 = vshrl.u32 %v3631, 7
  %v3633 = vsub.s32 0, %v3632
  %v3634 = vrot.slane %v3630, %v3633
  %v3639 = vunpack.c.l.b16 %v3626
  %v3640 = vunpack.c.l.b16 %v3627
  %v3641 = vunpack.c.l.b16 %v3628
  %v3642 = vunpack.c.l.b16 %v3629
  %v3643 = vpack.c.b16 %v3640, %v3639
  %v3644 = vpack.c.b16 %v3642, %v3641
  %v3648 = vsel %vm78, %v3625, 0
  %3650 = vmatprep.subr.bf16.mxu0 0
  %3651 = vmatpush1.bf16.msra.mxu0 %v3643
  %3652 = vmatprep.subr.bf16.mxu0 0
  %3653 = vmatpush1.bf16.msra.mxu0 %v3644
  %3654 = vmatprep.subr.bf16.mxu0 0
  %3655 = vmatpush1.bf16.msra.mxu0 0
  %3656 = vmatprep.subr.bf16.mxu0 0
  %3657 = vmatpush1.bf16.msra.mxu0 0
  %3658 = vmatprep.subr.bf16.mxu0 0
  %3659 = vmatpush1.bf16.msra.mxu0 0
  %3660 = vmatprep.subr.bf16.mxu0 0
  %3661 = vmatpush1.bf16.msra.mxu0 0
  %3662 = vmatprep.subr.bf16.mxu0 0
  %3663 = vmatpush1.bf16.msra.mxu0 0
  %3664 = vmatprep.subr.bf16.mxu0 0
  %3665 = vmatpush1.bf16.msra.mxu0 0
  %3666 = vmatprep.subr.bf16.mxu0 0
  %3667 = vmatpush1.bf16.msra.mxu0 0
  %3668 = vmatprep.subr.bf16.mxu0 0
  %3669 = vmatpush1.bf16.msra.mxu0 0
  %3670 = vmatprep.subr.bf16.mxu0 0
  %3671 = vmatpush1.bf16.msra.mxu0 0
  %3672 = vmatprep.subr.bf16.mxu0 0
  %3673 = vmatpush1.bf16.msra.mxu0 0
  %3674 = vmatprep.subr.bf16.mxu0 0
  %3675 = vmatpush1.bf16.msra.mxu0 0
  %3676 = vmatprep.subr.bf16.mxu0 0
  %3677 = vmatpush1.bf16.msra.mxu0 0
  %3678 = vmatprep.subr.bf16.mxu0 0
  %3679 = vmatpush1.bf16.msra.mxu0 0
  %3680 = vmatprep.subr.bf16.mxu0 0
  %3681 = vmatpush1.bf16.msra.mxu0 0
  %3682 = vmatprep.mubr.bf16.mxu0 0
  %3683 = vmatmul.mubr.bf16.gmra.mrb[0].mxu0 %v3648
  %v3684 = vpop.f32.mrb[0].mxu0
  %v3685 = vadd.f32 %v3634, %v3684
  %v3686 = vpop.f32.mrb[0].mxu0
  %v3687 = vpop.f32.mrb[0].mxu0
  %v3688 = vadd.f32 %v3634, %v3687
  %v3689 = vpop.f32.mrb[0].mxu0
  %3690 = vdwg.mxu0
  %v3691 = vadd.f32 %v3386, %v3685
  %v3692 = vadd.f32 %v3387, %v3688
  %v3693 = vld [vmem:[%s0 + $0x30] sm:$0xff]
  %v3694 = vld [vmem:[%s0 + $0x38] sm:$0xff]
  %v3695 = vadd.f32 %v3691, %v3693
  %v3696 = vadd.f32 %v3692, %v3694
  %v3697 = vld [vmem:[%s0 + $0x120] sm:$0x1]
  %v3698 = vld [vmem:[%s0 + $0x128] sm:$0x1]
  %v3699 = vsel %vm78, %v3695, 0.0
  %3700 = vadd.xlane.f32.xlu0 %v3699
  %v3701 = vpop.xlane.xlu0 %3700
  %v3702 = vsel %vm78, %v3696, 0.0
  %3703 = vadd.xlane.f32.xlu0 %v3702
  %v3704 = vpop.xlane.xlu0 %3703
  %v3705 = vmul.f32 %v3701, %v85
  %v3706 = vmul.f32 %v3704, %v85
  %v3707 = vsub.f32 %v3695, %v3705
  %v3708 = vsub.f32 %v3696, %v3706
  %v3709 = vmul.f32 %v3707, %v3707
  %v3710 = vmul.f32 %v3708, %v3708
  %v3711 = vsel %vm78, %v3709, 0.0
  %3712 = vadd.xlane.f32.xlu0 %v3711
  %v3713 = vpop.xlane.xlu0 %3712
  %v3714 = vsel %vm78, %v3710, 0.0
  %3715 = vadd.xlane.f32.xlu0 %v3714
  %v3716 = vpop.xlane.xlu0 %3715
  %v3717 = vmul.f32 %v3713, %v85
  %v3718 = vmul.f32 %v3716, %v85
  %v3719 = vadd.f32 %v3717, 1e-05
  %v3720 = vadd.f32 %v3718, 1e-05
  %v3721 = vrsqrt.pop %v3719
  %v3722 = vrsqrt.pop %v3720
  %v3723 = vmul.f32 %v3707, %v3721
  %v3724 = vmul.f32 %v3708, %v3722
  %v3725 = vlaneseq
  %v3726 = vshrl.u32 %v3725, 7
  %v3727 = vsub.s32 0, %v3726
  %v3728 = vrot.slane %v3697, %v3727
  %v3729 = vmul.f32 %v3723, %v3728
  %v3730 = vmul.f32 %v3724, %v3728
  %v3731 = vlaneseq
  %v3732 = vshrl.u32 %v3731, 7
  %v3733 = vsub.s32 0, %v3732
  %v3734 = vrot.slane %v3698, %v3733
  %v3735 = vadd.f32 %v3729, %v3734
  %v3736 = vadd.f32 %v3730, %v3734
  %v3737 = vpack.c.bf16 %v3736, %v3735
  %v3738 = vld [vmem:[%s1 + $0xa0] sm:$0xf]
  %v3739 = vld [vmem:[%s1 + $0xa4] sm:$0xf]
  %v3740 = vld [vmem:[%s1 + $0xa8] sm:$0xf]
  %v3741 = vld [vmem:[%s1 + $0xac] sm:$0xf]
  %v3742 = vld [vmem:[%s0 + $0x130] sm:$0x1]
  %v3743 = vlaneseq
  %v3744 = vshrl.u32 %v3743, 7
  %v3745 = vsub.s32 0, %v3744
  %v3746 = vrot.slane %v3742, %v3745
  %v3751 = vunpack.c.l.b16 %v3738
  %v3752 = vunpack.c.l.b16 %v3739
  %v3753 = vunpack.c.l.b16 %v3740
  %v3754 = vunpack.c.l.b16 %v3741
  %v3755 = vpack.c.b16 %v3752, %v3751
  %v3756 = vpack.c.b16 %v3754, %v3753
  %v3760 = vsel %vm78, %v3737, 0
  %3762 = vmatprep.subr.bf16.mxu0 0
  %3763 = vmatpush1.bf16.msra.mxu0 %v3755
  %3764 = vmatprep.subr.bf16.mxu0 0
  %3765 = vmatpush1.bf16.msra.mxu0 %v3756
  %3766 = vmatprep.subr.bf16.mxu0 0
  %3767 = vmatpush1.bf16.msra.mxu0 0
  %3768 = vmatprep.subr.bf16.mxu0 0
  %3769 = vmatpush1.bf16.msra.mxu0 0
  %3770 = vmatprep.subr.bf16.mxu0 0
  %3771 = vmatpush1.bf16.msra.mxu0 0
  %3772 = vmatprep.subr.bf16.mxu0 0
  %3773 = vmatpush1.bf16.msra.mxu0 0
  %3774 = vmatprep.subr.bf16.mxu0 0
  %3775 = vmatpush1.bf16.msra.mxu0 0
  %3776 = vmatprep.subr.bf16.mxu0 0
  %3777 = vmatpush1.bf16.msra.mxu0 0
  %3778 = vmatprep.subr.bf16.mxu0 0
  %3779 = vmatpush1.bf16.msra.mxu0 0
  %3780 = vmatprep.subr.bf16.mxu0 0
  %3781 = vmatpush1.bf16.msra.mxu0 0
  %3782 = vmatprep.subr.bf16.mxu0 0
  %3783 = vmatpush1.bf16.msra.mxu0 0
  %3784 = vmatprep.subr.bf16.mxu0 0
  %3785 = vmatpush1.bf16.msra.mxu0 0
  %3786 = vmatprep.subr.bf16.mxu0 0
  %3787 = vmatpush1.bf16.msra.mxu0 0
  %3788 = vmatprep.subr.bf16.mxu0 0
  %3789 = vmatpush1.bf16.msra.mxu0 0
  %3790 = vmatprep.subr.bf16.mxu0 0
  %3791 = vmatpush1.bf16.msra.mxu0 0
  %3792 = vmatprep.subr.bf16.mxu0 0
  %3793 = vmatpush1.bf16.msra.mxu0 0
  %3794 = vmatprep.mubr.bf16.mxu0 0
  %3795 = vmatmul.mubr.bf16.gmra.mrb[0].mxu0 %v3760
  %v3796 = vpop.f32.mrb[0].mxu0
  %v3797 = vadd.f32 %v3746, %v3796
  %v3798 = vpop.f32.mrb[0].mxu0
  %v3799 = vpop.f32.mrb[0].mxu0
  %v3800 = vadd.f32 %v3746, %v3799
  %v3801 = vpop.f32.mrb[0].mxu0
  %3802 = vdwg.mxu0
  %3804 = vrot.lane.b32.xlu0 %v3797, 96
  %v3805 = vpop.permute.xlu0 %3804
  %v3806 = vsel %vm187, %v3797, 0
  %v3808 = vsel %vm187, %v3805, 0
  %3810 = vmatprep.subr.mxu0 0.0
  %3811 = vmatpush1.xpose.msra.mxu0 %v3808
  %3812 = vmatprep.subr.mxu0 0.0
  %3813 = vmatpush1.xpose.msra.mxu0 0.0
  %3814 = vmatprep.subr.mxu0 0.0
  %3815 = vmatpush1.xpose.msra.mxu0 0.0
  %3816 = vmatprep.subr.mxu0 0.0
  %3817 = vmatpush1.xpose.msra.mxu0 0.0
  %3818 = vmatprep.subr.mxu0 0.0
  %3819 = vmatpush1.xpose.msra.mxu0 0.0
  %3820 = vmatprep.subr.mxu0 0.0
  %3821 = vmatpush1.xpose.msra.mxu0 0.0
  %3822 = vmatprep.subr.mxu0 0.0
  %3823 = vmatpush1.xpose.msra.mxu0 0.0
  %3824 = vmatprep.subr.mxu0 0.0
  %3825 = vmatpush1.xpose.msra.mxu0 0.0
  %3826 = vmatprep.subr.mxu0 0.0
  %3827 = vmatpush1.xpose.msra.mxu0 0.0
  %3828 = vmatprep.subr.mxu0 0.0
  %3829 = vmatpush1.xpose.msra.mxu0 0.0
  %3830 = vmatprep.subr.mxu0 0.0
  %3831 = vmatpush1.xpose.msra.mxu0 0.0
  %3832 = vmatprep.subr.mxu0 0.0
  %3833 = vmatpush1.xpose.msra.mxu0 0.0
  %3834 = vmatprep.subr.mxu0 0.0
  %3835 = vmatpush1.xpose.msra.mxu0 0.0
  %3836 = vmatprep.subr.mxu0 0.0
  %3837 = vmatpush1.xpose.msra.mxu0 0.0
  %3838 = vmatprep.subr.mxu0 0.0
  %3839 = vmatpush1.xpose.msra.mxu0 0.0
  %3840 = vmatprep.subr.mxu0 0.0
  %3841 = vmatpush1.xpose.msra.mxu0 0.0
  %3842 = vmatprep.subr.mxu0 0.0
  %3843 = vmatpush1.xpose.msra.mxu0 0.0
  %3844 = vmatprep.subr.mxu0 0.0
  %3845 = vmatpush1.xpose.msra.mxu0 0.0
  %3846 = vmatprep.subr.mxu0 0.0
  %3847 = vmatpush1.xpose.msra.mxu0 0.0
  %3848 = vmatprep.subr.mxu0 0.0
  %3849 = vmatpush1.xpose.msra.mxu0 0.0
  %3850 = vmatprep.subr.mxu0 0.0
  %3851 = vmatpush1.xpose.msra.mxu0 0.0
  %3852 = vmatprep.subr.mxu0 0.0
  %3853 = vmatpush1.xpose.msra.mxu0 0.0
  %3854 = vmatprep.subr.mxu0 0.0
  %3855 = vmatpush1.xpose.msra.mxu0 0.0
  %3856 = vmatprep.subr.mxu0 0.0
  %3857 = vmatpush1.xpose.msra.mxu0 0.0
  %3858 = vmatprep.subr.mxu0 0.0
  %3859 = vmatpush1.xpose.msra.mxu0 0.0
  %3860 = vmatprep.subr.mxu0 0.0
  %3861 = vmatpush1.xpose.msra.mxu0 0.0
  %3862 = vmatprep.subr.mxu0 0.0
  %3863 = vmatpush1.xpose.msra.mxu0 0.0
  %3864 = vmatprep.subr.mxu0 0.0
  %3865 = vmatpush1.xpose.msra.mxu0 0.0
  %3866 = vmatprep.subr.mxu0 0.0
  %3867 = vmatpush1.xpose.msra.mxu0 0.0
  %3868 = vmatprep.subr.mxu0 0.0
  %3869 = vmatpush1.xpose.msra.mxu0 0.0
  %3870 = vmatprep.subr.mxu0 0.0
  %3871 = vmatpush1.xpose.msra.mxu0 0.0
  %3872 = vmatprep.subr.mxu0 0.0
  %3873 = vmatpush1.xpose.msra.mxu0 0.0
  %3874 = vmatprep.mubr.f32.mxu0 0.0
  %3875 = vmatmul.mubr.f32.gmra.mrb[0].mxu0 %v3806
  %v3876 = vpop.f32.mrb[0].mxu0
  %v3877 = vadd.f32 0.0, %v3876
  %v3878 = vpop.f32.mrb[0].mxu0
  %3879 = vdwg.mxu0
  %3881 = vrot.lane.b32.xlu0 %v3800, 96
  %v3882 = vpop.permute.xlu0 %3881
  %v3883 = vsel %vm187, %v3800, 0
  %v3885 = vsel %vm187, %v3882, 0
  %3887 = vmatprep.subr.mxu0 0.0
  %3888 = vmatpush1.xpose.msra.mxu0 %v3885
  %3889 = vmatprep.subr.mxu0 0.0
  %3890 = vmatpush1.xpose.msra.mxu0 0.0
  %3891 = vmatprep.subr.mxu0 0.0
  %3892 = vmatpush1.xpose.msra.mxu0 0.0
  %3893 = vmatprep.subr.mxu0 0.0
  %3894 = vmatpush1.xpose.msra.mxu0 0.0
  %3895 = vmatprep.subr.mxu0 0.0
  %3896 = vmatpush1.xpose.msra.mxu0 0.0
  %3897 = vmatprep.subr.mxu0 0.0
  %3898 = vmatpush1.xpose.msra.mxu0 0.0
  %3899 = vmatprep.subr.mxu0 0.0
  %3900 = vmatpush1.xpose.msra.mxu0 0.0
  %3901 = vmatprep.subr.mxu0 0.0
  %3902 = vmatpush1.xpose.msra.mxu0 0.0
  %3903 = vmatprep.subr.mxu0 0.0
  %3904 = vmatpush1.xpose.msra.mxu0 0.0
  %3905 = vmatprep.subr.mxu0 0.0
  %3906 = vmatpush1.xpose.msra.mxu0 0.0
  %3907 = vmatprep.subr.mxu0 0.0
  %3908 = vmatpush1.xpose.msra.mxu0 0.0
  %3909 = vmatprep.subr.mxu0 0.0
  %3910 = vmatpush1.xpose.msra.mxu0 0.0
  %3911 = vmatprep.subr.mxu0 0.0
  %3912 = vmatpush1.xpose.msra.mxu0 0.0
  %3913 = vmatprep.subr.mxu0 0.0
  %3914 = vmatpush1.xpose.msra.mxu0 0.0
  %3915 = vmatprep.subr.mxu0 0.0
  %3916 = vmatpush1.xpose.msra.mxu0 0.0
  %3917 = vmatprep.subr.mxu0 0.0
  %3918 = vmatpush1.xpose.msra.mxu0 0.0
  %3919 = vmatprep.subr.mxu0 0.0
  %3920 = vmatpush1.xpose.msra.mxu0 0.0
  %3921 = vmatprep.subr.mxu0 0.0
  %3922 = vmatpush1.xpose.msra.mxu0 0.0
  %3923 = vmatprep.subr.mxu0 0.0
  %3924 = vmatpush1.xpose.msra.mxu0 0.0
  %3925 = vmatprep.subr.mxu0 0.0
  %3926 = vmatpush1.xpose.msra.mxu0 0.0
  %3927 = vmatprep.subr.mxu0 0.0
  %3928 = vmatpush1.xpose.msra.mxu0 0.0
  %3929 = vmatprep.subr.mxu0 0.0
  %3930 = vmatpush1.xpose.msra.mxu0 0.0
  %3931 = vmatprep.subr.mxu0 0.0
  %3932 = vmatpush1.xpose.msra.mxu0 0.0
  %3933 = vmatprep.subr.mxu0 0.0
  %3934 = vmatpush1.xpose.msra.mxu0 0.0
  %3935 = vmatprep.subr.mxu0 0.0
  %3936 = vmatpush1.xpose.msra.mxu0 0.0
  %3937 = vmatprep.subr.mxu0 0.0
  %3938 = vmatpush1.xpose.msra.mxu0 0.0
  %3939 = vmatprep.subr.mxu0 0.0
  %3940 = vmatpush1.xpose.msra.mxu0 0.0
  %3941 = vmatprep.subr.mxu0 0.0
  %3942 = vmatpush1.xpose.msra.mxu0 0.0
  %3943 = vmatprep.subr.mxu0 0.0
  %3944 = vmatpush1.xpose.msra.mxu0 0.0
  %3945 = vmatprep.subr.mxu0 0.0
  %3946 = vmatpush1.xpose.msra.mxu0 0.0
  %3947 = vmatprep.subr.mxu0 0.0
  %3948 = vmatpush1.xpose.msra.mxu0 0.0
  %3949 = vmatprep.subr.mxu0 0.0
  %3950 = vmatpush1.xpose.msra.mxu0 0.0
  %3951 = vmatprep.mubr.f32.mxu0 0.0
  %3952 = vmatmul.mubr.f32.gmra.mrb[0].mxu0 %v3883
  %v3953 = vpop.f32.mrb[0].mxu0
  %v3954 = vadd.f32 0.0, %v3953
  %v3955 = vpop.f32.mrb[0].mxu0
  %3956 = vdwg.mxu0
  %v3957 = vmul.f32 %v3877, 0.35355338
  %v3958 = vmul.f32 %v3954, 0.35355338
  %v3959 = vsel %vm187, %v3957, -inf
  %3960 = vmax.xlane.f32.xlu0 %v3959
  %v3961 = vpop.xlane.xlu0 %3960
  %v3962 = vsel %vm187, %v3958, -inf
  %3963 = vmax.xlane.f32.xlu0 %v3962
  %v3964 = vpop.xlane.xlu0 %3963
  %v3965 = vsub.f32 %v3957, %v3961
  %v3966 = vsub.f32 %v3958, %v3964
  %v3967 = vmul.f32 %v3965, 1.442695
  %v3968 = vpow.pop %v3967
  %v3969 = vmul.f32 %v3966, 1.442695
  %v3970 = vpow.pop %v3969
  %v3971 = vsel %vm187, %v3968, 0.0
  %3972 = vadd.xlane.f32.xlu0 %v3971
  %v3973 = vpop.xlane.xlu0 %3972
  %v3974 = vsel %vm187, %v3970, 0.0
  %3975 = vadd.xlane.f32.xlu0 %v3974
  %v3976 = vpop.xlane.xlu0 %3975
  %v3977 = vrcp.pop %v3973
  %v3978 = vrcp.pop %v3976
  %v3979 = vmul.f32 %v3968, %v3977
  %v3980 = vmul.f32 %v3970, %v3978
  %3981 = vrot.lane.b32.xlu0 %v3797, 64
  %v3982 = vpop.permute.xlu0 %3981
  %v3985 = vsel %vm187, %v3979, 0
  %3987 = vmatprep.subr.mxu0 0.0
  %3988 = vmatpush1.msra.mxu0 %v3982
  %3989 = vmatprep.subr.mxu0 0.0
  %3990 = vmatpush1.msra.mxu0 0.0
  %3991 = vmatprep.subr.mxu0 0.0
  %3992 = vmatpush1.msra.mxu0 0.0
  %3993 = vmatprep.subr.mxu0 0.0
  %3994 = vmatpush1.msra.mxu0 0.0
  %3995 = vmatprep.subr.mxu0 0.0
  %3996 = vmatpush1.msra.mxu0 0.0
  %3997 = vmatprep.subr.mxu0 0.0
  %3998 = vmatpush1.msra.mxu0 0.0
  %3999 = vmatprep.subr.mxu0 0.0
  %4000 = vmatpush1.msra.mxu0 0.0
  %4001 = vmatprep.subr.mxu0 0.0
  %4002 = vmatpush1.msra.mxu0 0.0
  %4003 = vmatprep.subr.mxu0 0.0
  %4004 = vmatpush1.msra.mxu0 0.0
  %4005 = vmatprep.subr.mxu0 0.0
  %4006 = vmatpush1.msra.mxu0 0.0
  %4007 = vmatprep.subr.mxu0 0.0
  %4008 = vmatpush1.msra.mxu0 0.0
  %4009 = vmatprep.subr.mxu0 0.0
  %4010 = vmatpush1.msra.mxu0 0.0
  %4011 = vmatprep.subr.mxu0 0.0
  %4012 = vmatpush1.msra.mxu0 0.0
  %4013 = vmatprep.subr.mxu0 0.0
  %4014 = vmatpush1.msra.mxu0 0.0
  %4015 = vmatprep.subr.mxu0 0.0
  %4016 = vmatpush1.msra.mxu0 0.0
  %4017 = vmatprep.subr.mxu0 0.0
  %4018 = vmatpush1.msra.mxu0 0.0
  %4019 = vmatprep.subr.mxu0 0.0
  %4020 = vmatpush1.msra.mxu0 0.0
  %4021 = vmatprep.subr.mxu0 0.0
  %4022 = vmatpush1.msra.mxu0 0.0
  %4023 = vmatprep.subr.mxu0 0.0
  %4024 = vmatpush1.msra.mxu0 0.0
  %4025 = vmatprep.subr.mxu0 0.0
  %4026 = vmatpush1.msra.mxu0 0.0
  %4027 = vmatprep.subr.mxu0 0.0
  %4028 = vmatpush1.msra.mxu0 0.0
  %4029 = vmatprep.subr.mxu0 0.0
  %4030 = vmatpush1.msra.mxu0 0.0
  %4031 = vmatprep.subr.mxu0 0.0
  %4032 = vmatpush1.msra.mxu0 0.0
  %4033 = vmatprep.subr.mxu0 0.0
  %4034 = vmatpush1.msra.mxu0 0.0
  %4035 = vmatprep.subr.mxu0 0.0
  %4036 = vmatpush1.msra.mxu0 0.0
  %4037 = vmatprep.subr.mxu0 0.0
  %4038 = vmatpush1.msra.mxu0 0.0
  %4039 = vmatprep.subr.mxu0 0.0
  %4040 = vmatpush1.msra.mxu0 0.0
  %4041 = vmatprep.subr.mxu0 0.0
  %4042 = vmatpush1.msra.mxu0 0.0
  %4043 = vmatprep.subr.mxu0 0.0
  %4044 = vmatpush1.msra.mxu0 0.0
  %4045 = vmatprep.subr.mxu0 0.0
  %4046 = vmatpush1.msra.mxu0 0.0
  %4047 = vmatprep.subr.mxu0 0.0
  %4048 = vmatpush1.msra.mxu0 0.0
  %4049 = vmatprep.subr.mxu0 0.0
  %4050 = vmatpush1.msra.mxu0 0.0
  %4051 = vmatprep.mubr.f32.mxu0 0.0
  %4052 = vmatmul.mubr.f32.gmra.mrb[0].mxu0 %v3985
  %v4053 = vpop.f32.mrb[0].mxu0
  %v4054 = vadd.f32 0.0, %v4053
  %v4055 = vpop.f32.mrb[0].mxu0
  %4056 = vdwg.mxu0
  %4057 = vrot.lane.b32.xlu0 %v3800, 64
  %v4058 = vpop.permute.xlu0 %4057
  %v4061 = vsel %vm187, %v3980, 0
  %4063 = vmatprep.subr.mxu0 0.0
  %4064 = vmatpush1.msra.mxu0 %v4058
  %4065 = vmatprep.subr.mxu0 0.0
  %4066 = vmatpush1.msra.mxu0 0.0
  %4067 = vmatprep.subr.mxu0 0.0
  %4068 = vmatpush1.msra.mxu0 0.0
  %4069 = vmatprep.subr.mxu0 0.0
  %4070 = vmatpush1.msra.mxu0 0.0
  %4071 = vmatprep.subr.mxu0 0.0
  %4072 = vmatpush1.msra.mxu0 0.0
  %4073 = vmatprep.subr.mxu0 0.0
  %4074 = vmatpush1.msra.mxu0 0.0
  %4075 = vmatprep.subr.mxu0 0.0
  %4076 = vmatpush1.msra.mxu0 0.0
  %4077 = vmatprep.subr.mxu0 0.0
  %4078 = vmatpush1.msra.mxu0 0.0
  %4079 = vmatprep.subr.mxu0 0.0
  %4080 = vmatpush1.msra.mxu0 0.0
  %4081 = vmatprep.subr.mxu0 0.0
  %4082 = vmatpush1.msra.mxu0 0.0
  %4083 = vmatprep.subr.mxu0 0.0
  %4084 = vmatpush1.msra.mxu0 0.0
  %4085 = vmatprep.subr.mxu0 0.0
  %4086 = vmatpush1.msra.mxu0 0.0
  %4087 = vmatprep.subr.mxu0 0.0
  %4088 = vmatpush1.msra.mxu0 0.0
  %4089 = vmatprep.subr.mxu0 0.0
  %4090 = vmatpush1.msra.mxu0 0.0
  %4091 = vmatprep.subr.mxu0 0.0
  %4092 = vmatpush1.msra.mxu0 0.0
  %4093 = vmatprep.subr.mxu0 0.0
  %4094 = vmatpush1.msra.mxu0 0.0
  %4095 = vmatprep.subr.mxu0 0.0
  %4096 = vmatpush1.msra.mxu0 0.0
  %4097 = vmatprep.subr.mxu0 0.0
  %4098 = vmatpush1.msra.mxu0 0.0
  %4099 = vmatprep.subr.mxu0 0.0
  %4100 = vmatpush1.msra.mxu0 0.0
  %4101 = vmatprep.subr.mxu0 0.0
  %4102 = vmatpush1.msra.mxu0 0.0
  %4103 = vmatprep.subr.mxu0 0.0
  %4104 = vmatpush1.msra.mxu0 0.0
  %4105 = vmatprep.subr.mxu0 0.0
  %4106 = vmatpush1.msra.mxu0 0.0
  %4107 = vmatprep.subr.mxu0 0.0
  %4108 = vmatpush1.msra.mxu0 0.0
  %4109 = vmatprep.subr.mxu0 0.0
  %4110 = vmatpush1.msra.mxu0 0.0
  %4111 = vmatprep.subr.mxu0 0.0
  %4112 = vmatpush1.msra.mxu0 0.0
  %4113 = vmatprep.subr.mxu0 0.0
  %4114 = vmatpush1.msra.mxu0 0.0
  %4115 = vmatprep.subr.mxu0 0.0
  %4116 = vmatpush1.msra.mxu0 0.0
  %4117 = vmatprep.subr.mxu0 0.0
  %4118 = vmatpush1.msra.mxu0 0.0
  %4119 = vmatprep.subr.mxu0 0.0
  %4120 = vmatpush1.msra.mxu0 0.0
  %4121 = vmatprep.subr.mxu0 0.0
  %4122 = vmatpush1.msra.mxu0 0.0
  %4123 = vmatprep.subr.mxu0 0.0
  %4124 = vmatpush1.msra.mxu0 0.0
  %4125 = vmatprep.subr.mxu0 0.0
  %4126 = vmatpush1.msra.mxu0 0.0
  %4127 = vmatprep.mubr.f32.mxu0 0.0
  %4128 = vmatmul.mubr.f32.gmra.mrb[0].mxu0 %v4061
  %v4129 = vpop.f32.mrb[0].mxu0
  %v4130 = vadd.f32 0.0, %v4129
  %v4131 = vpop.f32.mrb[0].mxu0
  %4132 = vdwg.mxu0
  %4133 = vst.msk [vmem:[#allocation2] sm:$0xff] %vm187, %v4054
  %4134 = vst.msk [vmem:[#allocation2 + $0x8] sm:$0xff] %vm187, %v4130
  %4135 = vrot.lane.b32.xlu0 %v3797, 120
  %v4136 = vpop.permute.xlu0 %4135
  %4137 = vrot.lane.b32.xlu0 %v3797, 88
  %v4138 = vpop.permute.xlu0 %4137
  %v4139 = vsel %vm187, %v4136, 0
  %v4141 = vsel %vm187, %v4138, 0
  %4143 = vmatprep.subr.mxu0 0.0
  %4144 = vmatpush1.xpose.msra.mxu0 %v4141
  %4145 = vmatprep.subr.mxu0 0.0
  %4146 = vmatpush1.xpose.msra.mxu0 0.0
  %4147 = vmatprep.subr.mxu0 0.0
  %4148 = vmatpush1.xpose.msra.mxu0 0.0
  %4149 = vmatprep.subr.mxu0 0.0
  %4150 = vmatpush1.xpose.msra.mxu0 0.0
  %4151 = vmatprep.subr.mxu0 0.0
  %4152 = vmatpush1.xpose.msra.mxu0 0.0
  %4153 = vmatprep.subr.mxu0 0.0
  %4154 = vmatpush1.xpose.msra.mxu0 0.0
  %4155 = vmatprep.subr.mxu0 0.0
  %4156 = vmatpush1.xpose.msra.mxu0 0.0
  %4157 = vmatprep.subr.mxu0 0.0
  %4158 = vmatpush1.xpose.msra.mxu0 0.0
  %4159 = vmatprep.subr.mxu0 0.0
  %4160 = vmatpush1.xpose.msra.mxu0 0.0
  %4161 = vmatprep.subr.mxu0 0.0
  %4162 = vmatpush1.xpose.msra.mxu0 0.0
  %4163 = vmatprep.subr.mxu0 0.0
  %4164 = vmatpush1.xpose.msra.mxu0 0.0
  %4165 = vmatprep.subr.mxu0 0.0
  %4166 = vmatpush1.xpose.msra.mxu0 0.0
  %4167 = vmatprep.subr.mxu0 0.0
  %4168 = vmatpush1.xpose.msra.mxu0 0.0
  %4169 = vmatprep.subr.mxu0 0.0
  %4170 = vmatpush1.xpose.msra.mxu0 0.0
  %4171 = vmatprep.subr.mxu0 0.0
  %4172 = vmatpush1.xpose.msra.mxu0 0.0
  %4173 = vmatprep.subr.mxu0 0.0
  %4174 = vmatpush1.xpose.msra.mxu0 0.0
  %4175 = vmatprep.subr.mxu0 0.0
  %4176 = vmatpush1.xpose.msra.mxu0 0.0
  %4177 = vmatprep.subr.mxu0 0.0
  %4178 = vmatpush1.xpose.msra.mxu0 0.0
  %4179 = vmatprep.subr.mxu0 0.0
  %4180 = vmatpush1.xpose.msra.mxu0 0.0
  %4181 = vmatprep.subr.mxu0 0.0
  %4182 = vmatpush1.xpose.msra.mxu0 0.0
  %4183 = vmatprep.subr.mxu0 0.0
  %4184 = vmatpush1.xpose.msra.mxu0 0.0
  %4185 = vmatprep.subr.mxu0 0.0
  %4186 = vmatpush1.xpose.msra.mxu0 0.0
  %4187 = vmatprep.subr.mxu0 0.0
  %4188 = vmatpush1.xpose.msra.mxu0 0.0
  %4189 = vmatprep.subr.mxu0 0.0
  %4190 = vmatpush1.xpose.msra.mxu0 0.0
  %4191 = vmatprep.subr.mxu0 0.0
  %4192 = vmatpush1.xpose.msra.mxu0 0.0
  %4193 = vmatprep.subr.mxu0 0.0
  %4194 = vmatpush1.xpose.msra.mxu0 0.0
  %4195 = vmatprep.subr.mxu0 0.0
  %4196 = vmatpush1.xpose.msra.mxu0 0.0
  %4197 = vmatprep.subr.mxu0 0.0
  %4198 = vmatpush1.xpose.msra.mxu0 0.0
  %4199 = vmatprep.subr.mxu0 0.0
  %4200 = vmatpush1.xpose.msra.mxu0 0.0
  %4201 = vmatprep.subr.mxu0 0.0
  %4202 = vmatpush1.xpose.msra.mxu0 0.0
  %4203 = vmatprep.subr.mxu0 0.0
  %4204 = vmatpush1.xpose.msra.mxu0 0.0
  %4205 = vmatprep.subr.mxu0 0.0
  %4206 = vmatpush1.xpose.msra.mxu0 0.0
  %4207 = vmatprep.mubr.f32.mxu0 0.0
  %4208 = vmatmul.mubr.f32.gmra.mrb[0].mxu0 %v4139
  %v4209 = vpop.f32.mrb[0].mxu0
  %v4210 = vadd.f32 0.0, %v4209
  %v4211 = vpop.f32.mrb[0].mxu0
  %4212 = vdwg.mxu0
  %4213 = vrot.lane.b32.xlu0 %v3800, 120
  %v4214 = vpop.permute.xlu0 %4213
  %4215 = vrot.lane.b32.xlu0 %v3800, 88
  %v4216 = vpop.permute.xlu0 %4215
  %v4217 = vsel %vm187, %v4214, 0
  %v4219 = vsel %vm187, %v4216, 0
  %4221 = vmatprep.subr.mxu0 0.0
  %4222 = vmatpush1.xpose.msra.mxu0 %v4219
  %4223 = vmatprep.subr.mxu0 0.0
  %4224 = vmatpush1.xpose.msra.mxu0 0.0
  %4225 = vmatprep.subr.mxu0 0.0
  %4226 = vmatpush1.xpose.msra.mxu0 0.0
  %4227 = vmatprep.subr.mxu0 0.0
  %4228 = vmatpush1.xpose.msra.mxu0 0.0
  %4229 = vmatprep.subr.mxu0 0.0
  %4230 = vmatpush1.xpose.msra.mxu0 0.0
  %4231 = vmatprep.subr.mxu0 0.0
  %4232 = vmatpush1.xpose.msra.mxu0 0.0
  %4233 = vmatprep.subr.mxu0 0.0
  %4234 = vmatpush1.xpose.msra.mxu0 0.0
  %4235 = vmatprep.subr.mxu0 0.0
  %4236 = vmatpush1.xpose.msra.mxu0 0.0
  %4237 = vmatprep.subr.mxu0 0.0
  %4238 = vmatpush1.xpose.msra.mxu0 0.0
  %4239 = vmatprep.subr.mxu0 0.0
  %4240 = vmatpush1.xpose.msra.mxu0 0.0
  %4241 = vmatprep.subr.mxu0 0.0
  %4242 = vmatpush1.xpose.msra.mxu0 0.0
  %4243 = vmatprep.subr.mxu0 0.0
  %4244 = vmatpush1.xpose.msra.mxu0 0.0
  %4245 = vmatprep.subr.mxu0 0.0
  %4246 = vmatpush1.xpose.msra.mxu0 0.0
  %4247 = vmatprep.subr.mxu0 0.0
  %4248 = vmatpush1.xpose.msra.mxu0 0.0
  %4249 = vmatprep.subr.mxu0 0.0
  %4250 = vmatpush1.xpose.msra.mxu0 0.0
  %4251 = vmatprep.subr.mxu0 0.0
  %4252 = vmatpush1.xpose.msra.mxu0 0.0
  %4253 = vmatprep.subr.mxu0 0.0
  %4254 = vmatpush1.xpose.msra.mxu0 0.0
  %4255 = vmatprep.subr.mxu0 0.0
  %4256 = vmatpush1.xpose.msra.mxu0 0.0
  %4257 = vmatprep.subr.mxu0 0.0
  %4258 = vmatpush1.xpose.msra.mxu0 0.0
  %4259 = vmatprep.subr.mxu0 0.0
  %4260 = vmatpush1.xpose.msra.mxu0 0.0
  %4261 = vmatprep.subr.mxu0 0.0
  %4262 = vmatpush1.xpose.msra.mxu0 0.0
  %4263 = vmatprep.subr.mxu0 0.0
  %4264 = vmatpush1.xpose.msra.mxu0 0.0
  %4265 = vmatprep.subr.mxu0 0.0
  %4266 = vmatpush1.xpose.msra.mxu0 0.0
  %4267 = vmatprep.subr.mxu0 0.0
  %4268 = vmatpush1.xpose.msra.mxu0 0.0
  %4269 = vmatprep.subr.mxu0 0.0
  %4270 = vmatpush1.xpose.msra.mxu0 0.0
  %4271 = vmatprep.subr.mxu0 0.0
  %4272 = vmatpush1.xpose.msra.mxu0 0.0
  %4273 = vmatprep.subr.mxu0 0.0
  %4274 = vmatpush1.xpose.msra.mxu0 0.0
  %4275 = vmatprep.subr.mxu0 0.0
  %4276 = vmatpush1.xpose.msra.mxu0 0.0
  %4277 = vmatprep.subr.mxu0 0.0
  %4278 = vmatpush1.xpose.msra.mxu0 0.0
  %4279 = vmatprep.subr.mxu0 0.0
  %4280 = vmatpush1.xpose.msra.mxu0 0.0
  %4281 = vmatprep.subr.mxu0 0.0
  %4282 = vmatpush1.xpose.msra.mxu0 0.0
  %4283 = vmatprep.subr.mxu0 0.0
  %4284 = vmatpush1.xpose.msra.mxu0 0.0
  %4285 = vmatprep.mubr.f32.mxu0 0.0
  %4286 = vmatmul.mubr.f32.gmra.mrb[0].mxu0 %v4217
  %v4287 = vpop.f32.mrb[0].mxu0
  %v4288 = vadd.f32 0.0, %v4287
  %v4289 = vpop.f32.mrb[0].mxu0
  %4290 = vdwg.mxu0
  %v4291 = vmul.f32 %v4210, 0.35355338
  %v4292 = vmul.f32 %v4288, 0.35355338
  %v4293 = vsel %vm187, %v4291, -inf
  %4294 = vmax.xlane.f32.xlu0 %v4293
  %v4295 = vpop.xlane.xlu0 %4294
  %v4296 = vsel %vm187, %v4292, -inf
  %4297 = vmax.xlane.f32.xlu0 %v4296
  %v4298 = vpop.xlane.xlu0 %4297
  %v4299 = vsub.f32 %v4291, %v4295
  %v4300 = vsub.f32 %v4292, %v4298
  %v4301 = vmul.f32 %v4299, 1.442695
  %v4302 = vpow.pop %v4301
  %v4303 = vmul.f32 %v4300, 1.442695
  %v4304 = vpow.pop %v4303
  %v4305 = vsel %vm187, %v4302, 0.0
  %4306 = vadd.xlane.f32.xlu0 %v4305
  %v4307 = vpop.xlane.xlu0 %4306
  %v4308 = vsel %vm187, %v4304, 0.0
  %4309 = vadd.xlane.f32.xlu0 %v4308
  %v4310 = vpop.xlane.xlu0 %4309
  %v4311 = vrcp.pop %v4307
  %v4312 = vrcp.pop %v4310
  %v4313 = vmul.f32 %v4302, %v4311
  %v4314 = vmul.f32 %v4304, %v4312
  %4315 = vrot.lane.b32.xlu0 %v3797, 56
  %v4316 = vpop.permute.xlu0 %4315
  %v4319 = vsel %vm187, %v4313, 0
  %4321 = vmatprep.subr.mxu0 0.0
  %4322 = vmatpush1.msra.mxu0 %v4316
  %4323 = vmatprep.subr.mxu0 0.0
  %4324 = vmatpush1.msra.mxu0 0.0
  %4325 = vmatprep.subr.mxu0 0.0
  %4326 = vmatpush1.msra.mxu0 0.0
  %4327 = vmatprep.subr.mxu0 0.0
  %4328 = vmatpush1.msra.mxu0 0.0
  %4329 = vmatprep.subr.mxu0 0.0
  %4330 = vmatpush1.msra.mxu0 0.0
  %4331 = vmatprep.subr.mxu0 0.0
  %4332 = vmatpush1.msra.mxu0 0.0
  %4333 = vmatprep.subr.mxu0 0.0
  %4334 = vmatpush1.msra.mxu0 0.0
  %4335 = vmatprep.subr.mxu0 0.0
  %4336 = vmatpush1.msra.mxu0 0.0
  %4337 = vmatprep.subr.mxu0 0.0
  %4338 = vmatpush1.msra.mxu0 0.0
  %4339 = vmatprep.subr.mxu0 0.0
  %4340 = vmatpush1.msra.mxu0 0.0
  %4341 = vmatprep.subr.mxu0 0.0
  %4342 = vmatpush1.msra.mxu0 0.0
  %4343 = vmatprep.subr.mxu0 0.0
  %4344 = vmatpush1.msra.mxu0 0.0
  %4345 = vmatprep.subr.mxu0 0.0
  %4346 = vmatpush1.msra.mxu0 0.0
  %4347 = vmatprep.subr.mxu0 0.0
  %4348 = vmatpush1.msra.mxu0 0.0
  %4349 = vmatprep.subr.mxu0 0.0
  %4350 = vmatpush1.msra.mxu0 0.0
  %4351 = vmatprep.subr.mxu0 0.0
  %4352 = vmatpush1.msra.mxu0 0.0
  %4353 = vmatprep.subr.mxu0 0.0
  %4354 = vmatpush1.msra.mxu0 0.0
  %4355 = vmatprep.subr.mxu0 0.0
  %4356 = vmatpush1.msra.mxu0 0.0
  %4357 = vmatprep.subr.mxu0 0.0
  %4358 = vmatpush1.msra.mxu0 0.0
  %4359 = vmatprep.subr.mxu0 0.0
  %4360 = vmatpush1.msra.mxu0 0.0
  %4361 = vmatprep.subr.mxu0 0.0
  %4362 = vmatpush1.msra.mxu0 0.0
  %4363 = vmatprep.subr.mxu0 0.0
  %4364 = vmatpush1.msra.mxu0 0.0
  %4365 = vmatprep.subr.mxu0 0.0
  %4366 = vmatpush1.msra.mxu0 0.0
  %4367 = vmatprep.subr.mxu0 0.0
  %4368 = vmatpush1.msra.mxu0 0.0
  %4369 = vmatprep.subr.mxu0 0.0
  %4370 = vmatpush1.msra.mxu0 0.0
  %4371 = vmatprep.subr.mxu0 0.0
  %4372 = vmatpush1.msra.mxu0 0.0
  %4373 = vmatprep.subr.mxu0 0.0
  %4374 = vmatpush1.msra.mxu0 0.0
  %4375 = vmatprep.subr.mxu0 0.0
  %4376 = vmatpush1.msra.mxu0 0.0
  %4377 = vmatprep.subr.mxu0 0.0
  %4378 = vmatpush1.msra.mxu0 0.0
  %4379 = vmatprep.subr.mxu0 0.0
  %4380 = vmatpush1.msra.mxu0 0.0
  %4381 = vmatprep.subr.mxu0 0.0
  %4382 = vmatpush1.msra.mxu0 0.0
  %4383 = vmatprep.subr.mxu0 0.0
  %4384 = vmatpush1.msra.mxu0 0.0
  %4385 = vmatprep.mubr.f32.mxu0 0.0
  %4386 = vmatmul.mubr.f32.gmra.mrb[0].mxu0 %v4319
  %v4387 = vpop.f32.mrb[0].mxu0
  %v4388 = vadd.f32 0.0, %v4387
  %v4389 = vpop.f32.mrb[0].mxu0
  %4390 = vdwg.mxu0
  %4391 = vrot.lane.b32.xlu0 %v3800, 56
  %v4392 = vpop.permute.xlu0 %4391
  %v4395 = vsel %vm187, %v4314, 0
  %4397 = vmatprep.subr.mxu0 0.0
  %4398 = vmatpush1.msra.mxu0 %v4392
  %4399 = vmatprep.subr.mxu0 0.0
  %4400 = vmatpush1.msra.mxu0 0.0
  %4401 = vmatprep.subr.mxu0 0.0
  %4402 = vmatpush1.msra.mxu0 0.0
  %4403 = vmatprep.subr.mxu0 0.0
  %4404 = vmatpush1.msra.mxu0 0.0
  %4405 = vmatprep.subr.mxu0 0.0
  %4406 = vmatpush1.msra.mxu0 0.0
  %4407 = vmatprep.subr.mxu0 0.0
  %4408 = vmatpush1.msra.mxu0 0.0
  %4409 = vmatprep.subr.mxu0 0.0
  %4410 = vmatpush1.msra.mxu0 0.0
  %4411 = vmatprep.subr.mxu0 0.0
  %4412 = vmatpush1.msra.mxu0 0.0
  %4413 = vmatprep.subr.mxu0 0.0
  %4414 = vmatpush1.msra.mxu0 0.0
  %4415 = vmatprep.subr.mxu0 0.0
  %4416 = vmatpush1.msra.mxu0 0.0
  %4417 = vmatprep.subr.mxu0 0.0
  %4418 = vmatpush1.msra.mxu0 0.0
  %4419 = vmatprep.subr.mxu0 0.0
  %4420 = vmatpush1.msra.mxu0 0.0
  %4421 = vmatprep.subr.mxu0 0.0
  %4422 = vmatpush1.msra.mxu0 0.0
  %4423 = vmatprep.subr.mxu0 0.0
  %4424 = vmatpush1.msra.mxu0 0.0
  %4425 = vmatprep.subr.mxu0 0.0
  %4426 = vmatpush1.msra.mxu0 0.0
  %4427 = vmatprep.subr.mxu0 0.0
  %4428 = vmatpush1.msra.mxu0 0.0
  %4429 = vmatprep.subr.mxu0 0.0
  %4430 = vmatpush1.msra.mxu0 0.0
  %4431 = vmatprep.subr.mxu0 0.0
  %4432 = vmatpush1.msra.mxu0 0.0
  %4433 = vmatprep.subr.mxu0 0.0
  %4434 = vmatpush1.msra.mxu0 0.0
  %4435 = vmatprep.subr.mxu0 0.0
  %4436 = vmatpush1.msra.mxu0 0.0
  %4437 = vmatprep.subr.mxu0 0.0
  %4438 = vmatpush1.msra.mxu0 0.0
  %4439 = vmatprep.subr.mxu0 0.0
  %4440 = vmatpush1.msra.mxu0 0.0
  %4441 = vmatprep.subr.mxu0 0.0
  %4442 = vmatpush1.msra.mxu0 0.0
  %4443 = vmatprep.subr.mxu0 0.0
  %4444 = vmatpush1.msra.mxu0 0.0
  %4445 = vmatprep.subr.mxu0 0.0
  %4446 = vmatpush1.msra.mxu0 0.0
  %4447 = vmatprep.subr.mxu0 0.0
  %4448 = vmatpush1.msra.mxu0 0.0
  %4449 = vmatprep.subr.mxu0 0.0
  %4450 = vmatpush1.msra.mxu0 0.0
  %4451 = vmatprep.subr.mxu0 0.0
  %4452 = vmatpush1.msra.mxu0 0.0
  %4453 = vmatprep.subr.mxu0 0.0
  %4454 = vmatpush1.msra.mxu0 0.0
  %4455 = vmatprep.subr.mxu0 0.0
  %4456 = vmatpush1.msra.mxu0 0.0
  %4457 = vmatprep.subr.mxu0 0.0
  %4458 = vmatpush1.msra.mxu0 0.0
  %4459 = vmatprep.subr.mxu0 0.0
  %4460 = vmatpush1.msra.mxu0 0.0
  %4461 = vmatprep.mubr.f32.mxu0 0.0
  %4462 = vmatmul.mubr.f32.gmra.mrb[0].mxu0 %v4395
  %v4463 = vpop.f32.mrb[0].mxu0
  %v4464 = vadd.f32 0.0, %v4463
  %v4465 = vpop.f32.mrb[0].mxu0
  %4466 = vdwg.mxu0
  %4469 = vrot.lane.b32.xlu0 %v4388, 8
  %v4470 = vpop.permute.xlu0 %4469
  %4471 = vrot.lane.b32.xlu0 %v4464, 8
  %v4472 = vpop.permute.xlu0 %4471
  %4475 = vst.msk [vmem:[#allocation2] sm:$0xff] %vm857, %v4470
  %4476 = vst.msk [vmem:[#allocation2 + $0x8] sm:$0xff] %vm857, %v4472
  %4477 = vrot.lane.b32.xlu0 %v3797, 112
  %v4478 = vpop.permute.xlu0 %4477
  %4479 = vrot.lane.b32.xlu0 %v3797, 80
  %v4480 = vpop.permute.xlu0 %4479
  %v4481 = vsel %vm187, %v4478, 0
  %v4483 = vsel %vm187, %v4480, 0
  %4485 = vmatprep.subr.mxu0 0.0
  %4486 = vmatpush1.xpose.msra.mxu0 %v4483
  %4487 = vmatprep.subr.mxu0 0.0
  %4488 = vmatpush1.xpose.msra.mxu0 0.0
  %4489 = vmatprep.subr.mxu0 0.0
  %4490 = vmatpush1.xpose.msra.mxu0 0.0
  %4491 = vmatprep.subr.mxu0 0.0
  %4492 = vmatpush1.xpose.msra.mxu0 0.0
  %4493 = vmatprep.subr.mxu0 0.0
  %4494 = vmatpush1.xpose.msra.mxu0 0.0
  %4495 = vmatprep.subr.mxu0 0.0
  %4496 = vmatpush1.xpose.msra.mxu0 0.0
  %4497 = vmatprep.subr.mxu0 0.0
  %4498 = vmatpush1.xpose.msra.mxu0 0.0
  %4499 = vmatprep.subr.mxu0 0.0
  %4500 = vmatpush1.xpose.msra.mxu0 0.0
  %4501 = vmatprep.subr.mxu0 0.0
  %4502 = vmatpush1.xpose.msra.mxu0 0.0
  %4503 = vmatprep.subr.mxu0 0.0
  %4504 = vmatpush1.xpose.msra.mxu0 0.0
  %4505 = vmatprep.subr.mxu0 0.0
  %4506 = vmatpush1.xpose.msra.mxu0 0.0
  %4507 = vmatprep.subr.mxu0 0.0
  %4508 = vmatpush1.xpose.msra.mxu0 0.0
  %4509 = vmatprep.subr.mxu0 0.0
  %4510 = vmatpush1.xpose.msra.mxu0 0.0
  %4511 = vmatprep.subr.mxu0 0.0
  %4512 = vmatpush1.xpose.msra.mxu0 0.0
  %4513 = vmatprep.subr.mxu0 0.0
  %4514 = vmatpush1.xpose.msra.mxu0 0.0
  %4515 = vmatprep.subr.mxu0 0.0
  %4516 = vmatpush1.xpose.msra.mxu0 0.0
  %4517 = vmatprep.subr.mxu0 0.0
  %4518 = vmatpush1.xpose.msra.mxu0 0.0
  %4519 = vmatprep.subr.mxu0 0.0
  %4520 = vmatpush1.xpose.msra.mxu0 0.0
  %4521 = vmatprep.subr.mxu0 0.0
  %4522 = vmatpush1.xpose.msra.mxu0 0.0
  %4523 = vmatprep.subr.mxu0 0.0
  %4524 = vmatpush1.xpose.msra.mxu0 0.0
  %4525 = vmatprep.subr.mxu0 0.0
  %4526 = vmatpush1.xpose.msra.mxu0 0.0
  %4527 = vmatprep.subr.mxu0 0.0
  %4528 = vmatpush1.xpose.msra.mxu0 0.0
  %4529 = vmatprep.subr.mxu0 0.0
  %4530 = vmatpush1.xpose.msra.mxu0 0.0
  %4531 = vmatprep.subr.mxu0 0.0
  %4532 = vmatpush1.xpose.msra.mxu0 0.0
  %4533 = vmatprep.subr.mxu0 0.0
  %4534 = vmatpush1.xpose.msra.mxu0 0.0
  %4535 = vmatprep.subr.mxu0 0.0
  %4536 = vmatpush1.xpose.msra.mxu0 0.0
  %4537 = vmatprep.subr.mxu0 0.0
  %4538 = vmatpush1.xpose.msra.mxu0 0.0
  %4539 = vmatprep.subr.mxu0 0.0
  %4540 = vmatpush1.xpose.msra.mxu0 0.0
  %4541 = vmatprep.subr.mxu0 0.0
  %4542 = vmatpush1.xpose.msra.mxu0 0.0
  %4543 = vmatprep.subr.mxu0 0.0
  %4544 = vmatpush1.xpose.msra.mxu0 0.0
  %4545 = vmatprep.subr.mxu0 0.0
  %4546 = vmatpush1.xpose.msra.mxu0 0.0
  %4547 = vmatprep.subr.mxu0 0.0
  %4548 = vmatpush1.xpose.msra.mxu0 0.0
  %4549 = vmatprep.mubr.f32.mxu0 0.0
  %4550 = vmatmul.mubr.f32.gmra.mrb[0].mxu0 %v4481
  %v4551 = vpop.f32.mrb[0].mxu0
  %v4552 = vadd.f32 0.0, %v4551
  %v4553 = vpop.f32.mrb[0].mxu0
  %4554 = vdwg.mxu0
  %4555 = vrot.lane.b32.xlu0 %v3800, 112
  %v4556 = vpop.permute.xlu0 %4555
  %4557 = vrot.lane.b32.xlu0 %v3800, 80
  %v4558 = vpop.permute.xlu0 %4557
  %v4559 = vsel %vm187, %v4556, 0
  %v4561 = vsel %vm187, %v4558, 0
  %4563 = vmatprep.subr.mxu0 0.0
  %4564 = vmatpush1.xpose.msra.mxu0 %v4561
  %4565 = vmatprep.subr.mxu0 0.0
  %4566 = vmatpush1.xpose.msra.mxu0 0.0
  %4567 = vmatprep.subr.mxu0 0.0
  %4568 = vmatpush1.xpose.msra.mxu0 0.0
  %4569 = vmatprep.subr.mxu0 0.0
  %4570 = vmatpush1.xpose.msra.mxu0 0.0
  %4571 = vmatprep.subr.mxu0 0.0
  %4572 = vmatpush1.xpose.msra.mxu0 0.0
  %4573 = vmatprep.subr.mxu0 0.0
  %4574 = vmatpush1.xpose.msra.mxu0 0.0
  %4575 = vmatprep.subr.mxu0 0.0
  %4576 = vmatpush1.xpose.msra.mxu0 0.0
  %4577 = vmatprep.subr.mxu0 0.0
  %4578 = vmatpush1.xpose.msra.mxu0 0.0
  %4579 = vmatprep.subr.mxu0 0.0
  %4580 = vmatpush1.xpose.msra.mxu0 0.0
  %4581 = vmatprep.subr.mxu0 0.0
  %4582 = vmatpush1.xpose.msra.mxu0 0.0
  %4583 = vmatprep.subr.mxu0 0.0
  %4584 = vmatpush1.xpose.msra.mxu0 0.0
  %4585 = vmatprep.subr.mxu0 0.0
  %4586 = vmatpush1.xpose.msra.mxu0 0.0
  %4587 = vmatprep.subr.mxu0 0.0
  %4588 = vmatpush1.xpose.msra.mxu0 0.0
  %4589 = vmatprep.subr.mxu0 0.0
  %4590 = vmatpush1.xpose.msra.mxu0 0.0
  %4591 = vmatprep.subr.mxu0 0.0
  %4592 = vmatpush1.xpose.msra.mxu0 0.0
  %4593 = vmatprep.subr.mxu0 0.0
  %4594 = vmatpush1.xpose.msra.mxu0 0.0
  %4595 = vmatprep.subr.mxu0 0.0
  %4596 = vmatpush1.xpose.msra.mxu0 0.0
  %4597 = vmatprep.subr.mxu0 0.0
  %4598 = vmatpush1.xpose.msra.mxu0 0.0
  %4599 = vmatprep.subr.mxu0 0.0
  %4600 = vmatpush1.xpose.msra.mxu0 0.0
  %4601 = vmatprep.subr.mxu0 0.0
  %4602 = vmatpush1.xpose.msra.mxu0 0.0
  %4603 = vmatprep.subr.mxu0 0.0
  %4604 = vmatpush1.xpose.msra.mxu0 0.0
  %4605 = vmatprep.subr.mxu0 0.0
  %4606 = vmatpush1.xpose.msra.mxu0 0.0
  %4607 = vmatprep.subr.mxu0 0.0
  %4608 = vmatpush1.xpose.msra.mxu0 0.0
  %4609 = vmatprep.subr.mxu0 0.0
  %4610 = vmatpush1.xpose.msra.mxu0 0.0
  %4611 = vmatprep.subr.mxu0 0.0
  %4612 = vmatpush1.xpose.msra.mxu0 0.0
  %4613 = vmatprep.subr.mxu0 0.0
  %4614 = vmatpush1.xpose.msra.mxu0 0.0
  %4615 = vmatprep.subr.mxu0 0.0
  %4616 = vmatpush1.xpose.msra.mxu0 0.0
  %4617 = vmatprep.subr.mxu0 0.0
  %4618 = vmatpush1.xpose.msra.mxu0 0.0
  %4619 = vmatprep.subr.mxu0 0.0
  %4620 = vmatpush1.xpose.msra.mxu0 0.0
  %4621 = vmatprep.subr.mxu0 0.0
  %4622 = vmatpush1.xpose.msra.mxu0 0.0
  %4623 = vmatprep.subr.mxu0 0.0
  %4624 = vmatpush1.xpose.msra.mxu0 0.0
  %4625 = vmatprep.subr.mxu0 0.0
  %4626 = vmatpush1.xpose.msra.mxu0 0.0
  %4627 = vmatprep.mubr.f32.mxu0 0.0
  %4628 = vmatmul.mubr.f32.gmra.mrb[0].mxu0 %v4559
  %v4629 = vpop.f32.mrb[0].mxu0
  %v4630 = vadd.f32 0.0, %v4629
  %v4631 = vpop.f32.mrb[0].mxu0
  %4632 = vdwg.mxu0
  %v4633 = vmul.f32 %v4552, 0.35355338
  %v4634 = vmul.f32 %v4630, 0.35355338
  %v4635 = vsel %vm187, %v4633, -inf
  %4636 = vmax.xlane.f32.xlu0 %v4635
  %v4637 = vpop.xlane.xlu0 %4636
  %v4638 = vsel %vm187, %v4634, -inf
  %4639 = vmax.xlane.f32.xlu0 %v4638
  %v4640 = vpop.xlane.xlu0 %4639
  %v4641 = vsub.f32 %v4633, %v4637
  %v4642 = vsub.f32 %v4634, %v4640
  %v4643 = vmul.f32 %v4641, 1.442695
  %v4644 = vpow.pop %v4643
  %v4645 = vmul.f32 %v4642, 1.442695
  %v4646 = vpow.pop %v4645
  %v4647 = vsel %vm187, %v4644, 0.0
  %4648 = vadd.xlane.f32.xlu0 %v4647
  %v4649 = vpop.xlane.xlu0 %4648
  %v4650 = vsel %vm187, %v4646, 0.0
  %4651 = vadd.xlane.f32.xlu0 %v4650
  %v4652 = vpop.xlane.xlu0 %4651
  %v4653 = vrcp.pop %v4649
  %v4654 = vrcp.pop %v4652
  %v4655 = vmul.f32 %v4644, %v4653
  %v4656 = vmul.f32 %v4646, %v4654
  %4657 = vrot.lane.b32.xlu0 %v3797, 48
  %v4658 = vpop.permute.xlu0 %4657
  %v4661 = vsel %vm187, %v4655, 0
  %4663 = vmatprep.subr.mxu0 0.0
  %4664 = vmatpush1.msra.mxu0 %v4658
  %4665 = vmatprep.subr.mxu0 0.0
  %4666 = vmatpush1.msra.mxu0 0.0
  %4667 = vmatprep.subr.mxu0 0.0
  %4668 = vmatpush1.msra.mxu0 0.0
  %4669 = vmatprep.subr.mxu0 0.0
  %4670 = vmatpush1.msra.mxu0 0.0
  %4671 = vmatprep.subr.mxu0 0.0
  %4672 = vmatpush1.msra.mxu0 0.0
  %4673 = vmatprep.subr.mxu0 0.0
  %4674 = vmatpush1.msra.mxu0 0.0
  %4675 = vmatprep.subr.mxu0 0.0
  %4676 = vmatpush1.msra.mxu0 0.0
  %4677 = vmatprep.subr.mxu0 0.0
  %4678 = vmatpush1.msra.mxu0 0.0
  %4679 = vmatprep.subr.mxu0 0.0
  %4680 = vmatpush1.msra.mxu0 0.0
  %4681 = vmatprep.subr.mxu0 0.0
  %4682 = vmatpush1.msra.mxu0 0.0
  %4683 = vmatprep.subr.mxu0 0.0
  %4684 = vmatpush1.msra.mxu0 0.0
  %4685 = vmatprep.subr.mxu0 0.0
  %4686 = vmatpush1.msra.mxu0 0.0
  %4687 = vmatprep.subr.mxu0 0.0
  %4688 = vmatpush1.msra.mxu0 0.0
  %4689 = vmatprep.subr.mxu0 0.0
  %4690 = vmatpush1.msra.mxu0 0.0
  %4691 = vmatprep.subr.mxu0 0.0
  %4692 = vmatpush1.msra.mxu0 0.0
  %4693 = vmatprep.subr.mxu0 0.0
  %4694 = vmatpush1.msra.mxu0 0.0
  %4695 = vmatprep.subr.mxu0 0.0
  %4696 = vmatpush1.msra.mxu0 0.0
  %4697 = vmatprep.subr.mxu0 0.0
  %4698 = vmatpush1.msra.mxu0 0.0
  %4699 = vmatprep.subr.mxu0 0.0
  %4700 = vmatpush1.msra.mxu0 0.0
  %4701 = vmatprep.subr.mxu0 0.0
  %4702 = vmatpush1.msra.mxu0 0.0
  %4703 = vmatprep.subr.mxu0 0.0
  %4704 = vmatpush1.msra.mxu0 0.0
  %4705 = vmatprep.subr.mxu0 0.0
  %4706 = vmatpush1.msra.mxu0 0.0
  %4707 = vmatprep.subr.mxu0 0.0
  %4708 = vmatpush1.msra.mxu0 0.0
  %4709 = vmatprep.subr.mxu0 0.0
  %4710 = vmatpush1.msra.mxu0 0.0
  %4711 = vmatprep.subr.mxu0 0.0
  %4712 = vmatpush1.msra.mxu0 0.0
  %4713 = vmatprep.subr.mxu0 0.0
  %4714 = vmatpush1.msra.mxu0 0.0
  %4715 = vmatprep.subr.mxu0 0.0
  %4716 = vmatpush1.msra.mxu0 0.0
  %4717 = vmatprep.subr.mxu0 0.0
  %4718 = vmatpush1.msra.mxu0 0.0
  %4719 = vmatprep.subr.mxu0 0.0
  %4720 = vmatpush1.msra.mxu0 0.0
  %4721 = vmatprep.subr.mxu0 0.0
  %4722 = vmatpush1.msra.mxu0 0.0
  %4723 = vmatprep.subr.mxu0 0.0
  %4724 = vmatpush1.msra.mxu0 0.0
  %4725 = vmatprep.subr.mxu0 0.0
  %4726 = vmatpush1.msra.mxu0 0.0
  %4727 = vmatprep.mubr.f32.mxu0 0.0
  %4728 = vmatmul.mubr.f32.gmra.mrb[0].mxu0 %v4661
  %v4729 = vpop.f32.mrb[0].mxu0
  %v4730 = vadd.f32 0.0, %v4729
  %v4731 = vpop.f32.mrb[0].mxu0
  %4732 = vdwg.mxu0
  %4733 = vrot.lane.b32.xlu0 %v3800, 48
  %v4734 = vpop.permute.xlu0 %4733
  %v4737 = vsel %vm187, %v4656, 0
  %4739 = vmatprep.subr.mxu0 0.0
  %4740 = vmatpush1.msra.mxu0 %v4734
  %4741 = vmatprep.subr.mxu0 0.0
  %4742 = vmatpush1.msra.mxu0 0.0
  %4743 = vmatprep.subr.mxu0 0.0
  %4744 = vmatpush1.msra.mxu0 0.0
  %4745 = vmatprep.subr.mxu0 0.0
  %4746 = vmatpush1.msra.mxu0 0.0
  %4747 = vmatprep.subr.mxu0 0.0
  %4748 = vmatpush1.msra.mxu0 0.0
  %4749 = vmatprep.subr.mxu0 0.0
  %4750 = vmatpush1.msra.mxu0 0.0
  %4751 = vmatprep.subr.mxu0 0.0
  %4752 = vmatpush1.msra.mxu0 0.0
  %4753 = vmatprep.subr.mxu0 0.0
  %4754 = vmatpush1.msra.mxu0 0.0
  %4755 = vmatprep.subr.mxu0 0.0
  %4756 = vmatpush1.msra.mxu0 0.0
  %4757 = vmatprep.subr.mxu0 0.0
  %4758 = vmatpush1.msra.mxu0 0.0
  %4759 = vmatprep.subr.mxu0 0.0
  %4760 = vmatpush1.msra.mxu0 0.0
  %4761 = vmatprep.subr.mxu0 0.0
  %4762 = vmatpush1.msra.mxu0 0.0
  %4763 = vmatprep.subr.mxu0 0.0
  %4764 = vmatpush1.msra.mxu0 0.0
  %4765 = vmatprep.subr.mxu0 0.0
  %4766 = vmatpush1.msra.mxu0 0.0
  %4767 = vmatprep.subr.mxu0 0.0
  %4768 = vmatpush1.msra.mxu0 0.0
  %4769 = vmatprep.subr.mxu0 0.0
  %4770 = vmatpush1.msra.mxu0 0.0
  %4771 = vmatprep.subr.mxu0 0.0
  %4772 = vmatpush1.msra.mxu0 0.0
  %4773 = vmatprep.subr.mxu0 0.0
  %4774 = vmatpush1.msra.mxu0 0.0
  %4775 = vmatprep.subr.mxu0 0.0
  %4776 = vmatpush1.msra.mxu0 0.0
  %4777 = vmatprep.subr.mxu0 0.0
  %4778 = vmatpush1.msra.mxu0 0.0
  %4779 = vmatprep.subr.mxu0 0.0
  %4780 = vmatpush1.msra.mxu0 0.0
  %4781 = vmatprep.subr.mxu0 0.0
  %4782 = vmatpush1.msra.mxu0 0.0
  %4783 = vmatprep.subr.mxu0 0.0
  %4784 = vmatpush1.msra.mxu0 0.0
  %4785 = vmatprep.subr.mxu0 0.0
  %4786 = vmatpush1.msra.mxu0 0.0
  %4787 = vmatprep.subr.mxu0 0.0
  %4788 = vmatpush1.msra.mxu0 0.0
  %4789 = vmatprep.subr.mxu0 0.0
  %4790 = vmatpush1.msra.mxu0 0.0
  %4791 = vmatprep.subr.mxu0 0.0
  %4792 = vmatpush1.msra.mxu0 0.0
  %4793 = vmatprep.subr.mxu0 0.0
  %4794 = vmatpush1.msra.mxu0 0.0
  %4795 = vmatprep.subr.mxu0 0.0
  %4796 = vmatpush1.msra.mxu0 0.0
  %4797 = vmatprep.subr.mxu0 0.0
  %4798 = vmatpush1.msra.mxu0 0.0
  %4799 = vmatprep.subr.mxu0 0.0
  %4800 = vmatpush1.msra.mxu0 0.0
  %4801 = vmatprep.subr.mxu0 0.0
  %4802 = vmatpush1.msra.mxu0 0.0
  %4803 = vmatprep.mubr.f32.mxu0 0.0
  %4804 = vmatmul.mubr.f32.gmra.mrb[0].mxu0 %v4737
  %v4805 = vpop.f32.mrb[0].mxu0
  %v4806 = vadd.f32 0.0, %v4805
  %v4807 = vpop.f32.mrb[0].mxu0
  %4808 = vdwg.mxu0
  %4811 = vrot.lane.b32.xlu0 %v4730, 16
  %v4812 = vpop.permute.xlu0 %4811
  %4813 = vrot.lane.b32.xlu0 %v4806, 16
  %v4814 = vpop.permute.xlu0 %4813
  %4817 = vst.msk [vmem:[#allocation2] sm:$0xff] %vm1200, %v4812
  %4818 = vst.msk [vmem:[#allocation2 + $0x8] sm:$0xff] %vm1200, %v4814
  %4819 = vrot.lane.b32.xlu0 %v3797, 104
  %v4820 = vpop.permute.xlu0 %4819
  %4821 = vrot.lane.b32.xlu0 %v3797, 72
  %v4822 = vpop.permute.xlu0 %4821
  %v4823 = vsel %vm187, %v4820, 0
  %v4825 = vsel %vm187, %v4822, 0
  %4827 = vmatprep.subr.mxu0 0.0
  %4828 = vmatpush1.xpose.msra.mxu0 %v4825
  %4829 = vmatprep.subr.mxu0 0.0
  %4830 = vmatpush1.xpose.msra.mxu0 0.0
  %4831 = vmatprep.subr.mxu0 0.0
  %4832 = vmatpush1.xpose.msra.mxu0 0.0
  %4833 = vmatprep.subr.mxu0 0.0
  %4834 = vmatpush1.xpose.msra.mxu0 0.0
  %4835 = vmatprep.subr.mxu0 0.0
  %4836 = vmatpush1.xpose.msra.mxu0 0.0
  %4837 = vmatprep.subr.mxu0 0.0
  %4838 = vmatpush1.xpose.msra.mxu0 0.0
  %4839 = vmatprep.subr.mxu0 0.0
  %4840 = vmatpush1.xpose.msra.mxu0 0.0
  %4841 = vmatprep.subr.mxu0 0.0
  %4842 = vmatpush1.xpose.msra.mxu0 0.0
  %4843 = vmatprep.subr.mxu0 0.0
  %4844 = vmatpush1.xpose.msra.mxu0 0.0
  %4845 = vmatprep.subr.mxu0 0.0
  %4846 = vmatpush1.xpose.msra.mxu0 0.0
  %4847 = vmatprep.subr.mxu0 0.0
  %4848 = vmatpush1.xpose.msra.mxu0 0.0
  %4849 = vmatprep.subr.mxu0 0.0
  %4850 = vmatpush1.xpose.msra.mxu0 0.0
  %4851 = vmatprep.subr.mxu0 0.0
  %4852 = vmatpush1.xpose.msra.mxu0 0.0
  %4853 = vmatprep.subr.mxu0 0.0
  %4854 = vmatpush1.xpose.msra.mxu0 0.0
  %4855 = vmatprep.subr.mxu0 0.0
  %4856 = vmatpush1.xpose.msra.mxu0 0.0
  %4857 = vmatprep.subr.mxu0 0.0
  %4858 = vmatpush1.xpose.msra.mxu0 0.0
  %4859 = vmatprep.subr.mxu0 0.0
  %4860 = vmatpush1.xpose.msra.mxu0 0.0
  %4861 = vmatprep.subr.mxu0 0.0
  %4862 = vmatpush1.xpose.msra.mxu0 0.0
  %4863 = vmatprep.subr.mxu0 0.0
  %4864 = vmatpush1.xpose.msra.mxu0 0.0
  %4865 = vmatprep.subr.mxu0 0.0
  %4866 = vmatpush1.xpose.msra.mxu0 0.0
  %4867 = vmatprep.subr.mxu0 0.0
  %4868 = vmatpush1.xpose.msra.mxu0 0.0
  %4869 = vmatprep.subr.mxu0 0.0
  %4870 = vmatpush1.xpose.msra.mxu0 0.0
  %4871 = vmatprep.subr.mxu0 0.0
  %4872 = vmatpush1.xpose.msra.mxu0 0.0
  %4873 = vmatprep.subr.mxu0 0.0
  %4874 = vmatpush1.xpose.msra.mxu0 0.0
  %4875 = vmatprep.subr.mxu0 0.0
  %4876 = vmatpush1.xpose.msra.mxu0 0.0
  %4877 = vmatprep.subr.mxu0 0.0
  %4878 = vmatpush1.xpose.msra.mxu0 0.0
  %4879 = vmatprep.subr.mxu0 0.0
  %4880 = vmatpush1.xpose.msra.mxu0 0.0
  %4881 = vmatprep.subr.mxu0 0.0
  %4882 = vmatpush1.xpose.msra.mxu0 0.0
  %4883 = vmatprep.subr.mxu0 0.0
  %4884 = vmatpush1.xpose.msra.mxu0 0.0
  %4885 = vmatprep.subr.mxu0 0.0
  %4886 = vmatpush1.xpose.msra.mxu0 0.0
  %4887 = vmatprep.subr.mxu0 0.0
  %4888 = vmatpush1.xpose.msra.mxu0 0.0
  %4889 = vmatprep.subr.mxu0 0.0
  %4890 = vmatpush1.xpose.msra.mxu0 0.0
  %4891 = vmatprep.mubr.f32.mxu0 0.0
  %4892 = vmatmul.mubr.f32.gmra.mrb[0].mxu0 %v4823
  %v4893 = vpop.f32.mrb[0].mxu0
  %v4894 = vadd.f32 0.0, %v4893
  %v4895 = vpop.f32.mrb[0].mxu0
  %4896 = vdwg.mxu0
  %4897 = vrot.lane.b32.xlu0 %v3800, 104
  %v4898 = vpop.permute.xlu0 %4897
  %4899 = vrot.lane.b32.xlu0 %v3800, 72
  %v4900 = vpop.permute.xlu0 %4899
  %v4901 = vsel %vm187, %v4898, 0
  %v4903 = vsel %vm187, %v4900, 0
  %4905 = vmatprep.subr.mxu0 0.0
  %4906 = vmatpush1.xpose.msra.mxu0 %v4903
  %4907 = vmatprep.subr.mxu0 0.0
  %4908 = vmatpush1.xpose.msra.mxu0 0.0
  %4909 = vmatprep.subr.mxu0 0.0
  %4910 = vmatpush1.xpose.msra.mxu0 0.0
  %4911 = vmatprep.subr.mxu0 0.0
  %4912 = vmatpush1.xpose.msra.mxu0 0.0
  %4913 = vmatprep.subr.mxu0 0.0
  %4914 = vmatpush1.xpose.msra.mxu0 0.0
  %4915 = vmatprep.subr.mxu0 0.0
  %4916 = vmatpush1.xpose.msra.mxu0 0.0
  %4917 = vmatprep.subr.mxu0 0.0
  %4918 = vmatpush1.xpose.msra.mxu0 0.0
  %4919 = vmatprep.subr.mxu0 0.0
  %4920 = vmatpush1.xpose.msra.mxu0 0.0
  %4921 = vmatprep.subr.mxu0 0.0
  %4922 = vmatpush1.xpose.msra.mxu0 0.0
  %4923 = vmatprep.subr.mxu0 0.0
  %4924 = vmatpush1.xpose.msra.mxu0 0.0
  %4925 = vmatprep.subr.mxu0 0.0
  %4926 = vmatpush1.xpose.msra.mxu0 0.0
  %4927 = vmatprep.subr.mxu0 0.0
  %4928 = vmatpush1.xpose.msra.mxu0 0.0
  %4929 = vmatprep.subr.mxu0 0.0
  %4930 = vmatpush1.xpose.msra.mxu0 0.0
  %4931 = vmatprep.subr.mxu0 0.0
  %4932 = vmatpush1.xpose.msra.mxu0 0.0
  %4933 = vmatprep.subr.mxu0 0.0
  %4934 = vmatpush1.xpose.msra.mxu0 0.0
  %4935 = vmatprep.subr.mxu0 0.0
  %4936 = vmatpush1.xpose.msra.mxu0 0.0
  %4937 = vmatprep.subr.mxu0 0.0
  %4938 = vmatpush1.xpose.msra.mxu0 0.0
  %4939 = vmatprep.subr.mxu0 0.0
  %4940 = vmatpush1.xpose.msra.mxu0 0.0
  %4941 = vmatprep.subr.mxu0 0.0
  %4942 = vmatpush1.xpose.msra.mxu0 0.0
  %4943 = vmatprep.subr.mxu0 0.0
  %4944 = vmatpush1.xpose.msra.mxu0 0.0
  %4945 = vmatprep.subr.mxu0 0.0
  %4946 = vmatpush1.xpose.msra.mxu0 0.0
  %4947 = vmatprep.subr.mxu0 0.0
  %4948 = vmatpush1.xpose.msra.mxu0 0.0
  %4949 = vmatprep.subr.mxu0 0.0
  %4950 = vmatpush1.xpose.msra.mxu0 0.0
  %4951 = vmatprep.subr.mxu0 0.0
  %4952 = vmatpush1.xpose.msra.mxu0 0.0
  %4953 = vmatprep.subr.mxu0 0.0
  %4954 = vmatpush1.xpose.msra.mxu0 0.0
  %4955 = vmatprep.subr.mxu0 0.0
  %4956 = vmatpush1.xpose.msra.mxu0 0.0
  %4957 = vmatprep.subr.mxu0 0.0
  %4958 = vmatpush1.xpose.msra.mxu0 0.0
  %4959 = vmatprep.subr.mxu0 0.0
  %4960 = vmatpush1.xpose.msra.mxu0 0.0
  %4961 = vmatprep.subr.mxu0 0.0
  %4962 = vmatpush1.xpose.msra.mxu0 0.0
  %4963 = vmatprep.subr.mxu0 0.0
  %4964 = vmatpush1.xpose.msra.mxu0 0.0
  %4965 = vmatprep.subr.mxu0 0.0
  %4966 = vmatpush1.xpose.msra.mxu0 0.0
  %4967 = vmatprep.subr.mxu0 0.0
  %4968 = vmatpush1.xpose.msra.mxu0 0.0
  %4969 = vmatprep.mubr.f32.mxu0 0.0
  %4970 = vmatmul.mubr.f32.gmra.mrb[0].mxu0 %v4901
  %v4971 = vpop.f32.mrb[0].mxu0
  %v4972 = vadd.f32 0.0, %v4971
  %v4973 = vpop.f32.mrb[0].mxu0
  %4974 = vdwg.mxu0
  %v4975 = vmul.f32 %v4894, 0.35355338
  %v4976 = vmul.f32 %v4972, 0.35355338
  %v4977 = vsel %vm187, %v4975, -inf
  %4978 = vmax.xlane.f32.xlu0 %v4977
  %v4979 = vpop.xlane.xlu0 %4978
  %v4980 = vsel %vm187, %v4976, -inf
  %4981 = vmax.xlane.f32.xlu0 %v4980
  %v4982 = vpop.xlane.xlu0 %4981
  %v4983 = vsub.f32 %v4975, %v4979
  %v4984 = vsub.f32 %v4976, %v4982
  %v4985 = vmul.f32 %v4983, 1.442695
  %v4986 = vpow.pop %v4985
  %v4987 = vmul.f32 %v4984, 1.442695
  %v4988 = vpow.pop %v4987
  %v4989 = vsel %vm187, %v4986, 0.0
  %4990 = vadd.xlane.f32.xlu0 %v4989
  %v4991 = vpop.xlane.xlu0 %4990
  %v4992 = vsel %vm187, %v4988, 0.0
  %4993 = vadd.xlane.f32.xlu0 %v4992
  %v4994 = vpop.xlane.xlu0 %4993
  %v4995 = vrcp.pop %v4991
  %v4996 = vrcp.pop %v4994
  %v4997 = vmul.f32 %v4986, %v4995
  %v4998 = vmul.f32 %v4988, %v4996
  %4999 = vrot.lane.b32.xlu0 %v3797, 40
  %v5000 = vpop.permute.xlu0 %4999
  %v5003 = vsel %vm187, %v4997, 0
  %5005 = vmatprep.subr.mxu0 0.0
  %5006 = vmatpush1.msra.mxu0 %v5000
  %5007 = vmatprep.subr.mxu0 0.0
  %5008 = vmatpush1.msra.mxu0 0.0
  %5009 = vmatprep.subr.mxu0 0.0
  %5010 = vmatpush1.msra.mxu0 0.0
  %5011 = vmatprep.subr.mxu0 0.0
  %5012 = vmatpush1.msra.mxu0 0.0
  %5013 = vmatprep.subr.mxu0 0.0
  %5014 = vmatpush1.msra.mxu0 0.0
  %5015 = vmatprep.subr.mxu0 0.0
  %5016 = vmatpush1.msra.mxu0 0.0
  %5017 = vmatprep.subr.mxu0 0.0
  %5018 = vmatpush1.msra.mxu0 0.0
  %5019 = vmatprep.subr.mxu0 0.0
  %5020 = vmatpush1.msra.mxu0 0.0
  %5021 = vmatprep.subr.mxu0 0.0
  %5022 = vmatpush1.msra.mxu0 0.0
  %5023 = vmatprep.subr.mxu0 0.0
  %5024 = vmatpush1.msra.mxu0 0.0
  %5025 = vmatprep.subr.mxu0 0.0
  %5026 = vmatpush1.msra.mxu0 0.0
  %5027 = vmatprep.subr.mxu0 0.0
  %5028 = vmatpush1.msra.mxu0 0.0
  %5029 = vmatprep.subr.mxu0 0.0
  %5030 = vmatpush1.msra.mxu0 0.0
  %5031 = vmatprep.subr.mxu0 0.0
  %5032 = vmatpush1.msra.mxu0 0.0
  %5033 = vmatprep.subr.mxu0 0.0
  %5034 = vmatpush1.msra.mxu0 0.0
  %5035 = vmatprep.subr.mxu0 0.0
  %5036 = vmatpush1.msra.mxu0 0.0
  %5037 = vmatprep.subr.mxu0 0.0
  %5038 = vmatpush1.msra.mxu0 0.0
  %5039 = vmatprep.subr.mxu0 0.0
  %5040 = vmatpush1.msra.mxu0 0.0
  %5041 = vmatprep.subr.mxu0 0.0
  %5042 = vmatpush1.msra.mxu0 0.0
  %5043 = vmatprep.subr.mxu0 0.0
  %5044 = vmatpush1.msra.mxu0 0.0
  %5045 = vmatprep.subr.mxu0 0.0
  %5046 = vmatpush1.msra.mxu0 0.0
  %5047 = vmatprep.subr.mxu0 0.0
  %5048 = vmatpush1.msra.mxu0 0.0
  %5049 = vmatprep.subr.mxu0 0.0
  %5050 = vmatpush1.msra.mxu0 0.0
  %5051 = vmatprep.subr.mxu0 0.0
  %5052 = vmatpush1.msra.mxu0 0.0
  %5053 = vmatprep.subr.mxu0 0.0
  %5054 = vmatpush1.msra.mxu0 0.0
  %5055 = vmatprep.subr.mxu0 0.0
  %5056 = vmatpush1.msra.mxu0 0.0
  %5057 = vmatprep.subr.mxu0 0.0
  %5058 = vmatpush1.msra.mxu0 0.0
  %5059 = vmatprep.subr.mxu0 0.0
  %5060 = vmatpush1.msra.mxu0 0.0
  %5061 = vmatprep.subr.mxu0 0.0
  %5062 = vmatpush1.msra.mxu0 0.0
  %5063 = vmatprep.subr.mxu0 0.0
  %5064 = vmatpush1.msra.mxu0 0.0
  %5065 = vmatprep.subr.mxu0 0.0
  %5066 = vmatpush1.msra.mxu0 0.0
  %5067 = vmatprep.subr.mxu0 0.0
  %5068 = vmatpush1.msra.mxu0 0.0
  %5069 = vmatprep.mubr.f32.mxu0 0.0
  %5070 = vmatmul.mubr.f32.gmra.mrb[0].mxu0 %v5003
  %v5071 = vpop.f32.mrb[0].mxu0
  %v5072 = vadd.f32 0.0, %v5071
  %v5073 = vpop.f32.mrb[0].mxu0
  %5074 = vdwg.mxu0
  %5075 = vrot.lane.b32.xlu0 %v3800, 40
  %v5076 = vpop.permute.xlu0 %5075
  %v5079 = vsel %vm187, %v4998, 0
  %5081 = vmatprep.subr.mxu0 0.0
  %5082 = vmatpush1.msra.mxu0 %v5076
  %5083 = vmatprep.subr.mxu0 0.0
  %5084 = vmatpush1.msra.mxu0 0.0
  %5085 = vmatprep.subr.mxu0 0.0
  %5086 = vmatpush1.msra.mxu0 0.0
  %5087 = vmatprep.subr.mxu0 0.0
  %5088 = vmatpush1.msra.mxu0 0.0
  %5089 = vmatprep.subr.mxu0 0.0
  %5090 = vmatpush1.msra.mxu0 0.0
  %5091 = vmatprep.subr.mxu0 0.0
  %5092 = vmatpush1.msra.mxu0 0.0
  %5093 = vmatprep.subr.mxu0 0.0
  %5094 = vmatpush1.msra.mxu0 0.0
  %5095 = vmatprep.subr.mxu0 0.0
  %5096 = vmatpush1.msra.mxu0 0.0
  %5097 = vmatprep.subr.mxu0 0.0
  %5098 = vmatpush1.msra.mxu0 0.0
  %5099 = vmatprep.subr.mxu0 0.0
  %5100 = vmatpush1.msra.mxu0 0.0
  %5101 = vmatprep.subr.mxu0 0.0
  %5102 = vmatpush1.msra.mxu0 0.0
  %5103 = vmatprep.subr.mxu0 0.0
  %5104 = vmatpush1.msra.mxu0 0.0
  %5105 = vmatprep.subr.mxu0 0.0
  %5106 = vmatpush1.msra.mxu0 0.0
  %5107 = vmatprep.subr.mxu0 0.0
  %5108 = vmatpush1.msra.mxu0 0.0
  %5109 = vmatprep.subr.mxu0 0.0
  %5110 = vmatpush1.msra.mxu0 0.0
  %5111 = vmatprep.subr.mxu0 0.0
  %5112 = vmatpush1.msra.mxu0 0.0
  %5113 = vmatprep.subr.mxu0 0.0
  %5114 = vmatpush1.msra.mxu0 0.0
  %5115 = vmatprep.subr.mxu0 0.0
  %5116 = vmatpush1.msra.mxu0 0.0
  %5117 = vmatprep.subr.mxu0 0.0
  %5118 = vmatpush1.msra.mxu0 0.0
  %5119 = vmatprep.subr.mxu0 0.0
  %5120 = vmatpush1.msra.mxu0 0.0
  %5121 = vmatprep.subr.mxu0 0.0
  %5122 = vmatpush1.msra.mxu0 0.0
  %5123 = vmatprep.subr.mxu0 0.0
  %5124 = vmatpush1.msra.mxu0 0.0
  %5125 = vmatprep.subr.mxu0 0.0
  %5126 = vmatpush1.msra.mxu0 0.0
  %5127 = vmatprep.subr.mxu0 0.0
  %5128 = vmatpush1.msra.mxu0 0.0
  %5129 = vmatprep.subr.mxu0 0.0
  %5130 = vmatpush1.msra.mxu0 0.0
  %5131 = vmatprep.subr.mxu0 0.0
  %5132 = vmatpush1.msra.mxu0 0.0
  %5133 = vmatprep.subr.mxu0 0.0
  %5134 = vmatpush1.msra.mxu0 0.0
  %5135 = vmatprep.subr.mxu0 0.0
  %5136 = vmatpush1.msra.mxu0 0.0
  %5137 = vmatprep.subr.mxu0 0.0
  %5138 = vmatpush1.msra.mxu0 0.0
  %5139 = vmatprep.subr.mxu0 0.0
  %5140 = vmatpush1.msra.mxu0 0.0
  %5141 = vmatprep.subr.mxu0 0.0
  %5142 = vmatpush1.msra.mxu0 0.0
  %5143 = vmatprep.subr.mxu0 0.0
  %5144 = vmatpush1.msra.mxu0 0.0
  %5145 = vmatprep.mubr.f32.mxu0 0.0
  %5146 = vmatmul.mubr.f32.gmra.mrb[0].mxu0 %v5079
  %v5147 = vpop.f32.mrb[0].mxu0
  %v5148 = vadd.f32 0.0, %v5147
  %v5149 = vpop.f32.mrb[0].mxu0
  %5150 = vdwg.mxu0
  %5153 = vrot.lane.b32.xlu0 %v5072, 24
  %v5154 = vpop.permute.xlu0 %5153
  %5155 = vrot.lane.b32.xlu0 %v5148, 24
  %v5156 = vpop.permute.xlu0 %5155
  %5159 = vst.msk [vmem:[#allocation2] sm:$0xff] %vm1543, %v5154
  %5160 = vst.msk [vmem:[#allocation2 + $0x8] sm:$0xff] %vm1543, %v5156
  %v5161 = vld [vmem:[#allocation2] sm:$0xff]
  %v5162 = vld [vmem:[#allocation2 + $0x8] sm:$0xff]
  %v5163 = vld [vmem:[%s0 + $0x138] sm:$0xff]
  %v5164 = vld [vmem:[%s0 + $0x140] sm:$0xff]
  %v5165 = vld [vmem:[%s0 + $0x148] sm:$0x1]
  %v5166 = vld [vmem:[%s0 + $0x150] sm:$0x1]
  %v5167 = vsel %vm78, %v5161, 0.0
  %5168 = vadd.xlane.f32.xlu0 %v5167
  %v5169 = vpop.xlane.xlu0 %5168
  %v5170 = vsel %vm78, %v5162, 0.0
  %5171 = vadd.xlane.f32.xlu0 %v5170
  %v5172 = vpop.xlane.xlu0 %5171
  %v5173 = vmul.f32 %v5169, %v85
  %v5174 = vmul.f32 %v5172, %v85
  %v5175 = vsub.f32 %v5161, %v5173
  %v5176 = vsub.f32 %v5162, %v5174
  %v5177 = vmul.f32 %v5175, %v5175
  %v5178 = vmul.f32 %v5176, %v5176
  %v5179 = vsel %vm78, %v5177, 0.0
  %5180 = vadd.xlane.f32.xlu0 %v5179
  %v5181 = vpop.xlane.xlu0 %5180
  %v5182 = vsel %vm78, %v5178, 0.0
  %5183 = vadd.xlane.f32.xlu0 %v5182
  %v5184 = vpop.xlane.xlu0 %5183
  %v5185 = vmul.f32 %v5181, %v85
  %v5186 = vmul.f32 %v5184, %v85
  %v5187 = vadd.f32 %v5185, 1e-05
  %v5188 = vadd.f32 %v5186, 1e-05
  %v5189 = vrsqrt.pop %v5187
  %v5190 = vrsqrt.pop %v5188
  %v5191 = vmul.f32 %v5175, %v5189
  %v5192 = vmul.f32 %v5176, %v5190
  %v5193 = vlaneseq
  %v5194 = vshrl.u32 %v5193, 7
  %v5195 = vsub.s32 0, %v5194
  %v5196 = vrot.slane %v5165, %v5195
  %v5197 = vmul.f32 %v5191, %v5196
  %v5198 = vmul.f32 %v5192, %v5196
  %v5199 = vlaneseq
  %v5200 = vshrl.u32 %v5199, 7
  %v5201 = vsub.s32 0, %v5200
  %v5202 = vrot.slane %v5166, %v5201
  %v5203 = vadd.f32 %v5197, %v5202
  %v5204 = vadd.f32 %v5198, %v5202
  %v5205 = vadd.f32 %v5163, 1.0
  %v5206 = vadd.f32 %v5164, 1.0
  %v5207 = vmul.f32 %v5203, %v5205
  %v5208 = vmul.f32 %v5204, %v5206
  %5211 = vrot.lane.b32.xlu0 %v5163, 96
  %v5212 = vpop.permute.xlu0 %5211
  %5213 = vrot.lane.b32.xlu0 %v5164, 96
  %v5214 = vpop.permute.xlu0 %5213
  %v5217 = vadd.f32 %v5207, %v5212
  %v5218 = vadd.f32 %v5208, %v5214
  %v5219 = vxor.u32 %v5217, 2147483648
  %v5220 = vxor.u32 %v5218, 2147483648
  %v5221 = vmul.f32 %v5219, 1.442695
  %v5222 = vpow.pop %v5221
  %v5223 = vmul.f32 %v5220, 1.442695
  %v5224 = vpow.pop %v5223
  %v5225 = vadd.f32 %v5222, 1.0
  %v5226 = vadd.f32 %v5224, 1.0
  %v5227 = vrcp.pop %v5225
  %v5228 = vmul.f32 1.0, %v5227
  %v5229 = vrcp.pop %v5226
  %v5230 = vmul.f32 1.0, %v5229
  %v5231 = vmul.f32 %v5217, %v5228
  %v5232 = vmul.f32 %v5218, %v5230
  %v5233 = vpack.c.bf16 %v5232, %v5231
  %v5234 = vld [vmem:[%s1 + $0xb0] sm:$0xf]
  %v5235 = vld [vmem:[%s1 + $0xb4] sm:$0xf]
  %v5236 = vld [vmem:[%s1 + $0xb8] sm:$0xf]
  %v5237 = vld [vmem:[%s1 + $0xbc] sm:$0xf]
  %v5238 = vld [vmem:[%s0 + $0x158] sm:$0x1]
  %v5239 = vlaneseq
  %v5240 = vshrl.u32 %v5239, 7
  %v5241 = vsub.s32 0, %v5240
  %v5242 = vrot.slane %v5238, %v5241
  %v5247 = vunpack.c.l.b16 %v5234
  %v5248 = vunpack.c.l.b16 %v5235
  %v5249 = vunpack.c.l.b16 %v5236
  %v5250 = vunpack.c.l.b16 %v5237
  %v5251 = vpack.c.b16 %v5248, %v5247
  %v5252 = vpack.c.b16 %v5250, %v5249
  %v5256 = vsel %vm78, %v5233, 0
  %5258 = vmatprep.subr.bf16.mxu0 0
  %5259 = vmatpush1.bf16.msra.mxu0 %v5251
  %5260 = vmatprep.subr.bf16.mxu0 0
  %5261 = vmatpush1.bf16.msra.mxu0 %v5252
  %5262 = vmatprep.subr.bf16.mxu0 0
  %5263 = vmatpush1.bf16.msra.mxu0 0
  %5264 = vmatprep.subr.bf16.mxu0 0
  %5265 = vmatpush1.bf16.msra.mxu0 0
  %5266 = vmatprep.subr.bf16.mxu0 0
  %5267 = vmatpush1.bf16.msra.mxu0 0
  %5268 = vmatprep.subr.bf16.mxu0 0
  %5269 = vmatpush1.bf16.msra.mxu0 0
  %5270 = vmatprep.subr.bf16.mxu0 0
  %5271 = vmatpush1.bf16.msra.mxu0 0
  %5272 = vmatprep.subr.bf16.mxu0 0
  %5273 = vmatpush1.bf16.msra.mxu0 0
  %5274 = vmatprep.subr.bf16.mxu0 0
  %5275 = vmatpush1.bf16.msra.mxu0 0
  %5276 = vmatprep.subr.bf16.mxu0 0
  %5277 = vmatpush1.bf16.msra.mxu0 0
  %5278 = vmatprep.subr.bf16.mxu0 0
  %5279 = vmatpush1.bf16.msra.mxu0 0
  %5280 = vmatprep.subr.bf16.mxu0 0
  %5281 = vmatpush1.bf16.msra.mxu0 0
  %5282 = vmatprep.subr.bf16.mxu0 0
  %5283 = vmatpush1.bf16.msra.mxu0 0
  %5284 = vmatprep.subr.bf16.mxu0 0
  %5285 = vmatpush1.bf16.msra.mxu0 0
  %5286 = vmatprep.subr.bf16.mxu0 0
  %5287 = vmatpush1.bf16.msra.mxu0 0
  %5288 = vmatprep.subr.bf16.mxu0 0
  %5289 = vmatpush1.bf16.msra.mxu0 0
  %5290 = vmatprep.mubr.bf16.mxu0 0
  %5291 = vmatmul.mubr.bf16.gmra.mrb[0].mxu0 %v5256
  %v5292 = vpop.f32.mrb[0].mxu0
  %v5293 = vadd.f32 %v5242, %v5292
  %v5294 = vpop.f32.mrb[0].mxu0
  %v5295 = vpop.f32.mrb[0].mxu0
  %v5296 = vadd.f32 %v5242, %v5295
  %v5297 = vpop.f32.mrb[0].mxu0
  %5298 = vdwg.mxu0
  %v5299 = vadd.f32 %v3695, %v5293
  %v5300 = vadd.f32 %v3696, %v5296
  %v5301 = vld [vmem:[%s0 + $0x160] sm:$0x1]
  %v5302 = vld [vmem:[%s0 + $0x168] sm:$0x1]
  %v5303 = vsel %vm78, %v5299, 0.0
  %5304 = vadd.xlane.f32.xlu0 %v5303
  %v5305 = vpop.xlane.xlu0 %5304
  %v5306 = vsel %vm78, %v5300, 0.0
  %5307 = vadd.xlane.f32.xlu0 %v5306
  %v5308 = vpop.xlane.xlu0 %5307
  %v5309 = vmul.f32 %v5305, %v85
  %v5310 = vmul.f32 %v5308, %v85
  %v5311 = vsub.f32 %v5299, %v5309
  %v5312 = vsub.f32 %v5300, %v5310
  %v5313 = vmul.f32 %v5311, %v5311
  %v5314 = vmul.f32 %v5312, %v5312
  %v5315 = vsel %vm78, %v5313, 0.0
  %5316 = vadd.xlane.f32.xlu0 %v5315
  %v5317 = vpop.xlane.xlu0 %5316
  %v5318 = vsel %vm78, %v5314, 0.0
  %5319 = vadd.xlane.f32.xlu0 %v5318
  %v5320 = vpop.xlane.xlu0 %5319
  %v5321 = vmul.f32 %v5317, %v85
  %v5322 = vmul.f32 %v5320, %v85
  %v5323 = vadd.f32 %v5321, 1e-05
  %v5324 = vadd.f32 %v5322, 1e-05
  %v5325 = vrsqrt.pop %v5323
  %v5326 = vrsqrt.pop %v5324
  %v5327 = vmul.f32 %v5311, %v5325
  %v5328 = vmul.f32 %v5312, %v5326
  %v5329 = vlaneseq
  %v5330 = vshrl.u32 %v5329, 7
  %v5331 = vsub.s32 0, %v5330
  %v5332 = vrot.slane %v5301, %v5331
  %v5333 = vmul.f32 %v5327, %v5332
  %v5334 = vmul.f32 %v5328, %v5332
  %v5335 = vlaneseq
  %v5336 = vshrl.u32 %v5335, 7
  %v5337 = vsub.s32 0, %v5336
  %v5338 = vrot.slane %v5302, %v5337
  %v5339 = vadd.f32 %v5333, %v5338
  %v5340 = vadd.f32 %v5334, %v5338
  %v5341 = vld [vmem:[%s0 + $0x170] sm:$0x1]
  %v5342 = vld [vmem:[%s0 + $0x178] sm:$0x1]
  %v5343 = vlaneseq
  %v5344 = vshrl.u32 %v5343, 7
  %v5345 = vsub.s32 0, %v5344
  %v5346 = vrot.slane %v5341, %v5345
  %v5347 = vmul.f32 %v1754, %v5346
  %v5348 = vmul.f32 %v1755, %v5346
  %v5349 = vlaneseq
  %v5350 = vshrl.u32 %v5349, 7
  %v5351 = vsub.s32 0, %v5350
  %v5352 = vrot.slane %v5342, %v5351
  %v5353 = vadd.f32 %v5347, %v5352
  %v5354 = vadd.f32 %v5348, %v5352
  %v5355 = vpack.c.bf16 %v5340, %v5339
  %v5356 = vld [vmem:[%s1 + $0xc0] sm:$0xf]
  %v5357 = vld [vmem:[%s1 + $0xc4] sm:$0xf]
  %v5358 = vld [vmem:[%s1 + $0xc8] sm:$0xf]
  %v5359 = vld [vmem:[%s1 + $0xcc] sm:$0xf]
  %v5360 = vld [vmem:[%s0 + $0x180] sm:$0x1]
  %v5361 = vlaneseq
  %v5362 = vshrl.u32 %v5361, 7
  %v5363 = vsub.s32 0, %v5362
  %v5364 = vrot.slane %v5360, %v5363
  %v5369 = vunpack.c.l.b16 %v5356
  %v5370 = vunpack.c.l.b16 %v5357
  %v5371 = vunpack.c.l.b16 %v5358
  %v5372 = vunpack.c.l.b16 %v5359
  %v5373 = vpack.c.b16 %v5370, %v5369
  %v5374 = vpack.c.b16 %v5372, %v5371
  %v5378 = vsel %vm78, %v5355, 0
  %5380 = vmatprep.subr.bf16.mxu0 0
  %5381 = vmatpush1.bf16.msra.mxu0 %v5373
  %5382 = vmatprep.subr.bf16.mxu0 0
  %5383 = vmatpush1.bf16.msra.mxu0 %v5374
  %5384 = vmatprep.subr.bf16.mxu0 0
  %5385 = vmatpush1.bf16.msra.mxu0 0
  %5386 = vmatprep.subr.bf16.mxu0 0
  %5387 = vmatpush1.bf16.msra.mxu0 0
  %5388 = vmatprep.subr.bf16.mxu0 0
  %5389 = vmatpush1.bf16.msra.mxu0 0
  %5390 = vmatprep.subr.bf16.mxu0 0
  %5391 = vmatpush1.bf16.msra.mxu0 0
  %5392 = vmatprep.subr.bf16.mxu0 0
  %5393 = vmatpush1.bf16.msra.mxu0 0
  %5394 = vmatprep.subr.bf16.mxu0 0
  %5395 = vmatpush1.bf16.msra.mxu0 0
  %5396 = vmatprep.subr.bf16.mxu0 0
  %5397 = vmatpush1.bf16.msra.mxu0 0
  %5398 = vmatprep.subr.bf16.mxu0 0
  %5399 = vmatpush1.bf16.msra.mxu0 0
  %5400 = vmatprep.subr.bf16.mxu0 0
  %5401 = vmatpush1.bf16.msra.mxu0 0
  %5402 = vmatprep.subr.bf16.mxu0 0
  %5403 = vmatpush1.bf16.msra.mxu0 0
  %5404 = vmatprep.subr.bf16.mxu0 0
  %5405 = vmatpush1.bf16.msra.mxu0 0
  %5406 = vmatprep.subr.bf16.mxu0 0
  %5407 = vmatpush1.bf16.msra.mxu0 0
  %5408 = vmatprep.subr.bf16.mxu0 0
  %5409 = vmatpush1.bf16.msra.mxu0 0
  %5410 = vmatprep.subr.bf16.mxu0 0
  %5411 = vmatpush1.bf16.msra.mxu0 0
  %5412 = vmatprep.mubr.bf16.mxu0 0
  %5413 = vmatmul.mubr.bf16.gmra.mrb[0].mxu0 %v5378
  %v5414 = vpop.f32.mrb[0].mxu0
  %v5415 = vadd.f32 %v5364, %v5414
  %v5416 = vpop.f32.mrb[0].mxu0
  %v5417 = vpop.f32.mrb[0].mxu0
  %v5418 = vadd.f32 %v5364, %v5417
  %v5419 = vpop.f32.mrb[0].mxu0
  %5420 = vdwg.mxu0
  %v5421 = vpack.c.bf16 %v5354, %v5353
  %v5422 = vld [vmem:[%s1 + $0xd0] sm:$0xf]
  %v5423 = vld [vmem:[%s1 + $0xd4] sm:$0xf]
  %v5424 = vld [vmem:[%s0 + $0x188] sm:$0x1]
  %v5425 = vlaneseq
  %v5426 = vshrl.u32 %v5425, 7
  %v5427 = vsub.s32 0, %v5426
  %v5428 = vrot.slane %v5424, %v5427
  %v5431 = vunpack.c.l.b16 %v5422
  %v5432 = vunpack.c.l.b16 %v5423
  %v5433 = vpack.c.b16 %v5432, %v5431
  %v5436 = vsel %vm1728, %v5421, 0
  %5438 = vmatprep.subr.bf16.mxu0 0
  %5439 = vmatpush1.bf16.msra.mxu0 %v5433
  %5440 = vmatprep.subr.bf16.mxu0 0
  %5441 = vmatpush1.bf16.msra.mxu0 0
  %5442 = vmatprep.subr.bf16.mxu0 0
  %5443 = vmatpush1.bf16.msra.mxu0 0
  %5444 = vmatprep.subr.bf16.mxu0 0
  %5445 = vmatpush1.bf16.msra.mxu0 0
  %5446 = vmatprep.subr.bf16.mxu0 0
  %5447 = vmatpush1.bf16.msra.mxu0 0
  %5448 = vmatprep.subr.bf16.mxu0 0
  %5449 = vmatpush1.bf16.msra.mxu0 0
  %5450 = vmatprep.subr.bf16.mxu0 0
  %5451 = vmatpush1.bf16.msra.mxu0 0
  %5452 = vmatprep.subr.bf16.mxu0 0
  %5453 = vmatpush1.bf16.msra.mxu0 0
  %5454 = vmatprep.subr.bf16.mxu0 0
  %5455 = vmatpush1.bf16.msra.mxu0 0
  %5456 = vmatprep.subr.bf16.mxu0 0
  %5457 = vmatpush1.bf16.msra.mxu0 0
  %5458 = vmatprep.subr.bf16.mxu0 0
  %5459 = vmatpush1.bf16.msra.mxu0 0
  %5460 = vmatprep.subr.bf16.mxu0 0
  %5461 = vmatpush1.bf16.msra.mxu0 0
  %5462 = vmatprep.subr.bf16.mxu0 0
  %5463 = vmatpush1.bf16.msra.mxu0 0
  %5464 = vmatprep.subr.bf16.mxu0 0
  %5465 = vmatpush1.bf16.msra.mxu0 0
  %5466 = vmatprep.subr.bf16.mxu0 0
  %5467 = vmatpush1.bf16.msra.mxu0 0
  %5468 = vmatprep.subr.bf16.mxu0 0
  %5469 = vmatpush1.bf16.msra.mxu0 0
  %5470 = vmatprep.mubr.bf16.mxu0 0
  %5471 = vmatmul.mubr.bf16.gmra.mrb[0].mxu0 %v5436
  %v5472 = vpop.f32.mrb[0].mxu0
  %v5473 = vadd.f32 %v5428, %v5472
  %v5474 = vpop.f32.mrb[0].mxu0
  %v5475 = vpop.f32.mrb[0].mxu0
  %v5476 = vadd.f32 %v5428, %v5475
  %v5477 = vpop.f32.mrb[0].mxu0
  %5478 = vdwg.mxu0
  %v5480 = vsel %vm187, %v5415, 0
  %v5483 = vsel %vm187, %v5473, 0
  %5485 = vmatprep.subr.mxu0 0.0
  %5486 = vmatpush1.xpose.msra.mxu0 %v5483
  %5487 = vmatprep.subr.mxu0 0.0
  %5488 = vmatpush1.xpose.msra.mxu0 0.0
  %5489 = vmatprep.subr.mxu0 0.0
  %5490 = vmatpush1.xpose.msra.mxu0 0.0
  %5491 = vmatprep.subr.mxu0 0.0
  %5492 = vmatpush1.xpose.msra.mxu0 0.0
  %5493 = vmatprep.subr.mxu0 0.0
  %5494 = vmatpush1.xpose.msra.mxu0 0.0
  %5495 = vmatprep.subr.mxu0 0.0
  %5496 = vmatpush1.xpose.msra.mxu0 0.0
  %5497 = vmatprep.subr.mxu0 0.0
  %5498 = vmatpush1.xpose.msra.mxu0 0.0
  %5499 = vmatprep.subr.mxu0 0.0
  %5500 = vmatpush1.xpose.msra.mxu0 0.0
  %5501 = vmatprep.subr.mxu0 0.0
  %5502 = vmatpush1.xpose.msra.mxu0 0.0
  %5503 = vmatprep.subr.mxu0 0.0
  %5504 = vmatpush1.xpose.msra.mxu0 0.0
  %5505 = vmatprep.subr.mxu0 0.0
  %5506 = vmatpush1.xpose.msra.mxu0 0.0
  %5507 = vmatprep.subr.mxu0 0.0
  %5508 = vmatpush1.xpose.msra.mxu0 0.0
  %5509 = vmatprep.subr.mxu0 0.0
  %5510 = vmatpush1.xpose.msra.mxu0 0.0
  %5511 = vmatprep.subr.mxu0 0.0
  %5512 = vmatpush1.xpose.msra.mxu0 0.0
  %5513 = vmatprep.subr.mxu0 0.0
  %5514 = vmatpush1.xpose.msra.mxu0 0.0
  %5515 = vmatprep.subr.mxu0 0.0
  %5516 = vmatpush1.xpose.msra.mxu0 0.0
  %5517 = vmatprep.subr.mxu0 0.0
  %5518 = vmatpush1.xpose.msra.mxu0 0.0
  %5519 = vmatprep.subr.mxu0 0.0
  %5520 = vmatpush1.xpose.msra.mxu0 0.0
  %5521 = vmatprep.subr.mxu0 0.0
  %5522 = vmatpush1.xpose.msra.mxu0 0.0
  %5523 = vmatprep.subr.mxu0 0.0
  %5524 = vmatpush1.xpose.msra.mxu0 0.0
  %5525 = vmatprep.subr.mxu0 0.0
  %5526 = vmatpush1.xpose.msra.mxu0 0.0
  %5527 = vmatprep.subr.mxu0 0.0
  %5528 = vmatpush1.xpose.msra.mxu0 0.0
  %5529 = vmatprep.subr.mxu0 0.0
  %5530 = vmatpush1.xpose.msra.mxu0 0.0
  %5531 = vmatprep.subr.mxu0 0.0
  %5532 = vmatpush1.xpose.msra.mxu0 0.0
  %5533 = vmatprep.subr.mxu0 0.0
  %5534 = vmatpush1.xpose.msra.mxu0 0.0
  %5535 = vmatprep.subr.mxu0 0.0
  %5536 = vmatpush1.xpose.msra.mxu0 0.0
  %5537 = vmatprep.subr.mxu0 0.0
  %5538 = vmatpush1.xpose.msra.mxu0 0.0
  %5539 = vmatprep.subr.mxu0 0.0
  %5540 = vmatpush1.xpose.msra.mxu0 0.0
  %5541 = vmatprep.subr.mxu0 0.0
  %5542 = vmatpush1.xpose.msra.mxu0 0.0
  %5543 = vmatprep.subr.mxu0 0.0
  %5544 = vmatpush1.xpose.msra.mxu0 0.0
  %5545 = vmatprep.subr.mxu0 0.0
  %5546 = vmatpush1.xpose.msra.mxu0 0.0
  %5547 = vmatprep.subr.mxu0 0.0
  %5548 = vmatpush1.xpose.msra.mxu0 0.0
  %5549 = vmatprep.mubr.f32.mxu0 0.0
  %5550 = vmatmul.mubr.f32.gmra.mrb[0].mxu0 %v5480
  %v5551 = vpop.f32.mrb[0].mxu0
  %v5552 = vadd.f32 0.0, %v5551
  %v5553 = vpop.f32.mrb[0].mxu0
  %5554 = vdwg.mxu0
  %v5556 = vsel %vm187, %v5418, 0
  %v5559 = vsel %vm187, %v5476, 0
  %5561 = vmatprep.subr.mxu0 0.0
  %5562 = vmatpush1.xpose.msra.mxu0 %v5559
  %5563 = vmatprep.subr.mxu0 0.0
  %5564 = vmatpush1.xpose.msra.mxu0 0.0
  %5565 = vmatprep.subr.mxu0 0.0
  %5566 = vmatpush1.xpose.msra.mxu0 0.0
  %5567 = vmatprep.subr.mxu0 0.0
  %5568 = vmatpush1.xpose.msra.mxu0 0.0
  %5569 = vmatprep.subr.mxu0 0.0
  %5570 = vmatpush1.xpose.msra.mxu0 0.0
  %5571 = vmatprep.subr.mxu0 0.0
  %5572 = vmatpush1.xpose.msra.mxu0 0.0
  %5573 = vmatprep.subr.mxu0 0.0
  %5574 = vmatpush1.xpose.msra.mxu0 0.0
  %5575 = vmatprep.subr.mxu0 0.0
  %5576 = vmatpush1.xpose.msra.mxu0 0.0
  %5577 = vmatprep.subr.mxu0 0.0
  %5578 = vmatpush1.xpose.msra.mxu0 0.0
  %5579 = vmatprep.subr.mxu0 0.0
  %5580 = vmatpush1.xpose.msra.mxu0 0.0
  %5581 = vmatprep.subr.mxu0 0.0
  %5582 = vmatpush1.xpose.msra.mxu0 0.0
  %5583 = vmatprep.subr.mxu0 0.0
  %5584 = vmatpush1.xpose.msra.mxu0 0.0
  %5585 = vmatprep.subr.mxu0 0.0
  %5586 = vmatpush1.xpose.msra.mxu0 0.0
  %5587 = vmatprep.subr.mxu0 0.0
  %5588 = vmatpush1.xpose.msra.mxu0 0.0
  %5589 = vmatprep.subr.mxu0 0.0
  %5590 = vmatpush1.xpose.msra.mxu0 0.0
  %5591 = vmatprep.subr.mxu0 0.0
  %5592 = vmatpush1.xpose.msra.mxu0 0.0
  %5593 = vmatprep.subr.mxu0 0.0
  %5594 = vmatpush1.xpose.msra.mxu0 0.0
  %5595 = vmatprep.subr.mxu0 0.0
  %5596 = vmatpush1.xpose.msra.mxu0 0.0
  %5597 = vmatprep.subr.mxu0 0.0
  %5598 = vmatpush1.xpose.msra.mxu0 0.0
  %5599 = vmatprep.subr.mxu0 0.0
  %5600 = vmatpush1.xpose.msra.mxu0 0.0
  %5601 = vmatprep.subr.mxu0 0.0
  %5602 = vmatpush1.xpose.msra.mxu0 0.0
  %5603 = vmatprep.subr.mxu0 0.0
  %5604 = vmatpush1.xpose.msra.mxu0 0.0
  %5605 = vmatprep.subr.mxu0 0.0
  %5606 = vmatpush1.xpose.msra.mxu0 0.0
  %5607 = vmatprep.subr.mxu0 0.0
  %5608 = vmatpush1.xpose.msra.mxu0 0.0
  %5609 = vmatprep.subr.mxu0 0.0
  %5610 = vmatpush1.xpose.msra.mxu0 0.0
  %5611 = vmatprep.subr.mxu0 0.0
  %5612 = vmatpush1.xpose.msra.mxu0 0.0
  %5613 = vmatprep.subr.mxu0 0.0
  %5614 = vmatpush1.xpose.msra.mxu0 0.0
  %5615 = vmatprep.subr.mxu0 0.0
  %5616 = vmatpush1.xpose.msra.mxu0 0.0
  %5617 = vmatprep.subr.mxu0 0.0
  %5618 = vmatpush1.xpose.msra.mxu0 0.0
  %5619 = vmatprep.subr.mxu0 0.0
  %5620 = vmatpush1.xpose.msra.mxu0 0.0
  %5621 = vmatprep.subr.mxu0 0.0
  %5622 = vmatpush1.xpose.msra.mxu0 0.0
  %5623 = vmatprep.subr.mxu0 0.0
  %5624 = vmatpush1.xpose.msra.mxu0 0.0
  %5625 = vmatprep.mubr.f32.mxu0 0.0
  %5626 = vmatmul.mubr.f32.gmra.mrb[0].mxu0 %v5556
  %v5627 = vpop.f32.mrb[0].mxu0
  %v5628 = vadd.f32 0.0, %v5627
  %v5629 = vpop.f32.mrb[0].mxu0
  %5630 = vdwg.mxu0
  %v5631 = vmul.f32 %v5552, 0.35355338
  %v5632 = vmul.f32 %v5628, 0.35355338
  %v5633 = vsel %vm187, %v5631, -inf
  %5634 = vmax.xlane.f32.xlu0 %v5633
  %v5635 = vpop.xlane.xlu0 %5634
  %v5636 = vsel %vm187, %v5632, -inf
  %5637 = vmax.xlane.f32.xlu0 %v5636
  %v5638 = vpop.xlane.xlu0 %5637
  %v5639 = vsub.f32 %v5631, %v5635
  %v5640 = vsub.f32 %v5632, %v5638
  %v5641 = vmul.f32 %v5639, 1.442695
  %v5642 = vpow.pop %v5641
  %v5643 = vmul.f32 %v5640, 1.442695
  %v5644 = vpow.pop %v5643
  %v5645 = vsel %vm187, %v5642, 0.0
  %5646 = vadd.xlane.f32.xlu0 %v5645
  %v5647 = vpop.xlane.xlu0 %5646
  %v5648 = vsel %vm187, %v5644, 0.0
  %5649 = vadd.xlane.f32.xlu0 %v5648
  %v5650 = vpop.xlane.xlu0 %5649
  %v5651 = vrcp.pop %v5647
  %v5652 = vrcp.pop %v5650
  %v5653 = vmul.f32 %v5642, %v5651
  %v5654 = vmul.f32 %v5644, %v5652
  %5655 = vrot.lane.b32.xlu0 %v5473, 96
  %v5656 = vpop.permute.xlu0 %5655
  %v5659 = vsel %vm187, %v5653, 0
  %5661 = vmatprep.subr.mxu0 0.0
  %5662 = vmatpush1.msra.mxu0 %v5656
  %5663 = vmatprep.subr.mxu0 0.0
  %5664 = vmatpush1.msra.mxu0 0.0
  %5665 = vmatprep.subr.mxu0 0.0
  %5666 = vmatpush1.msra.mxu0 0.0
  %5667 = vmatprep.subr.mxu0 0.0
  %5668 = vmatpush1.msra.mxu0 0.0
  %5669 = vmatprep.subr.mxu0 0.0
  %5670 = vmatpush1.msra.mxu0 0.0
  %5671 = vmatprep.subr.mxu0 0.0
  %5672 = vmatpush1.msra.mxu0 0.0
  %5673 = vmatprep.subr.mxu0 0.0
  %5674 = vmatpush1.msra.mxu0 0.0
  %5675 = vmatprep.subr.mxu0 0.0
  %5676 = vmatpush1.msra.mxu0 0.0
  %5677 = vmatprep.subr.mxu0 0.0
  %5678 = vmatpush1.msra.mxu0 0.0
  %5679 = vmatprep.subr.mxu0 0.0
  %5680 = vmatpush1.msra.mxu0 0.0
  %5681 = vmatprep.subr.mxu0 0.0
  %5682 = vmatpush1.msra.mxu0 0.0
  %5683 = vmatprep.subr.mxu0 0.0
  %5684 = vmatpush1.msra.mxu0 0.0
  %5685 = vmatprep.subr.mxu0 0.0
  %5686 = vmatpush1.msra.mxu0 0.0
  %5687 = vmatprep.subr.mxu0 0.0
  %5688 = vmatpush1.msra.mxu0 0.0
  %5689 = vmatprep.subr.mxu0 0.0
  %5690 = vmatpush1.msra.mxu0 0.0
  %5691 = vmatprep.subr.mxu0 0.0
  %5692 = vmatpush1.msra.mxu0 0.0
  %5693 = vmatprep.subr.mxu0 0.0
  %5694 = vmatpush1.msra.mxu0 0.0
  %5695 = vmatprep.subr.mxu0 0.0
  %5696 = vmatpush1.msra.mxu0 0.0
  %5697 = vmatprep.subr.mxu0 0.0
  %5698 = vmatpush1.msra.mxu0 0.0
  %5699 = vmatprep.subr.mxu0 0.0
  %5700 = vmatpush1.msra.mxu0 0.0
  %5701 = vmatprep.subr.mxu0 0.0
  %5702 = vmatpush1.msra.mxu0 0.0
  %5703 = vmatprep.subr.mxu0 0.0
  %5704 = vmatpush1.msra.mxu0 0.0
  %5705 = vmatprep.subr.mxu0 0.0
  %5706 = vmatpush1.msra.mxu0 0.0
  %5707 = vmatprep.subr.mxu0 0.0
  %5708 = vmatpush1.msra.mxu0 0.0
  %5709 = vmatprep.subr.mxu0 0.0
  %5710 = vmatpush1.msra.mxu0 0.0
  %5711 = vmatprep.subr.mxu0 0.0
  %5712 = vmatpush1.msra.mxu0 0.0
  %5713 = vmatprep.subr.mxu0 0.0
  %5714 = vmatpush1.msra.mxu0 0.0
  %5715 = vmatprep.subr.mxu0 0.0
  %5716 = vmatpush1.msra.mxu0 0.0
  %5717 = vmatprep.subr.mxu0 0.0
  %5718 = vmatpush1.msra.mxu0 0.0
  %5719 = vmatprep.subr.mxu0 0.0
  %5720 = vmatpush1.msra.mxu0 0.0
  %5721 = vmatprep.subr.mxu0 0.0
  %5722 = vmatpush1.msra.mxu0 0.0
  %5723 = vmatprep.subr.mxu0 0.0
  %5724 = vmatpush1.msra.mxu0 0.0
  %5725 = vmatprep.mubr.f32.mxu0 0.0
  %5726 = vmatmul.mubr.f32.gmra.mrb[0].mxu0 %v5659
  %v5727 = vpop.f32.mrb[0].mxu0
  %v5728 = vadd.f32 0.0, %v5727
  %v5729 = vpop.f32.mrb[0].mxu0
  %5730 = vdwg.mxu0
  %5731 = vrot.lane.b32.xlu0 %v5476, 96
  %v5732 = vpop.permute.xlu0 %5731
  %v5735 = vsel %vm187, %v5654, 0
  %5737 = vmatprep.subr.mxu0 0.0
  %5738 = vmatpush1.msra.mxu0 %v5732
  %5739 = vmatprep.subr.mxu0 0.0
  %5740 = vmatpush1.msra.mxu0 0.0
  %5741 = vmatprep.subr.mxu0 0.0
  %5742 = vmatpush1.msra.mxu0 0.0
  %5743 = vmatprep.subr.mxu0 0.0
  %5744 = vmatpush1.msra.mxu0 0.0
  %5745 = vmatprep.subr.mxu0 0.0
  %5746 = vmatpush1.msra.mxu0 0.0
  %5747 = vmatprep.subr.mxu0 0.0
  %5748 = vmatpush1.msra.mxu0 0.0
  %5749 = vmatprep.subr.mxu0 0.0
  %5750 = vmatpush1.msra.mxu0 0.0
  %5751 = vmatprep.subr.mxu0 0.0
  %5752 = vmatpush1.msra.mxu0 0.0
  %5753 = vmatprep.subr.mxu0 0.0
  %5754 = vmatpush1.msra.mxu0 0.0
  %5755 = vmatprep.subr.mxu0 0.0
  %5756 = vmatpush1.msra.mxu0 0.0
  %5757 = vmatprep.subr.mxu0 0.0
  %5758 = vmatpush1.msra.mxu0 0.0
  %5759 = vmatprep.subr.mxu0 0.0
  %5760 = vmatpush1.msra.mxu0 0.0
  %5761 = vmatprep.subr.mxu0 0.0
  %5762 = vmatpush1.msra.mxu0 0.0
  %5763 = vmatprep.subr.mxu0 0.0
  %5764 = vmatpush1.msra.mxu0 0.0
  %5765 = vmatprep.subr.mxu0 0.0
  %5766 = vmatpush1.msra.mxu0 0.0
  %5767 = vmatprep.subr.mxu0 0.0
  %5768 = vmatpush1.msra.mxu0 0.0
  %5769 = vmatprep.subr.mxu0 0.0
  %5770 = vmatpush1.msra.mxu0 0.0
  %5771 = vmatprep.subr.mxu0 0.0
  %5772 = vmatpush1.msra.mxu0 0.0
  %5773 = vmatprep.subr.mxu0 0.0
  %5774 = vmatpush1.msra.mxu0 0.0
  %5775 = vmatprep.subr.mxu0 0.0
  %5776 = vmatpush1.msra.mxu0 0.0
  %5777 = vmatprep.subr.mxu0 0.0
  %5778 = vmatpush1.msra.mxu0 0.0
  %5779 = vmatprep.subr.mxu0 0.0
  %5780 = vmatpush1.msra.mxu0 0.0
  %5781 = vmatprep.subr.mxu0 0.0
  %5782 = vmatpush1.msra.mxu0 0.0
  %5783 = vmatprep.subr.mxu0 0.0
  %5784 = vmatpush1.msra.mxu0 0.0
  %5785 = vmatprep.subr.mxu0 0.0
  %5786 = vmatpush1.msra.mxu0 0.0
  %5787 = vmatprep.subr.mxu0 0.0
  %5788 = vmatpush1.msra.mxu0 0.0
  %5789 = vmatprep.subr.mxu0 0.0
  %5790 = vmatpush1.msra.mxu0 0.0
  %5791 = vmatprep.subr.mxu0 0.0
  %5792 = vmatpush1.msra.mxu0 0.0
  %5793 = vmatprep.subr.mxu0 0.0
  %5794 = vmatpush1.msra.mxu0 0.0
  %5795 = vmatprep.subr.mxu0 0.0
  %5796 = vmatpush1.msra.mxu0 0.0
  %5797 = vmatprep.subr.mxu0 0.0
  %5798 = vmatpush1.msra.mxu0 0.0
  %5799 = vmatprep.subr.mxu0 0.0
  %5800 = vmatpush1.msra.mxu0 0.0
  %5801 = vmatprep.mubr.f32.mxu0 0.0
  %5802 = vmatmul.mubr.f32.gmra.mrb[0].mxu0 %v5735
  %v5803 = vpop.f32.mrb[0].mxu0
  %v5804 = vadd.f32 0.0, %v5803
  %v5805 = vpop.f32.mrb[0].mxu0
  %5806 = vdwg.mxu0
  %5807 = vst.msk [vmem:[#allocation2] sm:$0xff] %vm187, %v5728
  %5808 = vst.msk [vmem:[#allocation2 + $0x8] sm:$0xff] %vm187, %v5804
  %5809 = vrot.lane.b32.xlu0 %v5415, 120
  %v5810 = vpop.permute.xlu0 %5809
  %5811 = vrot.lane.b32.xlu0 %v5473, 120
  %v5812 = vpop.permute.xlu0 %5811
  %v5813 = vsel %vm187, %v5810, 0
  %v5815 = vsel %vm187, %v5812, 0
  %5817 = vmatprep.subr.mxu0 0.0
  %5818 = vmatpush1.xpose.msra.mxu0 %v5815
  %5819 = vmatprep.subr.mxu0 0.0
  %5820 = vmatpush1.xpose.msra.mxu0 0.0
  %5821 = vmatprep.subr.mxu0 0.0
  %5822 = vmatpush1.xpose.msra.mxu0 0.0
  %5823 = vmatprep.subr.mxu0 0.0
  %5824 = vmatpush1.xpose.msra.mxu0 0.0
  %5825 = vmatprep.subr.mxu0 0.0
  %5826 = vmatpush1.xpose.msra.mxu0 0.0
  %5827 = vmatprep.subr.mxu0 0.0
  %5828 = vmatpush1.xpose.msra.mxu0 0.0
  %5829 = vmatprep.subr.mxu0 0.0
  %5830 = vmatpush1.xpose.msra.mxu0 0.0
  %5831 = vmatprep.subr.mxu0 0.0
  %5832 = vmatpush1.xpose.msra.mxu0 0.0
  %5833 = vmatprep.subr.mxu0 0.0
  %5834 = vmatpush1.xpose.msra.mxu0 0.0
  %5835 = vmatprep.subr.mxu0 0.0
  %5836 = vmatpush1.xpose.msra.mxu0 0.0
  %5837 = vmatprep.subr.mxu0 0.0
  %5838 = vmatpush1.xpose.msra.mxu0 0.0
  %5839 = vmatprep.subr.mxu0 0.0
  %5840 = vmatpush1.xpose.msra.mxu0 0.0
  %5841 = vmatprep.subr.mxu0 0.0
  %5842 = vmatpush1.xpose.msra.mxu0 0.0
  %5843 = vmatprep.subr.mxu0 0.0
  %5844 = vmatpush1.xpose.msra.mxu0 0.0
  %5845 = vmatprep.subr.mxu0 0.0
  %5846 = vmatpush1.xpose.msra.mxu0 0.0
  %5847 = vmatprep.subr.mxu0 0.0
  %5848 = vmatpush1.xpose.msra.mxu0 0.0
  %5849 = vmatprep.subr.mxu0 0.0
  %5850 = vmatpush1.xpose.msra.mxu0 0.0
  %5851 = vmatprep.subr.mxu0 0.0
  %5852 = vmatpush1.xpose.msra.mxu0 0.0
  %5853 = vmatprep.subr.mxu0 0.0
  %5854 = vmatpush1.xpose.msra.mxu0 0.0
  %5855 = vmatprep.subr.mxu0 0.0
  %5856 = vmatpush1.xpose.msra.mxu0 0.0
  %5857 = vmatprep.subr.mxu0 0.0
  %5858 = vmatpush1.xpose.msra.mxu0 0.0
  %5859 = vmatprep.subr.mxu0 0.0
  %5860 = vmatpush1.xpose.msra.mxu0 0.0
  %5861 = vmatprep.subr.mxu0 0.0
  %5862 = vmatpush1.xpose.msra.mxu0 0.0
  %5863 = vmatprep.subr.mxu0 0.0
  %5864 = vmatpush1.xpose.msra.mxu0 0.0
  %5865 = vmatprep.subr.mxu0 0.0
  %5866 = vmatpush1.xpose.msra.mxu0 0.0
  %5867 = vmatprep.subr.mxu0 0.0
  %5868 = vmatpush1.xpose.msra.mxu0 0.0
  %5869 = vmatprep.subr.mxu0 0.0
  %5870 = vmatpush1.xpose.msra.mxu0 0.0
  %5871 = vmatprep.subr.mxu0 0.0
  %5872 = vmatpush1.xpose.msra.mxu0 0.0
  %5873 = vmatprep.subr.mxu0 0.0
  %5874 = vmatpush1.xpose.msra.mxu0 0.0
  %5875 = vmatprep.subr.mxu0 0.0
  %5876 = vmatpush1.xpose.msra.mxu0 0.0
  %5877 = vmatprep.subr.mxu0 0.0
  %5878 = vmatpush1.xpose.msra.mxu0 0.0
  %5879 = vmatprep.subr.mxu0 0.0
  %5880 = vmatpush1.xpose.msra.mxu0 0.0
  %5881 = vmatprep.mubr.f32.mxu0 0.0
  %5882 = vmatmul.mubr.f32.gmra.mrb[0].mxu0 %v5813
  %v5883 = vpop.f32.mrb[0].mxu0
  %v5884 = vadd.f32 0.0, %v5883
  %v5885 = vpop.f32.mrb[0].mxu0
  %5886 = vdwg.mxu0
  %5887 = vrot.lane.b32.xlu0 %v5418, 120
  %v5888 = vpop.permute.xlu0 %5887
  %5889 = vrot.lane.b32.xlu0 %v5476, 120
  %v5890 = vpop.permute.xlu0 %5889
  %v5891 = vsel %vm187, %v5888, 0
  %v5893 = vsel %vm187, %v5890, 0
  %5895 = vmatprep.subr.mxu0 0.0
  %5896 = vmatpush1.xpose.msra.mxu0 %v5893
  %5897 = vmatprep.subr.mxu0 0.0
  %5898 = vmatpush1.xpose.msra.mxu0 0.0
  %5899 = vmatprep.subr.mxu0 0.0
  %5900 = vmatpush1.xpose.msra.mxu0 0.0
  %5901 = vmatprep.subr.mxu0 0.0
  %5902 = vmatpush1.xpose.msra.mxu0 0.0
  %5903 = vmatprep.subr.mxu0 0.0
  %5904 = vmatpush1.xpose.msra.mxu0 0.0
  %5905 = vmatprep.subr.mxu0 0.0
  %5906 = vmatpush1.xpose.msra.mxu0 0.0
  %5907 = vmatprep.subr.mxu0 0.0
  %5908 = vmatpush1.xpose.msra.mxu0 0.0
  %5909 = vmatprep.subr.mxu0 0.0
  %5910 = vmatpush1.xpose.msra.mxu0 0.0
  %5911 = vmatprep.subr.mxu0 0.0
  %5912 = vmatpush1.xpose.msra.mxu0 0.0
  %5913 = vmatprep.subr.mxu0 0.0
  %5914 = vmatpush1.xpose.msra.mxu0 0.0
  %5915 = vmatprep.subr.mxu0 0.0
  %5916 = vmatpush1.xpose.msra.mxu0 0.0
  %5917 = vmatprep.subr.mxu0 0.0
  %5918 = vmatpush1.xpose.msra.mxu0 0.0
  %5919 = vmatprep.subr.mxu0 0.0
  %5920 = vmatpush1.xpose.msra.mxu0 0.0
  %5921 = vmatprep.subr.mxu0 0.0
  %5922 = vmatpush1.xpose.msra.mxu0 0.0
  %5923 = vmatprep.subr.mxu0 0.0
  %5924 = vmatpush1.xpose.msra.mxu0 0.0
  %5925 = vmatprep.subr.mxu0 0.0
  %5926 = vmatpush1.xpose.msra.mxu0 0.0
  %5927 = vmatprep.subr.mxu0 0.0
  %5928 = vmatpush1.xpose.msra.mxu0 0.0
  %5929 = vmatprep.subr.mxu0 0.0
  %5930 = vmatpush1.xpose.msra.mxu0 0.0
  %5931 = vmatprep.subr.mxu0 0.0
  %5932 = vmatpush1.xpose.msra.mxu0 0.0
  %5933 = vmatprep.subr.mxu0 0.0
  %5934 = vmatpush1.xpose.msra.mxu0 0.0
  %5935 = vmatprep.subr.mxu0 0.0
  %5936 = vmatpush1.xpose.msra.mxu0 0.0
  %5937 = vmatprep.subr.mxu0 0.0
  %5938 = vmatpush1.xpose.msra.mxu0 0.0
  %5939 = vmatprep.subr.mxu0 0.0
  %5940 = vmatpush1.xpose.msra.mxu0 0.0
  %5941 = vmatprep.subr.mxu0 0.0
  %5942 = vmatpush1.xpose.msra.mxu0 0.0
  %5943 = vmatprep.subr.mxu0 0.0
  %5944 = vmatpush1.xpose.msra.mxu0 0.0
  %5945 = vmatprep.subr.mxu0 0.0
  %5946 = vmatpush1.xpose.msra.mxu0 0.0
  %5947 = vmatprep.subr.mxu0 0.0
  %5948 = vmatpush1.xpose.msra.mxu0 0.0
  %5949 = vmatprep.subr.mxu0 0.0
  %5950 = vmatpush1.xpose.msra.mxu0 0.0
  %5951 = vmatprep.subr.mxu0 0.0
  %5952 = vmatpush1.xpose.msra.mxu0 0.0
  %5953 = vmatprep.subr.mxu0 0.0
  %5954 = vmatpush1.xpose.msra.mxu0 0.0
  %5955 = vmatprep.subr.mxu0 0.0
  %5956 = vmatpush1.xpose.msra.mxu0 0.0
  %5957 = vmatprep.subr.mxu0 0.0
  %5958 = vmatpush1.xpose.msra.mxu0 0.0
  %5959 = vmatprep.mubr.f32.mxu0 0.0
  %5960 = vmatmul.mubr.f32.gmra.mrb[0].mxu0 %v5891
  %v5961 = vpop.f32.mrb[0].mxu0
  %v5962 = vadd.f32 0.0, %v5961
  %v5963 = vpop.f32.mrb[0].mxu0
  %5964 = vdwg.mxu0
  %v5965 = vmul.f32 %v5884, 0.35355338
  %v5966 = vmul.f32 %v5962, 0.35355338
  %v5967 = vsel %vm187, %v5965, -inf
  %5968 = vmax.xlane.f32.xlu0 %v5967
  %v5969 = vpop.xlane.xlu0 %5968
  %v5970 = vsel %vm187, %v5966, -inf
  %5971 = vmax.xlane.f32.xlu0 %v5970
  %v5972 = vpop.xlane.xlu0 %5971
  %v5973 = vsub.f32 %v5965, %v5969
  %v5974 = vsub.f32 %v5966, %v5972
  %v5975 = vmul.f32 %v5973, 1.442695
  %v5976 = vpow.pop %v5975
  %v5977 = vmul.f32 %v5974, 1.442695
  %v5978 = vpow.pop %v5977
  %v5979 = vsel %vm187, %v5976, 0.0
  %5980 = vadd.xlane.f32.xlu0 %v5979
  %v5981 = vpop.xlane.xlu0 %5980
  %v5982 = vsel %vm187, %v5978, 0.0
  %5983 = vadd.xlane.f32.xlu0 %v5982
  %v5984 = vpop.xlane.xlu0 %5983
  %v5985 = vrcp.pop %v5981
  %v5986 = vrcp.pop %v5984
  %v5987 = vmul.f32 %v5976, %v5985
  %v5988 = vmul.f32 %v5978, %v5986
  %5989 = vrot.lane.b32.xlu0 %v5473, 88
  %v5990 = vpop.permute.xlu0 %5989
  %v5993 = vsel %vm187, %v5987, 0
  %5995 = vmatprep.subr.mxu0 0.0
  %5996 = vmatpush1.msra.mxu0 %v5990
  %5997 = vmatprep.subr.mxu0 0.0
  %5998 = vmatpush1.msra.mxu0 0.0
  %5999 = vmatprep.subr.mxu0 0.0
  %6000 = vmatpush1.msra.mxu0 0.0
  %6001 = vmatprep.subr.mxu0 0.0
  %6002 = vmatpush1.msra.mxu0 0.0
  %6003 = vmatprep.subr.mxu0 0.0
  %6004 = vmatpush1.msra.mxu0 0.0
  %6005 = vmatprep.subr.mxu0 0.0
  %6006 = vmatpush1.msra.mxu0 0.0
  %6007 = vmatprep.subr.mxu0 0.0
  %6008 = vmatpush1.msra.mxu0 0.0
  %6009 = vmatprep.subr.mxu0 0.0
  %6010 = vmatpush1.msra.mxu0 0.0
  %6011 = vmatprep.subr.mxu0 0.0
  %6012 = vmatpush1.msra.mxu0 0.0
  %6013 = vmatprep.subr.mxu0 0.0
  %6014 = vmatpush1.msra.mxu0 0.0
  %6015 = vmatprep.subr.mxu0 0.0
  %6016 = vmatpush1.msra.mxu0 0.0
  %6017 = vmatprep.subr.mxu0 0.0
  %6018 = vmatpush1.msra.mxu0 0.0
  %6019 = vmatprep.subr.mxu0 0.0
  %6020 = vmatpush1.msra.mxu0 0.0
  %6021 = vmatprep.subr.mxu0 0.0
  %6022 = vmatpush1.msra.mxu0 0.0
  %6023 = vmatprep.subr.mxu0 0.0
  %6024 = vmatpush1.msra.mxu0 0.0
  %6025 = vmatprep.subr.mxu0 0.0
  %6026 = vmatpush1.msra.mxu0 0.0
  %6027 = vmatprep.subr.mxu0 0.0
  %6028 = vmatpush1.msra.mxu0 0.0
  %6029 = vmatprep.subr.mxu0 0.0
  %6030 = vmatpush1.msra.mxu0 0.0
  %6031 = vmatprep.subr.mxu0 0.0
  %6032 = vmatpush1.msra.mxu0 0.0
  %6033 = vmatprep.subr.mxu0 0.0
  %6034 = vmatpush1.msra.mxu0 0.0
  %6035 = vmatprep.subr.mxu0 0.0
  %6036 = vmatpush1.msra.mxu0 0.0
  %6037 = vmatprep.subr.mxu0 0.0
  %6038 = vmatpush1.msra.mxu0 0.0
  %6039 = vmatprep.subr.mxu0 0.0
  %6040 = vmatpush1.msra.mxu0 0.0
  %6041 = vmatprep.subr.mxu0 0.0
  %6042 = vmatpush1.msra.mxu0 0.0
  %6043 = vmatprep.subr.mxu0 0.0
  %6044 = vmatpush1.msra.mxu0 0.0
  %6045 = vmatprep.subr.mxu0 0.0
  %6046 = vmatpush1.msra.mxu0 0.0
  %6047 = vmatprep.subr.mxu0 0.0
  %6048 = vmatpush1.msra.mxu0 0.0
  %6049 = vmatprep.subr.mxu0 0.0
  %6050 = vmatpush1.msra.mxu0 0.0
  %6051 = vmatprep.subr.mxu0 0.0
  %6052 = vmatpush1.msra.mxu0 0.0
  %6053 = vmatprep.subr.mxu0 0.0
  %6054 = vmatpush1.msra.mxu0 0.0
  %6055 = vmatprep.subr.mxu0 0.0
  %6056 = vmatpush1.msra.mxu0 0.0
  %6057 = vmatprep.subr.mxu0 0.0
  %6058 = vmatpush1.msra.mxu0 0.0
  %6059 = vmatprep.mubr.f32.mxu0 0.0
  %6060 = vmatmul.mubr.f32.gmra.mrb[0].mxu0 %v5993
  %v6061 = vpop.f32.mrb[0].mxu0
  %v6062 = vadd.f32 0.0, %v6061
  %v6063 = vpop.f32.mrb[0].mxu0
  %6064 = vdwg.mxu0
  %6065 = vrot.lane.b32.xlu0 %v5476, 88
  %v6066 = vpop.permute.xlu0 %6065
  %v6069 = vsel %vm187, %v5988, 0
  %6071 = vmatprep.subr.mxu0 0.0
  %6072 = vmatpush1.msra.mxu0 %v6066
  %6073 = vmatprep.subr.mxu0 0.0
  %6074 = vmatpush1.msra.mxu0 0.0
  %6075 = vmatprep.subr.mxu0 0.0
  %6076 = vmatpush1.msra.mxu0 0.0
  %6077 = vmatprep.subr.mxu0 0.0
  %6078 = vmatpush1.msra.mxu0 0.0
  %6079 = vmatprep.subr.mxu0 0.0
  %6080 = vmatpush1.msra.mxu0 0.0
  %6081 = vmatprep.subr.mxu0 0.0
  %6082 = vmatpush1.msra.mxu0 0.0
  %6083 = vmatprep.subr.mxu0 0.0
  %6084 = vmatpush1.msra.mxu0 0.0
  %6085 = vmatprep.subr.mxu0 0.0
  %6086 = vmatpush1.msra.mxu0 0.0
  %6087 = vmatprep.subr.mxu0 0.0
  %6088 = vmatpush1.msra.mxu0 0.0
  %6089 = vmatprep.subr.mxu0 0.0
  %6090 = vmatpush1.msra.mxu0 0.0
  %6091 = vmatprep.subr.mxu0 0.0
  %6092 = vmatpush1.msra.mxu0 0.0
  %6093 = vmatprep.subr.mxu0 0.0
  %6094 = vmatpush1.msra.mxu0 0.0
  %6095 = vmatprep.subr.mxu0 0.0
  %6096 = vmatpush1.msra.mxu0 0.0
  %6097 = vmatprep.subr.mxu0 0.0
  %6098 = vmatpush1.msra.mxu0 0.0
  %6099 = vmatprep.subr.mxu0 0.0
  %6100 = vmatpush1.msra.mxu0 0.0
  %6101 = vmatprep.subr.mxu0 0.0
  %6102 = vmatpush1.msra.mxu0 0.0
  %6103 = vmatprep.subr.mxu0 0.0
  %6104 = vmatpush1.msra.mxu0 0.0
  %6105 = vmatprep.subr.mxu0 0.0
  %6106 = vmatpush1.msra.mxu0 0.0
  %6107 = vmatprep.subr.mxu0 0.0
  %6108 = vmatpush1.msra.mxu0 0.0
  %6109 = vmatprep.subr.mxu0 0.0
  %6110 = vmatpush1.msra.mxu0 0.0
  %6111 = vmatprep.subr.mxu0 0.0
  %6112 = vmatpush1.msra.mxu0 0.0
  %6113 = vmatprep.subr.mxu0 0.0
  %6114 = vmatpush1.msra.mxu0 0.0
  %6115 = vmatprep.subr.mxu0 0.0
  %6116 = vmatpush1.msra.mxu0 0.0
  %6117 = vmatprep.subr.mxu0 0.0
  %6118 = vmatpush1.msra.mxu0 0.0
  %6119 = vmatprep.subr.mxu0 0.0
  %6120 = vmatpush1.msra.mxu0 0.0
  %6121 = vmatprep.subr.mxu0 0.0
  %6122 = vmatpush1.msra.mxu0 0.0
  %6123 = vmatprep.subr.mxu0 0.0
  %6124 = vmatpush1.msra.mxu0 0.0
  %6125 = vmatprep.subr.mxu0 0.0
  %6126 = vmatpush1.msra.mxu0 0.0
  %6127 = vmatprep.subr.mxu0 0.0
  %6128 = vmatpush1.msra.mxu0 0.0
  %6129 = vmatprep.subr.mxu0 0.0
  %6130 = vmatpush1.msra.mxu0 0.0
  %6131 = vmatprep.subr.mxu0 0.0
  %6132 = vmatpush1.msra.mxu0 0.0
  %6133 = vmatprep.subr.mxu0 0.0
  %6134 = vmatpush1.msra.mxu0 0.0
  %6135 = vmatprep.mubr.f32.mxu0 0.0
  %6136 = vmatmul.mubr.f32.gmra.mrb[0].mxu0 %v6069
  %v6137 = vpop.f32.mrb[0].mxu0
  %v6138 = vadd.f32 0.0, %v6137
  %v6139 = vpop.f32.mrb[0].mxu0
  %6140 = vdwg.mxu0
  %6143 = vrot.lane.b32.xlu0 %v6062, 8
  %v6144 = vpop.permute.xlu0 %6143
  %6145 = vrot.lane.b32.xlu0 %v6138, 8
  %v6146 = vpop.permute.xlu0 %6145
  %6149 = vst.msk [vmem:[#allocation2] sm:$0xff] %vm857, %v6144
  %6150 = vst.msk [vmem:[#allocation2 + $0x8] sm:$0xff] %vm857, %v6146
  %6151 = vrot.lane.b32.xlu0 %v5415, 112
  %v6152 = vpop.permute.xlu0 %6151
  %6153 = vrot.lane.b32.xlu0 %v5473, 112
  %v6154 = vpop.permute.xlu0 %6153
  %v6155 = vsel %vm187, %v6152, 0
  %v6157 = vsel %vm187, %v6154, 0
  %6159 = vmatprep.subr.mxu0 0.0
  %6160 = vmatpush1.xpose.msra.mxu0 %v6157
  %6161 = vmatprep.subr.mxu0 0.0
  %6162 = vmatpush1.xpose.msra.mxu0 0.0
  %6163 = vmatprep.subr.mxu0 0.0
  %6164 = vmatpush1.xpose.msra.mxu0 0.0
  %6165 = vmatprep.subr.mxu0 0.0
  %6166 = vmatpush1.xpose.msra.mxu0 0.0
  %6167 = vmatprep.subr.mxu0 0.0
  %6168 = vmatpush1.xpose.msra.mxu0 0.0
  %6169 = vmatprep.subr.mxu0 0.0
  %6170 = vmatpush1.xpose.msra.mxu0 0.0
  %6171 = vmatprep.subr.mxu0 0.0
  %6172 = vmatpush1.xpose.msra.mxu0 0.0
  %6173 = vmatprep.subr.mxu0 0.0
  %6174 = vmatpush1.xpose.msra.mxu0 0.0
  %6175 = vmatprep.subr.mxu0 0.0
  %6176 = vmatpush1.xpose.msra.mxu0 0.0
  %6177 = vmatprep.subr.mxu0 0.0
  %6178 = vmatpush1.xpose.msra.mxu0 0.0
  %6179 = vmatprep.subr.mxu0 0.0
  %6180 = vmatpush1.xpose.msra.mxu0 0.0
  %6181 = vmatprep.subr.mxu0 0.0
  %6182 = vmatpush1.xpose.msra.mxu0 0.0
  %6183 = vmatprep.subr.mxu0 0.0
  %6184 = vmatpush1.xpose.msra.mxu0 0.0
  %6185 = vmatprep.subr.mxu0 0.0
  %6186 = vmatpush1.xpose.msra.mxu0 0.0
  %6187 = vmatprep.subr.mxu0 0.0
  %6188 = vmatpush1.xpose.msra.mxu0 0.0
  %6189 = vmatprep.subr.mxu0 0.0
  %6190 = vmatpush1.xpose.msra.mxu0 0.0
  %6191 = vmatprep.subr.mxu0 0.0
  %6192 = vmatpush1.xpose.msra.mxu0 0.0
  %6193 = vmatprep.subr.mxu0 0.0
  %6194 = vmatpush1.xpose.msra.mxu0 0.0
  %6195 = vmatprep.subr.mxu0 0.0
  %6196 = vmatpush1.xpose.msra.mxu0 0.0
  %6197 = vmatprep.subr.mxu0 0.0
  %6198 = vmatpush1.xpose.msra.mxu0 0.0
  %6199 = vmatprep.subr.mxu0 0.0
  %6200 = vmatpush1.xpose.msra.mxu0 0.0
  %6201 = vmatprep.subr.mxu0 0.0
  %6202 = vmatpush1.xpose.msra.mxu0 0.0
  %6203 = vmatprep.subr.mxu0 0.0
  %6204 = vmatpush1.xpose.msra.mxu0 0.0
  %6205 = vmatprep.subr.mxu0 0.0
  %6206 = vmatpush1.xpose.msra.mxu0 0.0
  %6207 = vmatprep.subr.mxu0 0.0
  %6208 = vmatpush1.xpose.msra.mxu0 0.0
  %6209 = vmatprep.subr.mxu0 0.0
  %6210 = vmatpush1.xpose.msra.mxu0 0.0
  %6211 = vmatprep.subr.mxu0 0.0
  %6212 = vmatpush1.xpose.msra.mxu0 0.0
  %6213 = vmatprep.subr.mxu0 0.0
  %6214 = vmatpush1.xpose.msra.mxu0 0.0
  %6215 = vmatprep.subr.mxu0 0.0
  %6216 = vmatpush1.xpose.msra.mxu0 0.0
  %6217 = vmatprep.subr.mxu0 0.0
  %6218 = vmatpush1.xpose.msra.mxu0 0.0
  %6219 = vmatprep.subr.mxu0 0.0
  %6220 = vmatpush1.xpose.msra.mxu0 0.0
  %6221 = vmatprep.subr.mxu0 0.0
  %6222 = vmatpush1.xpose.msra.mxu0 0.0
  %6223 = vmatprep.mubr.f32.mxu0 0.0
  %6224 = vmatmul.mubr.f32.gmra.mrb[0].mxu0 %v6155
  %v6225 = vpop.f32.mrb[0].mxu0
  %v6226 = vadd.f32 0.0, %v6225
  %v6227 = vpop.f32.mrb[0].mxu0
  %6228 = vdwg.mxu0
  %6229 = vrot.lane.b32.xlu0 %v5418, 112
  %v6230 = vpop.permute.xlu0 %6229
  %6231 = vrot.lane.b32.xlu0 %v5476, 112
  %v6232 = vpop.permute.xlu0 %6231
  %v6233 = vsel %vm187, %v6230, 0
  %v6235 = vsel %vm187, %v6232, 0
  %6237 = vmatprep.subr.mxu0 0.0
  %6238 = vmatpush1.xpose.msra.mxu0 %v6235
  %6239 = vmatprep.subr.mxu0 0.0
  %6240 = vmatpush1.xpose.msra.mxu0 0.0
  %6241 = vmatprep.subr.mxu0 0.0
  %6242 = vmatpush1.xpose.msra.mxu0 0.0
  %6243 = vmatprep.subr.mxu0 0.0
  %6244 = vmatpush1.xpose.msra.mxu0 0.0
  %6245 = vmatprep.subr.mxu0 0.0
  %6246 = vmatpush1.xpose.msra.mxu0 0.0
  %6247 = vmatprep.subr.mxu0 0.0
  %6248 = vmatpush1.xpose.msra.mxu0 0.0
  %6249 = vmatprep.subr.mxu0 0.0
  %6250 = vmatpush1.xpose.msra.mxu0 0.0
  %6251 = vmatprep.subr.mxu0 0.0
  %6252 = vmatpush1.xpose.msra.mxu0 0.0
  %6253 = vmatprep.subr.mxu0 0.0
  %6254 = vmatpush1.xpose.msra.mxu0 0.0
  %6255 = vmatprep.subr.mxu0 0.0
  %6256 = vmatpush1.xpose.msra.mxu0 0.0
  %6257 = vmatprep.subr.mxu0 0.0
  %6258 = vmatpush1.xpose.msra.mxu0 0.0
  %6259 = vmatprep.subr.mxu0 0.0
  %6260 = vmatpush1.xpose.msra.mxu0 0.0
  %6261 = vmatprep.subr.mxu0 0.0
  %6262 = vmatpush1.xpose.msra.mxu0 0.0
  %6263 = vmatprep.subr.mxu0 0.0
  %6264 = vmatpush1.xpose.msra.mxu0 0.0
  %6265 = vmatprep.subr.mxu0 0.0
  %6266 = vmatpush1.xpose.msra.mxu0 0.0
  %6267 = vmatprep.subr.mxu0 0.0
  %6268 = vmatpush1.xpose.msra.mxu0 0.0
  %6269 = vmatprep.subr.mxu0 0.0
  %6270 = vmatpush1.xpose.msra.mxu0 0.0
  %6271 = vmatprep.subr.mxu0 0.0
  %6272 = vmatpush1.xpose.msra.mxu0 0.0
  %6273 = vmatprep.subr.mxu0 0.0
  %6274 = vmatpush1.xpose.msra.mxu0 0.0
  %6275 = vmatprep.subr.mxu0 0.0
  %6276 = vmatpush1.xpose.msra.mxu0 0.0
  %6277 = vmatprep.subr.mxu0 0.0
  %6278 = vmatpush1.xpose.msra.mxu0 0.0
  %6279 = vmatprep.subr.mxu0 0.0
  %6280 = vmatpush1.xpose.msra.mxu0 0.0
  %6281 = vmatprep.subr.mxu0 0.0
  %6282 = vmatpush1.xpose.msra.mxu0 0.0
  %6283 = vmatprep.subr.mxu0 0.0
  %6284 = vmatpush1.xpose.msra.mxu0 0.0
  %6285 = vmatprep.subr.mxu0 0.0
  %6286 = vmatpush1.xpose.msra.mxu0 0.0
  %6287 = vmatprep.subr.mxu0 0.0
  %6288 = vmatpush1.xpose.msra.mxu0 0.0
  %6289 = vmatprep.subr.mxu0 0.0
  %6290 = vmatpush1.xpose.msra.mxu0 0.0
  %6291 = vmatprep.subr.mxu0 0.0
  %6292 = vmatpush1.xpose.msra.mxu0 0.0
  %6293 = vmatprep.subr.mxu0 0.0
  %6294 = vmatpush1.xpose.msra.mxu0 0.0
  %6295 = vmatprep.subr.mxu0 0.0
  %6296 = vmatpush1.xpose.msra.mxu0 0.0
  %6297 = vmatprep.subr.mxu0 0.0
  %6298 = vmatpush1.xpose.msra.mxu0 0.0
  %6299 = vmatprep.subr.mxu0 0.0
  %6300 = vmatpush1.xpose.msra.mxu0 0.0
  %6301 = vmatprep.mubr.f32.mxu0 0.0
  %6302 = vmatmul.mubr.f32.gmra.mrb[0].mxu0 %v6233
  %v6303 = vpop.f32.mrb[0].mxu0
  %v6304 = vadd.f32 0.0, %v6303
  %v6305 = vpop.f32.mrb[0].mxu0
  %6306 = vdwg.mxu0
  %v6307 = vmul.f32 %v6226, 0.35355338
  %v6308 = vmul.f32 %v6304, 0.35355338
  %v6309 = vsel %vm187, %v6307, -inf
  %6310 = vmax.xlane.f32.xlu0 %v6309
  %v6311 = vpop.xlane.xlu0 %6310
  %v6312 = vsel %vm187, %v6308, -inf
  %6313 = vmax.xlane.f32.xlu0 %v6312
  %v6314 = vpop.xlane.xlu0 %6313
  %v6315 = vsub.f32 %v6307, %v6311
  %v6316 = vsub.f32 %v6308, %v6314
  %v6317 = vmul.f32 %v6315, 1.442695
  %v6318 = vpow.pop %v6317
  %v6319 = vmul.f32 %v6316, 1.442695
  %v6320 = vpow.pop %v6319
  %v6321 = vsel %vm187, %v6318, 0.0
  %6322 = vadd.xlane.f32.xlu0 %v6321
  %v6323 = vpop.xlane.xlu0 %6322
  %v6324 = vsel %vm187, %v6320, 0.0
  %6325 = vadd.xlane.f32.xlu0 %v6324
  %v6326 = vpop.xlane.xlu0 %6325
  %v6327 = vrcp.pop %v6323
  %v6328 = vrcp.pop %v6326
  %v6329 = vmul.f32 %v6318, %v6327
  %v6330 = vmul.f32 %v6320, %v6328
  %6331 = vrot.lane.b32.xlu0 %v5473, 80
  %v6332 = vpop.permute.xlu0 %6331
  %v6335 = vsel %vm187, %v6329, 0
  %6337 = vmatprep.subr.mxu0 0.0
  %6338 = vmatpush1.msra.mxu0 %v6332
  %6339 = vmatprep.subr.mxu0 0.0
  %6340 = vmatpush1.msra.mxu0 0.0
  %6341 = vmatprep.subr.mxu0 0.0
  %6342 = vmatpush1.msra.mxu0 0.0
  %6343 = vmatprep.subr.mxu0 0.0
  %6344 = vmatpush1.msra.mxu0 0.0
  %6345 = vmatprep.subr.mxu0 0.0
  %6346 = vmatpush1.msra.mxu0 0.0
  %6347 = vmatprep.subr.mxu0 0.0
  %6348 = vmatpush1.msra.mxu0 0.0
  %6349 = vmatprep.subr.mxu0 0.0
  %6350 = vmatpush1.msra.mxu0 0.0
  %6351 = vmatprep.subr.mxu0 0.0
  %6352 = vmatpush1.msra.mxu0 0.0
  %6353 = vmatprep.subr.mxu0 0.0
  %6354 = vmatpush1.msra.mxu0 0.0
  %6355 = vmatprep.subr.mxu0 0.0
  %6356 = vmatpush1.msra.mxu0 0.0
  %6357 = vmatprep.subr.mxu0 0.0
  %6358 = vmatpush1.msra.mxu0 0.0
  %6359 = vmatprep.subr.mxu0 0.0
  %6360 = vmatpush1.msra.mxu0 0.0
  %6361 = vmatprep.subr.mxu0 0.0
  %6362 = vmatpush1.msra.mxu0 0.0
  %6363 = vmatprep.subr.mxu0 0.0
  %6364 = vmatpush1.msra.mxu0 0.0
  %6365 = vmatprep.subr.mxu0 0.0
  %6366 = vmatpush1.msra.mxu0 0.0
  %6367 = vmatprep.subr.mxu0 0.0
  %6368 = vmatpush1.msra.mxu0 0.0
  %6369 = vmatprep.subr.mxu0 0.0
  %6370 = vmatpush1.msra.mxu0 0.0
  %6371 = vmatprep.subr.mxu0 0.0
  %6372 = vmatpush1.msra.mxu0 0.0
  %6373 = vmatprep.subr.mxu0 0.0
  %6374 = vmatpush1.msra.mxu0 0.0
  %6375 = vmatprep.subr.mxu0 0.0
  %6376 = vmatpush1.msra.mxu0 0.0
  %6377 = vmatprep.subr.mxu0 0.0
  %6378 = vmatpush1.msra.mxu0 0.0
  %6379 = vmatprep.subr.mxu0 0.0
  %6380 = vmatpush1.msra.mxu0 0.0
  %6381 = vmatprep.subr.mxu0 0.0
  %6382 = vmatpush1.msra.mxu0 0.0
  %6383 = vmatprep.subr.mxu0 0.0
  %6384 = vmatpush1.msra.mxu0 0.0
  %6385 = vmatprep.subr.mxu0 0.0
  %6386 = vmatpush1.msra.mxu0 0.0
  %6387 = vmatprep.subr.mxu0 0.0
  %6388 = vmatpush1.msra.mxu0 0.0
  %6389 = vmatprep.subr.mxu0 0.0
  %6390 = vmatpush1.msra.mxu0 0.0
  %6391 = vmatprep.subr.mxu0 0.0
  %6392 = vmatpush1.msra.mxu0 0.0
  %6393 = vmatprep.subr.mxu0 0.0
  %6394 = vmatpush1.msra.mxu0 0.0
  %6395 = vmatprep.subr.mxu0 0.0
  %6396 = vmatpush1.msra.mxu0 0.0
  %6397 = vmatprep.subr.mxu0 0.0
  %6398 = vmatpush1.msra.mxu0 0.0
  %6399 = vmatprep.subr.mxu0 0.0
  %6400 = vmatpush1.msra.mxu0 0.0
  %6401 = vmatprep.mubr.f32.mxu0 0.0
  %6402 = vmatmul.mubr.f32.gmra.mrb[0].mxu0 %v6335
  %v6403 = vpop.f32.mrb[0].mxu0
  %v6404 = vadd.f32 0.0, %v6403
  %v6405 = vpop.f32.mrb[0].mxu0
  %6406 = vdwg.mxu0
  %6407 = vrot.lane.b32.xlu0 %v5476, 80
  %v6408 = vpop.permute.xlu0 %6407
  %v6411 = vsel %vm187, %v6330, 0
  %6413 = vmatprep.subr.mxu0 0.0
  %6414 = vmatpush1.msra.mxu0 %v6408
  %6415 = vmatprep.subr.mxu0 0.0
  %6416 = vmatpush1.msra.mxu0 0.0
  %6417 = vmatprep.subr.mxu0 0.0
  %6418 = vmatpush1.msra.mxu0 0.0
  %6419 = vmatprep.subr.mxu0 0.0
  %6420 = vmatpush1.msra.mxu0 0.0
  %6421 = vmatprep.subr.mxu0 0.0
  %6422 = vmatpush1.msra.mxu0 0.0
  %6423 = vmatprep.subr.mxu0 0.0
  %6424 = vmatpush1.msra.mxu0 0.0
  %6425 = vmatprep.subr.mxu0 0.0
  %6426 = vmatpush1.msra.mxu0 0.0
  %6427 = vmatprep.subr.mxu0 0.0
  %6428 = vmatpush1.msra.mxu0 0.0
  %6429 = vmatprep.subr.mxu0 0.0
  %6430 = vmatpush1.msra.mxu0 0.0
  %6431 = vmatprep.subr.mxu0 0.0
  %6432 = vmatpush1.msra.mxu0 0.0
  %6433 = vmatprep.subr.mxu0 0.0
  %6434 = vmatpush1.msra.mxu0 0.0
  %6435 = vmatprep.subr.mxu0 0.0
  %6436 = vmatpush1.msra.mxu0 0.0
  %6437 = vmatprep.subr.mxu0 0.0
  %6438 = vmatpush1.msra.mxu0 0.0
  %6439 = vmatprep.subr.mxu0 0.0
  %6440 = vmatpush1.msra.mxu0 0.0
  %6441 = vmatprep.subr.mxu0 0.0
  %6442 = vmatpush1.msra.mxu0 0.0
  %6443 = vmatprep.subr.mxu0 0.0
  %6444 = vmatpush1.msra.mxu0 0.0
  %6445 = vmatprep.subr.mxu0 0.0
  %6446 = vmatpush1.msra.mxu0 0.0
  %6447 = vmatprep.subr.mxu0 0.0
  %6448 = vmatpush1.msra.mxu0 0.0
  %6449 = vmatprep.subr.mxu0 0.0
  %6450 = vmatpush1.msra.mxu0 0.0
  %6451 = vmatprep.subr.mxu0 0.0
  %6452 = vmatpush1.msra.mxu0 0.0
  %6453 = vmatprep.subr.mxu0 0.0
  %6454 = vmatpush1.msra.mxu0 0.0
  %6455 = vmatprep.subr.mxu0 0.0
  %6456 = vmatpush1.msra.mxu0 0.0
  %6457 = vmatprep.subr.mxu0 0.0
  %6458 = vmatpush1.msra.mxu0 0.0
  %6459 = vmatprep.subr.mxu0 0.0
  %6460 = vmatpush1.msra.mxu0 0.0
  %6461 = vmatprep.subr.mxu0 0.0
  %6462 = vmatpush1.msra.mxu0 0.0
  %6463 = vmatprep.subr.mxu0 0.0
  %6464 = vmatpush1.msra.mxu0 0.0
  %6465 = vmatprep.subr.mxu0 0.0
  %6466 = vmatpush1.msra.mxu0 0.0
  %6467 = vmatprep.subr.mxu0 0.0
  %6468 = vmatpush1.msra.mxu0 0.0
  %6469 = vmatprep.subr.mxu0 0.0
  %6470 = vmatpush1.msra.mxu0 0.0
  %6471 = vmatprep.subr.mxu0 0.0
  %6472 = vmatpush1.msra.mxu0 0.0
  %6473 = vmatprep.subr.mxu0 0.0
  %6474 = vmatpush1.msra.mxu0 0.0
  %6475 = vmatprep.subr.mxu0 0.0
  %6476 = vmatpush1.msra.mxu0 0.0
  %6477 = vmatprep.mubr.f32.mxu0 0.0
  %6478 = vmatmul.mubr.f32.gmra.mrb[0].mxu0 %v6411
  %v6479 = vpop.f32.mrb[0].mxu0
  %v6480 = vadd.f32 0.0, %v6479
  %v6481 = vpop.f32.mrb[0].mxu0
  %6482 = vdwg.mxu0
  %6485 = vrot.lane.b32.xlu0 %v6404, 16
  %v6486 = vpop.permute.xlu0 %6485
  %6487 = vrot.lane.b32.xlu0 %v6480, 16
  %v6488 = vpop.permute.xlu0 %6487
  %6491 = vst.msk [vmem:[#allocation2] sm:$0xff] %vm1200, %v6486
  %6492 = vst.msk [vmem:[#allocation2 + $0x8] sm:$0xff] %vm1200, %v6488
  %6493 = vrot.lane.b32.xlu0 %v5415, 104
  %v6494 = vpop.permute.xlu0 %6493
  %6495 = vrot.lane.b32.xlu0 %v5473, 104
  %v6496 = vpop.permute.xlu0 %6495
  %v6497 = vsel %vm187, %v6494, 0
  %v6499 = vsel %vm187, %v6496, 0
  %6501 = vmatprep.subr.mxu0 0.0
  %6502 = vmatpush1.xpose.msra.mxu0 %v6499
  %6503 = vmatprep.subr.mxu0 0.0
  %6504 = vmatpush1.xpose.msra.mxu0 0.0
  %6505 = vmatprep.subr.mxu0 0.0
  %6506 = vmatpush1.xpose.msra.mxu0 0.0
  %6507 = vmatprep.subr.mxu0 0.0
  %6508 = vmatpush1.xpose.msra.mxu0 0.0
  %6509 = vmatprep.subr.mxu0 0.0
  %6510 = vmatpush1.xpose.msra.mxu0 0.0
  %6511 = vmatprep.subr.mxu0 0.0
  %6512 = vmatpush1.xpose.msra.mxu0 0.0
  %6513 = vmatprep.subr.mxu0 0.0
  %6514 = vmatpush1.xpose.msra.mxu0 0.0
  %6515 = vmatprep.subr.mxu0 0.0
  %6516 = vmatpush1.xpose.msra.mxu0 0.0
  %6517 = vmatprep.subr.mxu0 0.0
  %6518 = vmatpush1.xpose.msra.mxu0 0.0
  %6519 = vmatprep.subr.mxu0 0.0
  %6520 = vmatpush1.xpose.msra.mxu0 0.0
  %6521 = vmatprep.subr.mxu0 0.0
  %6522 = vmatpush1.xpose.msra.mxu0 0.0
  %6523 = vmatprep.subr.mxu0 0.0
  %6524 = vmatpush1.xpose.msra.mxu0 0.0
  %6525 = vmatprep.subr.mxu0 0.0
  %6526 = vmatpush1.xpose.msra.mxu0 0.0
  %6527 = vmatprep.subr.mxu0 0.0
  %6528 = vmatpush1.xpose.msra.mxu0 0.0
  %6529 = vmatprep.subr.mxu0 0.0
  %6530 = vmatpush1.xpose.msra.mxu0 0.0
  %6531 = vmatprep.subr.mxu0 0.0
  %6532 = vmatpush1.xpose.msra.mxu0 0.0
  %6533 = vmatprep.subr.mxu0 0.0
  %6534 = vmatpush1.xpose.msra.mxu0 0.0
  %6535 = vmatprep.subr.mxu0 0.0
  %6536 = vmatpush1.xpose.msra.mxu0 0.0
  %6537 = vmatprep.subr.mxu0 0.0
  %6538 = vmatpush1.xpose.msra.mxu0 0.0
  %6539 = vmatprep.subr.mxu0 0.0
  %6540 = vmatpush1.xpose.msra.mxu0 0.0
  %6541 = vmatprep.subr.mxu0 0.0
  %6542 = vmatpush1.xpose.msra.mxu0 0.0
  %6543 = vmatprep.subr.mxu0 0.0
  %6544 = vmatpush1.xpose.msra.mxu0 0.0
  %6545 = vmatprep.subr.mxu0 0.0
  %6546 = vmatpush1.xpose.msra.mxu0 0.0
  %6547 = vmatprep.subr.mxu0 0.0
  %6548 = vmatpush1.xpose.msra.mxu0 0.0
  %6549 = vmatprep.subr.mxu0 0.0
  %6550 = vmatpush1.xpose.msra.mxu0 0.0
  %6551 = vmatprep.subr.mxu0 0.0
  %6552 = vmatpush1.xpose.msra.mxu0 0.0
  %6553 = vmatprep.subr.mxu0 0.0
  %6554 = vmatpush1.xpose.msra.mxu0 0.0
  %6555 = vmatprep.subr.mxu0 0.0
  %6556 = vmatpush1.xpose.msra.mxu0 0.0
  %6557 = vmatprep.subr.mxu0 0.0
  %6558 = vmatpush1.xpose.msra.mxu0 0.0
  %6559 = vmatprep.subr.mxu0 0.0
  %6560 = vmatpush1.xpose.msra.mxu0 0.0
  %6561 = vmatprep.subr.mxu0 0.0
  %6562 = vmatpush1.xpose.msra.mxu0 0.0
  %6563 = vmatprep.subr.mxu0 0.0
  %6564 = vmatpush1.xpose.msra.mxu0 0.0
  %6565 = vmatprep.mubr.f32.mxu0 0.0
  %6566 = vmatmul.mubr.f32.gmra.mrb[0].mxu0 %v6497
  %v6567 = vpop.f32.mrb[0].mxu0
  %v6568 = vadd.f32 0.0, %v6567
  %v6569 = vpop.f32.mrb[0].mxu0
  %6570 = vdwg.mxu0
  %6571 = vrot.lane.b32.xlu0 %v5418, 104
  %v6572 = vpop.permute.xlu0 %6571
  %6573 = vrot.lane.b32.xlu0 %v5476, 104
  %v6574 = vpop.permute.xlu0 %6573
  %v6575 = vsel %vm187, %v6572, 0
  %v6577 = vsel %vm187, %v6574, 0
  %6579 = vmatprep.subr.mxu0 0.0
  %6580 = vmatpush1.xpose.msra.mxu0 %v6577
  %6581 = vmatprep.subr.mxu0 0.0
  %6582 = vmatpush1.xpose.msra.mxu0 0.0
  %6583 = vmatprep.subr.mxu0 0.0
  %6584 = vmatpush1.xpose.msra.mxu0 0.0
  %6585 = vmatprep.subr.mxu0 0.0
  %6586 = vmatpush1.xpose.msra.mxu0 0.0
  %6587 = vmatprep.subr.mxu0 0.0
  %6588 = vmatpush1.xpose.msra.mxu0 0.0
  %6589 = vmatprep.subr.mxu0 0.0
  %6590 = vmatpush1.xpose.msra.mxu0 0.0
  %6591 = vmatprep.subr.mxu0 0.0
  %6592 = vmatpush1.xpose.msra.mxu0 0.0
  %6593 = vmatprep.subr.mxu0 0.0
  %6594 = vmatpush1.xpose.msra.mxu0 0.0
  %6595 = vmatprep.subr.mxu0 0.0
  %6596 = vmatpush1.xpose.msra.mxu0 0.0
  %6597 = vmatprep.subr.mxu0 0.0
  %6598 = vmatpush1.xpose.msra.mxu0 0.0
  %6599 = vmatprep.subr.mxu0 0.0
  %6600 = vmatpush1.xpose.msra.mxu0 0.0
  %6601 = vmatprep.subr.mxu0 0.0
  %6602 = vmatpush1.xpose.msra.mxu0 0.0
  %6603 = vmatprep.subr.mxu0 0.0
  %6604 = vmatpush1.xpose.msra.mxu0 0.0
  %6605 = vmatprep.subr.mxu0 0.0
  %6606 = vmatpush1.xpose.msra.mxu0 0.0
  %6607 = vmatprep.subr.mxu0 0.0
  %6608 = vmatpush1.xpose.msra.mxu0 0.0
  %6609 = vmatprep.subr.mxu0 0.0
  %6610 = vmatpush1.xpose.msra.mxu0 0.0
  %6611 = vmatprep.subr.mxu0 0.0
  %6612 = vmatpush1.xpose.msra.mxu0 0.0
  %6613 = vmatprep.subr.mxu0 0.0
  %6614 = vmatpush1.xpose.msra.mxu0 0.0
  %6615 = vmatprep.subr.mxu0 0.0
  %6616 = vmatpush1.xpose.msra.mxu0 0.0
  %6617 = vmatprep.subr.mxu0 0.0
  %6618 = vmatpush1.xpose.msra.mxu0 0.0
  %6619 = vmatprep.subr.mxu0 0.0
  %6620 = vmatpush1.xpose.msra.mxu0 0.0
  %6621 = vmatprep.subr.mxu0 0.0
  %6622 = vmatpush1.xpose.msra.mxu0 0.0
  %6623 = vmatprep.subr.mxu0 0.0
  %6624 = vmatpush1.xpose.msra.mxu0 0.0
  %6625 = vmatprep.subr.mxu0 0.0
  %6626 = vmatpush1.xpose.msra.mxu0 0.0
  %6627 = vmatprep.subr.mxu0 0.0
  %6628 = vmatpush1.xpose.msra.mxu0 0.0
  %6629 = vmatprep.subr.mxu0 0.0
  %6630 = vmatpush1.xpose.msra.mxu0 0.0
  %6631 = vmatprep.subr.mxu0 0.0
  %6632 = vmatpush1.xpose.msra.mxu0 0.0
  %6633 = vmatprep.subr.mxu0 0.0
  %6634 = vmatpush1.xpose.msra.mxu0 0.0
  %6635 = vmatprep.subr.mxu0 0.0
  %6636 = vmatpush1.xpose.msra.mxu0 0.0
  %6637 = vmatprep.subr.mxu0 0.0
  %6638 = vmatpush1.xpose.msra.mxu0 0.0
  %6639 = vmatprep.subr.mxu0 0.0
  %6640 = vmatpush1.xpose.msra.mxu0 0.0
  %6641 = vmatprep.subr.mxu0 0.0
  %6642 = vmatpush1.xpose.msra.mxu0 0.0
  %6643 = vmatprep.mubr.f32.mxu0 0.0
  %6644 = vmatmul.mubr.f32.gmra.mrb[0].mxu0 %v6575
  %v6645 = vpop.f32.mrb[0].mxu0
  %v6646 = vadd.f32 0.0, %v6645
  %v6647 = vpop.f32.mrb[0].mxu0
  %6648 = vdwg.mxu0
  %v6649 = vmul.f32 %v6568, 0.35355338
  %v6650 = vmul.f32 %v6646, 0.35355338
  %v6651 = vsel %vm187, %v6649, -inf
  %6652 = vmax.xlane.f32.xlu0 %v6651
  %v6653 = vpop.xlane.xlu0 %6652
  %v6654 = vsel %vm187, %v6650, -inf
  %6655 = vmax.xlane.f32.xlu0 %v6654
  %v6656 = vpop.xlane.xlu0 %6655
  %v6657 = vsub.f32 %v6649, %v6653
  %v6658 = vsub.f32 %v6650, %v6656
  %v6659 = vmul.f32 %v6657, 1.442695
  %v6660 = vpow.pop %v6659
  %v6661 = vmul.f32 %v6658, 1.442695
  %v6662 = vpow.pop %v6661
  %v6663 = vsel %vm187, %v6660, 0.0
  %6664 = vadd.xlane.f32.xlu0 %v6663
  %v6665 = vpop.xlane.xlu0 %6664
  %v6666 = vsel %vm187, %v6662, 0.0
  %6667 = vadd.xlane.f32.xlu0 %v6666
  %v6668 = vpop.xlane.xlu0 %6667
  %v6669 = vrcp.pop %v6665
  %v6670 = vrcp.pop %v6668
  %v6671 = vmul.f32 %v6660, %v6669
  %v6672 = vmul.f32 %v6662, %v6670
  %6673 = vrot.lane.b32.xlu0 %v5473, 72
  %v6674 = vpop.permute.xlu0 %6673
  %v6677 = vsel %vm187, %v6671, 0
  %6679 = vmatprep.subr.mxu0 0.0
  %6680 = vmatpush1.msra.mxu0 %v6674
  %6681 = vmatprep.subr.mxu0 0.0
  %6682 = vmatpush1.msra.mxu0 0.0
  %6683 = vmatprep.subr.mxu0 0.0
  %6684 = vmatpush1.msra.mxu0 0.0
  %6685 = vmatprep.subr.mxu0 0.0
  %6686 = vmatpush1.msra.mxu0 0.0
  %6687 = vmatprep.subr.mxu0 0.0
  %6688 = vmatpush1.msra.mxu0 0.0
  %6689 = vmatprep.subr.mxu0 0.0
  %6690 = vmatpush1.msra.mxu0 0.0
  %6691 = vmatprep.subr.mxu0 0.0
  %6692 = vmatpush1.msra.mxu0 0.0
  %6693 = vmatprep.subr.mxu0 0.0
  %6694 = vmatpush1.msra.mxu0 0.0
  %6695 = vmatprep.subr.mxu0 0.0
  %6696 = vmatpush1.msra.mxu0 0.0
  %6697 = vmatprep.subr.mxu0 0.0
  %6698 = vmatpush1.msra.mxu0 0.0
  %6699 = vmatprep.subr.mxu0 0.0
  %6700 = vmatpush1.msra.mxu0 0.0
  %6701 = vmatprep.subr.mxu0 0.0
  %6702 = vmatpush1.msra.mxu0 0.0
  %6703 = vmatprep.subr.mxu0 0.0
  %6704 = vmatpush1.msra.mxu0 0.0
  %6705 = vmatprep.subr.mxu0 0.0
  %6706 = vmatpush1.msra.mxu0 0.0
  %6707 = vmatprep.subr.mxu0 0.0
  %6708 = vmatpush1.msra.mxu0 0.0
  %6709 = vmatprep.subr.mxu0 0.0
  %6710 = vmatpush1.msra.mxu0 0.0
  %6711 = vmatprep.subr.mxu0 0.0
  %6712 = vmatpush1.msra.mxu0 0.0
  %6713 = vmatprep.subr.mxu0 0.0
  %6714 = vmatpush1.msra.mxu0 0.0
  %6715 = vmatprep.subr.mxu0 0.0
  %6716 = vmatpush1.msra.mxu0 0.0
  %6717 = vmatprep.subr.mxu0 0.0
  %6718 = vmatpush1.msra.mxu0 0.0
  %6719 = vmatprep.subr.mxu0 0.0
  %6720 = vmatpush1.msra.mxu0 0.0
  %6721 = vmatprep.subr.mxu0 0.0
  %6722 = vmatpush1.msra.mxu0 0.0
  %6723 = vmatprep.subr.mxu0 0.0
  %6724 = vmatpush1.msra.mxu0 0.0
  %6725 = vmatprep.subr.mxu0 0.0
  %6726 = vmatpush1.msra.mxu0 0.0
  %6727 = vmatprep.subr.mxu0 0.0
  %6728 = vmatpush1.msra.mxu0 0.0
  %6729 = vmatprep.subr.mxu0 0.0
  %6730 = vmatpush1.msra.mxu0 0.0
  %6731 = vmatprep.subr.mxu0 0.0
  %6732 = vmatpush1.msra.mxu0 0.0
  %6733 = vmatprep.subr.mxu0 0.0
  %6734 = vmatpush1.msra.mxu0 0.0
  %6735 = vmatprep.subr.mxu0 0.0
  %6736 = vmatpush1.msra.mxu0 0.0
  %6737 = vmatprep.subr.mxu0 0.0
  %6738 = vmatpush1.msra.mxu0 0.0
  %6739 = vmatprep.subr.mxu0 0.0
  %6740 = vmatpush1.msra.mxu0 0.0
  %6741 = vmatprep.subr.mxu0 0.0
  %6742 = vmatpush1.msra.mxu0 0.0
  %6743 = vmatprep.mubr.f32.mxu0 0.0
  %6744 = vmatmul.mubr.f32.gmra.mrb[0].mxu0 %v6677
  %v6745 = vpop.f32.mrb[0].mxu0
  %v6746 = vadd.f32 0.0, %v6745
  %v6747 = vpop.f32.mrb[0].mxu0
  %6748 = vdwg.mxu0
  %6749 = vrot.lane.b32.xlu0 %v5476, 72
  %v6750 = vpop.permute.xlu0 %6749
  %v6753 = vsel %vm187, %v6672, 0
  %6755 = vmatprep.subr.mxu0 0.0
  %6756 = vmatpush1.msra.mxu0 %v6750
  %6757 = vmatprep.subr.mxu0 0.0
  %6758 = vmatpush1.msra.mxu0 0.0
  %6759 = vmatprep.subr.mxu0 0.0
  %6760 = vmatpush1.msra.mxu0 0.0
  %6761 = vmatprep.subr.mxu0 0.0
  %6762 = vmatpush1.msra.mxu0 0.0
  %6763 = vmatprep.subr.mxu0 0.0
  %6764 = vmatpush1.msra.mxu0 0.0
  %6765 = vmatprep.subr.mxu0 0.0
  %6766 = vmatpush1.msra.mxu0 0.0
  %6767 = vmatprep.subr.mxu0 0.0
  %6768 = vmatpush1.msra.mxu0 0.0
  %6769 = vmatprep.subr.mxu0 0.0
  %6770 = vmatpush1.msra.mxu0 0.0
  %6771 = vmatprep.subr.mxu0 0.0
  %6772 = vmatpush1.msra.mxu0 0.0
  %6773 = vmatprep.subr.mxu0 0.0
  %6774 = vmatpush1.msra.mxu0 0.0
  %6775 = vmatprep.subr.mxu0 0.0
  %6776 = vmatpush1.msra.mxu0 0.0
  %6777 = vmatprep.subr.mxu0 0.0
  %6778 = vmatpush1.msra.mxu0 0.0
  %6779 = vmatprep.subr.mxu0 0.0
  %6780 = vmatpush1.msra.mxu0 0.0
  %6781 = vmatprep.subr.mxu0 0.0
  %6782 = vmatpush1.msra.mxu0 0.0
  %6783 = vmatprep.subr.mxu0 0.0
  %6784 = vmatpush1.msra.mxu0 0.0
  %6785 = vmatprep.subr.mxu0 0.0
  %6786 = vmatpush1.msra.mxu0 0.0
  %6787 = vmatprep.subr.mxu0 0.0
  %6788 = vmatpush1.msra.mxu0 0.0
  %6789 = vmatprep.subr.mxu0 0.0
  %6790 = vmatpush1.msra.mxu0 0.0
  %6791 = vmatprep.subr.mxu0 0.0
  %6792 = vmatpush1.msra.mxu0 0.0
  %6793 = vmatprep.subr.mxu0 0.0
  %6794 = vmatpush1.msra.mxu0 0.0
  %6795 = vmatprep.subr.mxu0 0.0
  %6796 = vmatpush1.msra.mxu0 0.0
  %6797 = vmatprep.subr.mxu0 0.0
  %6798 = vmatpush1.msra.mxu0 0.0
  %6799 = vmatprep.subr.mxu0 0.0
  %6800 = vmatpush1.msra.mxu0 0.0
  %6801 = vmatprep.subr.mxu0 0.0
  %6802 = vmatpush1.msra.mxu0 0.0
  %6803 = vmatprep.subr.mxu0 0.0
  %6804 = vmatpush1.msra.mxu0 0.0
  %6805 = vmatprep.subr.mxu0 0.0
  %6806 = vmatpush1.msra.mxu0 0.0
  %6807 = vmatprep.subr.mxu0 0.0
  %6808 = vmatpush1.msra.mxu0 0.0
  %6809 = vmatprep.subr.mxu0 0.0
  %6810 = vmatpush1.msra.mxu0 0.0
  %6811 = vmatprep.subr.mxu0 0.0
  %6812 = vmatpush1.msra.mxu0 0.0
  %6813 = vmatprep.subr.mxu0 0.0
  %6814 = vmatpush1.msra.mxu0 0.0
  %6815 = vmatprep.subr.mxu0 0.0
  %6816 = vmatpush1.msra.mxu0 0.0
  %6817 = vmatprep.subr.mxu0 0.0
  %6818 = vmatpush1.msra.mxu0 0.0
  %6819 = vmatprep.mubr.f32.mxu0 0.0
  %6820 = vmatmul.mubr.f32.gmra.mrb[0].mxu0 %v6753
  %v6821 = vpop.f32.mrb[0].mxu0
  %v6822 = vadd.f32 0.0, %v6821
  %v6823 = vpop.f32.mrb[0].mxu0
  %6824 = vdwg.mxu0
  %6827 = vrot.lane.b32.xlu0 %v6746, 24
  %v6828 = vpop.permute.xlu0 %6827
  %6829 = vrot.lane.b32.xlu0 %v6822, 24
  %v6830 = vpop.permute.xlu0 %6829
  %6833 = vst.msk [vmem:[#allocation2] sm:$0xff] %vm1543, %v6828
  %6834 = vst.msk [vmem:[#allocation2 + $0x8] sm:$0xff] %vm1543, %v6830
  %v6835 = vld [vmem:[#allocation2] sm:$0xff]
  %v6836 = vld [vmem:[#allocation2 + $0x8] sm:$0xff]
  %v6837 = vld [vmem:[%s0 + $0x190] sm:$0xff]
  %v6838 = vld [vmem:[%s0 + $0x198] sm:$0xff]
  %v6839 = vld [vmem:[%s0 + $0x1a0] sm:$0x1]
  %v6840 = vld [vmem:[%s0 + $0x1a8] sm:$0x1]
  %v6841 = vsel %vm78, %v6835, 0.0
  %6842 = vadd.xlane.f32.xlu0 %v6841
  %v6843 = vpop.xlane.xlu0 %6842
  %v6844 = vsel %vm78, %v6836, 0.0
  %6845 = vadd.xlane.f32.xlu0 %v6844
  %v6846 = vpop.xlane.xlu0 %6845
  %v6847 = vmul.f32 %v6843, %v85
  %v6848 = vmul.f32 %v6846, %v85
  %v6849 = vsub.f32 %v6835, %v6847
  %v6850 = vsub.f32 %v6836, %v6848
  %v6851 = vmul.f32 %v6849, %v6849
  %v6852 = vmul.f32 %v6850, %v6850
  %v6853 = vsel %vm78, %v6851, 0.0
  %6854 = vadd.xlane.f32.xlu0 %v6853
  %v6855 = vpop.xlane.xlu0 %6854
  %v6856 = vsel %vm78, %v6852, 0.0
  %6857 = vadd.xlane.f32.xlu0 %v6856
  %v6858 = vpop.xlane.xlu0 %6857
  %v6859 = vmul.f32 %v6855, %v85
  %v6860 = vmul.f32 %v6858, %v85
  %v6861 = vadd.f32 %v6859, 1e-05
  %v6862 = vadd.f32 %v6860, 1e-05
  %v6863 = vrsqrt.pop %v6861
  %v6864 = vrsqrt.pop %v6862
  %v6865 = vmul.f32 %v6849, %v6863
  %v6866 = vmul.f32 %v6850, %v6864
  %v6867 = vlaneseq
  %v6868 = vshrl.u32 %v6867, 7
  %v6869 = vsub.s32 0, %v6868
  %v6870 = vrot.slane %v6839, %v6869
  %v6871 = vmul.f32 %v6865, %v6870
  %v6872 = vmul.f32 %v6866, %v6870
  %v6873 = vlaneseq
  %v6874 = vshrl.u32 %v6873, 7
  %v6875 = vsub.s32 0, %v6874
  %v6876 = vrot.slane %v6840, %v6875
  %v6877 = vadd.f32 %v6871, %v6876
  %v6878 = vadd.f32 %v6872, %v6876
  %v6879 = vadd.f32 %v6837, 1.0
  %v6880 = vadd.f32 %v6838, 1.0
  %v6881 = vmul.f32 %v6877, %v6879
  %v6882 = vmul.f32 %v6878, %v6880
  %6885 = vrot.lane.b32.xlu0 %v6837, 96
  %v6886 = vpop.permute.xlu0 %6885
  %6887 = vrot.lane.b32.xlu0 %v6838, 96
  %v6888 = vpop.permute.xlu0 %6887
  %v6891 = vadd.f32 %v6881, %v6886
  %v6892 = vadd.f32 %v6882, %v6888
  %v6893 = vxor.u32 %v6891, 2147483648
  %v6894 = vxor.u32 %v6892, 2147483648
  %v6895 = vmul.f32 %v6893, 1.442695
  %v6896 = vpow.pop %v6895
  %v6897 = vmul.f32 %v6894, 1.442695
  %v6898 = vpow.pop %v6897
  %v6899 = vadd.f32 %v6896, 1.0
  %v6900 = vadd.f32 %v6898, 1.0
  %v6901 = vrcp.pop %v6899
  %v6902 = vmul.f32 1.0, %v6901
  %v6903 = vrcp.pop %v6900
  %v6904 = vmul.f32 1.0, %v6903
  %v6905 = vmul.f32 %v6891, %v6902
  %v6906 = vmul.f32 %v6892, %v6904
  %v6907 = vpack.c.bf16 %v6906, %v6905
  %v6908 = vld [vmem:[%s1 + $0xd8] sm:$0xf]
  %v6909 = vld [vmem:[%s1 + $0xdc] sm:$0xf]
  %v6910 = vld [vmem:[%s1 + $0xe0] sm:$0xf]
  %v6911 = vld [vmem:[%s1 + $0xe4] sm:$0xf]
  %v6912 = vld [vmem:[%s0 + $0x1b0] sm:$0x1]
  %v6913 = vlaneseq
  %v6914 = vshrl.u32 %v6913, 7
  %v6915 = vsub.s32 0, %v6914
  %v6916 = vrot.slane %v6912, %v6915
  %v6921 = vunpack.c.l.b16 %v6908
  %v6922 = vunpack.c.l.b16 %v6909
  %v6923 = vunpack.c.l.b16 %v6910
  %v6924 = vunpack.c.l.b16 %v6911
  %v6925 = vpack.c.b16 %v6922, %v6921
  %v6926 = vpack.c.b16 %v6924, %v6923
  %v6930 = vsel %vm78, %v6907, 0
  %6932 = vmatprep.subr.bf16.mxu0 0
  %6933 = vmatpush1.bf16.msra.mxu0 %v6925
  %6934 = vmatprep.subr.bf16.mxu0 0
  %6935 = vmatpush1.bf16.msra.mxu0 %v6926
  %6936 = vmatprep.subr.bf16.mxu0 0
  %6937 = vmatpush1.bf16.msra.mxu0 0
  %6938 = vmatprep.subr.bf16.mxu0 0
  %6939 = vmatpush1.bf16.msra.mxu0 0
  %6940 = vmatprep.subr.bf16.mxu0 0
  %6941 = vmatpush1.bf16.msra.mxu0 0
  %6942 = vmatprep.subr.bf16.mxu0 0
  %6943 = vmatpush1.bf16.msra.mxu0 0
  %6944 = vmatprep.subr.bf16.mxu0 0
  %6945 = vmatpush1.bf16.msra.mxu0 0
  %6946 = vmatprep.subr.bf16.mxu0 0
  %6947 = vmatpush1.bf16.msra.mxu0 0
  %6948 = vmatprep.subr.bf16.mxu0 0
  %6949 = vmatpush1.bf16.msra.mxu0 0
  %6950 = vmatprep.subr.bf16.mxu0 0
  %6951 = vmatpush1.bf16.msra.mxu0 0
  %6952 = vmatprep.subr.bf16.mxu0 0
  %6953 = vmatpush1.bf16.msra.mxu0 0
  %6954 = vmatprep.subr.bf16.mxu0 0
  %6955 = vmatpush1.bf16.msra.mxu0 0
  %6956 = vmatprep.subr.bf16.mxu0 0
  %6957 = vmatpush1.bf16.msra.mxu0 0
  %6958 = vmatprep.subr.bf16.mxu0 0
  %6959 = vmatpush1.bf16.msra.mxu0 0
  %6960 = vmatprep.subr.bf16.mxu0 0
  %6961 = vmatpush1.bf16.msra.mxu0 0
  %6962 = vmatprep.subr.bf16.mxu0 0
  %6963 = vmatpush1.bf16.msra.mxu0 0
  %6964 = vmatprep.mubr.bf16.mxu0 0
  %6965 = vmatmul.mubr.bf16.gmra.mrb[0].mxu0 %v6930
  %v6966 = vpop.f32.mrb[0].mxu0
  %v6967 = vadd.f32 %v6916, %v6966
  %v6968 = vpop.f32.mrb[0].mxu0
  %v6969 = vpop.f32.mrb[0].mxu0
  %v6970 = vadd.f32 %v6916, %v6969
  %v6971 = vpop.f32.mrb[0].mxu0
  %6972 = vdwg.mxu0
  %v6973 = vadd.f32 %v5299, %v6967
  %v6974 = vadd.f32 %v5300, %v6970
  %v6975 = vpack.c.bf16 %v6974, %v6973
  %v6976 = vld [vmem:[%s1 + $0xe8] sm:$0xf]
  %v6977 = vld [vmem:[%s1 + $0xec] sm:$0xf]
  %v6978 = vld [vmem:[%s1 + $0xf0] sm:$0xf]
  %v6979 = vld [vmem:[%s1 + $0xf4] sm:$0xf]
  %v6980 = vld [vmem:[%s0 + $0x1b8] sm:$0x1]
  %v6981 = vlaneseq
  %v6982 = vshrl.u32 %v6981, 7
  %v6983 = vsub.s32 0, %v6982
  %v6984 = vrot.slane %v6980, %v6983
  %v6989 = vunpack.c.l.b16 %v6976
  %v6990 = vunpack.c.l.b16 %v6977
  %v6991 = vunpack.c.l.b16 %v6978
  %v6992 = vunpack.c.l.b16 %v6979
  %v6993 = vpack.c.b16 %v6990, %v6989
  %v6994 = vpack.c.b16 %v6992, %v6991
  %v6998 = vsel %vm78, %v6975, 0
  %7000 = vmatprep.subr.bf16.mxu0 0
  %7001 = vmatpush1.bf16.msra.mxu0 %v6993
  %7002 = vmatprep.subr.bf16.mxu0 0
  %7003 = vmatpush1.bf16.msra.mxu0 %v6994
  %7004 = vmatprep.subr.bf16.mxu0 0
  %7005 = vmatpush1.bf16.msra.mxu0 0
  %7006 = vmatprep.subr.bf16.mxu0 0
  %7007 = vmatpush1.bf16.msra.mxu0 0
  %7008 = vmatprep.subr.bf16.mxu0 0
  %7009 = vmatpush1.bf16.msra.mxu0 0
  %7010 = vmatprep.subr.bf16.mxu0 0
  %7011 = vmatpush1.bf16.msra.mxu0 0
  %7012 = vmatprep.subr.bf16.mxu0 0
  %7013 = vmatpush1.bf16.msra.mxu0 0
  %7014 = vmatprep.subr.bf16.mxu0 0
  %7015 = vmatpush1.bf16.msra.mxu0 0
  %7016 = vmatprep.subr.bf16.mxu0 0
  %7017 = vmatpush1.bf16.msra.mxu0 0
  %7018 = vmatprep.subr.bf16.mxu0 0
  %7019 = vmatpush1.bf16.msra.mxu0 0
  %7020 = vmatprep.subr.bf16.mxu0 0
  %7021 = vmatpush1.bf16.msra.mxu0 0
  %7022 = vmatprep.subr.bf16.mxu0 0
  %7023 = vmatpush1.bf16.msra.mxu0 0
  %7024 = vmatprep.subr.bf16.mxu0 0
  %7025 = vmatpush1.bf16.msra.mxu0 0
  %7026 = vmatprep.subr.bf16.mxu0 0
  %7027 = vmatpush1.bf16.msra.mxu0 0
  %7028 = vmatprep.subr.bf16.mxu0 0
  %7029 = vmatpush1.bf16.msra.mxu0 0
  %7030 = vmatprep.subr.bf16.mxu0 0
  %7031 = vmatpush1.bf16.msra.mxu0 0
  %7032 = vmatprep.mubr.bf16.mxu0 0
  %7033 = vmatmul.mubr.bf16.gmra.mrb[0].mxu0 %v6998
  %v7034 = vpop.f32.mrb[0].mxu0
  %v7035 = vadd.f32 %v6984, %v7034
  %v7036 = vpop.f32.mrb[0].mxu0
  %v7037 = vpop.f32.mrb[0].mxu0
  %v7038 = vadd.f32 %v6984, %v7037
  %v7039 = vpop.f32.mrb[0].mxu0
  %7040 = vdwg.mxu0
  %v7041 = vmul.f32 %v7035, 0.5
  %v7042 = vmul.f32 %v7038, 0.5
  %v7043 = vmul.f32 %v7035, 0.044715
  %v7044 = vmul.f32 %v7038, 0.044715
  %v7045 = vmul.f32 %v7043, %v7035
  %v7046 = vmul.f32 %v7044, %v7038
  %v7047 = vmul.f32 %v7045, %v7035
  %v7048 = vmul.f32 %v7046, %v7038
  %v7049 = vadd.f32 %v7035, %v7047
  %v7050 = vadd.f32 %v7038, %v7048
  %v7051 = vmul.f32 %v7049, 0.7978846
  %v7052 = vmul.f32 %v7050, 0.7978846
  %v7053 = vtanh.pop %v7051
  %v7054 = vtanh.pop %v7052
  %v7055 = vadd.f32 %v7053, 1.0
  %v7056 = vadd.f32 %v7054, 1.0
  %v7057 = vmul.f32 %v7041, %v7055
  %v7058 = vmul.f32 %v7042, %v7056
  %v7059 = vpack.c.bf16 %v7058, %v7057
  %v7060 = vld [vmem:[%s1 + $0xf8] sm:$0xf]
  %v7061 = vld [vmem:[%s1 + $0xfc] sm:$0xf]
  %v7062 = vld [vmem:[%s1 + $0x100] sm:$0xf]
  %v7063 = vld [vmem:[%s1 + $0x104] sm:$0xf]
  %v7064 = vld [vmem:[%s1 + $0x108] sm:$0xf]
  %v7065 = vld [vmem:[%s1 + $0x10c] sm:$0xf]
  %v7066 = vld [vmem:[%s1 + $0x110] sm:$0xf]
  %v7067 = vld [vmem:[%s1 + $0x114] sm:$0xf]
  %v7068 = vld [vmem:[%s0 + $0x1c0] sm:$0x1]
  %v7069 = vlaneseq
  %v7070 = vshrl.u32 %v7069, 7
  %v7071 = vsub.s32 0, %v7070
  %v7072 = vrot.slane %v7068, %v7071
  %v7081 = vunpack.c.l.b16 %v7060
  %v7082 = vunpack.c.l.b16 %v7061
  %v7083 = vunpack.c.l.b16 %v7062
  %v7084 = vunpack.c.l.b16 %v7063
  %v7085 = vunpack.c.l.b16 %v7064
  %v7086 = vunpack.c.l.b16 %v7065
  %v7087 = vunpack.c.l.b16 %v7066
  %v7088 = vunpack.c.l.b16 %v7067
  %v7089 = vpack.c.b16 %v7082, %v7081
  %v7090 = vpack.c.b16 %v7084, %v7083
  %v7091 = vpack.c.b16 %v7086, %v7085
  %v7092 = vpack.c.b16 %v7088, %v7087
  %v7098 = vsel %vm3510, %v7059, 0
  %7100 = vmatprep.subr.bf16.mxu0 0
  %7101 = vmatpush1.bf16.msra.mxu0 %v7089
  %7102 = vmatprep.subr.bf16.mxu0 0
  %7103 = vmatpush1.bf16.msra.mxu0 %v7090
  %7104 = vmatprep.subr.bf16.mxu0 0
  %7105 = vmatpush1.bf16.msra.mxu0 %v7091
  %7106 = vmatprep.subr.bf16.mxu0 0
  %7107 = vmatpush1.bf16.msra.mxu0 %v7092
  %7108 = vmatprep.subr.bf16.mxu0 0
  %7109 = vmatpush1.bf16.msra.mxu0 0
  %7110 = vmatprep.subr.bf16.mxu0 0
  %7111 = vmatpush1.bf16.msra.mxu0 0
  %7112 = vmatprep.subr.bf16.mxu0 0
  %7113 = vmatpush1.bf16.msra.mxu0 0
  %7114 = vmatprep.subr.bf16.mxu0 0
  %7115 = vmatpush1.bf16.msra.mxu0 0
  %7116 = vmatprep.subr.bf16.mxu0 0
  %7117 = vmatpush1.bf16.msra.mxu0 0
  %7118 = vmatprep.subr.bf16.mxu0 0
  %7119 = vmatpush1.bf16.msra.mxu0 0
  %7120 = vmatprep.subr.bf16.mxu0 0
  %7121 = vmatpush1.bf16.msra.mxu0 0
  %7122 = vmatprep.subr.bf16.mxu0 0
  %7123 = vmatpush1.bf16.msra.mxu0 0
  %7124 = vmatprep.subr.bf16.mxu0 0
  %7125 = vmatpush1.bf16.msra.mxu0 0
  %7126 = vmatprep.subr.bf16.mxu0 0
  %7127 = vmatpush1.bf16.msra.mxu0 0
  %7128 = vmatprep.subr.bf16.mxu0 0
  %7129 = vmatpush1.bf16.msra.mxu0 0
  %7130 = vmatprep.subr.bf16.mxu0 0
  %7131 = vmatpush1.bf16.msra.mxu0 0
  %7132 = vmatprep.mubr.bf16.mxu0 0
  %7133 = vmatmul.mubr.bf16.gmra.mrb[0].mxu0 %v7098
  %v7134 = vpop.f32.mrb[0].mxu0
  %v7135 = vadd.f32 %v7072, %v7134
  %v7136 = vpop.f32.mrb[0].mxu0
  %v7137 = vpop.f32.mrb[0].mxu0
  %v7138 = vadd.f32 %v7072, %v7137
  %v7139 = vpop.f32.mrb[0].mxu0
  %7140 = vdwg.mxu0
  %v7141 = vld [vmem:[%s0 + $0x1c8] sm:$0xff]
  %v7142 = vld [vmem:[%s0 + $0x1d0] sm:$0xff]
  %v7143 = vld [vmem:[%s0 + $0x1d8] sm:$0x1]
  %v7144 = vld [vmem:[%s0 + $0x1e0] sm:$0x1]
  %v7145 = vsel %vm78, %v7135, 0.0
  %7146 = vadd.xlane.f32.xlu0 %v7145
  %v7147 = vpop.xlane.xlu0 %7146
  %v7148 = vsel %vm78, %v7138, 0.0
  %7149 = vadd.xlane.f32.xlu0 %v7148
  %v7150 = vpop.xlane.xlu0 %7149
  %v7151 = vmul.f32 %v7147, %v85
  %v7152 = vmul.f32 %v7150, %v85
  %v7153 = vsub.f32 %v7135, %v7151
  %v7154 = vsub.f32 %v7138, %v7152
  %v7155 = vmul.f32 %v7153, %v7153
  %v7156 = vmul.f32 %v7154, %v7154
  %v7157 = vsel %vm78, %v7155, 0.0
  %7158 = vadd.xlane.f32.xlu0 %v7157
  %v7159 = vpop.xlane.xlu0 %7158
  %v7160 = vsel %vm78, %v7156, 0.0
  %7161 = vadd.xlane.f32.xlu0 %v7160
  %v7162 = vpop.xlane.xlu0 %7161
  %v7163 = vmul.f32 %v7159, %v85
  %v7164 = vmul.f32 %v7162, %v85
  %v7165 = vadd.f32 %v7163, 1e-05
  %v7166 = vadd.f32 %v7164, 1e-05
  %v7167 = vrsqrt.pop %v7165
  %v7168 = vrsqrt.pop %v7166
  %v7169 = vmul.f32 %v7153, %v7167
  %v7170 = vmul.f32 %v7154, %v7168
  %v7171 = vlaneseq
  %v7172 = vshrl.u32 %v7171, 7
  %v7173 = vsub.s32 0, %v7172
  %v7174 = vrot.slane %v7143, %v7173
  %v7175 = vmul.f32 %v7169, %v7174
  %v7176 = vmul.f32 %v7170, %v7174
  %v7177 = vlaneseq
  %v7178 = vshrl.u32 %v7177, 7
  %v7179 = vsub.s32 0, %v7178
  %v7180 = vrot.slane %v7144, %v7179
  %v7181 = vadd.f32 %v7175, %v7180
  %v7182 = vadd.f32 %v7176, %v7180
  %v7183 = vadd.f32 %v7141, 1.0
  %v7184 = vadd.f32 %v7142, 1.0
  %v7185 = vmul.f32 %v7181, %v7183
  %v7186 = vmul.f32 %v7182, %v7184
  %7189 = vrot.lane.b32.xlu0 %v7141, 96
  %v7190 = vpop.permute.xlu0 %7189
  %7191 = vrot.lane.b32.xlu0 %v7142, 96
  %v7192 = vpop.permute.xlu0 %7191
  %v7195 = vadd.f32 %v7185, %v7190
  %v7196 = vadd.f32 %v7186, %v7192
  %v7197 = vxor.u32 %v7195, 2147483648
  %v7198 = vxor.u32 %v7196, 2147483648
  %v7199 = vmul.f32 %v7197, 1.442695
  %v7200 = vpow.pop %v7199
  %v7201 = vmul.f32 %v7198, 1.442695
  %v7202 = vpow.pop %v7201
  %v7203 = vadd.f32 %v7200, 1.0
  %v7204 = vadd.f32 %v7202, 1.0
  %v7205 = vrcp.pop %v7203
  %v7206 = vmul.f32 1.0, %v7205
  %v7207 = vrcp.pop %v7204
  %v7208 = vmul.f32 1.0, %v7207
  %v7209 = vmul.f32 %v7195, %v7206
  %v7210 = vmul.f32 %v7196, %v7208
  %v7211 = vpack.c.bf16 %v7210, %v7209
  %v7212 = vld [vmem:[%s1 + $0x118] sm:$0xf]
  %v7213 = vld [vmem:[%s1 + $0x11c] sm:$0xf]
  %v7214 = vld [vmem:[%s1 + $0x120] sm:$0xf]
  %v7215 = vld [vmem:[%s1 + $0x124] sm:$0xf]
  %v7216 = vld [vmem:[%s0 + $0x1e8] sm:$0x1]
  %v7217 = vlaneseq
  %v7218 = vshrl.u32 %v7217, 7
  %v7219 = vsub.s32 0, %v7218
  %v7220 = vrot.slane %v7216, %v7219
  %v7225 = vunpack.c.l.b16 %v7212
  %v7226 = vunpack.c.l.b16 %v7213
  %v7227 = vunpack.c.l.b16 %v7214
  %v7228 = vunpack.c.l.b16 %v7215
  %v7229 = vpack.c.b16 %v7226, %v7225
  %v7230 = vpack.c.b16 %v7228, %v7227
  %v7234 = vsel %vm78, %v7211, 0
  %7236 = vmatprep.subr.bf16.mxu0 0
  %7237 = vmatpush1.bf16.msra.mxu0 %v7229
  %7238 = vmatprep.subr.bf16.mxu0 0
  %7239 = vmatpush1.bf16.msra.mxu0 %v7230
  %7240 = vmatprep.subr.bf16.mxu0 0
  %7241 = vmatpush1.bf16.msra.mxu0 0
  %7242 = vmatprep.subr.bf16.mxu0 0
  %7243 = vmatpush1.bf16.msra.mxu0 0
  %7244 = vmatprep.subr.bf16.mxu0 0
  %7245 = vmatpush1.bf16.msra.mxu0 0
  %7246 = vmatprep.subr.bf16.mxu0 0
  %7247 = vmatpush1.bf16.msra.mxu0 0
  %7248 = vmatprep.subr.bf16.mxu0 0
  %7249 = vmatpush1.bf16.msra.mxu0 0
  %7250 = vmatprep.subr.bf16.mxu0 0
  %7251 = vmatpush1.bf16.msra.mxu0 0
  %7252 = vmatprep.subr.bf16.mxu0 0
  %7253 = vmatpush1.bf16.msra.mxu0 0
  %7254 = vmatprep.subr.bf16.mxu0 0
  %7255 = vmatpush1.bf16.msra.mxu0 0
  %7256 = vmatprep.subr.bf16.mxu0 0
  %7257 = vmatpush1.bf16.msra.mxu0 0
  %7258 = vmatprep.subr.bf16.mxu0 0
  %7259 = vmatpush1.bf16.msra.mxu0 0
  %7260 = vmatprep.subr.bf16.mxu0 0
  %7261 = vmatpush1.bf16.msra.mxu0 0
  %7262 = vmatprep.subr.bf16.mxu0 0
  %7263 = vmatpush1.bf16.msra.mxu0 0
  %7264 = vmatprep.subr.bf16.mxu0 0
  %7265 = vmatpush1.bf16.msra.mxu0 0
  %7266 = vmatprep.subr.bf16.mxu0 0
  %7267 = vmatpush1.bf16.msra.mxu0 0
  %7268 = vmatprep.mubr.bf16.mxu0 0
  %7269 = vmatmul.mubr.bf16.gmra.mrb[0].mxu0 %v7234
  %v7270 = vpop.f32.mrb[0].mxu0
  %v7271 = vadd.f32 %v7220, %v7270
  %v7272 = vpop.f32.mrb[0].mxu0
  %v7273 = vpop.f32.mrb[0].mxu0
  %v7274 = vadd.f32 %v7220, %v7273
  %v7275 = vpop.f32.mrb[0].mxu0
  %7276 = vdwg.mxu0
  %v7277 = vadd.f32 %v6973, %v7271
  %v7278 = vadd.f32 %v6974, %v7274
  %v7279 = vpack.c.bf16 %v7278, %v7277
  %v7280 = vld [vmem:[%s1 + $0x8] sm:$0xf]
  %v7281 = vld [vmem:[%s1 + $0xc] sm:$0xf]
  %v7282 = vld [vmem:[%s1 + $0x10] sm:$0xf]
  %v7283 = vld [vmem:[%s1 + $0x14] sm:$0xf]
  %v7284 = vld [vmem:[%s0 + $0x48] sm:$0x1]
  %v7285 = vlaneseq
  %v7286 = vshrl.u32 %v7285, 7
  %v7287 = vsub.s32 0, %v7286
  %v7288 = vrot.slane %v7284, %v7287
  %v7293 = vunpack.c.l.b16 %v7280
  %v7294 = vunpack.c.l.b16 %v7281
  %v7295 = vunpack.c.l.b16 %v7282
  %v7296 = vunpack.c.l.b16 %v7283
  %v7297 = vpack.c.b16 %v7294, %v7293
  %v7298 = vpack.c.b16 %v7296, %v7295
  %v7302 = vsel %vm78, %v7279, 0
  %7304 = vmatprep.subr.bf16.mxu0 0
  %7305 = vmatpush1.bf16.msra.mxu0 %v7297
  %7306 = vmatprep.subr.bf16.mxu0 0
  %7307 = vmatpush1.bf16.msra.mxu0 %v7298
  %7308 = vmatprep.subr.bf16.mxu0 0
  %7309 = vmatpush1.bf16.msra.mxu0 0
  %7310 = vmatprep.subr.bf16.mxu0 0
  %7311 = vmatpush1.bf16.msra.mxu0 0
  %7312 = vmatprep.subr.bf16.mxu0 0
  %7313 = vmatpush1.bf16.msra.mxu0 0
  %7314 = vmatprep.subr.bf16.mxu0 0
  %7315 = vmatpush1.bf16.msra.mxu0 0
  %7316 = vmatprep.subr.bf16.mxu0 0
  %7317 = vmatpush1.bf16.msra.mxu0 0
  %7318 = vmatprep.subr.bf16.mxu0 0
  %7319 = vmatpush1.bf16.msra.mxu0 0
  %7320 = vmatprep.subr.bf16.mxu0 0
  %7321 = vmatpush1.bf16.msra.mxu0 0
  %7322 = vmatprep.subr.bf16.mxu0 0
  %7323 = vmatpush1.bf16.msra.mxu0 0
  %7324 = vmatprep.subr.bf16.mxu0 0
  %7325 = vmatpush1.bf16.msra.mxu0 0
  %7326 = vmatprep.subr.bf16.mxu0 0
  %7327 = vmatpush1.bf16.msra.mxu0 0
  %7328 = vmatprep.subr.bf16.mxu0 0
  %7329 = vmatpush1.bf16.msra.mxu0 0
  %7330 = vmatprep.subr.bf16.mxu0 0
  %7331 = vmatpush1.bf16.msra.mxu0 0
  %7332 = vmatprep.subr.bf16.mxu0 0
  %7333 = vmatpush1.bf16.msra.mxu0 0
  %7334 = vmatprep.subr.bf16.mxu0 0
  %7335 = vmatpush1.bf16.msra.mxu0 0
  %7336 = vmatprep.mubr.bf16.mxu0 0
  %7337 = vmatmul.mubr.bf16.gmra.mrb[0].mxu0 %v7302
  %v7338 = vpop.f32.mrb[0].mxu0
  %v7339 = vadd.f32 %v7288, %v7338
  %v7340 = vpop.f32.mrb[0].mxu0
  %v7341 = vpop.f32.mrb[0].mxu0
  %v7342 = vadd.f32 %v7288, %v7341
  %v7343 = vpop.f32.mrb[0].mxu0
  %7344 = vdwg.mxu0
  %7345 = vst [vmem:[%s2] sm:$0xff] %v7339
  %7346 = vst [vmem:[%s2 + $0x8] sm:$0xff] %v7342
  // Predicated region
  $region10: #{gesture_transformer_forward.1} parent=0 // pred_check
    _
  $region11: #{gesture_transformer_forward.1} parent=0 // pred_check_branch
    %7348 = sbr.rel (0) target = $region13
  $region12: #{gesture_transformer_forward.1} parent=0 // pred_region
    _
  $region13: #{gesture_transformer_forward.1} parent=0 // pred_fallthru
    _
  // Predicated region
  $region14: #{gesture_transformer_forward.1} parent=0 // pred_check
    _
  $region15: #{gesture_transformer_forward.1} parent=0 // pred_check_branch
    %7350 = sbr.rel (0) target = $region17
  $region16: #{gesture_transformer_forward.1} parent=0 // pred_region
    _
  $region17: #{gesture_transformer_forward.1} parent=0 // pred_fallthru
    _

</llo_original>
